<compile_context>
chip_gen: v6e
topology: v6e:2x2x1
jax: 0.10.0
libtpu: 0.0.40
codegen_flags: <defaults>
</compile_context>

<pallas_src>
import functools

import jax
import jax.numpy as jnp
from jax.experimental import pallas as pl
from jax.experimental.pallas import tpu as pltpu

LANE = 128


def _round_up(x, m):
    return (x + m - 1) // m * m


def _full_spec(arr):
    """Whole-array-in-VMEM BlockSpec (no grid)."""
    return pl.BlockSpec(arr.shape, lambda nd=arr.ndim: (0,) * nd)


def build_plan(conv_cfg, img_size, in_channels=1):
    """Static layer plan: ('conv', H, Cin, Cout) or ('pool', H, C)."""
    plan = []
    h, c = img_size, in_channels
    for v in conv_cfg:
        if v == "M":
            plan.append(("pool", h, c))
            h //= 2
        else:
            plan.append(("conv", h, c, v))
            c = v
    return plan, h, c


# ------------------------------ fused kernel --------------------------------


def cnn_fused_kernel(plan, n, n_dense, *refs):
    """Entire Cnn forward for the whole batch; intermediates stay in VMEM.

    refs = [x]
           + [w_im2col, bn_scale, bn_bias]  per conv layer
           + [w_padded, b_padded]           per dense layer (incl. output)
           + [logits_out]
           + [pad_scratch, patch_scratch]   per conv layer
           + [flat_scratch]
    """
    n_conv = sum(1 for l in plan if l[0] == "conv")
    i = 0
    x_ref = refs[i]; i += 1
    conv_p = [refs[i + 3 * k: i + 3 * k + 3] for k in range(n_conv)]
    i += 3 * n_conv
    dense_p = [refs[i + 2 * k: i + 2 * k + 2] for k in range(n_dense)]
    i += 2 * n_dense
    o_ref = refs[i]; i += 1
    conv_s = [refs[i + 2 * k: i + 2 * k + 2] for k in range(n_conv)]
    i += 2 * n_conv
    flat_ref = refs[i]

    x = x_ref[...]                                    # (N, H, W, Cin) NHWC f32
    ci = 0
    for layer in plan:
        if layer[0] == "pool":                        # fused 2x2 / stride-2 max
            _, h, c = layer
            x = jnp.max(x.reshape(n, h // 2, 2, h, c), axis=2)
            x = jnp.max(x.reshape(n, h // 2, h // 2, 2, c), axis=3)
        else:                                         # conv3x3(p=1) + BN + ReLU
            _, h, cin, cout = layer
            w_ref, s_ref, b_ref = conv_p[ci]
            pad_ref, patch_ref = conv_s[ci]
            ci += 1
            # halo padding built in VMEM (no HBM pad pass in the wrapper)
            pad_ref[...] = jnp.zeros_like(pad_ref)
            pad_ref[:, 1:h + 1, 1:h + 1, :] = x
            # im2col patches (N*H*W, 9*Cin): one MXU matmul per conv layer
            for dh in range(3):
                for dw in range(3):
                    t = dh * 3 + dw
                    patch_ref[:, t * cin:(t + 1) * cin] = (
                        pad_ref[:, dh:dh + h, dw:dw + h, :]
                        .reshape(n * h * h, cin))
            y = jnp.dot(patch_ref[...], w_ref[...],
                        preferred_element_type=jnp.float32)
            y = jnp.maximum(y * s_ref[...] + b_ref[...], 0.0)  # folded BN+ReLU
            x = y.reshape(n, h, h, cout)

    # NHWC flatten into a lane-dense (N, F) slab. The first dense weight's rows
    # were pre-permuted to this order, so no NCHW transpose is needed.
    hf, cf = x.shape[1], x.shape[3]
    for hh in range(hf):
        for ww in range(hf):
            s0 = (hh * hf + ww) * cf
            flat_ref[:, s0:s0 + cf] = x[:, hh, ww, :]
    act = flat_ref[...]

    # dense stack; widths are zero-padded to 128 lanes (results identical since
    # the padded weight rows/cols and biases are zero). Last layer has no ReLU.
    for k in range(n_dense):
        w_ref, b_ref = dense_p[k]
        act = jnp.dot(act, w_ref[...],
                      preferred_element_type=jnp.float32) + b_ref[...]
        if k < n_dense - 1:
            act = jnp.maximum(act, 0.0)
            # TODO(synk): nn.Dropout omitted -- inference-mode (identity).
    o_ref[...] = act                                  # (N, 128) lane-dense store


# ------------------------------- wrapper -------------------------------------


def cnn_forward(x_nchw, params, conv_cfg, img_size, n_classes):
    n = x_nchw.shape[0]
    plan, hf, cf = build_plan(conv_cfg, img_size)
    flat_size = hf * hf * cf

    # NCHW -> NHWC at the boundary (Cin=1 here, so this is a free reshape).
    x_nhwc = jnp.transpose(x_nchw, (0, 2, 3, 1)).astype(jnp.float32)

    conv_params = params["conv"]
    dense_params = params["dense"]
    n_dense = len(dense_params)
    out_pad = dense_params[-1][0].shape[1]

    inputs = [x_nhwc]
    for w, s, b in conv_params:
        inputs += [w, s, b]
    for w, b in dense_params:
        inputs += [w, b]

    scratch = []
    for layer in plan:
        if layer[0] == "conv":
            _, h, cin, cout = layer
            scratch.append(pltpu.VMEM((n, h + 2, h + 2, cin), jnp.float32))
            scratch.append(pltpu.VMEM((n * h * h, 9 * cin), jnp.float32))
    scratch.append(pltpu.VMEM((n, flat_size), jnp.float32))

    logits_pad = pl.pallas_call(
        functools.partial(cnn_fused_kernel, plan, n, n_dense),
        out_shape=jax.ShapeDtypeStruct((n, out_pad), jnp.float32),
        in_specs=[_full_spec(a) for a in inputs],
        out_specs=pl.BlockSpec((n, out_pad), lambda: (0, 0)),
        scratch_shapes=scratch,
    )(*inputs)
    return logits_pad[:, :n_classes]


# ------------------------- deterministic params ------------------------------


def init_params(key, conv_cfg, dense_cfg, n_classes, img_size):
    eps = 1e-5
    keys = iter(jax.random.split(key, 128))
    plan, hf, cf = build_plan(conv_cfg, img_size)

    convs = []
    in_c = 1
    for v in conv_cfg:
        if v == "M":
            continue
        w = 0.1 * jax.random.normal(next(keys), (3, 3, in_c, v), jnp.float32)
        cb = 0.1 * jax.random.normal(next(keys), (v,), jnp.float32)
        gamma = 1.0 + 0.1 * jax.random.normal(next(keys), (v,), jnp.float32)
        beta = 0.1 * jax.random.normal(next(keys), (v,), jnp.float32)
        mean = 0.1 * jax.random.normal(next(keys), (v,), jnp.float32)
        var = 0.5 + jnp.abs(jax.random.normal(next(keys), (v,), jnp.float32))
        scale = gamma / jnp.sqrt(var + eps)           # BN eval-mode folding
        bias = (cb - mean) * scale + beta             # conv bias folded in
        w_mat = w.reshape(9 * in_c, v)                # im2col rows = (dh,dw,cin)
        convs.append((w_mat, scale.reshape(1, v), bias.reshape(1, v)))
        in_c = v

    flat = hf * hf * cf
    # Offline row permutation of the first dense weight: generated in PyTorch
    # NCHW-flatten row order, re-indexed to NHWC-flatten order so the kernel
    # needs no transpose before the flatten.
    hh, ww, cc = jnp.meshgrid(jnp.arange(hf), jnp.arange(hf), jnp.arange(cf),
                              indexing="ij")
    nchw_rows = (cc * hf * hf + hh * hf + ww).reshape(-1)

    denses = []
    widths = list(dense_cfg) + [n_classes]
    for li, v in enumerate(widths):
        in_n = flat if li == 0 else widths[li - 1]
        w = jax.random.normal(next(keys), (in_n, v), jnp.float32) / jnp.sqrt(
            jnp.float32(in_n))
        b = 0.1 * jax.random.normal(next(keys), (1, v), jnp.float32)
        if li == 0:
            w = w[nchw_rows, :]                       # NCHW-order rows -> NHWC
            rows = flat
        else:
            rows = _round_up(widths[li - 1], LANE)    # padded width of prev act
        cols = _round_up(v, LANE)                     # lane-dense output width
        wp = jnp.zeros((rows, cols), jnp.float32).at[:w.shape[0], :v].set(w)
        bp = jnp.zeros((1, cols), jnp.float32).at[:, :v].set(b)
        denses.append((wp, bp))
    return {"conv": convs, "dense": denses}


# --------------------------------- main --------------------------------------


if __name__ == "__main__":
    # Cnn(conv_cfg=[4,'M',8,'M'], dense_cfg=[32], n_classes=7, img_size=16)
    conv_cfg = [4, "M", 8, "M"]
    dense_cfg = [32]
    n_classes = 7
    img_size = 16

    key = jax.random.PRNGKey(0)
    kx, kp = jax.random.split(key)
    x = jax.random.normal(kx, (2, 1, img_size, img_size), jnp.float32)  # NCHW
    params = init_params(kp, conv_cfg, dense_cfg, n_classes, img_size)

    @jax.jit
    def fwd(xx, pp):
        return cnn_forward(xx, pp, conv_cfg, img_size, n_classes)

    out = jax.block_until_ready(fwd(x, params))
    assert out.shape == (2, n_classes), out.shape
    print("KERNEL_OK")
</pallas_src>

<mosaic_0001>
module attributes {stable_mosaic.version = 11 : i64} {
  func.func @cnn_fused_kernel(%arg0: memref<2x16x16x1xf32, #tpu.memory_space<vmem>>, %arg1: memref<9x4xf32, #tpu.memory_space<vmem>>, %arg2: memref<1x4xf32, #tpu.memory_space<vmem>>, %arg3: memref<1x4xf32, #tpu.memory_space<vmem>>, %arg4: memref<36x8xf32, #tpu.memory_space<vmem>>, %arg5: memref<1x8xf32, #tpu.memory_space<vmem>>, %arg6: memref<1x8xf32, #tpu.memory_space<vmem>>, %arg7: memref<128x128xf32, #tpu.memory_space<vmem>>, %arg8: memref<1x128xf32, #tpu.memory_space<vmem>>, %arg9: memref<128x128xf32, #tpu.memory_space<vmem>>, %arg10: memref<1x128xf32, #tpu.memory_space<vmem>>, %arg11: memref<2x128xf32, #tpu.memory_space<vmem>>, %arg12: memref<2x18x18x1xf32, #tpu.memory_space<vmem>>, %arg13: memref<512x9xf32, #tpu.memory_space<vmem>>, %arg14: memref<2x10x10x4xf32, #tpu.memory_space<vmem>>, %arg15: memref<128x36xf32, #tpu.memory_space<vmem>>, %arg16: memref<2x128xf32, #tpu.memory_space<vmem>>) attributes {dimension_semantics = [], scalar_prefetch = 0 : i64, scratch_operands = 5 : i64, tpu.core_type = #tpu.core_type<tc>} {
    %c0 = arith.constant 0 : index
    %c0_0 = arith.constant 0 : index
    %c0_1 = arith.constant 0 : index
    %c0_2 = arith.constant 0 : index
    %0 = vector.load %arg0[%c0, %c0_0, %c0_1, %c0_2] : memref<2x16x16x1xf32, #tpu.memory_space<vmem>>, vector<2x16x16x1xf32>
    %cst = arith.constant 0.000000e+00 : f32
    %1 = vector.broadcast %cst : f32 to vector<2x18x18x1xf32>
    %c0_3 = arith.constant 0 : index
    %c0_4 = arith.constant 0 : index
    %c0_5 = arith.constant 0 : index
    %c0_6 = arith.constant 0 : index
    %2 = vector.load %arg12[%c0_3, %c0_4, %c0_5, %c0_6] : memref<2x18x18x1xf32, #tpu.memory_space<vmem>>, vector<2x18x18x1xf32>
    tpu.vector_store %arg12[%c0_3, %c0_4, %c0_5, %c0_6], %1 {strides = array<i32>} : memref<2x18x18x1xf32, #tpu.memory_space<vmem>>, vector<2x18x18x1xf32>,
    %c0_7 = arith.constant 0 : index
    %c1 = arith.constant 1 : index
    %c1_8 = arith.constant 1 : index
    %c0_9 = arith.constant 0 : index
    %3 = vector.load %arg12[%c0_7, %c1, %c1_8, %c0_9] : memref<2x18x18x1xf32, #tpu.memory_space<vmem>>, vector<2x16x16x1xf32>
    tpu.vector_store %arg12[%c0_7, %c1, %c1_8, %c0_9], %0 {strides = array<i32>} : memref<2x18x18x1xf32, #tpu.memory_space<vmem>>, vector<2x16x16x1xf32>,
    %c0_10 = arith.constant 0 : index
    %c0_11 = arith.constant 0 : index
    %c0_12 = arith.constant 0 : index
    %c0_13 = arith.constant 0 : index
    %4 = vector.load %arg12[%c0_10, %c0_11, %c0_12, %c0_13] : memref<2x18x18x1xf32, #tpu.memory_space<vmem>>, vector<2x16x16x1xf32>
    %5 = vector.shape_cast %4 : vector<2x16x16x1xf32> to vector<512x1xf32>
    %c0_14 = arith.constant 0 : index
    %c0_15 = arith.constant 0 : index
    %6 = vector.load %arg13[%c0_14, %c0_15] : memref<512x9xf32, #tpu.memory_space<vmem>>, vector<512x1xf32>
    tpu.vector_store %arg13[%c0_14, %c0_15], %5 {strides = array<i32>} : memref<512x9xf32, #tpu.memory_space<vmem>>, vector<512x1xf32>,
    %c0_16 = arith.constant 0 : index
    %c0_17 = arith.constant 0 : index
    %c1_18 = arith.constant 1 : index
    %c0_19 = arith.constant 0 : index
    %7 = vector.load %arg12[%c0_16, %c0_17, %c1_18, %c0_19] : memref<2x18x18x1xf32, #tpu.memory_space<vmem>>, vector<2x16x16x1xf32>
    %8 = vector.shape_cast %7 : vector<2x16x16x1xf32> to vector<512x1xf32>
    %c0_20 = arith.constant 0 : index
    %c1_21 = arith.constant 1 : index
    %9 = vector.load %arg13[%c0_20, %c1_21] : memref<512x9xf32, #tpu.memory_space<vmem>>, vector<512x1xf32>
    tpu.vector_store %arg13[%c0_20, %c1_21], %8 {strides = array<i32>} : memref<512x9xf32, #tpu.memory_space<vmem>>, vector<512x1xf32>,
    %c0_22 = arith.constant 0 : index
    %c0_23 = arith.constant 0 : index
    %c2 = arith.constant 2 : index
    %c0_24 = arith.constant 0 : index
    %10 = vector.load %arg12[%c0_22, %c0_23, %c2, %c0_24] : memref<2x18x18x1xf32, #tpu.memory_space<vmem>>, vector<2x16x16x1xf32>
    %11 = vector.shape_cast %10 : vector<2x16x16x1xf32> to vector<512x1xf32>
    %c0_25 = arith.constant 0 : index
    %c2_26 = arith.constant 2 : index
    %12 = vector.load %arg13[%c0_25, %c2_26] : memref<512x9xf32, #tpu.memory_space<vmem>>, vector<512x1xf32>
    tpu.vector_store %arg13[%c0_25, %c2_26], %11 {strides = array<i32>} : memref<512x9xf32, #tpu.memory_space<vmem>>, vector<512x1xf32>,
    %c0_27 = arith.constant 0 : index
    %c1_28 = arith.constant 1 : index
    %c0_29 = arith.constant 0 : index
    %c0_30 = arith.constant 0 : index
    %13 = vector.load %arg12[%c0_27, %c1_28, %c0_29, %c0_30] : memref<2x18x18x1xf32, #tpu.memory_space<vmem>>, vector<2x16x16x1xf32>
    %14 = vector.shape_cast %13 : vector<2x16x16x1xf32> to vector<512x1xf32>
    %c0_31 = arith.constant 0 : index
    %c3 = arith.constant 3 : index
    %15 = vector.load %arg13[%c0_31, %c3] : memref<512x9xf32, #tpu.memory_space<vmem>>, vector<512x1xf32>
    tpu.vector_store %arg13[%c0_31, %c3], %14 {strides = array<i32>} : memref<512x9xf32, #tpu.memory_space<vmem>>, vector<512x1xf32>,
    %c0_32 = arith.constant 0 : index
    %c1_33 = arith.constant 1 : index
    %c1_34 = arith.constant 1 : index
    %c0_35 = arith.constant 0 : index
    %16 = vector.load %arg12[%c0_32, %c1_33, %c1_34, %c0_35] : memref<2x18x18x1xf32, #tpu.memory_space<vmem>>, vector<2x16x16x1xf32>
    %17 = vector.shape_cast %16 : vector<2x16x16x1xf32> to vector<512x1xf32>
    %c0_36 = arith.constant 0 : index
    %c4 = arith.constant 4 : index
    %18 = vector.load %arg13[%c0_36, %c4] : memref<512x9xf32, #tpu.memory_space<vmem>>, vector<512x1xf32>
    tpu.vector_store %arg13[%c0_36, %c4], %17 {strides = array<i32>} : memref<512x9xf32, #tpu.memory_space<vmem>>, vector<512x1xf32>,
    %c0_37 = arith.constant 0 : index
    %c1_38 = arith.constant 1 : index
    %c2_39 = arith.constant 2 : index
    %c0_40 = arith.constant 0 : index
    %19 = vector.load %arg12[%c0_37, %c1_38, %c2_39, %c0_40] : memref<2x18x18x1xf32, #tpu.memory_space<vmem>>, vector<2x16x16x1xf32>
    %20 = vector.shape_cast %19 : vector<2x16x16x1xf32> to vector<512x1xf32>
    %c0_41 = arith.constant 0 : index
    %c5 = arith.constant 5 : index
    %21 = vector.load %arg13[%c0_41, %c5] : memref<512x9xf32, #tpu.memory_space<vmem>>, vector<512x1xf32>
    tpu.vector_store %arg13[%c0_41, %c5], %20 {strides = array<i32>} : memref<512x9xf32, #tpu.memory_space<vmem>>, vector<512x1xf32>,
    %c0_42 = arith.constant 0 : index
    %c2_43 = arith.constant 2 : index
    %c0_44 = arith.constant 0 : index
    %c0_45 = arith.constant 0 : index
    %22 = vector.load %arg12[%c0_42, %c2_43, %c0_44, %c0_45] : memref<2x18x18x1xf32, #tpu.memory_space<vmem>>, vector<2x16x16x1xf32>
    %23 = vector.shape_cast %22 : vector<2x16x16x1xf32> to vector<512x1xf32>
    %c0_46 = arith.constant 0 : index
    %c6 = arith.constant 6 : index
    %24 = vector.load %arg13[%c0_46, %c6] : memref<512x9xf32, #tpu.memory_space<vmem>>, vector<512x1xf32>
    tpu.vector_store %arg13[%c0_46, %c6], %23 {strides = array<i32>} : memref<512x9xf32, #tpu.memory_space<vmem>>, vector<512x1xf32>,
    %c0_47 = arith.constant 0 : index
    %c2_48 = arith.constant 2 : index
    %c1_49 = arith.constant 1 : index
    %c0_50 = arith.constant 0 : index
    %25 = vector.load %arg12[%c0_47, %c2_48, %c1_49, %c0_50] : memref<2x18x18x1xf32, #tpu.memory_space<vmem>>, vector<2x16x16x1xf32>
    %26 = vector.shape_cast %25 : vector<2x16x16x1xf32> to vector<512x1xf32>
    %c0_51 = arith.constant 0 : index
    %c7 = arith.constant 7 : index
    %27 = vector.load %arg13[%c0_51, %c7] : memref<512x9xf32, #tpu.memory_space<vmem>>, vector<512x1xf32>
    tpu.vector_store %arg13[%c0_51, %c7], %26 {strides = array<i32>} : memref<512x9xf32, #tpu.memory_space<vmem>>, vector<512x1xf32>,
    %c0_52 = arith.constant 0 : index
    %c2_53 = arith.constant 2 : index
    %c2_54 = arith.constant 2 : index
    %c0_55 = arith.constant 0 : index
    %28 = vector.load %arg12[%c0_52, %c2_53, %c2_54, %c0_55] : memref<2x18x18x1xf32, #tpu.memory_space<vmem>>, vector<2x16x16x1xf32>
    %29 = vector.shape_cast %28 : vector<2x16x16x1xf32> to vector<512x1xf32>
    %c0_56 = arith.constant 0 : index
    %c8 = arith.constant 8 : index
    %30 = vector.load %arg13[%c0_56, %c8] : memref<512x9xf32, #tpu.memory_space<vmem>>, vector<512x1xf32>
    tpu.vector_store %arg13[%c0_56, %c8], %29 {strides = array<i32>} : memref<512x9xf32, #tpu.memory_space<vmem>>, vector<512x1xf32>,
    %c0_57 = arith.constant 0 : index
    %c0_58 = arith.constant 0 : index
    %31 = vector.load %arg13[%c0_57, %c0_58] : memref<512x9xf32, #tpu.memory_space<vmem>>, vector<512x9xf32>
    %c0_59 = arith.constant 0 : index
    %c0_60 = arith.constant 0 : index
    %32 = vector.load %arg1[%c0_59, %c0_60] : memref<9x4xf32, #tpu.memory_space<vmem>>, vector<9x4xf32>
    %cst_61 = arith.constant dense<0.000000e+00> : vector<512x4xf32>
    %33 = tpu.matmul %31, %32, %cst_61 {dimension_numbers = #tpu.dot_dimension_numbers<[1], [0], [0], [1], [0, 0, 1, 1], [], []>} : vector<512x9xf32>, vector<9x4xf32>, vector<512x4xf32> -> vector<512x4xf32>
    %c0_62 = arith.constant 0 : index
    %c0_63 = arith.constant 0 : index
    %34 = vector.load %arg2[%c0_62, %c0_63] : memref<1x4xf32, #tpu.memory_space<vmem>>, vector<1x4xf32>
    %35 = vector.broadcast %34 : vector<1x4xf32> to vector<512x4xf32>
    %36 = arith.mulf %33, %35 : vector<512x4xf32>
    %c0_64 = arith.constant 0 : index
    %c0_65 = arith.constant 0 : index
    %37 = vector.load %arg3[%c0_64, %c0_65] : memref<1x4xf32, #tpu.memory_space<vmem>>, vector<1x4xf32>
    %38 = vector.broadcast %37 : vector<1x4xf32> to vector<512x4xf32>
    %39 = arith.addf %36, %38 : vector<512x4xf32>
    %cst_66 = arith.constant 0.000000e+00 : f32
    %40 = vector.broadcast %cst_66 : f32 to vector<512x4xf32>
    %41 = arith.maximumf %39, %40 : vector<512x4xf32>
    %42 = vector.shape_cast %41 : vector<512x4xf32> to vector<2x16x16x4xf32>
    %43 = vector.shape_cast %42 : vector<2x16x16x4xf32> to vector<2x8x2x16x4xf32>
    %cst_67 = arith.constant dense<0xFF800000> : vector<2x8x16x4xf32>
    %44 = vector.multi_reduction <maximumf>, %43, %cst_67 [2] : vector<2x8x2x16x4xf32> to vector<2x8x16x4xf32>
    %45 = vector.shape_cast %44 : vector<2x8x16x4xf32> to vector<2x8x8x2x4xf32>
    %cst_68 = arith.constant dense<0xFF800000> : vector<2x8x8x4xf32>
    %46 = vector.multi_reduction <maximumf>, %45, %cst_68 [3] : vector<2x8x8x2x4xf32> to vector<2x8x8x4xf32>
    %cst_69 = arith.constant 0.000000e+00 : f32
    %47 = vector.broadcast %cst_69 : f32 to vector<2x10x10x4xf32>
    %c0_70 = arith.constant 0 : index
    %c0_71 = arith.constant 0 : index
    %c0_72 = arith.constant 0 : index
    %c0_73 = arith.constant 0 : index
    %48 = vector.load %arg14[%c0_70, %c0_71, %c0_72, %c0_73] : memref<2x10x10x4xf32, #tpu.memory_space<vmem>>, vector<2x10x10x4xf32>
    tpu.vector_store %arg14[%c0_70, %c0_71, %c0_72, %c0_73], %47 {strides = array<i32>} : memref<2x10x10x4xf32, #tpu.memory_space<vmem>>, vector<2x10x10x4xf32>,
    %c0_74 = arith.constant 0 : index
    %c1_75 = arith.constant 1 : index
    %c1_76 = arith.constant 1 : index
    %c0_77 = arith.constant 0 : index
    %49 = vector.load %arg14[%c0_74, %c1_75, %c1_76, %c0_77] : memref<2x10x10x4xf32, #tpu.memory_space<vmem>>, vector<2x8x8x4xf32>
    tpu.vector_store %arg14[%c0_74, %c1_75, %c1_76, %c0_77], %46 {strides = array<i32>} : memref<2x10x10x4xf32, #tpu.memory_space<vmem>>, vector<2x8x8x4xf32>,
    %c0_78 = arith.constant 0 : index
    %c0_79 = arith.constant 0 : index
    %c0_80 = arith.constant 0 : index
    %c0_81 = arith.constant 0 : index
    %50 = vector.load %arg14[%c0_78, %c0_79, %c0_80, %c0_81] : memref<2x10x10x4xf32, #tpu.memory_space<vmem>>, vector<2x8x8x4xf32>
    %51 = vector.shape_cast %50 : vector<2x8x8x4xf32> to vector<128x4xf32>
    %c0_82 = arith.constant 0 : index
    %c0_83 = arith.constant 0 : index
    %52 = vector.load %arg15[%c0_82, %c0_83] : memref<128x36xf32, #tpu.memory_space<vmem>>, vector<128x4xf32>
    tpu.vector_store %arg15[%c0_82, %c0_83], %51 {strides = array<i32>} : memref<128x36xf32, #tpu.memory_space<vmem>>, vector<128x4xf32>,
    %c0_84 = arith.constant 0 : index
    %c0_85 = arith.constant 0 : index
    %c1_86 = arith.constant 1 : index
    %c0_87 = arith.constant 0 : index
    %53 = vector.load %arg14[%c0_84, %c0_85, %c1_86, %c0_87] : memref<2x10x10x4xf32, #tpu.memory_space<vmem>>, vector<2x8x8x4xf32>
    %54 = vector.shape_cast %53 : vector<2x8x8x4xf32> to vector<128x4xf32>
    %c0_88 = arith.constant 0 : index
    %c4_89 = arith.constant 4 : index
    %55 = vector.load %arg15[%c0_88, %c4_89] : memref<128x36xf32, #tpu.memory_space<vmem>>, vector<128x4xf32>
    tpu.vector_store %arg15[%c0_88, %c4_89], %54 {strides = array<i32>} : memref<128x36xf32, #tpu.memory_space<vmem>>, vector<128x4xf32>,
    %c0_90 = arith.constant 0 : index
    %c0_91 = arith.constant 0 : index
    %c2_92 = arith.constant 2 : index
    %c0_93 = arith.constant 0 : index
    %56 = vector.load %arg14[%c0_90, %c0_91, %c2_92, %c0_93] : memref<2x10x10x4xf32, #tpu.memory_space<vmem>>, vector<2x8x8x4xf32>
    %57 = vector.shape_cast %56 : vector<2x8x8x4xf32> to vector<128x4xf32>
    %c0_94 = arith.constant 0 : index
    %c8_95 = arith.constant 8 : index
    %58 = vector.load %arg15[%c0_94, %c8_95] : memref<128x36xf32, #tpu.memory_space<vmem>>, vector<128x4xf32>
    tpu.vector_store %arg15[%c0_94, %c8_95], %57 {strides = array<i32>} : memref<128x36xf32, #tpu.memory_space<vmem>>, vector<128x4xf32>,
    %c0_96 = arith.constant 0 : index
    %c1_97 = arith.constant 1 : index
    %c0_98 = arith.constant 0 : index
    %c0_99 = arith.constant 0 : index
    %59 = vector.load %arg14[%c0_96, %c1_97, %c0_98, %c0_99] : memref<2x10x10x4xf32, #tpu.memory_space<vmem>>, vector<2x8x8x4xf32>
    %60 = vector.shape_cast %59 : vector<2x8x8x4xf32> to vector<128x4xf32>
    %c0_100 = arith.constant 0 : index
    %c12 = arith.constant 12 : index
    %61 = vector.load %arg15[%c0_100, %c12] : memref<128x36xf32, #tpu.memory_space<vmem>>, vector<128x4xf32>
    tpu.vector_store %arg15[%c0_100, %c12], %60 {strides = array<i32>} : memref<128x36xf32, #tpu.memory_space<vmem>>, vector<128x4xf32>,
    %c0_101 = arith.constant 0 : index
    %c1_102 = arith.constant 1 : index
    %c1_103 = arith.constant 1 : index
    %c0_104 = arith.constant 0 : index
    %62 = vector.load %arg14[%c0_101, %c1_102, %c1_103, %c0_104] : memref<2x10x10x4xf32, #tpu.memory_space<vmem>>, vector<2x8x8x4xf32>
    %63 = vector.shape_cast %62 : vector<2x8x8x4xf32> to vector<128x4xf32>
    %c0_105 = arith.constant 0 : index
    %c16 = arith.constant 16 : index
    %64 = vector.load %arg15[%c0_105, %c16] : memref<128x36xf32, #tpu.memory_space<vmem>>, vector<128x4xf32>
    tpu.vector_store %arg15[%c0_105, %c16], %63 {strides = array<i32>} : memref<128x36xf32, #tpu.memory_space<vmem>>, vector<128x4xf32>,
    %c0_106 = arith.constant 0 : index
    %c1_107 = arith.constant 1 : index
    %c2_108 = arith.constant 2 : index
    %c0_109 = arith.constant 0 : index
    %65 = vector.load %arg14[%c0_106, %c1_107, %c2_108, %c0_109] : memref<2x10x10x4xf32, #tpu.memory_space<vmem>>, vector<2x8x8x4xf32>
    %66 = vector.shape_cast %65 : vector<2x8x8x4xf32> to vector<128x4xf32>
    %c0_110 = arith.constant 0 : index
    %c20 = arith.constant 20 : index
    %67 = vector.load %arg15[%c0_110, %c20] : memref<128x36xf32, #tpu.memory_space<vmem>>, vector<128x4xf32>
    tpu.vector_store %arg15[%c0_110, %c20], %66 {strides = array<i32>} : memref<128x36xf32, #tpu.memory_space<vmem>>, vector<128x4xf32>,
    %c0_111 = arith.constant 0 : index
    %c2_112 = arith.constant 2 : index
    %c0_113 = arith.constant 0 : index
    %c0_114 = arith.constant 0 : index
    %68 = vector.load %arg14[%c0_111, %c2_112, %c0_113, %c0_114] : memref<2x10x10x4xf32, #tpu.memory_space<vmem>>, vector<2x8x8x4xf32>
    %69 = vector.shape_cast %68 : vector<2x8x8x4xf32> to vector<128x4xf32>
    %c0_115 = arith.constant 0 : index
    %c24 = arith.constant 24 : index
    %70 = vector.load %arg15[%c0_115, %c24] : memref<128x36xf32, #tpu.memory_space<vmem>>, vector<128x4xf32>
    tpu.vector_store %arg15[%c0_115, %c24], %69 {strides = array<i32>} : memref<128x36xf32, #tpu.memory_space<vmem>>, vector<128x4xf32>,
    %c0_116 = arith.constant 0 : index
    %c2_117 = arith.constant 2 : index
    %c1_118 = arith.constant 1 : index
    %c0_119 = arith.constant 0 : index
    %71 = vector.load %arg14[%c0_116, %c2_117, %c1_118, %c0_119] : memref<2x10x10x4xf32, #tpu.memory_space<vmem>>, vector<2x8x8x4xf32>
    %72 = vector.shape_cast %71 : vector<2x8x8x4xf32> to vector<128x4xf32>
    %c0_120 = arith.constant 0 : index
    %c28 = arith.constant 28 : index
    %73 = vector.load %arg15[%c0_120, %c28] : memref<128x36xf32, #tpu.memory_space<vmem>>, vector<128x4xf32>
    tpu.vector_store %arg15[%c0_120, %c28], %72 {strides = array<i32>} : memref<128x36xf32, #tpu.memory_space<vmem>>, vector<128x4xf32>,
    %c0_121 = arith.constant 0 : index
    %c2_122 = arith.constant 2 : index
    %c2_123 = arith.constant 2 : index
    %c0_124 = arith.constant 0 : index
    %74 = vector.load %arg14[%c0_121, %c2_122, %c2_123, %c0_124] : memref<2x10x10x4xf32, #tpu.memory_space<vmem>>, vector<2x8x8x4xf32>
    %75 = vector.shape_cast %74 : vector<2x8x8x4xf32> to vector<128x4xf32>
    %c0_125 = arith.constant 0 : index
    %c32 = arith.constant 32 : index
    %76 = vector.load %arg15[%c0_125, %c32] : memref<128x36xf32, #tpu.memory_space<vmem>>, vector<128x4xf32>
    tpu.vector_store %arg15[%c0_125, %c32], %75 {strides = array<i32>} : memref<128x36xf32, #tpu.memory_space<vmem>>, vector<128x4xf32>,
    %c0_126 = arith.constant 0 : index
    %c0_127 = arith.constant 0 : index
    %77 = vector.load %arg15[%c0_126, %c0_127] : memref<128x36xf32, #tpu.memory_space<vmem>>, vector<128x36xf32>
    %c0_128 = arith.constant 0 : index
    %c0_129 = arith.constant 0 : index
    %78 = vector.load %arg4[%c0_128, %c0_129] : memref<36x8xf32, #tpu.memory_space<vmem>>, vector<36x8xf32>
    %cst_130 = arith.constant dense<0.000000e+00> : vector<128x8xf32>
    %79 = tpu.matmul %77, %78, %cst_130 {dimension_numbers = #tpu.dot_dimension_numbers<[1], [0], [0], [1], [0, 0, 1, 1], [], []>} : vector<128x36xf32>, vector<36x8xf32>, vector<128x8xf32> -> vector<128x8xf32>
    %c0_131 = arith.constant 0 : index
    %c0_132 = arith.constant 0 : index
    %80 = vector.load %arg5[%c0_131, %c0_132] : memref<1x8xf32, #tpu.memory_space<vmem>>, vector<1x8xf32>
    %81 = vector.broadcast %80 : vector<1x8xf32> to vector<128x8xf32>
    %82 = arith.mulf %79, %81 : vector<128x8xf32>
    %c0_133 = arith.constant 0 : index
    %c0_134 = arith.constant 0 : index
    %83 = vector.load %arg6[%c0_133, %c0_134] : memref<1x8xf32, #tpu.memory_space<vmem>>, vector<1x8xf32>
    %84 = vector.broadcast %83 : vector<1x8xf32> to vector<128x8xf32>
    %85 = arith.addf %82, %84 : vector<128x8xf32>
    %cst_135 = arith.constant 0.000000e+00 : f32
    %86 = vector.broadcast %cst_135 : f32 to vector<128x8xf32>
    %87 = arith.maximumf %85, %86 : vector<128x8xf32>
    %88 = vector.shape_cast %87 : vector<128x8xf32> to vector<2x8x8x8xf32>
    %89 = vector.shape_cast %88 : vector<2x8x8x8xf32> to vector<2x4x2x8x8xf32>
    %cst_136 = arith.constant dense<0xFF800000> : vector<2x4x8x8xf32>
    %90 = vector.multi_reduction <maximumf>, %89, %cst_136 [2] : vector<2x4x2x8x8xf32> to vector<2x4x8x8xf32>
    %91 = vector.shape_cast %90 : vector<2x4x8x8xf32> to vector<2x4x4x2x8xf32>
    %cst_137 = arith.constant dense<0xFF800000> : vector<2x4x4x8xf32>
    %92 = vector.multi_reduction <maximumf>, %91, %cst_137 [3] : vector<2x4x4x2x8xf32> to vector<2x4x4x8xf32>
    %93 = vector.extract_strided_slice %92 {offsets = [0, 0, 0, 0], sizes = [2, 1, 1, 8], strides = [1, 1, 1, 1]} : vector<2x4x4x8xf32> to vector<2x1x1x8xf32>
    %94 = vector.shape_cast %93 : vector<2x1x1x8xf32> to vector<2x8xf32>
    %c0_138 = arith.constant 0 : index
    %c0_139 = arith.constant 0 : index
    %95 = vector.load %arg16[%c0_138, %c0_139] : memref<2x128xf32, #tpu.memory_space<vmem>>, vector<2x8xf32>
    tpu.vector_store %arg16[%c0_138, %c0_139], %94 {strides = array<i32>} : memref<2x128xf32, #tpu.memory_space<vmem>>, vector<2x8xf32>,
    %96 = vector.extract_strided_slice %92 {offsets = [0, 0, 1, 0], sizes = [2, 1, 1, 8], strides = [1, 1, 1, 1]} : vector<2x4x4x8xf32> to vector<2x1x1x8xf32>
    %97 = vector.shape_cast %96 : vector<2x1x1x8xf32> to vector<2x8xf32>
    %c0_140 = arith.constant 0 : index
    %c8_141 = arith.constant 8 : index
    %98 = vector.load %arg16[%c0_140, %c8_141] : memref<2x128xf32, #tpu.memory_space<vmem>>, vector<2x8xf32>
    tpu.vector_store %arg16[%c0_140, %c8_141], %97 {strides = array<i32>} : memref<2x128xf32, #tpu.memory_space<vmem>>, vector<2x8xf32>,
    %99 = vector.extract_strided_slice %92 {offsets = [0, 0, 2, 0], sizes = [2, 1, 1, 8], strides = [1, 1, 1, 1]} : vector<2x4x4x8xf32> to vector<2x1x1x8xf32>
    %100 = vector.shape_cast %99 : vector<2x1x1x8xf32> to vector<2x8xf32>
    %c0_142 = arith.constant 0 : index
    %c16_143 = arith.constant 16 : index
    %101 = vector.load %arg16[%c0_142, %c16_143] : memref<2x128xf32, #tpu.memory_space<vmem>>, vector<2x8xf32>
    tpu.vector_store %arg16[%c0_142, %c16_143], %100 {strides = array<i32>} : memref<2x128xf32, #tpu.memory_space<vmem>>, vector<2x8xf32>,
    %102 = vector.extract_strided_slice %92 {offsets = [0, 0, 3, 0], sizes = [2, 1, 1, 8], strides = [1, 1, 1, 1]} : vector<2x4x4x8xf32> to vector<2x1x1x8xf32>
    %103 = vector.shape_cast %102 : vector<2x1x1x8xf32> to vector<2x8xf32>
    %c0_144 = arith.constant 0 : index
    %c24_145 = arith.constant 24 : index
    %104 = vector.load %arg16[%c0_144, %c24_145] : memref<2x128xf32, #tpu.memory_space<vmem>>, vector<2x8xf32>
    tpu.vector_store %arg16[%c0_144, %c24_145], %103 {strides = array<i32>} : memref<2x128xf32, #tpu.memory_space<vmem>>, vector<2x8xf32>,
    %105 = vector.extract_strided_slice %92 {offsets = [0, 1, 0, 0], sizes = [2, 1, 1, 8], strides = [1, 1, 1, 1]} : vector<2x4x4x8xf32> to vector<2x1x1x8xf32>
    %106 = vector.shape_cast %105 : vector<2x1x1x8xf32> to vector<2x8xf32>
    %c0_146 = arith.constant 0 : index
    %c32_147 = arith.constant 32 : index
    %107 = vector.load %arg16[%c0_146, %c32_147] : memref<2x128xf32, #tpu.memory_space<vmem>>, vector<2x8xf32>
    tpu.vector_store %arg16[%c0_146, %c32_147], %106 {strides = array<i32>} : memref<2x128xf32, #tpu.memory_space<vmem>>, vector<2x8xf32>,
    %108 = vector.extract_strided_slice %92 {offsets = [0, 1, 1, 0], sizes = [2, 1, 1, 8], strides = [1, 1, 1, 1]} : vector<2x4x4x8xf32> to vector<2x1x1x8xf32>
    %109 = vector.shape_cast %108 : vector<2x1x1x8xf32> to vector<2x8xf32>
    %c0_148 = arith.constant 0 : index
    %c40 = arith.constant 40 : index
    %110 = vector.load %arg16[%c0_148, %c40] : memref<2x128xf32, #tpu.memory_space<vmem>>, vector<2x8xf32>
    tpu.vector_store %arg16[%c0_148, %c40], %109 {strides = array<i32>} : memref<2x128xf32, #tpu.memory_space<vmem>>, vector<2x8xf32>,
    %111 = vector.extract_strided_slice %92 {offsets = [0, 1, 2, 0], sizes = [2, 1, 1, 8], strides = [1, 1, 1, 1]} : vector<2x4x4x8xf32> to vector<2x1x1x8xf32>
    %112 = vector.shape_cast %111 : vector<2x1x1x8xf32> to vector<2x8xf32>
    %c0_149 = arith.constant 0 : index
    %c48 = arith.constant 48 : index
    %113 = vector.load %arg16[%c0_149, %c48] : memref<2x128xf32, #tpu.memory_space<vmem>>, vector<2x8xf32>
    tpu.vector_store %arg16[%c0_149, %c48], %112 {strides = array<i32>} : memref<2x128xf32, #tpu.memory_space<vmem>>, vector<2x8xf32>,
    %114 = vector.extract_strided_slice %92 {offsets = [0, 1, 3, 0], sizes = [2, 1, 1, 8], strides = [1, 1, 1, 1]} : vector<2x4x4x8xf32> to vector<2x1x1x8xf32>
    %115 = vector.shape_cast %114 : vector<2x1x1x8xf32> to vector<2x8xf32>
    %c0_150 = arith.constant 0 : index
    %c56 = arith.constant 56 : index
    %116 = vector.load %arg16[%c0_150, %c56] : memref<2x128xf32, #tpu.memory_space<vmem>>, vector<2x8xf32>
    tpu.vector_store %arg16[%c0_150, %c56], %115 {strides = array<i32>} : memref<2x128xf32, #tpu.memory_space<vmem>>, vector<2x8xf32>,
    %117 = vector.extract_strided_slice %92 {offsets = [0, 2, 0, 0], sizes = [2, 1, 1, 8], strides = [1, 1, 1, 1]} : vector<2x4x4x8xf32> to vector<2x1x1x8xf32>
    %118 = vector.shape_cast %117 : vector<2x1x1x8xf32> to vector<2x8xf32>
    %c0_151 = arith.constant 0 : index
    %c64 = arith.constant 64 : index
    %119 = vector.load %arg16[%c0_151, %c64] : memref<2x128xf32, #tpu.memory_space<vmem>>, vector<2x8xf32>
    tpu.vector_store %arg16[%c0_151, %c64], %118 {strides = array<i32>} : memref<2x128xf32, #tpu.memory_space<vmem>>, vector<2x8xf32>,
    %120 = vector.extract_strided_slice %92 {offsets = [0, 2, 1, 0], sizes = [2, 1, 1, 8], strides = [1, 1, 1, 1]} : vector<2x4x4x8xf32> to vector<2x1x1x8xf32>
    %121 = vector.shape_cast %120 : vector<2x1x1x8xf32> to vector<2x8xf32>
    %c0_152 = arith.constant 0 : index
    %c72 = arith.constant 72 : index
    %122 = vector.load %arg16[%c0_152, %c72] : memref<2x128xf32, #tpu.memory_space<vmem>>, vector<2x8xf32>
    tpu.vector_store %arg16[%c0_152, %c72], %121 {strides = array<i32>} : memref<2x128xf32, #tpu.memory_space<vmem>>, vector<2x8xf32>,
    %123 = vector.extract_strided_slice %92 {offsets = [0, 2, 2, 0], sizes = [2, 1, 1, 8], strides = [1, 1, 1, 1]} : vector<2x4x4x8xf32> to vector<2x1x1x8xf32>
    %124 = vector.shape_cast %123 : vector<2x1x1x8xf32> to vector<2x8xf32>
    %c0_153 = arith.constant 0 : index
    %c80 = arith.constant 80 : index
    %125 = vector.load %arg16[%c0_153, %c80] : memref<2x128xf32, #tpu.memory_space<vmem>>, vector<2x8xf32>
    tpu.vector_store %arg16[%c0_153, %c80], %124 {strides = array<i32>} : memref<2x128xf32, #tpu.memory_space<vmem>>, vector<2x8xf32>,
    %126 = vector.extract_strided_slice %92 {offsets = [0, 2, 3, 0], sizes = [2, 1, 1, 8], strides = [1, 1, 1, 1]} : vector<2x4x4x8xf32> to vector<2x1x1x8xf32>
    %127 = vector.shape_cast %126 : vector<2x1x1x8xf32> to vector<2x8xf32>
    %c0_154 = arith.constant 0 : index
    %c88 = arith.constant 88 : index
    %128 = vector.load %arg16[%c0_154, %c88] : memref<2x128xf32, #tpu.memory_space<vmem>>, vector<2x8xf32>
    tpu.vector_store %arg16[%c0_154, %c88], %127 {strides = array<i32>} : memref<2x128xf32, #tpu.memory_space<vmem>>, vector<2x8xf32>,
    %129 = vector.extract_strided_slice %92 {offsets = [0, 3, 0, 0], sizes = [2, 1, 1, 8], strides = [1, 1, 1, 1]} : vector<2x4x4x8xf32> to vector<2x1x1x8xf32>
    %130 = vector.shape_cast %129 : vector<2x1x1x8xf32> to vector<2x8xf32>
    %c0_155 = arith.constant 0 : index
    %c96 = arith.constant 96 : index
    %131 = vector.load %arg16[%c0_155, %c96] : memref<2x128xf32, #tpu.memory_space<vmem>>, vector<2x8xf32>
    tpu.vector_store %arg16[%c0_155, %c96], %130 {strides = array<i32>} : memref<2x128xf32, #tpu.memory_space<vmem>>, vector<2x8xf32>,
    %132 = vector.extract_strided_slice %92 {offsets = [0, 3, 1, 0], sizes = [2, 1, 1, 8], strides = [1, 1, 1, 1]} : vector<2x4x4x8xf32> to vector<2x1x1x8xf32>
    %133 = vector.shape_cast %132 : vector<2x1x1x8xf32> to vector<2x8xf32>
    %c0_156 = arith.constant 0 : index
    %c104 = arith.constant 104 : index
    %134 = vector.load %arg16[%c0_156, %c104] : memref<2x128xf32, #tpu.memory_space<vmem>>, vector<2x8xf32>
    tpu.vector_store %arg16[%c0_156, %c104], %133 {strides = array<i32>} : memref<2x128xf32, #tpu.memory_space<vmem>>, vector<2x8xf32>,
    %135 = vector.extract_strided_slice %92 {offsets = [0, 3, 2, 0], sizes = [2, 1, 1, 8], strides = [1, 1, 1, 1]} : vector<2x4x4x8xf32> to vector<2x1x1x8xf32>
    %136 = vector.shape_cast %135 : vector<2x1x1x8xf32> to vector<2x8xf32>
    %c0_157 = arith.constant 0 : index
    %c112 = arith.constant 112 : index
    %137 = vector.load %arg16[%c0_157, %c112] : memref<2x128xf32, #tpu.memory_space<vmem>>, vector<2x8xf32>
    tpu.vector_store %arg16[%c0_157, %c112], %136 {strides = array<i32>} : memref<2x128xf32, #tpu.memory_space<vmem>>, vector<2x8xf32>,
    %138 = vector.extract_strided_slice %92 {offsets = [0, 3, 3, 0], sizes = [2, 1, 1, 8], strides = [1, 1, 1, 1]} : vector<2x4x4x8xf32> to vector<2x1x1x8xf32>
    %139 = vector.shape_cast %138 : vector<2x1x1x8xf32> to vector<2x8xf32>
    %c0_158 = arith.constant 0 : index
    %c120 = arith.constant 120 : index
    %140 = vector.load %arg16[%c0_158, %c120] : memref<2x128xf32, #tpu.memory_space<vmem>>, vector<2x8xf32>
    tpu.vector_store %arg16[%c0_158, %c120], %139 {strides = array<i32>} : memref<2x128xf32, #tpu.memory_space<vmem>>, vector<2x8xf32>,
    %c0_159 = arith.constant 0 : index
    %c0_160 = arith.constant 0 : index
    %141 = vector.load %arg16[%c0_159, %c0_160] : memref<2x128xf32, #tpu.memory_space<vmem>>, vector<2x128xf32>
    %c0_161 = arith.constant 0 : index
    %c0_162 = arith.constant 0 : index
    %142 = vector.load %arg7[%c0_161, %c0_162] : memref<128x128xf32, #tpu.memory_space<vmem>>, vector<128x128xf32>
    %cst_163 = arith.constant dense<0.000000e+00> : vector<2x128xf32>
    %143 = tpu.matmul %141, %142, %cst_163 {dimension_numbers = #tpu.dot_dimension_numbers<[1], [0], [0], [1], [0, 0, 1, 1], [], []>} : vector<2x128xf32>, vector<128x128xf32>, vector<2x128xf32> -> vector<2x128xf32>
    %c0_164 = arith.constant 0 : index
    %c0_165 = arith.constant 0 : index
    %144 = vector.load %arg8[%c0_164, %c0_165] : memref<1x128xf32, #tpu.memory_space<vmem>>, vector<1x128xf32>
    %145 = vector.broadcast %144 : vector<1x128xf32> to vector<2x128xf32>
    %146 = arith.addf %143, %145 : vector<2x128xf32>
    %cst_166 = arith.constant 0.000000e+00 : f32
    %147 = vector.broadcast %cst_166 : f32 to vector<2x128xf32>
    %148 = arith.maximumf %146, %147 : vector<2x128xf32>
    %c0_167 = arith.constant 0 : index
    %c0_168 = arith.constant 0 : index
    %149 = vector.load %arg9[%c0_167, %c0_168] : memref<128x128xf32, #tpu.memory_space<vmem>>, vector<128x128xf32>
    %cst_169 = arith.constant dense<0.000000e+00> : vector<2x128xf32>
    %150 = tpu.matmul %148, %149, %cst_169 {dimension_numbers = #tpu.dot_dimension_numbers<[1], [0], [0], [1], [0, 0, 1, 1], [], []>} : vector<2x128xf32>, vector<128x128xf32>, vector<2x128xf32> -> vector<2x128xf32>
    %c0_170 = arith.constant 0 : index
    %c0_171 = arith.constant 0 : index
    %151 = vector.load %arg10[%c0_170, %c0_171] : memref<1x128xf32, #tpu.memory_space<vmem>>, vector<1x128xf32>
    %152 = vector.broadcast %151 : vector<1x128xf32> to vector<2x128xf32>
    %153 = arith.addf %150, %152 : vector<2x128xf32>
    %c0_172 = arith.constant 0 : index
    %c0_173 = arith.constant 0 : index
    %154 = vector.load %arg11[%c0_172, %c0_173] : memref<2x128xf32, #tpu.memory_space<vmem>>, vector<2x128xf32>
    tpu.vector_store %arg11[%c0_172, %c0_173], %153 {strides = array<i32>} : memref<2x128xf32, #tpu.memory_space<vmem>>, vector<2x128xf32>,
    return
  }
}

</mosaic_0001>

<llo_original>
// kernel: fwd.1
$region0: #{fwd.1}
  #allocation0 [shape = 'u32[]', space=smem, size = 0x4, offset = 0x4, fixed_abs, tag = 'smem constant byte address 0x4 - core index']
  #allocation1 [shape = 'u32[144,128]{1,0:T(1,128)}', space=vmem, size = 0x12000, scoped, tag = 'internal scratch']
  #allocation2 [shape = 'f32[2,18,18,1]{3,2,1,0:T(8,128)}', space=vmem, size = 0x6c000, scoped, tag = 'scratch operand']
  #allocation3 [shape = 'f32[512,9]{1,0:T(8,128)}', space=vmem, size = 0x40000, scoped, tag = 'scratch operand']
  #allocation4 [shape = 'f32[2,10,10,4]{3,2,1,0:T(8,128)}', space=vmem, size = 0x28000, scoped, tag = 'scratch operand']
  #allocation5 [shape = 'f32[128,36]{1,0:T(8,128)}', space=vmem, size = 0x10000, scoped, tag = 'scratch operand']
  #allocation6 [shape = 'f32[2,128]{1,0:T(2,128)}', space=vmem, size = 0x400, scoped, tag = 'scratch operand']
  %s0 = inlined_call_operand.vmem [shape: f32[2,16,16,1], index: 0, kind: input, shape index: {}]
  %s1 = inlined_call_operand.vmem [shape: f32[9,4], index: 1, kind: input, shape index: {}]
  %s2 = inlined_call_operand.vmem [shape: f32[1,4], index: 2, kind: input, shape index: {}]
  %s3 = inlined_call_operand.vmem [shape: f32[1,4], index: 3, kind: input, shape index: {}]
  %s4 = inlined_call_operand.vmem [shape: f32[36,8], index: 4, kind: input, shape index: {}]
  %s5 = inlined_call_operand.vmem [shape: f32[1,8], index: 5, kind: input, shape index: {}]
  %s6 = inlined_call_operand.vmem [shape: f32[1,8], index: 6, kind: input, shape index: {}]
  %s7 = inlined_call_operand.vmem [shape: f32[128,128], index: 7, kind: input, shape index: {}]
  %s8 = inlined_call_operand.vmem [shape: f32[1,128], index: 8, kind: input, shape index: {}]
  %s9 = inlined_call_operand.vmem [shape: f32[128,128], index: 9, kind: input, shape index: {}]
  %s10 = inlined_call_operand.vmem [shape: f32[1,128], index: 10, kind: input, shape index: {}]
  %s11 = inlined_call_operand.hbm [shape: f32[2,128], index: 11, kind: output, shape index: {}]
  %s12 = sld [smem:[#allocation0]]
  $region54: #{fwd.1} parent=0
    _
  %s14 = ssub.s32 1, %s12
  %s15 = scalar_select 0, %s14, %s12
  $region1: #{fwd.1} parent=0
    #allocation7 [shape = 'u8[1024]{0}', space=vmem, size = 0x400, scoped, tag = 'output window, operand 0, single buffered']
    #allocation8 [shape = 's32[1]{0}', space=sflag, size = 0x4, scoped, tag = 'scoped memory for fwd.1']
    %16 = vsyncpa [#allocation8], 0
    // Predicated region
    $region2: #{fwd.1} parent=1 // pred_check
      _
    $region3: #{fwd.1} parent=1 // pred_check_branch
      %18 = sbr.rel (0) target = $region5
    $region4: #{fwd.1} parent=1 // pred_region
      _
    $region5: #{fwd.1} parent=1 // pred_fallthru
      _
    // Predicated region
    $region6: #{fwd.1} parent=1 // pred_check
      _
    $region7: #{fwd.1} parent=1 // pred_check_branch
      %20 = sbr.rel (0) target = $region9
    $region8: #{fwd.1} parent=1 // pred_region
      _
    $region9: #{fwd.1} parent=1 // pred_fallthru
      _
    // Predicated region
    $region10: #{fwd.1} parent=1 // pred_check
      _
    $region11: #{fwd.1} parent=1 // pred_check_branch
      %22 = sbr.rel (0) target = $region13
    $region12: #{fwd.1} parent=1 // pred_region
      _
    $region13: #{fwd.1} parent=1 // pred_fallthru
      _
    // Predicated region
    $region14: #{fwd.1} parent=1 // pred_check
      _
    $region15: #{fwd.1} parent=1 // pred_check_branch
      %24 = sbr.rel (0) target = $region17
    $region16: #{fwd.1} parent=1 // pred_region
      _
    $region17: #{fwd.1} parent=1 // pred_fallthru
      _
    // Predicated region
    $region18: #{fwd.1} parent=1 // pred_check
      _
    $region19: #{fwd.1} parent=1 // pred_check_branch
      %26 = sbr.rel (0) target = $region21
    $region20: #{fwd.1} parent=1 // pred_region
      _
    $region21: #{fwd.1} parent=1 // pred_fallthru
      _
    // Predicated region
    $region22: #{fwd.1} parent=1 // pred_check
      _
    $region23: #{fwd.1} parent=1 // pred_check_branch
      %28 = sbr.rel (0) target = $region25
    $region24: #{fwd.1} parent=1 // pred_region
      _
    $region25: #{fwd.1} parent=1 // pred_fallthru
      _
    // Predicated region
    $region26: #{fwd.1} parent=1 // pred_check
      _
    $region27: #{fwd.1} parent=1 // pred_check_branch
      %30 = sbr.rel (0) target = $region29
    $region28: #{fwd.1} parent=1 // pred_region
      _
    $region29: #{fwd.1} parent=1 // pred_fallthru
      _
    // Predicated region
    $region30: #{fwd.1} parent=1 // pred_check
      _
    $region31: #{fwd.1} parent=1 // pred_check_branch
      %32 = sbr.rel (0) target = $region33
    $region32: #{fwd.1} parent=1 // pred_region
      _
    $region33: #{fwd.1} parent=1 // pred_fallthru
      _
    // Predicated region
    $region34: #{fwd.1} parent=1 // pred_check
      _
    $region35: #{fwd.1} parent=1 // pred_check_branch
      %34 = sbr.rel (0) target = $region37
    $region36: #{fwd.1} parent=1 // pred_region
      _
    $region37: #{fwd.1} parent=1 // pred_fallthru
      _
    // Predicated region
    $region38: #{fwd.1} parent=1 // pred_check
      _
    $region39: #{fwd.1} parent=1 // pred_check_branch
      %36 = sbr.rel (0) target = $region41
    $region40: #{fwd.1} parent=1 // pred_region
      _
    $region41: #{fwd.1} parent=1 // pred_fallthru
      _
    // Predicated region
    $region42: #{fwd.1} parent=1 // pred_check
      _
    $region43: #{fwd.1} parent=1 // pred_check_branch
      %38 = sbr.rel (0) target = $region45
    $region44: #{fwd.1} parent=1 // pred_region
      _
    $region45: #{fwd.1} parent=1 // pred_fallthru
      _
    %v39 = vld [vmem:[%s0] sm:$0xff]
    %v40 = vld [vmem:[%s0 + $0x8] sm:$0xff]
    %v41 = vld [vmem:[%s0 + $0x10] sm:$0xff]
    %v42 = vld [vmem:[%s0 + $0x18] sm:$0xff]
    %v43 = vld [vmem:[%s0 + $0x20] sm:$0xff]
    %v44 = vld [vmem:[%s0 + $0x28] sm:$0xff]
    %v45 = vld [vmem:[%s0 + $0x30] sm:$0xff]
    %v46 = vld [vmem:[%s0 + $0x38] sm:$0xff]
    %v47 = vld [vmem:[%s0 + $0x40] sm:$0xff]
    %v48 = vld [vmem:[%s0 + $0x48] sm:$0xff]
    %v49 = vld [vmem:[%s0 + $0x50] sm:$0xff]
    %v50 = vld [vmem:[%s0 + $0x58] sm:$0xff]
    %v51 = vld [vmem:[%s0 + $0x60] sm:$0xff]
    %v52 = vld [vmem:[%s0 + $0x68] sm:$0xff]
    %v53 = vld [vmem:[%s0 + $0x70] sm:$0xff]
    %v54 = vld [vmem:[%s0 + $0x78] sm:$0xff]
    %v55 = vld [vmem:[%s0 + $0x80] sm:$0xff]
    %v56 = vld [vmem:[%s0 + $0x88] sm:$0xff]
    %v57 = vld [vmem:[%s0 + $0x90] sm:$0xff]
    %v58 = vld [vmem:[%s0 + $0x98] sm:$0xff]
    %v59 = vld [vmem:[%s0 + $0xa0] sm:$0xff]
    %v60 = vld [vmem:[%s0 + $0xa8] sm:$0xff]
    %v61 = vld [vmem:[%s0 + $0xb0] sm:$0xff]
    %v62 = vld [vmem:[%s0 + $0xb8] sm:$0xff]
    %v63 = vld [vmem:[%s0 + $0xc0] sm:$0xff]
    %v64 = vld [vmem:[%s0 + $0xc8] sm:$0xff]
    %v65 = vld [vmem:[%s0 + $0xd0] sm:$0xff]
    %v66 = vld [vmem:[%s0 + $0xd8] sm:$0xff]
    %v67 = vld [vmem:[%s0 + $0xe0] sm:$0xff]
    %v68 = vld [vmem:[%s0 + $0xe8] sm:$0xff]
    %v69 = vld [vmem:[%s0 + $0xf0] sm:$0xff]
    %v70 = vld [vmem:[%s0 + $0xf8] sm:$0xff]
    %v71 = vld [vmem:[%s0 + $0x100] sm:$0xff]
    %v72 = vld [vmem:[%s0 + $0x108] sm:$0xff]
    %v73 = vld [vmem:[%s0 + $0x110] sm:$0xff]
    %v74 = vld [vmem:[%s0 + $0x118] sm:$0xff]
    %v75 = vld [vmem:[%s0 + $0x120] sm:$0xff]
    %v76 = vld [vmem:[%s0 + $0x128] sm:$0xff]
    %v77 = vld [vmem:[%s0 + $0x130] sm:$0xff]
    %v78 = vld [vmem:[%s0 + $0x138] sm:$0xff]
    %v79 = vld [vmem:[%s0 + $0x140] sm:$0xff]
    %v80 = vld [vmem:[%s0 + $0x148] sm:$0xff]
    %v81 = vld [vmem:[%s0 + $0x150] sm:$0xff]
    %v82 = vld [vmem:[%s0 + $0x158] sm:$0xff]
    %v83 = vld [vmem:[%s0 + $0x160] sm:$0xff]
    %v84 = vld [vmem:[%s0 + $0x168] sm:$0xff]
    %v85 = vld [vmem:[%s0 + $0x170] sm:$0xff]
    %v86 = vld [vmem:[%s0 + $0x178] sm:$0xff]
    %v87 = vld [vmem:[%s0 + $0x180] sm:$0xff]
    %v88 = vld [vmem:[%s0 + $0x188] sm:$0xff]
    %v89 = vld [vmem:[%s0 + $0x190] sm:$0xff]
    %v90 = vld [vmem:[%s0 + $0x198] sm:$0xff]
    %v91 = vld [vmem:[%s0 + $0x1a0] sm:$0xff]
    %v92 = vld [vmem:[%s0 + $0x1a8] sm:$0xff]
    %v93 = vld [vmem:[%s0 + $0x1b0] sm:$0xff]
    %v94 = vld [vmem:[%s0 + $0x1b8] sm:$0xff]
    %v95 = vld [vmem:[%s0 + $0x1c0] sm:$0xff]
    %v96 = vld [vmem:[%s0 + $0x1c8] sm:$0xff]
    %v97 = vld [vmem:[%s0 + $0x1d0] sm:$0xff]
    %v98 = vld [vmem:[%s0 + $0x1d8] sm:$0xff]
    %v99 = vld [vmem:[%s0 + $0x1e0] sm:$0xff]
    %v100 = vld [vmem:[%s0 + $0x1e8] sm:$0xff]
    %v101 = vld [vmem:[%s0 + $0x1f0] sm:$0xff]
    %v102 = vld [vmem:[%s0 + $0x1f8] sm:$0xff]
    %vm103 = vcmask 7168
    %104 = vst.msk [vmem:[#allocation2] sm:$0xff] %vm103, 0.0
    %105 = vst.msk [vmem:[#allocation2 + $0x8] sm:$0xff] %vm103, 0.0
    %vm106 = vcmask 1024
    %107 = vst.msk [vmem:[#allocation2 + $0x10] sm:$0x3] %vm106, 0.0
    %108 = vst.msk [vmem:[#allocation2 + $0x18] sm:$0xff] %vm103, 0.0
    %109 = vst.msk [vmem:[#allocation2 + $0x20] sm:$0xff] %vm103, 0.0
    %110 = vst.msk [vmem:[#allocation2 + $0x28] sm:$0x3] %vm106, 0.0
    %111 = vst.msk [vmem:[#allocation2 + $0x30] sm:$0xff] %vm103, 0.0
    %112 = vst.msk [vmem:[#allocation2 + $0x38] sm:$0xff] %vm103, 0.0
    %113 = vst.msk [vmem:[#allocation2 + $0x40] sm:$0x3] %vm106, 0.0
    %114 = vst.msk [vmem:[#allocation2 + $0x48] sm:$0xff] %vm103, 0.0
    %115 = vst.msk [vmem:[#allocation2 + $0x50] sm:$0xff] %vm103, 0.0
    %116 = vst.msk [vmem:[#allocation2 + $0x58] sm:$0x3] %vm106, 0.0
    %117 = vst.msk [vmem:[#allocation2 + $0x60] sm:$0xff] %vm103, 0.0
    %118 = vst.msk [vmem:[#allocation2 + $0x68] sm:$0xff] %vm103, 0.0
    %119 = vst.msk [vmem:[#allocation2 + $0x70] sm:$0x3] %vm106, 0.0
    %120 = vst.msk [vmem:[#allocation2 + $0x78] sm:$0xff] %vm103, 0.0
    %121 = vst.msk [vmem:[#allocation2 + $0x80] sm:$0xff] %vm103, 0.0
    %122 = vst.msk [vmem:[#allocation2 + $0x88] sm:$0x3] %vm106, 0.0
    %123 = vst.msk [vmem:[#allocation2 + $0x90] sm:$0xff] %vm103, 0.0
    %124 = vst.msk [vmem:[#allocation2 + $0x98] sm:$0xff] %vm103, 0.0
    %125 = vst.msk [vmem:[#allocation2 + $0xa0] sm:$0x3] %vm106, 0.0
    %126 = vst.msk [vmem:[#allocation2 + $0xa8] sm:$0xff] %vm103, 0.0
    %127 = vst.msk [vmem:[#allocation2 + $0xb0] sm:$0xff] %vm103, 0.0
    %128 = vst.msk [vmem:[#allocation2 + $0xb8] sm:$0x3] %vm106, 0.0
    %129 = vst.msk [vmem:[#allocation2 + $0xc0] sm:$0xff] %vm103, 0.0
    %130 = vst.msk [vmem:[#allocation2 + $0xc8] sm:$0xff] %vm103, 0.0
    %131 = vst.msk [vmem:[#allocation2 + $0xd0] sm:$0x3] %vm106, 0.0
    %132 = vst.msk [vmem:[#allocation2 + $0xd8] sm:$0xff] %vm103, 0.0
    %133 = vst.msk [vmem:[#allocation2 + $0xe0] sm:$0xff] %vm103, 0.0
    %134 = vst.msk [vmem:[#allocation2 + $0xe8] sm:$0x3] %vm106, 0.0
    %135 = vst.msk [vmem:[#allocation2 + $0xf0] sm:$0xff] %vm103, 0.0
    %136 = vst.msk [vmem:[#allocation2 + $0xf8] sm:$0xff] %vm103, 0.0
    %137 = vst.msk [vmem:[#allocation2 + $0x100] sm:$0x3] %vm106, 0.0
    %138 = vst.msk [vmem:[#allocation2 + $0x108] sm:$0xff] %vm103, 0.0
    %139 = vst.msk [vmem:[#allocation2 + $0x110] sm:$0xff] %vm103, 0.0
    %140 = vst.msk [vmem:[#allocation2 + $0x118] sm:$0x3] %vm106, 0.0
    %141 = vst.msk [vmem:[#allocation2 + $0x120] sm:$0xff] %vm103, 0.0
    %142 = vst.msk [vmem:[#allocation2 + $0x128] sm:$0xff] %vm103, 0.0
    %143 = vst.msk [vmem:[#allocation2 + $0x130] sm:$0x3] %vm106, 0.0
    %144 = vst.msk [vmem:[#allocation2 + $0x138] sm:$0xff] %vm103, 0.0
    %145 = vst.msk [vmem:[#allocation2 + $0x140] sm:$0xff] %vm103, 0.0
    %146 = vst.msk [vmem:[#allocation2 + $0x148] sm:$0x3] %vm106, 0.0
    %147 = vst.msk [vmem:[#allocation2 + $0x150] sm:$0xff] %vm103, 0.0
    %148 = vst.msk [vmem:[#allocation2 + $0x158] sm:$0xff] %vm103, 0.0
    %149 = vst.msk [vmem:[#allocation2 + $0x160] sm:$0x3] %vm106, 0.0
    %150 = vst.msk [vmem:[#allocation2 + $0x168] sm:$0xff] %vm103, 0.0
    %151 = vst.msk [vmem:[#allocation2 + $0x170] sm:$0xff] %vm103, 0.0
    %152 = vst.msk [vmem:[#allocation2 + $0x178] sm:$0x3] %vm106, 0.0
    %153 = vst.msk [vmem:[#allocation2 + $0x180] sm:$0xff] %vm103, 0.0
    %154 = vst.msk [vmem:[#allocation2 + $0x188] sm:$0xff] %vm103, 0.0
    %155 = vst.msk [vmem:[#allocation2 + $0x190] sm:$0x3] %vm106, 0.0
    %156 = vst.msk [vmem:[#allocation2 + $0x198] sm:$0xff] %vm103, 0.0
    %157 = vst.msk [vmem:[#allocation2 + $0x1a0] sm:$0xff] %vm103, 0.0
    %158 = vst.msk [vmem:[#allocation2 + $0x1a8] sm:$0x3] %vm106, 0.0
    %159 = vst.msk [vmem:[#allocation2 + $0x1b0] sm:$0xff] %vm103, 0.0
    %160 = vst.msk [vmem:[#allocation2 + $0x1b8] sm:$0xff] %vm103, 0.0
    %161 = vst.msk [vmem:[#allocation2 + $0x1c0] sm:$0x3] %vm106, 0.0
    %162 = vst.msk [vmem:[#allocation2 + $0x1c8] sm:$0xff] %vm103, 0.0
    %163 = vst.msk [vmem:[#allocation2 + $0x1d0] sm:$0xff] %vm103, 0.0
    %164 = vst.msk [vmem:[#allocation2 + $0x1d8] sm:$0x3] %vm106, 0.0
    %165 = vst.msk [vmem:[#allocation2 + $0x1e0] sm:$0xff] %vm103, 0.0
    %166 = vst.msk [vmem:[#allocation2 + $0x1e8] sm:$0xff] %vm103, 0.0
    %167 = vst.msk [vmem:[#allocation2 + $0x1f0] sm:$0x3] %vm106, 0.0
    %168 = vst.msk [vmem:[#allocation2 + $0x1f8] sm:$0xff] %vm103, 0.0
    %169 = vst.msk [vmem:[#allocation2 + $0x200] sm:$0xff] %vm103, 0.0
    %170 = vst.msk [vmem:[#allocation2 + $0x208] sm:$0x3] %vm106, 0.0
    %171 = vst.msk [vmem:[#allocation2 + $0x210] sm:$0xff] %vm103, 0.0
    %172 = vst.msk [vmem:[#allocation2 + $0x218] sm:$0xff] %vm103, 0.0
    %173 = vst.msk [vmem:[#allocation2 + $0x220] sm:$0x3] %vm106, 0.0
    %174 = vst.msk [vmem:[#allocation2 + $0x228] sm:$0xff] %vm103, 0.0
    %175 = vst.msk [vmem:[#allocation2 + $0x230] sm:$0xff] %vm103, 0.0
    %176 = vst.msk [vmem:[#allocation2 + $0x238] sm:$0x3] %vm106, 0.0
    %177 = vst.msk [vmem:[#allocation2 + $0x240] sm:$0xff] %vm103, 0.0
    %178 = vst.msk [vmem:[#allocation2 + $0x248] sm:$0xff] %vm103, 0.0
    %179 = vst.msk [vmem:[#allocation2 + $0x250] sm:$0x3] %vm106, 0.0
    %180 = vst.msk [vmem:[#allocation2 + $0x258] sm:$0xff] %vm103, 0.0
    %181 = vst.msk [vmem:[#allocation2 + $0x260] sm:$0xff] %vm103, 0.0
    %182 = vst.msk [vmem:[#allocation2 + $0x268] sm:$0x3] %vm106, 0.0
    %183 = vst.msk [vmem:[#allocation2 + $0x270] sm:$0xff] %vm103, 0.0
    %184 = vst.msk [vmem:[#allocation2 + $0x278] sm:$0xff] %vm103, 0.0
    %185 = vst.msk [vmem:[#allocation2 + $0x280] sm:$0x3] %vm106, 0.0
    %186 = vst.msk [vmem:[#allocation2 + $0x288] sm:$0xff] %vm103, 0.0
    %187 = vst.msk [vmem:[#allocation2 + $0x290] sm:$0xff] %vm103, 0.0
    %188 = vst.msk [vmem:[#allocation2 + $0x298] sm:$0x3] %vm106, 0.0
    %189 = vst.msk [vmem:[#allocation2 + $0x2a0] sm:$0xff] %vm103, 0.0
    %190 = vst.msk [vmem:[#allocation2 + $0x2a8] sm:$0xff] %vm103, 0.0
    %191 = vst.msk [vmem:[#allocation2 + $0x2b0] sm:$0x3] %vm106, 0.0
    %192 = vst.msk [vmem:[#allocation2 + $0x2b8] sm:$0xff] %vm103, 0.0
    %193 = vst.msk [vmem:[#allocation2 + $0x2c0] sm:$0xff] %vm103, 0.0
    %194 = vst.msk [vmem:[#allocation2 + $0x2c8] sm:$0x3] %vm106, 0.0
    %195 = vst.msk [vmem:[#allocation2 + $0x2d0] sm:$0xff] %vm103, 0.0
    %196 = vst.msk [vmem:[#allocation2 + $0x2d8] sm:$0xff] %vm103, 0.0
    %197 = vst.msk [vmem:[#allocation2 + $0x2e0] sm:$0x3] %vm106, 0.0
    %198 = vst.msk [vmem:[#allocation2 + $0x2e8] sm:$0xff] %vm103, 0.0
    %199 = vst.msk [vmem:[#allocation2 + $0x2f0] sm:$0xff] %vm103, 0.0
    %200 = vst.msk [vmem:[#allocation2 + $0x2f8] sm:$0x3] %vm106, 0.0
    %201 = vst.msk [vmem:[#allocation2 + $0x300] sm:$0xff] %vm103, 0.0
    %202 = vst.msk [vmem:[#allocation2 + $0x308] sm:$0xff] %vm103, 0.0
    %203 = vst.msk [vmem:[#allocation2 + $0x310] sm:$0x3] %vm106, 0.0
    %204 = vst.msk [vmem:[#allocation2 + $0x318] sm:$0xff] %vm103, 0.0
    %205 = vst.msk [vmem:[#allocation2 + $0x320] sm:$0xff] %vm103, 0.0
    %206 = vst.msk [vmem:[#allocation2 + $0x328] sm:$0x3] %vm106, 0.0
    %207 = vst.msk [vmem:[#allocation2 + $0x330] sm:$0xff] %vm103, 0.0
    %208 = vst.msk [vmem:[#allocation2 + $0x338] sm:$0xff] %vm103, 0.0
    %209 = vst.msk [vmem:[#allocation2 + $0x340] sm:$0x3] %vm106, 0.0
    %210 = vst.msk [vmem:[#allocation2 + $0x348] sm:$0xff] %vm103, 0.0
    %211 = vst.msk [vmem:[#allocation2 + $0x350] sm:$0xff] %vm103, 0.0
    %212 = vst.msk [vmem:[#allocation2 + $0x358] sm:$0x3] %vm106, 0.0
    %s213 = scalar_lea.vmem [#allocation2], 24
    %214 = vst.msk [vmem:[%s213 + $0x1] sm:$0xff] %vm103, %v39
    %215 = vst.msk [vmem:[%s213 + $0x9] sm:$0xff] %vm103, %v40
    %216 = vst.msk [vmem:[%s213 + $0x19] sm:$0xff] %vm103, %v41
    %217 = vst.msk [vmem:[%s213 + $0x21] sm:$0xff] %vm103, %v42
    %218 = vst.msk [vmem:[%s213 + $0x31] sm:$0xff] %vm103, %v43
    %219 = vst.msk [vmem:[%s213 + $0x39] sm:$0xff] %vm103, %v44
    %220 = vst.msk [vmem:[%s213 + $0x49] sm:$0xff] %vm103, %v45
    %221 = vst.msk [vmem:[%s213 + $0x51] sm:$0xff] %vm103, %v46
    %222 = vst.msk [vmem:[%s213 + $0x61] sm:$0xff] %vm103, %v47
    %223 = vst.msk [vmem:[%s213 + $0x69] sm:$0xff] %vm103, %v48
    %224 = vst.msk [vmem:[%s213 + $0x79] sm:$0xff] %vm103, %v49
    %225 = vst.msk [vmem:[%s213 + $0x81] sm:$0xff] %vm103, %v50
    %226 = vst.msk [vmem:[%s213 + $0x91] sm:$0xff] %vm103, %v51
    %227 = vst.msk [vmem:[%s213 + $0x99] sm:$0xff] %vm103, %v52
    %228 = vst.msk [vmem:[%s213 + $0xa9] sm:$0xff] %vm103, %v53
    %229 = vst.msk [vmem:[%s213 + $0xb1] sm:$0xff] %vm103, %v54
    %230 = vst.msk [vmem:[%s213 + $0xc1] sm:$0xff] %vm103, %v55
    %231 = vst.msk [vmem:[%s213 + $0xc9] sm:$0xff] %vm103, %v56
    %232 = vst.msk [vmem:[%s213 + $0xd9] sm:$0xff] %vm103, %v57
    %233 = vst.msk [vmem:[%s213 + $0xe1] sm:$0xff] %vm103, %v58
    %234 = vst.msk [vmem:[%s213 + $0xf1] sm:$0xff] %vm103, %v59
    %235 = vst.msk [vmem:[%s213 + $0xf9] sm:$0xff] %vm103, %v60
    %236 = vst.msk [vmem:[%s213 + $0x109] sm:$0xff] %vm103, %v61
    %237 = vst.msk [vmem:[%s213 + $0x111] sm:$0xff] %vm103, %v62
    %238 = vst.msk [vmem:[%s213 + $0x121] sm:$0xff] %vm103, %v63
    %239 = vst.msk [vmem:[%s213 + $0x129] sm:$0xff] %vm103, %v64
    %240 = vst.msk [vmem:[%s213 + $0x139] sm:$0xff] %vm103, %v65
    %241 = vst.msk [vmem:[%s213 + $0x141] sm:$0xff] %vm103, %v66
    %242 = vst.msk [vmem:[%s213 + $0x151] sm:$0xff] %vm103, %v67
    %243 = vst.msk [vmem:[%s213 + $0x159] sm:$0xff] %vm103, %v68
    %244 = vst.msk [vmem:[%s213 + $0x169] sm:$0xff] %vm103, %v69
    %245 = vst.msk [vmem:[%s213 + $0x171] sm:$0xff] %vm103, %v70
    %246 = vst.msk [vmem:[%s213 + $0x1b1] sm:$0xff] %vm103, %v71
    %247 = vst.msk [vmem:[%s213 + $0x1b9] sm:$0xff] %vm103, %v72
    %248 = vst.msk [vmem:[%s213 + $0x1c9] sm:$0xff] %vm103, %v73
    %249 = vst.msk [vmem:[%s213 + $0x1d1] sm:$0xff] %vm103, %v74
    %250 = vst.msk [vmem:[%s213 + $0x1e1] sm:$0xff] %vm103, %v75
    %251 = vst.msk [vmem:[%s213 + $0x1e9] sm:$0xff] %vm103, %v76
    %252 = vst.msk [vmem:[%s213 + $0x1f9] sm:$0xff] %vm103, %v77
    %253 = vst.msk [vmem:[%s213 + $0x201] sm:$0xff] %vm103, %v78
    %254 = vst.msk [vmem:[%s213 + $0x211] sm:$0xff] %vm103, %v79
    %255 = vst.msk [vmem:[%s213 + $0x219] sm:$0xff] %vm103, %v80
    %256 = vst.msk [vmem:[%s213 + $0x229] sm:$0xff] %vm103, %v81
    %257 = vst.msk [vmem:[%s213 + $0x231] sm:$0xff] %vm103, %v82
    %258 = vst.msk [vmem:[%s213 + $0x241] sm:$0xff] %vm103, %v83
    %259 = vst.msk [vmem:[%s213 + $0x249] sm:$0xff] %vm103, %v84
    %260 = vst.msk [vmem:[%s213 + $0x259] sm:$0xff] %vm103, %v85
    %261 = vst.msk [vmem:[%s213 + $0x261] sm:$0xff] %vm103, %v86
    %262 = vst.msk [vmem:[%s213 + $0x271] sm:$0xff] %vm103, %v87
    %263 = vst.msk [vmem:[%s213 + $0x279] sm:$0xff] %vm103, %v88
    %264 = vst.msk [vmem:[%s213 + $0x289] sm:$0xff] %vm103, %v89
    %265 = vst.msk [vmem:[%s213 + $0x291] sm:$0xff] %vm103, %v90
    %266 = vst.msk [vmem:[%s213 + $0x2a1] sm:$0xff] %vm103, %v91
    %267 = vst.msk [vmem:[%s213 + $0x2a9] sm:$0xff] %vm103, %v92
    %268 = vst.msk [vmem:[%s213 + $0x2b9] sm:$0xff] %vm103, %v93
    %269 = vst.msk [vmem:[%s213 + $0x2c1] sm:$0xff] %vm103, %v94
    %270 = vst.msk [vmem:[%s213 + $0x2d1] sm:$0xff] %vm103, %v95
    %271 = vst.msk [vmem:[%s213 + $0x2d9] sm:$0xff] %vm103, %v96
    %272 = vst.msk [vmem:[%s213 + $0x2e9] sm:$0xff] %vm103, %v97
    %273 = vst.msk [vmem:[%s213 + $0x2f1] sm:$0xff] %vm103, %v98
    %274 = vst.msk [vmem:[%s213 + $0x301] sm:$0xff] %vm103, %v99
    %275 = vst.msk [vmem:[%s213 + $0x309] sm:$0xff] %vm103, %v100
    %276 = vst.msk [vmem:[%s213 + $0x319] sm:$0xff] %vm103, %v101
    %277 = vst.msk [vmem:[%s213 + $0x321] sm:$0xff] %vm103, %v102
    %v278 = vld [vmem:[#allocation2] sm:$0xff]
    %v279 = vld [vmem:[#allocation2 + $0x8] sm:$0xff]
    %v280 = vld [vmem:[#allocation2 + $0x18] sm:$0xff]
    %v281 = vld [vmem:[#allocation2 + $0x20] sm:$0xff]
    %v282 = vld [vmem:[#allocation2 + $0x30] sm:$0xff]
    %v283 = vld [vmem:[#allocation2 + $0x38] sm:$0xff]
    %v284 = vld [vmem:[#allocation2 + $0x48] sm:$0xff]
    %v285 = vld [vmem:[#allocation2 + $0x50] sm:$0xff]
    %v286 = vld [vmem:[#allocation2 + $0x60] sm:$0xff]
    %v287 = vld [vmem:[#allocation2 + $0x68] sm:$0xff]
    %v288 = vld [vmem:[#allocation2 + $0x78] sm:$0xff]
    %v289 = vld [vmem:[#allocation2 + $0x80] sm:$0xff]
    %v290 = vld [vmem:[#allocation2 + $0x90] sm:$0xff]
    %v291 = vld [vmem:[#allocation2 + $0x98] sm:$0xff]
    %v292 = vld [vmem:[#allocation2 + $0xa8] sm:$0xff]
    %v293 = vld [vmem:[#allocation2 + $0xb0] sm:$0xff]
    %v294 = vld [vmem:[#allocation2 + $0xc0] sm:$0xff]
    %v295 = vld [vmem:[#allocation2 + $0xc8] sm:$0xff]
    %v296 = vld [vmem:[#allocation2 + $0xd8] sm:$0xff]
    %v297 = vld [vmem:[#allocation2 + $0xe0] sm:$0xff]
    %v298 = vld [vmem:[#allocation2 + $0xf0] sm:$0xff]
    %v299 = vld [vmem:[#allocation2 + $0xf8] sm:$0xff]
    %v300 = vld [vmem:[#allocation2 + $0x108] sm:$0xff]
    %v301 = vld [vmem:[#allocation2 + $0x110] sm:$0xff]
    %v302 = vld [vmem:[#allocation2 + $0x120] sm:$0xff]
    %v303 = vld [vmem:[#allocation2 + $0x128] sm:$0xff]
    %v304 = vld [vmem:[#allocation2 + $0x138] sm:$0xff]
    %v305 = vld [vmem:[#allocation2 + $0x140] sm:$0xff]
    %v306 = vld [vmem:[#allocation2 + $0x150] sm:$0xff]
    %v307 = vld [vmem:[#allocation2 + $0x158] sm:$0xff]
    %v308 = vld [vmem:[#allocation2 + $0x168] sm:$0xff]
    %v309 = vld [vmem:[#allocation2 + $0x170] sm:$0xff]
    %v310 = vld [vmem:[#allocation2 + $0x1b0] sm:$0xff]
    %v311 = vld [vmem:[#allocation2 + $0x1b8] sm:$0xff]
    %v312 = vld [vmem:[#allocation2 + $0x1c8] sm:$0xff]
    %v313 = vld [vmem:[#allocation2 + $0x1d0] sm:$0xff]
    %v314 = vld [vmem:[#allocation2 + $0x1e0] sm:$0xff]
    %v315 = vld [vmem:[#allocation2 + $0x1e8] sm:$0xff]
    %v316 = vld [vmem:[#allocation2 + $0x1f8] sm:$0xff]
    %v317 = vld [vmem:[#allocation2 + $0x200] sm:$0xff]
    %v318 = vld [vmem:[#allocation2 + $0x210] sm:$0xff]
    %v319 = vld [vmem:[#allocation2 + $0x218] sm:$0xff]
    %v320 = vld [vmem:[#allocation2 + $0x228] sm:$0xff]
    %v321 = vld [vmem:[#allocation2 + $0x230] sm:$0xff]
    %v322 = vld [vmem:[#allocation2 + $0x240] sm:$0xff]
    %v323 = vld [vmem:[#allocation2 + $0x248] sm:$0xff]
    %v324 = vld [vmem:[#allocation2 + $0x258] sm:$0xff]
    %v325 = vld [vmem:[#allocation2 + $0x260] sm:$0xff]
    %v326 = vld [vmem:[#allocation2 + $0x270] sm:$0xff]
    %v327 = vld [vmem:[#allocation2 + $0x278] sm:$0xff]
    %v328 = vld [vmem:[#allocation2 + $0x288] sm:$0xff]
    %v329 = vld [vmem:[#allocation2 + $0x290] sm:$0xff]
    %v330 = vld [vmem:[#allocation2 + $0x2a0] sm:$0xff]
    %v331 = vld [vmem:[#allocation2 + $0x2a8] sm:$0xff]
    %v332 = vld [vmem:[#allocation2 + $0x2b8] sm:$0xff]
    %v333 = vld [vmem:[#allocation2 + $0x2c0] sm:$0xff]
    %v334 = vld [vmem:[#allocation2 + $0x2d0] sm:$0xff]
    %v335 = vld [vmem:[#allocation2 + $0x2d8] sm:$0xff]
    %v336 = vld [vmem:[#allocation2 + $0x2e8] sm:$0xff]
    %v337 = vld [vmem:[#allocation2 + $0x2f0] sm:$0xff]
    %v338 = vld [vmem:[#allocation2 + $0x300] sm:$0xff]
    %v339 = vld [vmem:[#allocation2 + $0x308] sm:$0xff]
    %v340 = vld [vmem:[#allocation2 + $0x318] sm:$0xff]
    %v341 = vld [vmem:[#allocation2 + $0x320] sm:$0xff]
    %342 = vst.msk [vmem:[#allocation3] sm:$0xff] %vm103, %v278
    %343 = vst.msk [vmem:[#allocation3 + $0x8] sm:$0xff] %vm103, %v279
    %344 = vst.msk [vmem:[#allocation3 + $0x10] sm:$0xff] %vm103, %v280
    %345 = vst.msk [vmem:[#allocation3 + $0x18] sm:$0xff] %vm103, %v281
    %346 = vst.msk [vmem:[#allocation3 + $0x20] sm:$0xff] %vm103, %v282
    %347 = vst.msk [vmem:[#allocation3 + $0x28] sm:$0xff] %vm103, %v283
    %348 = vst.msk [vmem:[#allocation3 + $0x30] sm:$0xff] %vm103, %v284
    %349 = vst.msk [vmem:[#allocation3 + $0x38] sm:$0xff] %vm103, %v285
    %350 = vst.msk [vmem:[#allocation3 + $0x40] sm:$0xff] %vm103, %v286
    %351 = vst.msk [vmem:[#allocation3 + $0x48] sm:$0xff] %vm103, %v287
    %352 = vst.msk [vmem:[#allocation3 + $0x50] sm:$0xff] %vm103, %v288
    %353 = vst.msk [vmem:[#allocation3 + $0x58] sm:$0xff] %vm103, %v289
    %354 = vst.msk [vmem:[#allocation3 + $0x60] sm:$0xff] %vm103, %v290
    %355 = vst.msk [vmem:[#allocation3 + $0x68] sm:$0xff] %vm103, %v291
    %356 = vst.msk [vmem:[#allocation3 + $0x70] sm:$0xff] %vm103, %v292
    %357 = vst.msk [vmem:[#allocation3 + $0x78] sm:$0xff] %vm103, %v293
    %358 = vst.msk [vmem:[#allocation3 + $0x80] sm:$0xff] %vm103, %v294
    %359 = vst.msk [vmem:[#allocation3 + $0x88] sm:$0xff] %vm103, %v295
    %360 = vst.msk [vmem:[#allocation3 + $0x90] sm:$0xff] %vm103, %v296
    %361 = vst.msk [vmem:[#allocation3 + $0x98] sm:$0xff] %vm103, %v297
    %362 = vst.msk [vmem:[#allocation3 + $0xa0] sm:$0xff] %vm103, %v298
    %363 = vst.msk [vmem:[#allocation3 + $0xa8] sm:$0xff] %vm103, %v299
    %364 = vst.msk [vmem:[#allocation3 + $0xb0] sm:$0xff] %vm103, %v300
    %365 = vst.msk [vmem:[#allocation3 + $0xb8] sm:$0xff] %vm103, %v301
    %366 = vst.msk [vmem:[#allocation3 + $0xc0] sm:$0xff] %vm103, %v302
    %367 = vst.msk [vmem:[#allocation3 + $0xc8] sm:$0xff] %vm103, %v303
    %368 = vst.msk [vmem:[#allocation3 + $0xd0] sm:$0xff] %vm103, %v304
    %369 = vst.msk [vmem:[#allocation3 + $0xd8] sm:$0xff] %vm103, %v305
    %370 = vst.msk [vmem:[#allocation3 + $0xe0] sm:$0xff] %vm103, %v306
    %371 = vst.msk [vmem:[#allocation3 + $0xe8] sm:$0xff] %vm103, %v307
    %372 = vst.msk [vmem:[#allocation3 + $0xf0] sm:$0xff] %vm103, %v308
    %373 = vst.msk [vmem:[#allocation3 + $0xf8] sm:$0xff] %vm103, %v309
    %374 = vst.msk [vmem:[#allocation3 + $0x100] sm:$0xff] %vm103, %v310
    %375 = vst.msk [vmem:[#allocation3 + $0x108] sm:$0xff] %vm103, %v311
    %376 = vst.msk [vmem:[#allocation3 + $0x110] sm:$0xff] %vm103, %v312
    %377 = vst.msk [vmem:[#allocation3 + $0x118] sm:$0xff] %vm103, %v313
    %378 = vst.msk [vmem:[#allocation3 + $0x120] sm:$0xff] %vm103, %v314
    %379 = vst.msk [vmem:[#allocation3 + $0x128] sm:$0xff] %vm103, %v315
    %380 = vst.msk [vmem:[#allocation3 + $0x130] sm:$0xff] %vm103, %v316
    %381 = vst.msk [vmem:[#allocation3 + $0x138] sm:$0xff] %vm103, %v317
    %382 = vst.msk [vmem:[#allocation3 + $0x140] sm:$0xff] %vm103, %v318
    %383 = vst.msk [vmem:[#allocation3 + $0x148] sm:$0xff] %vm103, %v319
    %384 = vst.msk [vmem:[#allocation3 + $0x150] sm:$0xff] %vm103, %v320
    %385 = vst.msk [vmem:[#allocation3 + $0x158] sm:$0xff] %vm103, %v321
    %386 = vst.msk [vmem:[#allocation3 + $0x160] sm:$0xff] %vm103, %v322
    %387 = vst.msk [vmem:[#allocation3 + $0x168] sm:$0xff] %vm103, %v323
    %388 = vst.msk [vmem:[#allocation3 + $0x170] sm:$0xff] %vm103, %v324
    %389 = vst.msk [vmem:[#allocation3 + $0x178] sm:$0xff] %vm103, %v325
    %390 = vst.msk [vmem:[#allocation3 + $0x180] sm:$0xff] %vm103, %v326
    %391 = vst.msk [vmem:[#allocation3 + $0x188] sm:$0xff] %vm103, %v327
    %392 = vst.msk [vmem:[#allocation3 + $0x190] sm:$0xff] %vm103, %v328
    %393 = vst.msk [vmem:[#allocation3 + $0x198] sm:$0xff] %vm103, %v329
    %394 = vst.msk [vmem:[#allocation3 + $0x1a0] sm:$0xff] %vm103, %v330
    %395 = vst.msk [vmem:[#allocation3 + $0x1a8] sm:$0xff] %vm103, %v331
    %396 = vst.msk [vmem:[#allocation3 + $0x1b0] sm:$0xff] %vm103, %v332
    %397 = vst.msk [vmem:[#allocation3 + $0x1b8] sm:$0xff] %vm103, %v333
    %398 = vst.msk [vmem:[#allocation3 + $0x1c0] sm:$0xff] %vm103, %v334
    %399 = vst.msk [vmem:[#allocation3 + $0x1c8] sm:$0xff] %vm103, %v335
    %400 = vst.msk [vmem:[#allocation3 + $0x1d0] sm:$0xff] %vm103, %v336
    %401 = vst.msk [vmem:[#allocation3 + $0x1d8] sm:$0xff] %vm103, %v337
    %402 = vst.msk [vmem:[#allocation3 + $0x1e0] sm:$0xff] %vm103, %v338
    %403 = vst.msk [vmem:[#allocation3 + $0x1e8] sm:$0xff] %vm103, %v339
    %404 = vst.msk [vmem:[#allocation3 + $0x1f0] sm:$0xff] %vm103, %v340
    %405 = vst.msk [vmem:[#allocation3 + $0x1f8] sm:$0xff] %vm103, %v341
    %v406 = vld [vmem:[#allocation2 + $0x1] sm:$0xff]
    %v407 = vld [vmem:[#allocation2 + $0x9] sm:$0xff]
    %v408 = vld [vmem:[#allocation2 + $0x19] sm:$0xff]
    %v409 = vld [vmem:[#allocation2 + $0x21] sm:$0xff]
    %v410 = vld [vmem:[#allocation2 + $0x31] sm:$0xff]
    %v411 = vld [vmem:[#allocation2 + $0x39] sm:$0xff]
    %v412 = vld [vmem:[#allocation2 + $0x49] sm:$0xff]
    %v413 = vld [vmem:[#allocation2 + $0x51] sm:$0xff]
    %v414 = vld [vmem:[#allocation2 + $0x61] sm:$0xff]
    %v415 = vld [vmem:[#allocation2 + $0x69] sm:$0xff]
    %v416 = vld [vmem:[#allocation2 + $0x79] sm:$0xff]
    %v417 = vld [vmem:[#allocation2 + $0x81] sm:$0xff]
    %v418 = vld [vmem:[#allocation2 + $0x91] sm:$0xff]
    %v419 = vld [vmem:[#allocation2 + $0x99] sm:$0xff]
    %v420 = vld [vmem:[#allocation2 + $0xa9] sm:$0xff]
    %v421 = vld [vmem:[#allocation2 + $0xb1] sm:$0xff]
    %v422 = vld [vmem:[#allocation2 + $0xc1] sm:$0xff]
    %v423 = vld [vmem:[#allocation2 + $0xc9] sm:$0xff]
    %v424 = vld [vmem:[#allocation2 + $0xd9] sm:$0xff]
    %v425 = vld [vmem:[#allocation2 + $0xe1] sm:$0xff]
    %v426 = vld [vmem:[#allocation2 + $0xf1] sm:$0xff]
    %v427 = vld [vmem:[#allocation2 + $0xf9] sm:$0xff]
    %v428 = vld [vmem:[#allocation2 + $0x109] sm:$0xff]
    %v429 = vld [vmem:[#allocation2 + $0x111] sm:$0xff]
    %v430 = vld [vmem:[#allocation2 + $0x121] sm:$0xff]
    %v431 = vld [vmem:[#allocation2 + $0x129] sm:$0xff]
    %v432 = vld [vmem:[#allocation2 + $0x139] sm:$0xff]
    %v433 = vld [vmem:[#allocation2 + $0x141] sm:$0xff]
    %v434 = vld [vmem:[#allocation2 + $0x151] sm:$0xff]
    %v435 = vld [vmem:[#allocation2 + $0x159] sm:$0xff]
    %v436 = vld [vmem:[#allocation2 + $0x169] sm:$0xff]
    %v437 = vld [vmem:[#allocation2 + $0x171] sm:$0xff]
    %v438 = vld [vmem:[#allocation2 + $0x1b1] sm:$0xff]
    %v439 = vld [vmem:[#allocation2 + $0x1b9] sm:$0xff]
    %v440 = vld [vmem:[#allocation2 + $0x1c9] sm:$0xff]
    %v441 = vld [vmem:[#allocation2 + $0x1d1] sm:$0xff]
    %v442 = vld [vmem:[#allocation2 + $0x1e1] sm:$0xff]
    %v443 = vld [vmem:[#allocation2 + $0x1e9] sm:$0xff]
    %v444 = vld [vmem:[#allocation2 + $0x1f9] sm:$0xff]
    %v445 = vld [vmem:[#allocation2 + $0x201] sm:$0xff]
    %v446 = vld [vmem:[#allocation2 + $0x211] sm:$0xff]
    %v447 = vld [vmem:[#allocation2 + $0x219] sm:$0xff]
    %v448 = vld [vmem:[#allocation2 + $0x229] sm:$0xff]
    %v449 = vld [vmem:[#allocation2 + $0x231] sm:$0xff]
    %v450 = vld [vmem:[#allocation2 + $0x241] sm:$0xff]
    %v451 = vld [vmem:[#allocation2 + $0x249] sm:$0xff]
    %v452 = vld [vmem:[#allocation2 + $0x259] sm:$0xff]
    %v453 = vld [vmem:[#allocation2 + $0x261] sm:$0xff]
    %v454 = vld [vmem:[#allocation2 + $0x271] sm:$0xff]
    %v455 = vld [vmem:[#allocation2 + $0x279] sm:$0xff]
    %v456 = vld [vmem:[#allocation2 + $0x289] sm:$0xff]
    %v457 = vld [vmem:[#allocation2 + $0x291] sm:$0xff]
    %v458 = vld [vmem:[#allocation2 + $0x2a1] sm:$0xff]
    %v459 = vld [vmem:[#allocation2 + $0x2a9] sm:$0xff]
    %v460 = vld [vmem:[#allocation2 + $0x2b9] sm:$0xff]
    %v461 = vld [vmem:[#allocation2 + $0x2c1] sm:$0xff]
    %v462 = vld [vmem:[#allocation2 + $0x2d1] sm:$0xff]
    %v463 = vld [vmem:[#allocation2 + $0x2d9] sm:$0xff]
    %v464 = vld [vmem:[#allocation2 + $0x2e9] sm:$0xff]
    %v465 = vld [vmem:[#allocation2 + $0x2f1] sm:$0xff]
    %v466 = vld [vmem:[#allocation2 + $0x301] sm:$0xff]
    %v467 = vld [vmem:[#allocation2 + $0x309] sm:$0xff]
    %v468 = vld [vmem:[#allocation2 + $0x319] sm:$0xff]
    %v469 = vld [vmem:[#allocation2 + $0x321] sm:$0xff]
    %534 = vrot.lane.b32.xlu0 %v406, 1
    %v535 = vpop.permute.xlu0 %534
    %536 = vrot.lane.b32.xlu0 %v407, 1
    %v537 = vpop.permute.xlu0 %536
    %538 = vrot.lane.b32.xlu0 %v408, 1
    %v539 = vpop.permute.xlu0 %538
    %540 = vrot.lane.b32.xlu0 %v409, 1
    %v541 = vpop.permute.xlu0 %540
    %542 = vrot.lane.b32.xlu0 %v410, 1
    %v543 = vpop.permute.xlu0 %542
    %544 = vrot.lane.b32.xlu0 %v411, 1
    %v545 = vpop.permute.xlu0 %544
    %546 = vrot.lane.b32.xlu0 %v412, 1
    %v547 = vpop.permute.xlu0 %546
    %548 = vrot.lane.b32.xlu0 %v413, 1
    %v549 = vpop.permute.xlu0 %548
    %550 = vrot.lane.b32.xlu0 %v414, 1
    %v551 = vpop.permute.xlu0 %550
    %552 = vrot.lane.b32.xlu0 %v415, 1
    %v553 = vpop.permute.xlu0 %552
    %554 = vrot.lane.b32.xlu0 %v416, 1
    %v555 = vpop.permute.xlu0 %554
    %556 = vrot.lane.b32.xlu0 %v417, 1
    %v557 = vpop.permute.xlu0 %556
    %558 = vrot.lane.b32.xlu0 %v418, 1
    %v559 = vpop.permute.xlu0 %558
    %560 = vrot.lane.b32.xlu0 %v419, 1
    %v561 = vpop.permute.xlu0 %560
    %562 = vrot.lane.b32.xlu0 %v420, 1
    %v563 = vpop.permute.xlu0 %562
    %564 = vrot.lane.b32.xlu0 %v421, 1
    %v565 = vpop.permute.xlu0 %564
    %566 = vrot.lane.b32.xlu0 %v422, 1
    %v567 = vpop.permute.xlu0 %566
    %568 = vrot.lane.b32.xlu0 %v423, 1
    %v569 = vpop.permute.xlu0 %568
    %570 = vrot.lane.b32.xlu0 %v424, 1
    %v571 = vpop.permute.xlu0 %570
    %572 = vrot.lane.b32.xlu0 %v425, 1
    %v573 = vpop.permute.xlu0 %572
    %574 = vrot.lane.b32.xlu0 %v426, 1
    %v575 = vpop.permute.xlu0 %574
    %576 = vrot.lane.b32.xlu0 %v427, 1
    %v577 = vpop.permute.xlu0 %576
    %578 = vrot.lane.b32.xlu0 %v428, 1
    %v579 = vpop.permute.xlu0 %578
    %580 = vrot.lane.b32.xlu0 %v429, 1
    %v581 = vpop.permute.xlu0 %580
    %582 = vrot.lane.b32.xlu0 %v430, 1
    %v583 = vpop.permute.xlu0 %582
    %584 = vrot.lane.b32.xlu0 %v431, 1
    %v585 = vpop.permute.xlu0 %584
    %586 = vrot.lane.b32.xlu0 %v432, 1
    %v587 = vpop.permute.xlu0 %586
    %588 = vrot.lane.b32.xlu0 %v433, 1
    %v589 = vpop.permute.xlu0 %588
    %590 = vrot.lane.b32.xlu0 %v434, 1
    %v591 = vpop.permute.xlu0 %590
    %592 = vrot.lane.b32.xlu0 %v435, 1
    %v593 = vpop.permute.xlu0 %592
    %594 = vrot.lane.b32.xlu0 %v436, 1
    %v595 = vpop.permute.xlu0 %594
    %596 = vrot.lane.b32.xlu0 %v437, 1
    %v597 = vpop.permute.xlu0 %596
    %598 = vrot.lane.b32.xlu0 %v438, 1
    %v599 = vpop.permute.xlu0 %598
    %600 = vrot.lane.b32.xlu0 %v439, 1
    %v601 = vpop.permute.xlu0 %600
    %602 = vrot.lane.b32.xlu0 %v440, 1
    %v603 = vpop.permute.xlu0 %602
    %604 = vrot.lane.b32.xlu0 %v441, 1
    %v605 = vpop.permute.xlu0 %604
    %606 = vrot.lane.b32.xlu0 %v442, 1
    %v607 = vpop.permute.xlu0 %606
    %608 = vrot.lane.b32.xlu0 %v443, 1
    %v609 = vpop.permute.xlu0 %608
    %610 = vrot.lane.b32.xlu0 %v444, 1
    %v611 = vpop.permute.xlu0 %610
    %612 = vrot.lane.b32.xlu0 %v445, 1
    %v613 = vpop.permute.xlu0 %612
    %614 = vrot.lane.b32.xlu0 %v446, 1
    %v615 = vpop.permute.xlu0 %614
    %616 = vrot.lane.b32.xlu0 %v447, 1
    %v617 = vpop.permute.xlu0 %616
    %618 = vrot.lane.b32.xlu0 %v448, 1
    %v619 = vpop.permute.xlu0 %618
    %620 = vrot.lane.b32.xlu0 %v449, 1
    %v621 = vpop.permute.xlu0 %620
    %622 = vrot.lane.b32.xlu0 %v450, 1
    %v623 = vpop.permute.xlu0 %622
    %624 = vrot.lane.b32.xlu0 %v451, 1
    %v625 = vpop.permute.xlu0 %624
    %626 = vrot.lane.b32.xlu0 %v452, 1
    %v627 = vpop.permute.xlu0 %626
    %628 = vrot.lane.b32.xlu0 %v453, 1
    %v629 = vpop.permute.xlu0 %628
    %630 = vrot.lane.b32.xlu0 %v454, 1
    %v631 = vpop.permute.xlu0 %630
    %632 = vrot.lane.b32.xlu0 %v455, 1
    %v633 = vpop.permute.xlu0 %632
    %634 = vrot.lane.b32.xlu0 %v456, 1
    %v635 = vpop.permute.xlu0 %634
    %636 = vrot.lane.b32.xlu0 %v457, 1
    %v637 = vpop.permute.xlu0 %636
    %638 = vrot.lane.b32.xlu0 %v458, 1
    %v639 = vpop.permute.xlu0 %638
    %640 = vrot.lane.b32.xlu0 %v459, 1
    %v641 = vpop.permute.xlu0 %640
    %642 = vrot.lane.b32.xlu0 %v460, 1
    %v643 = vpop.permute.xlu0 %642
    %644 = vrot.lane.b32.xlu0 %v461, 1
    %v645 = vpop.permute.xlu0 %644
    %646 = vrot.lane.b32.xlu0 %v462, 1
    %v647 = vpop.permute.xlu0 %646
    %648 = vrot.lane.b32.xlu0 %v463, 1
    %v649 = vpop.permute.xlu0 %648
    %650 = vrot.lane.b32.xlu0 %v464, 1
    %v651 = vpop.permute.xlu0 %650
    %652 = vrot.lane.b32.xlu0 %v465, 1
    %v653 = vpop.permute.xlu0 %652
    %654 = vrot.lane.b32.xlu0 %v466, 1
    %v655 = vpop.permute.xlu0 %654
    %656 = vrot.lane.b32.xlu0 %v467, 1
    %v657 = vpop.permute.xlu0 %656
    %658 = vrot.lane.b32.xlu0 %v468, 1
    %v659 = vpop.permute.xlu0 %658
    %660 = vrot.lane.b32.xlu0 %v469, 1
    %v661 = vpop.permute.xlu0 %660
    %vm726 = vcmask 15368
    %727 = vst.msk [vmem:[#allocation3] sm:$0xff] %vm726, %v535
    %728 = vst.msk [vmem:[#allocation3 + $0x8] sm:$0xff] %vm726, %v537
    %729 = vst.msk [vmem:[#allocation3 + $0x10] sm:$0xff] %vm726, %v539
    %730 = vst.msk [vmem:[#allocation3 + $0x18] sm:$0xff] %vm726, %v541
    %731 = vst.msk [vmem:[#allocation3 + $0x20] sm:$0xff] %vm726, %v543
    %732 = vst.msk [vmem:[#allocation3 + $0x28] sm:$0xff] %vm726, %v545
    %733 = vst.msk [vmem:[#allocation3 + $0x30] sm:$0xff] %vm726, %v547
    %734 = vst.msk [vmem:[#allocation3 + $0x38] sm:$0xff] %vm726, %v549
    %735 = vst.msk [vmem:[#allocation3 + $0x40] sm:$0xff] %vm726, %v551
    %736 = vst.msk [vmem:[#allocation3 + $0x48] sm:$0xff] %vm726, %v553
    %737 = vst.msk [vmem:[#allocation3 + $0x50] sm:$0xff] %vm726, %v555
    %738 = vst.msk [vmem:[#allocation3 + $0x58] sm:$0xff] %vm726, %v557
    %739 = vst.msk [vmem:[#allocation3 + $0x60] sm:$0xff] %vm726, %v559
    %740 = vst.msk [vmem:[#allocation3 + $0x68] sm:$0xff] %vm726, %v561
    %741 = vst.msk [vmem:[#allocation3 + $0x70] sm:$0xff] %vm726, %v563
    %742 = vst.msk [vmem:[#allocation3 + $0x78] sm:$0xff] %vm726, %v565
    %743 = vst.msk [vmem:[#allocation3 + $0x80] sm:$0xff] %vm726, %v567
    %744 = vst.msk [vmem:[#allocation3 + $0x88] sm:$0xff] %vm726, %v569
    %745 = vst.msk [vmem:[#allocation3 + $0x90] sm:$0xff] %vm726, %v571
    %746 = vst.msk [vmem:[#allocation3 + $0x98] sm:$0xff] %vm726, %v573
    %747 = vst.msk [vmem:[#allocation3 + $0xa0] sm:$0xff] %vm726, %v575
    %748 = vst.msk [vmem:[#allocation3 + $0xa8] sm:$0xff] %vm726, %v577
    %749 = vst.msk [vmem:[#allocation3 + $0xb0] sm:$0xff] %vm726, %v579
    %750 = vst.msk [vmem:[#allocation3 + $0xb8] sm:$0xff] %vm726, %v581
    %751 = vst.msk [vmem:[#allocation3 + $0xc0] sm:$0xff] %vm726, %v583
    %752 = vst.msk [vmem:[#allocation3 + $0xc8] sm:$0xff] %vm726, %v585
    %753 = vst.msk [vmem:[#allocation3 + $0xd0] sm:$0xff] %vm726, %v587
    %754 = vst.msk [vmem:[#allocation3 + $0xd8] sm:$0xff] %vm726, %v589
    %755 = vst.msk [vmem:[#allocation3 + $0xe0] sm:$0xff] %vm726, %v591
    %756 = vst.msk [vmem:[#allocation3 + $0xe8] sm:$0xff] %vm726, %v593
    %757 = vst.msk [vmem:[#allocation3 + $0xf0] sm:$0xff] %vm726, %v595
    %758 = vst.msk [vmem:[#allocation3 + $0xf8] sm:$0xff] %vm726, %v597
    %759 = vst.msk [vmem:[#allocation3 + $0x100] sm:$0xff] %vm726, %v599
    %760 = vst.msk [vmem:[#allocation3 + $0x108] sm:$0xff] %vm726, %v601
    %761 = vst.msk [vmem:[#allocation3 + $0x110] sm:$0xff] %vm726, %v603
    %762 = vst.msk [vmem:[#allocation3 + $0x118] sm:$0xff] %vm726, %v605
    %763 = vst.msk [vmem:[#allocation3 + $0x120] sm:$0xff] %vm726, %v607
    %764 = vst.msk [vmem:[#allocation3 + $0x128] sm:$0xff] %vm726, %v609
    %765 = vst.msk [vmem:[#allocation3 + $0x130] sm:$0xff] %vm726, %v611
    %766 = vst.msk [vmem:[#allocation3 + $0x138] sm:$0xff] %vm726, %v613
    %767 = vst.msk [vmem:[#allocation3 + $0x140] sm:$0xff] %vm726, %v615
    %768 = vst.msk [vmem:[#allocation3 + $0x148] sm:$0xff] %vm726, %v617
    %769 = vst.msk [vmem:[#allocation3 + $0x150] sm:$0xff] %vm726, %v619
    %770 = vst.msk [vmem:[#allocation3 + $0x158] sm:$0xff] %vm726, %v621
    %771 = vst.msk [vmem:[#allocation3 + $0x160] sm:$0xff] %vm726, %v623
    %772 = vst.msk [vmem:[#allocation3 + $0x168] sm:$0xff] %vm726, %v625
    %773 = vst.msk [vmem:[#allocation3 + $0x170] sm:$0xff] %vm726, %v627
    %774 = vst.msk [vmem:[#allocation3 + $0x178] sm:$0xff] %vm726, %v629
    %775 = vst.msk [vmem:[#allocation3 + $0x180] sm:$0xff] %vm726, %v631
    %776 = vst.msk [vmem:[#allocation3 + $0x188] sm:$0xff] %vm726, %v633
    %777 = vst.msk [vmem:[#allocation3 + $0x190] sm:$0xff] %vm726, %v635
    %778 = vst.msk [vmem:[#allocation3 + $0x198] sm:$0xff] %vm726, %v637
    %779 = vst.msk [vmem:[#allocation3 + $0x1a0] sm:$0xff] %vm726, %v639
    %780 = vst.msk [vmem:[#allocation3 + $0x1a8] sm:$0xff] %vm726, %v641
    %781 = vst.msk [vmem:[#allocation3 + $0x1b0] sm:$0xff] %vm726, %v643
    %782 = vst.msk [vmem:[#allocation3 + $0x1b8] sm:$0xff] %vm726, %v645
    %783 = vst.msk [vmem:[#allocation3 + $0x1c0] sm:$0xff] %vm726, %v647
    %784 = vst.msk [vmem:[#allocation3 + $0x1c8] sm:$0xff] %vm726, %v649
    %785 = vst.msk [vmem:[#allocation3 + $0x1d0] sm:$0xff] %vm726, %v651
    %786 = vst.msk [vmem:[#allocation3 + $0x1d8] sm:$0xff] %vm726, %v653
    %787 = vst.msk [vmem:[#allocation3 + $0x1e0] sm:$0xff] %vm726, %v655
    %788 = vst.msk [vmem:[#allocation3 + $0x1e8] sm:$0xff] %vm726, %v657
    %789 = vst.msk [vmem:[#allocation3 + $0x1f0] sm:$0xff] %vm726, %v659
    %790 = vst.msk [vmem:[#allocation3 + $0x1f8] sm:$0xff] %vm726, %v661
    %v791 = vld [vmem:[#allocation2 + $0x2] sm:$0xff]
    %v792 = vld [vmem:[#allocation2 + $0xa] sm:$0xff]
    %v793 = vld [vmem:[#allocation2 + $0x1a] sm:$0xff]
    %v794 = vld [vmem:[#allocation2 + $0x22] sm:$0xff]
    %v795 = vld [vmem:[#allocation2 + $0x32] sm:$0xff]
    %v796 = vld [vmem:[#allocation2 + $0x3a] sm:$0xff]
    %v797 = vld [vmem:[#allocation2 + $0x4a] sm:$0xff]
    %v798 = vld [vmem:[#allocation2 + $0x52] sm:$0xff]
    %v799 = vld [vmem:[#allocation2 + $0x62] sm:$0xff]
    %v800 = vld [vmem:[#allocation2 + $0x6a] sm:$0xff]
    %v801 = vld [vmem:[#allocation2 + $0x7a] sm:$0xff]
    %v802 = vld [vmem:[#allocation2 + $0x82] sm:$0xff]
    %v803 = vld [vmem:[#allocation2 + $0x92] sm:$0xff]
    %v804 = vld [vmem:[#allocation2 + $0x9a] sm:$0xff]
    %v805 = vld [vmem:[#allocation2 + $0xaa] sm:$0xff]
    %v806 = vld [vmem:[#allocation2 + $0xb2] sm:$0xff]
    %v807 = vld [vmem:[#allocation2 + $0xc2] sm:$0xff]
    %v808 = vld [vmem:[#allocation2 + $0xca] sm:$0xff]
    %v809 = vld [vmem:[#allocation2 + $0xda] sm:$0xff]
    %v810 = vld [vmem:[#allocation2 + $0xe2] sm:$0xff]
    %v811 = vld [vmem:[#allocation2 + $0xf2] sm:$0xff]
    %v812 = vld [vmem:[#allocation2 + $0xfa] sm:$0xff]
    %v813 = vld [vmem:[#allocation2 + $0x10a] sm:$0xff]
    %v814 = vld [vmem:[#allocation2 + $0x112] sm:$0xff]
    %v815 = vld [vmem:[#allocation2 + $0x122] sm:$0xff]
    %v816 = vld [vmem:[#allocation2 + $0x12a] sm:$0xff]
    %v817 = vld [vmem:[#allocation2 + $0x13a] sm:$0xff]
    %v818 = vld [vmem:[#allocation2 + $0x142] sm:$0xff]
    %v819 = vld [vmem:[#allocation2 + $0x152] sm:$0xff]
    %v820 = vld [vmem:[#allocation2 + $0x15a] sm:$0xff]
    %v821 = vld [vmem:[#allocation2 + $0x16a] sm:$0xff]
    %v822 = vld [vmem:[#allocation2 + $0x172] sm:$0xff]
    %v823 = vld [vmem:[#allocation2 + $0x1b2] sm:$0xff]
    %v824 = vld [vmem:[#allocation2 + $0x1ba] sm:$0xff]
    %v825 = vld [vmem:[#allocation2 + $0x1ca] sm:$0xff]
    %v826 = vld [vmem:[#allocation2 + $0x1d2] sm:$0xff]
    %v827 = vld [vmem:[#allocation2 + $0x1e2] sm:$0xff]
    %v828 = vld [vmem:[#allocation2 + $0x1ea] sm:$0xff]
    %v829 = vld [vmem:[#allocation2 + $0x1fa] sm:$0xff]
    %v830 = vld [vmem:[#allocation2 + $0x202] sm:$0xff]
    %v831 = vld [vmem:[#allocation2 + $0x212] sm:$0xff]
    %v832 = vld [vmem:[#allocation2 + $0x21a] sm:$0xff]
    %v833 = vld [vmem:[#allocation2 + $0x22a] sm:$0xff]
    %v834 = vld [vmem:[#allocation2 + $0x232] sm:$0xff]
    %v835 = vld [vmem:[#allocation2 + $0x242] sm:$0xff]
    %v836 = vld [vmem:[#allocation2 + $0x24a] sm:$0xff]
    %v837 = vld [vmem:[#allocation2 + $0x25a] sm:$0xff]
    %v838 = vld [vmem:[#allocation2 + $0x262] sm:$0xff]
    %v839 = vld [vmem:[#allocation2 + $0x272] sm:$0xff]
    %v840 = vld [vmem:[#allocation2 + $0x27a] sm:$0xff]
    %v841 = vld [vmem:[#allocation2 + $0x28a] sm:$0xff]
    %v842 = vld [vmem:[#allocation2 + $0x292] sm:$0xff]
    %v843 = vld [vmem:[#allocation2 + $0x2a2] sm:$0xff]
    %v844 = vld [vmem:[#allocation2 + $0x2aa] sm:$0xff]
    %v845 = vld [vmem:[#allocation2 + $0x2ba] sm:$0xff]
    %v846 = vld [vmem:[#allocation2 + $0x2c2] sm:$0xff]
    %v847 = vld [vmem:[#allocation2 + $0x2d2] sm:$0xff]
    %v848 = vld [vmem:[#allocation2 + $0x2da] sm:$0xff]
    %v849 = vld [vmem:[#allocation2 + $0x2ea] sm:$0xff]
    %v850 = vld [vmem:[#allocation2 + $0x2f2] sm:$0xff]
    %v851 = vld [vmem:[#allocation2 + $0x302] sm:$0xff]
    %v852 = vld [vmem:[#allocation2 + $0x30a] sm:$0xff]
    %v853 = vld [vmem:[#allocation2 + $0x31a] sm:$0xff]
    %v854 = vld [vmem:[#allocation2 + $0x322] sm:$0xff]
    %919 = vrot.lane.b32.xlu0 %v791, 2
    %v920 = vpop.permute.xlu0 %919
    %921 = vrot.lane.b32.xlu0 %v792, 2
    %v922 = vpop.permute.xlu0 %921
    %923 = vrot.lane.b32.xlu0 %v793, 2
    %v924 = vpop.permute.xlu0 %923
    %925 = vrot.lane.b32.xlu0 %v794, 2
    %v926 = vpop.permute.xlu0 %925
    %927 = vrot.lane.b32.xlu0 %v795, 2
    %v928 = vpop.permute.xlu0 %927
    %929 = vrot.lane.b32.xlu0 %v796, 2
    %v930 = vpop.permute.xlu0 %929
    %931 = vrot.lane.b32.xlu0 %v797, 2
    %v932 = vpop.permute.xlu0 %931
    %933 = vrot.lane.b32.xlu0 %v798, 2
    %v934 = vpop.permute.xlu0 %933
    %935 = vrot.lane.b32.xlu0 %v799, 2
    %v936 = vpop.permute.xlu0 %935
    %937 = vrot.lane.b32.xlu0 %v800, 2
    %v938 = vpop.permute.xlu0 %937
    %939 = vrot.lane.b32.xlu0 %v801, 2
    %v940 = vpop.permute.xlu0 %939
    %941 = vrot.lane.b32.xlu0 %v802, 2
    %v942 = vpop.permute.xlu0 %941
    %943 = vrot.lane.b32.xlu0 %v803, 2
    %v944 = vpop.permute.xlu0 %943
    %945 = vrot.lane.b32.xlu0 %v804, 2
    %v946 = vpop.permute.xlu0 %945
    %947 = vrot.lane.b32.xlu0 %v805, 2
    %v948 = vpop.permute.xlu0 %947
    %949 = vrot.lane.b32.xlu0 %v806, 2
    %v950 = vpop.permute.xlu0 %949
    %951 = vrot.lane.b32.xlu0 %v807, 2
    %v952 = vpop.permute.xlu0 %951
    %953 = vrot.lane.b32.xlu0 %v808, 2
    %v954 = vpop.permute.xlu0 %953
    %955 = vrot.lane.b32.xlu0 %v809, 2
    %v956 = vpop.permute.xlu0 %955
    %957 = vrot.lane.b32.xlu0 %v810, 2
    %v958 = vpop.permute.xlu0 %957
    %959 = vrot.lane.b32.xlu0 %v811, 2
    %v960 = vpop.permute.xlu0 %959
    %961 = vrot.lane.b32.xlu0 %v812, 2
    %v962 = vpop.permute.xlu0 %961
    %963 = vrot.lane.b32.xlu0 %v813, 2
    %v964 = vpop.permute.xlu0 %963
    %965 = vrot.lane.b32.xlu0 %v814, 2
    %v966 = vpop.permute.xlu0 %965
    %967 = vrot.lane.b32.xlu0 %v815, 2
    %v968 = vpop.permute.xlu0 %967
    %969 = vrot.lane.b32.xlu0 %v816, 2
    %v970 = vpop.permute.xlu0 %969
    %971 = vrot.lane.b32.xlu0 %v817, 2
    %v972 = vpop.permute.xlu0 %971
    %973 = vrot.lane.b32.xlu0 %v818, 2
    %v974 = vpop.permute.xlu0 %973
    %975 = vrot.lane.b32.xlu0 %v819, 2
    %v976 = vpop.permute.xlu0 %975
    %977 = vrot.lane.b32.xlu0 %v820, 2
    %v978 = vpop.permute.xlu0 %977
    %979 = vrot.lane.b32.xlu0 %v821, 2
    %v980 = vpop.permute.xlu0 %979
    %981 = vrot.lane.b32.xlu0 %v822, 2
    %v982 = vpop.permute.xlu0 %981
    %983 = vrot.lane.b32.xlu0 %v823, 2
    %v984 = vpop.permute.xlu0 %983
    %985 = vrot.lane.b32.xlu0 %v824, 2
    %v986 = vpop.permute.xlu0 %985
    %987 = vrot.lane.b32.xlu0 %v825, 2
    %v988 = vpop.permute.xlu0 %987
    %989 = vrot.lane.b32.xlu0 %v826, 2
    %v990 = vpop.permute.xlu0 %989
    %991 = vrot.lane.b32.xlu0 %v827, 2
    %v992 = vpop.permute.xlu0 %991
    %993 = vrot.lane.b32.xlu0 %v828, 2
    %v994 = vpop.permute.xlu0 %993
    %995 = vrot.lane.b32.xlu0 %v829, 2
    %v996 = vpop.permute.xlu0 %995
    %997 = vrot.lane.b32.xlu0 %v830, 2
    %v998 = vpop.permute.xlu0 %997
    %999 = vrot.lane.b32.xlu0 %v831, 2
    %v1000 = vpop.permute.xlu0 %999
    %1001 = vrot.lane.b32.xlu0 %v832, 2
    %v1002 = vpop.permute.xlu0 %1001
    %1003 = vrot.lane.b32.xlu0 %v833, 2
    %v1004 = vpop.permute.xlu0 %1003
    %1005 = vrot.lane.b32.xlu0 %v834, 2
    %v1006 = vpop.permute.xlu0 %1005
    %1007 = vrot.lane.b32.xlu0 %v835, 2
    %v1008 = vpop.permute.xlu0 %1007
    %1009 = vrot.lane.b32.xlu0 %v836, 2
    %v1010 = vpop.permute.xlu0 %1009
    %1011 = vrot.lane.b32.xlu0 %v837, 2
    %v1012 = vpop.permute.xlu0 %1011
    %1013 = vrot.lane.b32.xlu0 %v838, 2
    %v1014 = vpop.permute.xlu0 %1013
    %1015 = vrot.lane.b32.xlu0 %v839, 2
    %v1016 = vpop.permute.xlu0 %1015
    %1017 = vrot.lane.b32.xlu0 %v840, 2
    %v1018 = vpop.permute.xlu0 %1017
    %1019 = vrot.lane.b32.xlu0 %v841, 2
    %v1020 = vpop.permute.xlu0 %1019
    %1021 = vrot.lane.b32.xlu0 %v842, 2
    %v1022 = vpop.permute.xlu0 %1021
    %1023 = vrot.lane.b32.xlu0 %v843, 2
    %v1024 = vpop.permute.xlu0 %1023
    %1025 = vrot.lane.b32.xlu0 %v844, 2
    %v1026 = vpop.permute.xlu0 %1025
    %1027 = vrot.lane.b32.xlu0 %v845, 2
    %v1028 = vpop.permute.xlu0 %1027
    %1029 = vrot.lane.b32.xlu0 %v846, 2
    %v1030 = vpop.permute.xlu0 %1029
    %1031 = vrot.lane.b32.xlu0 %v847, 2
    %v1032 = vpop.permute.xlu0 %1031
    %1033 = vrot.lane.b32.xlu0 %v848, 2
    %v1034 = vpop.permute.xlu0 %1033
    %1035 = vrot.lane.b32.xlu0 %v849, 2
    %v1036 = vpop.permute.xlu0 %1035
    %1037 = vrot.lane.b32.xlu0 %v850, 2
    %v1038 = vpop.permute.xlu0 %1037
    %1039 = vrot.lane.b32.xlu0 %v851, 2
    %v1040 = vpop.permute.xlu0 %1039
    %1041 = vrot.lane.b32.xlu0 %v852, 2
    %v1042 = vpop.permute.xlu0 %1041
    %1043 = vrot.lane.b32.xlu0 %v853, 2
    %v1044 = vpop.permute.xlu0 %1043
    %1045 = vrot.lane.b32.xlu0 %v854, 2
    %v1046 = vpop.permute.xlu0 %1045
    %vm1111 = vcmask 23568
    %1112 = vst.msk [vmem:[#allocation3] sm:$0xff] %vm1111, %v920
    %1113 = vst.msk [vmem:[#allocation3 + $0x8] sm:$0xff] %vm1111, %v922
    %1114 = vst.msk [vmem:[#allocation3 + $0x10] sm:$0xff] %vm1111, %v924
    %1115 = vst.msk [vmem:[#allocation3 + $0x18] sm:$0xff] %vm1111, %v926
    %1116 = vst.msk [vmem:[#allocation3 + $0x20] sm:$0xff] %vm1111, %v928
    %1117 = vst.msk [vmem:[#allocation3 + $0x28] sm:$0xff] %vm1111, %v930
    %1118 = vst.msk [vmem:[#allocation3 + $0x30] sm:$0xff] %vm1111, %v932
    %1119 = vst.msk [vmem:[#allocation3 + $0x38] sm:$0xff] %vm1111, %v934
    %1120 = vst.msk [vmem:[#allocation3 + $0x40] sm:$0xff] %vm1111, %v936
    %1121 = vst.msk [vmem:[#allocation3 + $0x48] sm:$0xff] %vm1111, %v938
    %1122 = vst.msk [vmem:[#allocation3 + $0x50] sm:$0xff] %vm1111, %v940
    %1123 = vst.msk [vmem:[#allocation3 + $0x58] sm:$0xff] %vm1111, %v942
    %1124 = vst.msk [vmem:[#allocation3 + $0x60] sm:$0xff] %vm1111, %v944
    %1125 = vst.msk [vmem:[#allocation3 + $0x68] sm:$0xff] %vm1111, %v946
    %1126 = vst.msk [vmem:[#allocation3 + $0x70] sm:$0xff] %vm1111, %v948
    %1127 = vst.msk [vmem:[#allocation3 + $0x78] sm:$0xff] %vm1111, %v950
    %1128 = vst.msk [vmem:[#allocation3 + $0x80] sm:$0xff] %vm1111, %v952
    %1129 = vst.msk [vmem:[#allocation3 + $0x88] sm:$0xff] %vm1111, %v954
    %1130 = vst.msk [vmem:[#allocation3 + $0x90] sm:$0xff] %vm1111, %v956
    %1131 = vst.msk [vmem:[#allocation3 + $0x98] sm:$0xff] %vm1111, %v958
    %1132 = vst.msk [vmem:[#allocation3 + $0xa0] sm:$0xff] %vm1111, %v960
    %1133 = vst.msk [vmem:[#allocation3 + $0xa8] sm:$0xff] %vm1111, %v962
    %1134 = vst.msk [vmem:[#allocation3 + $0xb0] sm:$0xff] %vm1111, %v964
    %1135 = vst.msk [vmem:[#allocation3 + $0xb8] sm:$0xff] %vm1111, %v966
    %1136 = vst.msk [vmem:[#allocation3 + $0xc0] sm:$0xff] %vm1111, %v968
    %1137 = vst.msk [vmem:[#allocation3 + $0xc8] sm:$0xff] %vm1111, %v970
    %1138 = vst.msk [vmem:[#allocation3 + $0xd0] sm:$0xff] %vm1111, %v972
    %1139 = vst.msk [vmem:[#allocation3 + $0xd8] sm:$0xff] %vm1111, %v974
    %1140 = vst.msk [vmem:[#allocation3 + $0xe0] sm:$0xff] %vm1111, %v976
    %1141 = vst.msk [vmem:[#allocation3 + $0xe8] sm:$0xff] %vm1111, %v978
    %1142 = vst.msk [vmem:[#allocation3 + $0xf0] sm:$0xff] %vm1111, %v980
    %1143 = vst.msk [vmem:[#allocation3 + $0xf8] sm:$0xff] %vm1111, %v982
    %1144 = vst.msk [vmem:[#allocation3 + $0x100] sm:$0xff] %vm1111, %v984
    %1145 = vst.msk [vmem:[#allocation3 + $0x108] sm:$0xff] %vm1111, %v986
    %1146 = vst.msk [vmem:[#allocation3 + $0x110] sm:$0xff] %vm1111, %v988
    %1147 = vst.msk [vmem:[#allocation3 + $0x118] sm:$0xff] %vm1111, %v990
    %1148 = vst.msk [vmem:[#allocation3 + $0x120] sm:$0xff] %vm1111, %v992
    %1149 = vst.msk [vmem:[#allocation3 + $0x128] sm:$0xff] %vm1111, %v994
    %1150 = vst.msk [vmem:[#allocation3 + $0x130] sm:$0xff] %vm1111, %v996
    %1151 = vst.msk [vmem:[#allocation3 + $0x138] sm:$0xff] %vm1111, %v998
    %1152 = vst.msk [vmem:[#allocation3 + $0x140] sm:$0xff] %vm1111, %v1000
    %1153 = vst.msk [vmem:[#allocation3 + $0x148] sm:$0xff] %vm1111, %v1002
    %1154 = vst.msk [vmem:[#allocation3 + $0x150] sm:$0xff] %vm1111, %v1004
    %1155 = vst.msk [vmem:[#allocation3 + $0x158] sm:$0xff] %vm1111, %v1006
    %1156 = vst.msk [vmem:[#allocation3 + $0x160] sm:$0xff] %vm1111, %v1008
    %1157 = vst.msk [vmem:[#allocation3 + $0x168] sm:$0xff] %vm1111, %v1010
    %1158 = vst.msk [vmem:[#allocation3 + $0x170] sm:$0xff] %vm1111, %v1012
    %1159 = vst.msk [vmem:[#allocation3 + $0x178] sm:$0xff] %vm1111, %v1014
    %1160 = vst.msk [vmem:[#allocation3 + $0x180] sm:$0xff] %vm1111, %v1016
    %1161 = vst.msk [vmem:[#allocation3 + $0x188] sm:$0xff] %vm1111, %v1018
    %1162 = vst.msk [vmem:[#allocation3 + $0x190] sm:$0xff] %vm1111, %v1020
    %1163 = vst.msk [vmem:[#allocation3 + $0x198] sm:$0xff] %vm1111, %v1022
    %1164 = vst.msk [vmem:[#allocation3 + $0x1a0] sm:$0xff] %vm1111, %v1024
    %1165 = vst.msk [vmem:[#allocation3 + $0x1a8] sm:$0xff] %vm1111, %v1026
    %1166 = vst.msk [vmem:[#allocation3 + $0x1b0] sm:$0xff] %vm1111, %v1028
    %1167 = vst.msk [vmem:[#allocation3 + $0x1b8] sm:$0xff] %vm1111, %v1030
    %1168 = vst.msk [vmem:[#allocation3 + $0x1c0] sm:$0xff] %vm1111, %v1032
    %1169 = vst.msk [vmem:[#allocation3 + $0x1c8] sm:$0xff] %vm1111, %v1034
    %1170 = vst.msk [vmem:[#allocation3 + $0x1d0] sm:$0xff] %vm1111, %v1036
    %1171 = vst.msk [vmem:[#allocation3 + $0x1d8] sm:$0xff] %vm1111, %v1038
    %1172 = vst.msk [vmem:[#allocation3 + $0x1e0] sm:$0xff] %vm1111, %v1040
    %1173 = vst.msk [vmem:[#allocation3 + $0x1e8] sm:$0xff] %vm1111, %v1042
    %1174 = vst.msk [vmem:[#allocation3 + $0x1f0] sm:$0xff] %vm1111, %v1044
    %1175 = vst.msk [vmem:[#allocation3 + $0x1f8] sm:$0xff] %vm1111, %v1046
    %v1176 = vld [vmem:[%s213] sm:$0xff]
    %v1177 = vld [vmem:[%s213 + $0x8] sm:$0xff]
    %v1178 = vld [vmem:[%s213 + $0x18] sm:$0xff]
    %v1179 = vld [vmem:[%s213 + $0x20] sm:$0xff]
    %v1180 = vld [vmem:[%s213 + $0x30] sm:$0xff]
    %v1181 = vld [vmem:[%s213 + $0x38] sm:$0xff]
    %v1182 = vld [vmem:[%s213 + $0x48] sm:$0xff]
    %v1183 = vld [vmem:[%s213 + $0x50] sm:$0xff]
    %v1184 = vld [vmem:[%s213 + $0x60] sm:$0xff]
    %v1185 = vld [vmem:[%s213 + $0x68] sm:$0xff]
    %v1186 = vld [vmem:[%s213 + $0x78] sm:$0xff]
    %v1187 = vld [vmem:[%s213 + $0x80] sm:$0xff]
    %v1188 = vld [vmem:[%s213 + $0x90] sm:$0xff]
    %v1189 = vld [vmem:[%s213 + $0x98] sm:$0xff]
    %v1190 = vld [vmem:[%s213 + $0xa8] sm:$0xff]
    %v1191 = vld [vmem:[%s213 + $0xb0] sm:$0xff]
    %v1192 = vld [vmem:[%s213 + $0xc0] sm:$0xff]
    %v1193 = vld [vmem:[%s213 + $0xc8] sm:$0xff]
    %v1194 = vld [vmem:[%s213 + $0xd8] sm:$0xff]
    %v1195 = vld [vmem:[%s213 + $0xe0] sm:$0xff]
    %v1196 = vld [vmem:[%s213 + $0xf0] sm:$0xff]
    %v1197 = vld [vmem:[%s213 + $0xf8] sm:$0xff]
    %v1198 = vld [vmem:[%s213 + $0x108] sm:$0xff]
    %v1199 = vld [vmem:[%s213 + $0x110] sm:$0xff]
    %v1200 = vld [vmem:[%s213 + $0x120] sm:$0xff]
    %v1201 = vld [vmem:[%s213 + $0x128] sm:$0xff]
    %v1202 = vld [vmem:[%s213 + $0x138] sm:$0xff]
    %v1203 = vld [vmem:[%s213 + $0x140] sm:$0xff]
    %v1204 = vld [vmem:[%s213 + $0x150] sm:$0xff]
    %v1205 = vld [vmem:[%s213 + $0x158] sm:$0xff]
    %v1206 = vld [vmem:[%s213 + $0x168] sm:$0xff]
    %v1207 = vld [vmem:[%s213 + $0x170] sm:$0xff]
    %v1208 = vld [vmem:[%s213 + $0x1b0] sm:$0xff]
    %v1209 = vld [vmem:[%s213 + $0x1b8] sm:$0xff]
    %v1210 = vld [vmem:[%s213 + $0x1c8] sm:$0xff]
    %v1211 = vld [vmem:[%s213 + $0x1d0] sm:$0xff]
    %v1212 = vld [vmem:[%s213 + $0x1e0] sm:$0xff]
    %v1213 = vld [vmem:[%s213 + $0x1e8] sm:$0xff]
    %v1214 = vld [vmem:[%s213 + $0x1f8] sm:$0xff]
    %v1215 = vld [vmem:[%s213 + $0x200] sm:$0xff]
    %v1216 = vld [vmem:[%s213 + $0x210] sm:$0xff]
    %v1217 = vld [vmem:[%s213 + $0x218] sm:$0xff]
    %v1218 = vld [vmem:[%s213 + $0x228] sm:$0xff]
    %v1219 = vld [vmem:[%s213 + $0x230] sm:$0xff]
    %v1220 = vld [vmem:[%s213 + $0x240] sm:$0xff]
    %v1221 = vld [vmem:[%s213 + $0x248] sm:$0xff]
    %v1222 = vld [vmem:[%s213 + $0x258] sm:$0xff]
    %v1223 = vld [vmem:[%s213 + $0x260] sm:$0xff]
    %v1224 = vld [vmem:[%s213 + $0x270] sm:$0xff]
    %v1225 = vld [vmem:[%s213 + $0x278] sm:$0xff]
    %v1226 = vld [vmem:[%s213 + $0x288] sm:$0xff]
    %v1227 = vld [vmem:[%s213 + $0x290] sm:$0xff]
    %v1228 = vld [vmem:[%s213 + $0x2a0] sm:$0xff]
    %v1229 = vld [vmem:[%s213 + $0x2a8] sm:$0xff]
    %v1230 = vld [vmem:[%s213 + $0x2b8] sm:$0xff]
    %v1231 = vld [vmem:[%s213 + $0x2c0] sm:$0xff]
    %v1232 = vld [vmem:[%s213 + $0x2d0] sm:$0xff]
    %v1233 = vld [vmem:[%s213 + $0x2d8] sm:$0xff]
    %v1234 = vld [vmem:[%s213 + $0x2e8] sm:$0xff]
    %v1235 = vld [vmem:[%s213 + $0x2f0] sm:$0xff]
    %v1236 = vld [vmem:[%s213 + $0x300] sm:$0xff]
    %v1237 = vld [vmem:[%s213 + $0x308] sm:$0xff]
    %v1238 = vld [vmem:[%s213 + $0x318] sm:$0xff]
    %v1239 = vld [vmem:[%s213 + $0x320] sm:$0xff]
    %1304 = vrot.lane.b32.xlu0 %v1176, 3
    %v1305 = vpop.permute.xlu0 %1304
    %1306 = vrot.lane.b32.xlu0 %v1177, 3
    %v1307 = vpop.permute.xlu0 %1306
    %1308 = vrot.lane.b32.xlu0 %v1178, 3
    %v1309 = vpop.permute.xlu0 %1308
    %1310 = vrot.lane.b32.xlu0 %v1179, 3
    %v1311 = vpop.permute.xlu0 %1310
    %1312 = vrot.lane.b32.xlu0 %v1180, 3
    %v1313 = vpop.permute.xlu0 %1312
    %1314 = vrot.lane.b32.xlu0 %v1181, 3
    %v1315 = vpop.permute.xlu0 %1314
    %1316 = vrot.lane.b32.xlu0 %v1182, 3
    %v1317 = vpop.permute.xlu0 %1316
    %1318 = vrot.lane.b32.xlu0 %v1183, 3
    %v1319 = vpop.permute.xlu0 %1318
    %1320 = vrot.lane.b32.xlu0 %v1184, 3
    %v1321 = vpop.permute.xlu0 %1320
    %1322 = vrot.lane.b32.xlu0 %v1185, 3
    %v1323 = vpop.permute.xlu0 %1322
    %1324 = vrot.lane.b32.xlu0 %v1186, 3
    %v1325 = vpop.permute.xlu0 %1324
    %1326 = vrot.lane.b32.xlu0 %v1187, 3
    %v1327 = vpop.permute.xlu0 %1326
    %1328 = vrot.lane.b32.xlu0 %v1188, 3
    %v1329 = vpop.permute.xlu0 %1328
    %1330 = vrot.lane.b32.xlu0 %v1189, 3
    %v1331 = vpop.permute.xlu0 %1330
    %1332 = vrot.lane.b32.xlu0 %v1190, 3
    %v1333 = vpop.permute.xlu0 %1332
    %1334 = vrot.lane.b32.xlu0 %v1191, 3
    %v1335 = vpop.permute.xlu0 %1334
    %1336 = vrot.lane.b32.xlu0 %v1192, 3
    %v1337 = vpop.permute.xlu0 %1336
    %1338 = vrot.lane.b32.xlu0 %v1193, 3
    %v1339 = vpop.permute.xlu0 %1338
    %1340 = vrot.lane.b32.xlu0 %v1194, 3
    %v1341 = vpop.permute.xlu0 %1340
    %1342 = vrot.lane.b32.xlu0 %v1195, 3
    %v1343 = vpop.permute.xlu0 %1342
    %1344 = vrot.lane.b32.xlu0 %v1196, 3
    %v1345 = vpop.permute.xlu0 %1344
    %1346 = vrot.lane.b32.xlu0 %v1197, 3
    %v1347 = vpop.permute.xlu0 %1346
    %1348 = vrot.lane.b32.xlu0 %v1198, 3
    %v1349 = vpop.permute.xlu0 %1348
    %1350 = vrot.lane.b32.xlu0 %v1199, 3
    %v1351 = vpop.permute.xlu0 %1350
    %1352 = vrot.lane.b32.xlu0 %v1200, 3
    %v1353 = vpop.permute.xlu0 %1352
    %1354 = vrot.lane.b32.xlu0 %v1201, 3
    %v1355 = vpop.permute.xlu0 %1354
    %1356 = vrot.lane.b32.xlu0 %v1202, 3
    %v1357 = vpop.permute.xlu0 %1356
    %1358 = vrot.lane.b32.xlu0 %v1203, 3
    %v1359 = vpop.permute.xlu0 %1358
    %1360 = vrot.lane.b32.xlu0 %v1204, 3
    %v1361 = vpop.permute.xlu0 %1360
    %1362 = vrot.lane.b32.xlu0 %v1205, 3
    %v1363 = vpop.permute.xlu0 %1362
    %1364 = vrot.lane.b32.xlu0 %v1206, 3
    %v1365 = vpop.permute.xlu0 %1364
    %1366 = vrot.lane.b32.xlu0 %v1207, 3
    %v1367 = vpop.permute.xlu0 %1366
    %1368 = vrot.lane.b32.xlu0 %v1208, 3
    %v1369 = vpop.permute.xlu0 %1368
    %1370 = vrot.lane.b32.xlu0 %v1209, 3
    %v1371 = vpop.permute.xlu0 %1370
    %1372 = vrot.lane.b32.xlu0 %v1210, 3
    %v1373 = vpop.permute.xlu0 %1372
    %1374 = vrot.lane.b32.xlu0 %v1211, 3
    %v1375 = vpop.permute.xlu0 %1374
    %1376 = vrot.lane.b32.xlu0 %v1212, 3
    %v1377 = vpop.permute.xlu0 %1376
    %1378 = vrot.lane.b32.xlu0 %v1213, 3
    %v1379 = vpop.permute.xlu0 %1378
    %1380 = vrot.lane.b32.xlu0 %v1214, 3
    %v1381 = vpop.permute.xlu0 %1380
    %1382 = vrot.lane.b32.xlu0 %v1215, 3
    %v1383 = vpop.permute.xlu0 %1382
    %1384 = vrot.lane.b32.xlu0 %v1216, 3
    %v1385 = vpop.permute.xlu0 %1384
    %1386 = vrot.lane.b32.xlu0 %v1217, 3
    %v1387 = vpop.permute.xlu0 %1386
    %1388 = vrot.lane.b32.xlu0 %v1218, 3
    %v1389 = vpop.permute.xlu0 %1388
    %1390 = vrot.lane.b32.xlu0 %v1219, 3
    %v1391 = vpop.permute.xlu0 %1390
    %1392 = vrot.lane.b32.xlu0 %v1220, 3
    %v1393 = vpop.permute.xlu0 %1392
    %1394 = vrot.lane.b32.xlu0 %v1221, 3
    %v1395 = vpop.permute.xlu0 %1394
    %1396 = vrot.lane.b32.xlu0 %v1222, 3
    %v1397 = vpop.permute.xlu0 %1396
    %1398 = vrot.lane.b32.xlu0 %v1223, 3
    %v1399 = vpop.permute.xlu0 %1398
    %1400 = vrot.lane.b32.xlu0 %v1224, 3
    %v1401 = vpop.permute.xlu0 %1400
    %1402 = vrot.lane.b32.xlu0 %v1225, 3
    %v1403 = vpop.permute.xlu0 %1402
    %1404 = vrot.lane.b32.xlu0 %v1226, 3
    %v1405 = vpop.permute.xlu0 %1404
    %1406 = vrot.lane.b32.xlu0 %v1227, 3
    %v1407 = vpop.permute.xlu0 %1406
    %1408 = vrot.lane.b32.xlu0 %v1228, 3
    %v1409 = vpop.permute.xlu0 %1408
    %1410 = vrot.lane.b32.xlu0 %v1229, 3
    %v1411 = vpop.permute.xlu0 %1410
    %1412 = vrot.lane.b32.xlu0 %v1230, 3
    %v1413 = vpop.permute.xlu0 %1412
    %1414 = vrot.lane.b32.xlu0 %v1231, 3
    %v1415 = vpop.permute.xlu0 %1414
    %1416 = vrot.lane.b32.xlu0 %v1232, 3
    %v1417 = vpop.permute.xlu0 %1416
    %1418 = vrot.lane.b32.xlu0 %v1233, 3
    %v1419 = vpop.permute.xlu0 %1418
    %1420 = vrot.lane.b32.xlu0 %v1234, 3
    %v1421 = vpop.permute.xlu0 %1420
    %1422 = vrot.lane.b32.xlu0 %v1235, 3
    %v1423 = vpop.permute.xlu0 %1422
    %1424 = vrot.lane.b32.xlu0 %v1236, 3
    %v1425 = vpop.permute.xlu0 %1424
    %1426 = vrot.lane.b32.xlu0 %v1237, 3
    %v1427 = vpop.permute.xlu0 %1426
    %1428 = vrot.lane.b32.xlu0 %v1238, 3
    %v1429 = vpop.permute.xlu0 %1428
    %1430 = vrot.lane.b32.xlu0 %v1239, 3
    %v1431 = vpop.permute.xlu0 %1430
    %vm1496 = vcmask 31768
    %1497 = vst.msk [vmem:[#allocation3] sm:$0xff] %vm1496, %v1305
    %1498 = vst.msk [vmem:[#allocation3 + $0x8] sm:$0xff] %vm1496, %v1307
    %1499 = vst.msk [vmem:[#allocation3 + $0x10] sm:$0xff] %vm1496, %v1309
    %1500 = vst.msk [vmem:[#allocation3 + $0x18] sm:$0xff] %vm1496, %v1311
    %1501 = vst.msk [vmem:[#allocation3 + $0x20] sm:$0xff] %vm1496, %v1313
    %1502 = vst.msk [vmem:[#allocation3 + $0x28] sm:$0xff] %vm1496, %v1315
    %1503 = vst.msk [vmem:[#allocation3 + $0x30] sm:$0xff] %vm1496, %v1317
    %1504 = vst.msk [vmem:[#allocation3 + $0x38] sm:$0xff] %vm1496, %v1319
    %1505 = vst.msk [vmem:[#allocation3 + $0x40] sm:$0xff] %vm1496, %v1321
    %1506 = vst.msk [vmem:[#allocation3 + $0x48] sm:$0xff] %vm1496, %v1323
    %1507 = vst.msk [vmem:[#allocation3 + $0x50] sm:$0xff] %vm1496, %v1325
    %1508 = vst.msk [vmem:[#allocation3 + $0x58] sm:$0xff] %vm1496, %v1327
    %1509 = vst.msk [vmem:[#allocation3 + $0x60] sm:$0xff] %vm1496, %v1329
    %1510 = vst.msk [vmem:[#allocation3 + $0x68] sm:$0xff] %vm1496, %v1331
    %1511 = vst.msk [vmem:[#allocation3 + $0x70] sm:$0xff] %vm1496, %v1333
    %1512 = vst.msk [vmem:[#allocation3 + $0x78] sm:$0xff] %vm1496, %v1335
    %1513 = vst.msk [vmem:[#allocation3 + $0x80] sm:$0xff] %vm1496, %v1337
    %1514 = vst.msk [vmem:[#allocation3 + $0x88] sm:$0xff] %vm1496, %v1339
    %1515 = vst.msk [vmem:[#allocation3 + $0x90] sm:$0xff] %vm1496, %v1341
    %1516 = vst.msk [vmem:[#allocation3 + $0x98] sm:$0xff] %vm1496, %v1343
    %1517 = vst.msk [vmem:[#allocation3 + $0xa0] sm:$0xff] %vm1496, %v1345
    %1518 = vst.msk [vmem:[#allocation3 + $0xa8] sm:$0xff] %vm1496, %v1347
    %1519 = vst.msk [vmem:[#allocation3 + $0xb0] sm:$0xff] %vm1496, %v1349
    %1520 = vst.msk [vmem:[#allocation3 + $0xb8] sm:$0xff] %vm1496, %v1351
    %1521 = vst.msk [vmem:[#allocation3 + $0xc0] sm:$0xff] %vm1496, %v1353
    %1522 = vst.msk [vmem:[#allocation3 + $0xc8] sm:$0xff] %vm1496, %v1355
    %1523 = vst.msk [vmem:[#allocation3 + $0xd0] sm:$0xff] %vm1496, %v1357
    %1524 = vst.msk [vmem:[#allocation3 + $0xd8] sm:$0xff] %vm1496, %v1359
    %1525 = vst.msk [vmem:[#allocation3 + $0xe0] sm:$0xff] %vm1496, %v1361
    %1526 = vst.msk [vmem:[#allocation3 + $0xe8] sm:$0xff] %vm1496, %v1363
    %1527 = vst.msk [vmem:[#allocation3 + $0xf0] sm:$0xff] %vm1496, %v1365
    %1528 = vst.msk [vmem:[#allocation3 + $0xf8] sm:$0xff] %vm1496, %v1367
    %1529 = vst.msk [vmem:[#allocation3 + $0x100] sm:$0xff] %vm1496, %v1369
    %1530 = vst.msk [vmem:[#allocation3 + $0x108] sm:$0xff] %vm1496, %v1371
    %1531 = vst.msk [vmem:[#allocation3 + $0x110] sm:$0xff] %vm1496, %v1373
    %1532 = vst.msk [vmem:[#allocation3 + $0x118] sm:$0xff] %vm1496, %v1375
    %1533 = vst.msk [vmem:[#allocation3 + $0x120] sm:$0xff] %vm1496, %v1377
    %1534 = vst.msk [vmem:[#allocation3 + $0x128] sm:$0xff] %vm1496, %v1379
    %1535 = vst.msk [vmem:[#allocation3 + $0x130] sm:$0xff] %vm1496, %v1381
    %1536 = vst.msk [vmem:[#allocation3 + $0x138] sm:$0xff] %vm1496, %v1383
    %1537 = vst.msk [vmem:[#allocation3 + $0x140] sm:$0xff] %vm1496, %v1385
    %1538 = vst.msk [vmem:[#allocation3 + $0x148] sm:$0xff] %vm1496, %v1387
    %1539 = vst.msk [vmem:[#allocation3 + $0x150] sm:$0xff] %vm1496, %v1389
    %1540 = vst.msk [vmem:[#allocation3 + $0x158] sm:$0xff] %vm1496, %v1391
    %1541 = vst.msk [vmem:[#allocation3 + $0x160] sm:$0xff] %vm1496, %v1393
    %1542 = vst.msk [vmem:[#allocation3 + $0x168] sm:$0xff] %vm1496, %v1395
    %1543 = vst.msk [vmem:[#allocation3 + $0x170] sm:$0xff] %vm1496, %v1397
    %1544 = vst.msk [vmem:[#allocation3 + $0x178] sm:$0xff] %vm1496, %v1399
    %1545 = vst.msk [vmem:[#allocation3 + $0x180] sm:$0xff] %vm1496, %v1401
    %1546 = vst.msk [vmem:[#allocation3 + $0x188] sm:$0xff] %vm1496, %v1403
    %1547 = vst.msk [vmem:[#allocation3 + $0x190] sm:$0xff] %vm1496, %v1405
    %1548 = vst.msk [vmem:[#allocation3 + $0x198] sm:$0xff] %vm1496, %v1407
    %1549 = vst.msk [vmem:[#allocation3 + $0x1a0] sm:$0xff] %vm1496, %v1409
    %1550 = vst.msk [vmem:[#allocation3 + $0x1a8] sm:$0xff] %vm1496, %v1411
    %1551 = vst.msk [vmem:[#allocation3 + $0x1b0] sm:$0xff] %vm1496, %v1413
    %1552 = vst.msk [vmem:[#allocation3 + $0x1b8] sm:$0xff] %vm1496, %v1415
    %1553 = vst.msk [vmem:[#allocation3 + $0x1c0] sm:$0xff] %vm1496, %v1417
    %1554 = vst.msk [vmem:[#allocation3 + $0x1c8] sm:$0xff] %vm1496, %v1419
    %1555 = vst.msk [vmem:[#allocation3 + $0x1d0] sm:$0xff] %vm1496, %v1421
    %1556 = vst.msk [vmem:[#allocation3 + $0x1d8] sm:$0xff] %vm1496, %v1423
    %1557 = vst.msk [vmem:[#allocation3 + $0x1e0] sm:$0xff] %vm1496, %v1425
    %1558 = vst.msk [vmem:[#allocation3 + $0x1e8] sm:$0xff] %vm1496, %v1427
    %1559 = vst.msk [vmem:[#allocation3 + $0x1f0] sm:$0xff] %vm1496, %v1429
    %1560 = vst.msk [vmem:[#allocation3 + $0x1f8] sm:$0xff] %vm1496, %v1431
    %v1561 = vld [vmem:[%s213 + $0x1] sm:$0xff]
    %v1562 = vld [vmem:[%s213 + $0x9] sm:$0xff]
    %v1563 = vld [vmem:[%s213 + $0x19] sm:$0xff]
    %v1564 = vld [vmem:[%s213 + $0x21] sm:$0xff]
    %v1565 = vld [vmem:[%s213 + $0x31] sm:$0xff]
    %v1566 = vld [vmem:[%s213 + $0x39] sm:$0xff]
    %v1567 = vld [vmem:[%s213 + $0x49] sm:$0xff]
    %v1568 = vld [vmem:[%s213 + $0x51] sm:$0xff]
    %v1569 = vld [vmem:[%s213 + $0x61] sm:$0xff]
    %v1570 = vld [vmem:[%s213 + $0x69] sm:$0xff]
    %v1571 = vld [vmem:[%s213 + $0x79] sm:$0xff]
    %v1572 = vld [vmem:[%s213 + $0x81] sm:$0xff]
    %v1573 = vld [vmem:[%s213 + $0x91] sm:$0xff]
    %v1574 = vld [vmem:[%s213 + $0x99] sm:$0xff]
    %v1575 = vld [vmem:[%s213 + $0xa9] sm:$0xff]
    %v1576 = vld [vmem:[%s213 + $0xb1] sm:$0xff]
    %v1577 = vld [vmem:[%s213 + $0xc1] sm:$0xff]
    %v1578 = vld [vmem:[%s213 + $0xc9] sm:$0xff]
    %v1579 = vld [vmem:[%s213 + $0xd9] sm:$0xff]
    %v1580 = vld [vmem:[%s213 + $0xe1] sm:$0xff]
    %v1581 = vld [vmem:[%s213 + $0xf1] sm:$0xff]
    %v1582 = vld [vmem:[%s213 + $0xf9] sm:$0xff]
    %v1583 = vld [vmem:[%s213 + $0x109] sm:$0xff]
    %v1584 = vld [vmem:[%s213 + $0x111] sm:$0xff]
    %v1585 = vld [vmem:[%s213 + $0x121] sm:$0xff]
    %v1586 = vld [vmem:[%s213 + $0x129] sm:$0xff]
    %v1587 = vld [vmem:[%s213 + $0x139] sm:$0xff]
    %v1588 = vld [vmem:[%s213 + $0x141] sm:$0xff]
    %v1589 = vld [vmem:[%s213 + $0x151] sm:$0xff]
    %v1590 = vld [vmem:[%s213 + $0x159] sm:$0xff]
    %v1591 = vld [vmem:[%s213 + $0x169] sm:$0xff]
    %v1592 = vld [vmem:[%s213 + $0x171] sm:$0xff]
    %v1593 = vld [vmem:[%s213 + $0x1b1] sm:$0xff]
    %v1594 = vld [vmem:[%s213 + $0x1b9] sm:$0xff]
    %v1595 = vld [vmem:[%s213 + $0x1c9] sm:$0xff]
    %v1596 = vld [vmem:[%s213 + $0x1d1] sm:$0xff]
    %v1597 = vld [vmem:[%s213 + $0x1e1] sm:$0xff]
    %v1598 = vld [vmem:[%s213 + $0x1e9] sm:$0xff]
    %v1599 = vld [vmem:[%s213 + $0x1f9] sm:$0xff]
    %v1600 = vld [vmem:[%s213 + $0x201] sm:$0xff]
    %v1601 = vld [vmem:[%s213 + $0x211] sm:$0xff]
    %v1602 = vld [vmem:[%s213 + $0x219] sm:$0xff]
    %v1603 = vld [vmem:[%s213 + $0x229] sm:$0xff]
    %v1604 = vld [vmem:[%s213 + $0x231] sm:$0xff]
    %v1605 = vld [vmem:[%s213 + $0x241] sm:$0xff]
    %v1606 = vld [vmem:[%s213 + $0x249] sm:$0xff]
    %v1607 = vld [vmem:[%s213 + $0x259] sm:$0xff]
    %v1608 = vld [vmem:[%s213 + $0x261] sm:$0xff]
    %v1609 = vld [vmem:[%s213 + $0x271] sm:$0xff]
    %v1610 = vld [vmem:[%s213 + $0x279] sm:$0xff]
    %v1611 = vld [vmem:[%s213 + $0x289] sm:$0xff]
    %v1612 = vld [vmem:[%s213 + $0x291] sm:$0xff]
    %v1613 = vld [vmem:[%s213 + $0x2a1] sm:$0xff]
    %v1614 = vld [vmem:[%s213 + $0x2a9] sm:$0xff]
    %v1615 = vld [vmem:[%s213 + $0x2b9] sm:$0xff]
    %v1616 = vld [vmem:[%s213 + $0x2c1] sm:$0xff]
    %v1617 = vld [vmem:[%s213 + $0x2d1] sm:$0xff]
    %v1618 = vld [vmem:[%s213 + $0x2d9] sm:$0xff]
    %v1619 = vld [vmem:[%s213 + $0x2e9] sm:$0xff]
    %v1620 = vld [vmem:[%s213 + $0x2f1] sm:$0xff]
    %v1621 = vld [vmem:[%s213 + $0x301] sm:$0xff]
    %v1622 = vld [vmem:[%s213 + $0x309] sm:$0xff]
    %v1623 = vld [vmem:[%s213 + $0x319] sm:$0xff]
    %v1624 = vld [vmem:[%s213 + $0x321] sm:$0xff]
    %1689 = vrot.lane.b32.xlu0 %v1561, 4
    %v1690 = vpop.permute.xlu0 %1689
    %1691 = vrot.lane.b32.xlu0 %v1562, 4
    %v1692 = vpop.permute.xlu0 %1691
    %1693 = vrot.lane.b32.xlu0 %v1563, 4
    %v1694 = vpop.permute.xlu0 %1693
    %1695 = vrot.lane.b32.xlu0 %v1564, 4
    %v1696 = vpop.permute.xlu0 %1695
    %1697 = vrot.lane.b32.xlu0 %v1565, 4
    %v1698 = vpop.permute.xlu0 %1697
    %1699 = vrot.lane.b32.xlu0 %v1566, 4
    %v1700 = vpop.permute.xlu0 %1699
    %1701 = vrot.lane.b32.xlu0 %v1567, 4
    %v1702 = vpop.permute.xlu0 %1701
    %1703 = vrot.lane.b32.xlu0 %v1568, 4
    %v1704 = vpop.permute.xlu0 %1703
    %1705 = vrot.lane.b32.xlu0 %v1569, 4
    %v1706 = vpop.permute.xlu0 %1705
    %1707 = vrot.lane.b32.xlu0 %v1570, 4
    %v1708 = vpop.permute.xlu0 %1707
    %1709 = vrot.lane.b32.xlu0 %v1571, 4
    %v1710 = vpop.permute.xlu0 %1709
    %1711 = vrot.lane.b32.xlu0 %v1572, 4
    %v1712 = vpop.permute.xlu0 %1711
    %1713 = vrot.lane.b32.xlu0 %v1573, 4
    %v1714 = vpop.permute.xlu0 %1713
    %1715 = vrot.lane.b32.xlu0 %v1574, 4
    %v1716 = vpop.permute.xlu0 %1715
    %1717 = vrot.lane.b32.xlu0 %v1575, 4
    %v1718 = vpop.permute.xlu0 %1717
    %1719 = vrot.lane.b32.xlu0 %v1576, 4
    %v1720 = vpop.permute.xlu0 %1719
    %1721 = vrot.lane.b32.xlu0 %v1577, 4
    %v1722 = vpop.permute.xlu0 %1721
    %1723 = vrot.lane.b32.xlu0 %v1578, 4
    %v1724 = vpop.permute.xlu0 %1723
    %1725 = vrot.lane.b32.xlu0 %v1579, 4
    %v1726 = vpop.permute.xlu0 %1725
    %1727 = vrot.lane.b32.xlu0 %v1580, 4
    %v1728 = vpop.permute.xlu0 %1727
    %1729 = vrot.lane.b32.xlu0 %v1581, 4
    %v1730 = vpop.permute.xlu0 %1729
    %1731 = vrot.lane.b32.xlu0 %v1582, 4
    %v1732 = vpop.permute.xlu0 %1731
    %1733 = vrot.lane.b32.xlu0 %v1583, 4
    %v1734 = vpop.permute.xlu0 %1733
    %1735 = vrot.lane.b32.xlu0 %v1584, 4
    %v1736 = vpop.permute.xlu0 %1735
    %1737 = vrot.lane.b32.xlu0 %v1585, 4
    %v1738 = vpop.permute.xlu0 %1737
    %1739 = vrot.lane.b32.xlu0 %v1586, 4
    %v1740 = vpop.permute.xlu0 %1739
    %1741 = vrot.lane.b32.xlu0 %v1587, 4
    %v1742 = vpop.permute.xlu0 %1741
    %1743 = vrot.lane.b32.xlu0 %v1588, 4
    %v1744 = vpop.permute.xlu0 %1743
    %1745 = vrot.lane.b32.xlu0 %v1589, 4
    %v1746 = vpop.permute.xlu0 %1745
    %1747 = vrot.lane.b32.xlu0 %v1590, 4
    %v1748 = vpop.permute.xlu0 %1747
    %1749 = vrot.lane.b32.xlu0 %v1591, 4
    %v1750 = vpop.permute.xlu0 %1749
    %1751 = vrot.lane.b32.xlu0 %v1592, 4
    %v1752 = vpop.permute.xlu0 %1751
    %1753 = vrot.lane.b32.xlu0 %v1593, 4
    %v1754 = vpop.permute.xlu0 %1753
    %1755 = vrot.lane.b32.xlu0 %v1594, 4
    %v1756 = vpop.permute.xlu0 %1755
    %1757 = vrot.lane.b32.xlu0 %v1595, 4
    %v1758 = vpop.permute.xlu0 %1757
    %1759 = vrot.lane.b32.xlu0 %v1596, 4
    %v1760 = vpop.permute.xlu0 %1759
    %1761 = vrot.lane.b32.xlu0 %v1597, 4
    %v1762 = vpop.permute.xlu0 %1761
    %1763 = vrot.lane.b32.xlu0 %v1598, 4
    %v1764 = vpop.permute.xlu0 %1763
    %1765 = vrot.lane.b32.xlu0 %v1599, 4
    %v1766 = vpop.permute.xlu0 %1765
    %1767 = vrot.lane.b32.xlu0 %v1600, 4
    %v1768 = vpop.permute.xlu0 %1767
    %1769 = vrot.lane.b32.xlu0 %v1601, 4
    %v1770 = vpop.permute.xlu0 %1769
    %1771 = vrot.lane.b32.xlu0 %v1602, 4
    %v1772 = vpop.permute.xlu0 %1771
    %1773 = vrot.lane.b32.xlu0 %v1603, 4
    %v1774 = vpop.permute.xlu0 %1773
    %1775 = vrot.lane.b32.xlu0 %v1604, 4
    %v1776 = vpop.permute.xlu0 %1775
    %1777 = vrot.lane.b32.xlu0 %v1605, 4
    %v1778 = vpop.permute.xlu0 %1777
    %1779 = vrot.lane.b32.xlu0 %v1606, 4
    %v1780 = vpop.permute.xlu0 %1779
    %1781 = vrot.lane.b32.xlu0 %v1607, 4
    %v1782 = vpop.permute.xlu0 %1781
    %1783 = vrot.lane.b32.xlu0 %v1608, 4
    %v1784 = vpop.permute.xlu0 %1783
    %1785 = vrot.lane.b32.xlu0 %v1609, 4
    %v1786 = vpop.permute.xlu0 %1785
    %1787 = vrot.lane.b32.xlu0 %v1610, 4
    %v1788 = vpop.permute.xlu0 %1787
    %1789 = vrot.lane.b32.xlu0 %v1611, 4
    %v1790 = vpop.permute.xlu0 %1789
    %1791 = vrot.lane.b32.xlu0 %v1612, 4
    %v1792 = vpop.permute.xlu0 %1791
    %1793 = vrot.lane.b32.xlu0 %v1613, 4
    %v1794 = vpop.permute.xlu0 %1793
    %1795 = vrot.lane.b32.xlu0 %v1614, 4
    %v1796 = vpop.permute.xlu0 %1795
    %1797 = vrot.lane.b32.xlu0 %v1615, 4
    %v1798 = vpop.permute.xlu0 %1797
    %1799 = vrot.lane.b32.xlu0 %v1616, 4
    %v1800 = vpop.permute.xlu0 %1799
    %1801 = vrot.lane.b32.xlu0 %v1617, 4
    %v1802 = vpop.permute.xlu0 %1801
    %1803 = vrot.lane.b32.xlu0 %v1618, 4
    %v1804 = vpop.permute.xlu0 %1803
    %1805 = vrot.lane.b32.xlu0 %v1619, 4
    %v1806 = vpop.permute.xlu0 %1805
    %1807 = vrot.lane.b32.xlu0 %v1620, 4
    %v1808 = vpop.permute.xlu0 %1807
    %1809 = vrot.lane.b32.xlu0 %v1621, 4
    %v1810 = vpop.permute.xlu0 %1809
    %1811 = vrot.lane.b32.xlu0 %v1622, 4
    %v1812 = vpop.permute.xlu0 %1811
    %1813 = vrot.lane.b32.xlu0 %v1623, 4
    %v1814 = vpop.permute.xlu0 %1813
    %1815 = vrot.lane.b32.xlu0 %v1624, 4
    %v1816 = vpop.permute.xlu0 %1815
    %vm1881 = vcmask 39968
    %1882 = vst.msk [vmem:[#allocation3] sm:$0xff] %vm1881, %v1690
    %1883 = vst.msk [vmem:[#allocation3 + $0x8] sm:$0xff] %vm1881, %v1692
    %1884 = vst.msk [vmem:[#allocation3 + $0x10] sm:$0xff] %vm1881, %v1694
    %1885 = vst.msk [vmem:[#allocation3 + $0x18] sm:$0xff] %vm1881, %v1696
    %1886 = vst.msk [vmem:[#allocation3 + $0x20] sm:$0xff] %vm1881, %v1698
    %1887 = vst.msk [vmem:[#allocation3 + $0x28] sm:$0xff] %vm1881, %v1700
    %1888 = vst.msk [vmem:[#allocation3 + $0x30] sm:$0xff] %vm1881, %v1702
    %1889 = vst.msk [vmem:[#allocation3 + $0x38] sm:$0xff] %vm1881, %v1704
    %1890 = vst.msk [vmem:[#allocation3 + $0x40] sm:$0xff] %vm1881, %v1706
    %1891 = vst.msk [vmem:[#allocation3 + $0x48] sm:$0xff] %vm1881, %v1708
    %1892 = vst.msk [vmem:[#allocation3 + $0x50] sm:$0xff] %vm1881, %v1710
    %1893 = vst.msk [vmem:[#allocation3 + $0x58] sm:$0xff] %vm1881, %v1712
    %1894 = vst.msk [vmem:[#allocation3 + $0x60] sm:$0xff] %vm1881, %v1714
    %1895 = vst.msk [vmem:[#allocation3 + $0x68] sm:$0xff] %vm1881, %v1716
    %1896 = vst.msk [vmem:[#allocation3 + $0x70] sm:$0xff] %vm1881, %v1718
    %1897 = vst.msk [vmem:[#allocation3 + $0x78] sm:$0xff] %vm1881, %v1720
    %1898 = vst.msk [vmem:[#allocation3 + $0x80] sm:$0xff] %vm1881, %v1722
    %1899 = vst.msk [vmem:[#allocation3 + $0x88] sm:$0xff] %vm1881, %v1724
    %1900 = vst.msk [vmem:[#allocation3 + $0x90] sm:$0xff] %vm1881, %v1726
    %1901 = vst.msk [vmem:[#allocation3 + $0x98] sm:$0xff] %vm1881, %v1728
    %1902 = vst.msk [vmem:[#allocation3 + $0xa0] sm:$0xff] %vm1881, %v1730
    %1903 = vst.msk [vmem:[#allocation3 + $0xa8] sm:$0xff] %vm1881, %v1732
    %1904 = vst.msk [vmem:[#allocation3 + $0xb0] sm:$0xff] %vm1881, %v1734
    %1905 = vst.msk [vmem:[#allocation3 + $0xb8] sm:$0xff] %vm1881, %v1736
    %1906 = vst.msk [vmem:[#allocation3 + $0xc0] sm:$0xff] %vm1881, %v1738
    %1907 = vst.msk [vmem:[#allocation3 + $0xc8] sm:$0xff] %vm1881, %v1740
    %1908 = vst.msk [vmem:[#allocation3 + $0xd0] sm:$0xff] %vm1881, %v1742
    %1909 = vst.msk [vmem:[#allocation3 + $0xd8] sm:$0xff] %vm1881, %v1744
    %1910 = vst.msk [vmem:[#allocation3 + $0xe0] sm:$0xff] %vm1881, %v1746
    %1911 = vst.msk [vmem:[#allocation3 + $0xe8] sm:$0xff] %vm1881, %v1748
    %1912 = vst.msk [vmem:[#allocation3 + $0xf0] sm:$0xff] %vm1881, %v1750
    %1913 = vst.msk [vmem:[#allocation3 + $0xf8] sm:$0xff] %vm1881, %v1752
    %1914 = vst.msk [vmem:[#allocation3 + $0x100] sm:$0xff] %vm1881, %v1754
    %1915 = vst.msk [vmem:[#allocation3 + $0x108] sm:$0xff] %vm1881, %v1756
    %1916 = vst.msk [vmem:[#allocation3 + $0x110] sm:$0xff] %vm1881, %v1758
    %1917 = vst.msk [vmem:[#allocation3 + $0x118] sm:$0xff] %vm1881, %v1760
    %1918 = vst.msk [vmem:[#allocation3 + $0x120] sm:$0xff] %vm1881, %v1762
    %1919 = vst.msk [vmem:[#allocation3 + $0x128] sm:$0xff] %vm1881, %v1764
    %1920 = vst.msk [vmem:[#allocation3 + $0x130] sm:$0xff] %vm1881, %v1766
    %1921 = vst.msk [vmem:[#allocation3 + $0x138] sm:$0xff] %vm1881, %v1768
    %1922 = vst.msk [vmem:[#allocation3 + $0x140] sm:$0xff] %vm1881, %v1770
    %1923 = vst.msk [vmem:[#allocation3 + $0x148] sm:$0xff] %vm1881, %v1772
    %1924 = vst.msk [vmem:[#allocation3 + $0x150] sm:$0xff] %vm1881, %v1774
    %1925 = vst.msk [vmem:[#allocation3 + $0x158] sm:$0xff] %vm1881, %v1776
    %1926 = vst.msk [vmem:[#allocation3 + $0x160] sm:$0xff] %vm1881, %v1778
    %1927 = vst.msk [vmem:[#allocation3 + $0x168] sm:$0xff] %vm1881, %v1780
    %1928 = vst.msk [vmem:[#allocation3 + $0x170] sm:$0xff] %vm1881, %v1782
    %1929 = vst.msk [vmem:[#allocation3 + $0x178] sm:$0xff] %vm1881, %v1784
    %1930 = vst.msk [vmem:[#allocation3 + $0x180] sm:$0xff] %vm1881, %v1786
    %1931 = vst.msk [vmem:[#allocation3 + $0x188] sm:$0xff] %vm1881, %v1788
    %1932 = vst.msk [vmem:[#allocation3 + $0x190] sm:$0xff] %vm1881, %v1790
    %1933 = vst.msk [vmem:[#allocation3 + $0x198] sm:$0xff] %vm1881, %v1792
    %1934 = vst.msk [vmem:[#allocation3 + $0x1a0] sm:$0xff] %vm1881, %v1794
    %1935 = vst.msk [vmem:[#allocation3 + $0x1a8] sm:$0xff] %vm1881, %v1796
    %1936 = vst.msk [vmem:[#allocation3 + $0x1b0] sm:$0xff] %vm1881, %v1798
    %1937 = vst.msk [vmem:[#allocation3 + $0x1b8] sm:$0xff] %vm1881, %v1800
    %1938 = vst.msk [vmem:[#allocation3 + $0x1c0] sm:$0xff] %vm1881, %v1802
    %1939 = vst.msk [vmem:[#allocation3 + $0x1c8] sm:$0xff] %vm1881, %v1804
    %1940 = vst.msk [vmem:[#allocation3 + $0x1d0] sm:$0xff] %vm1881, %v1806
    %1941 = vst.msk [vmem:[#allocation3 + $0x1d8] sm:$0xff] %vm1881, %v1808
    %1942 = vst.msk [vmem:[#allocation3 + $0x1e0] sm:$0xff] %vm1881, %v1810
    %1943 = vst.msk [vmem:[#allocation3 + $0x1e8] sm:$0xff] %vm1881, %v1812
    %1944 = vst.msk [vmem:[#allocation3 + $0x1f0] sm:$0xff] %vm1881, %v1814
    %1945 = vst.msk [vmem:[#allocation3 + $0x1f8] sm:$0xff] %vm1881, %v1816
    %v1946 = vld [vmem:[%s213 + $0x2] sm:$0xff]
    %v1947 = vld [vmem:[%s213 + $0xa] sm:$0xff]
    %v1948 = vld [vmem:[%s213 + $0x1a] sm:$0xff]
    %v1949 = vld [vmem:[%s213 + $0x22] sm:$0xff]
    %v1950 = vld [vmem:[%s213 + $0x32] sm:$0xff]
    %v1951 = vld [vmem:[%s213 + $0x3a] sm:$0xff]
    %v1952 = vld [vmem:[%s213 + $0x4a] sm:$0xff]
    %v1953 = vld [vmem:[%s213 + $0x52] sm:$0xff]
    %v1954 = vld [vmem:[%s213 + $0x62] sm:$0xff]
    %v1955 = vld [vmem:[%s213 + $0x6a] sm:$0xff]
    %v1956 = vld [vmem:[%s213 + $0x7a] sm:$0xff]
    %v1957 = vld [vmem:[%s213 + $0x82] sm:$0xff]
    %v1958 = vld [vmem:[%s213 + $0x92] sm:$0xff]
    %v1959 = vld [vmem:[%s213 + $0x9a] sm:$0xff]
    %v1960 = vld [vmem:[%s213 + $0xaa] sm:$0xff]
    %v1961 = vld [vmem:[%s213 + $0xb2] sm:$0xff]
    %v1962 = vld [vmem:[%s213 + $0xc2] sm:$0xff]
    %v1963 = vld [vmem:[%s213 + $0xca] sm:$0xff]
    %v1964 = vld [vmem:[%s213 + $0xda] sm:$0xff]
    %v1965 = vld [vmem:[%s213 + $0xe2] sm:$0xff]
    %v1966 = vld [vmem:[%s213 + $0xf2] sm:$0xff]
    %v1967 = vld [vmem:[%s213 + $0xfa] sm:$0xff]
    %v1968 = vld [vmem:[%s213 + $0x10a] sm:$0xff]
    %v1969 = vld [vmem:[%s213 + $0x112] sm:$0xff]
    %v1970 = vld [vmem:[%s213 + $0x122] sm:$0xff]
    %v1971 = vld [vmem:[%s213 + $0x12a] sm:$0xff]
    %v1972 = vld [vmem:[%s213 + $0x13a] sm:$0xff]
    %v1973 = vld [vmem:[%s213 + $0x142] sm:$0xff]
    %v1974 = vld [vmem:[%s213 + $0x152] sm:$0xff]
    %v1975 = vld [vmem:[%s213 + $0x15a] sm:$0xff]
    %v1976 = vld [vmem:[%s213 + $0x16a] sm:$0xff]
    %v1977 = vld [vmem:[%s213 + $0x172] sm:$0xff]
    %v1978 = vld [vmem:[%s213 + $0x1b2] sm:$0xff]
    %v1979 = vld [vmem:[%s213 + $0x1ba] sm:$0xff]
    %v1980 = vld [vmem:[%s213 + $0x1ca] sm:$0xff]
    %v1981 = vld [vmem:[%s213 + $0x1d2] sm:$0xff]
    %v1982 = vld [vmem:[%s213 + $0x1e2] sm:$0xff]
    %v1983 = vld [vmem:[%s213 + $0x1ea] sm:$0xff]
    %v1984 = vld [vmem:[%s213 + $0x1fa] sm:$0xff]
    %v1985 = vld [vmem:[%s213 + $0x202] sm:$0xff]
    %v1986 = vld [vmem:[%s213 + $0x212] sm:$0xff]
    %v1987 = vld [vmem:[%s213 + $0x21a] sm:$0xff]
    %v1988 = vld [vmem:[%s213 + $0x22a] sm:$0xff]
    %v1989 = vld [vmem:[%s213 + $0x232] sm:$0xff]
    %v1990 = vld [vmem:[%s213 + $0x242] sm:$0xff]
    %v1991 = vld [vmem:[%s213 + $0x24a] sm:$0xff]
    %v1992 = vld [vmem:[%s213 + $0x25a] sm:$0xff]
    %v1993 = vld [vmem:[%s213 + $0x262] sm:$0xff]
    %v1994 = vld [vmem:[%s213 + $0x272] sm:$0xff]
    %v1995 = vld [vmem:[%s213 + $0x27a] sm:$0xff]
    %v1996 = vld [vmem:[%s213 + $0x28a] sm:$0xff]
    %v1997 = vld [vmem:[%s213 + $0x292] sm:$0xff]
    %v1998 = vld [vmem:[%s213 + $0x2a2] sm:$0xff]
    %v1999 = vld [vmem:[%s213 + $0x2aa] sm:$0xff]
    %v2000 = vld [vmem:[%s213 + $0x2ba] sm:$0xff]
    %v2001 = vld [vmem:[%s213 + $0x2c2] sm:$0xff]
    %v2002 = vld [vmem:[%s213 + $0x2d2] sm:$0xff]
    %v2003 = vld [vmem:[%s213 + $0x2da] sm:$0xff]
    %v2004 = vld [vmem:[%s213 + $0x2ea] sm:$0xff]
    %v2005 = vld [vmem:[%s213 + $0x2f2] sm:$0xff]
    %v2006 = vld [vmem:[%s213 + $0x302] sm:$0xff]
    %v2007 = vld [vmem:[%s213 + $0x30a] sm:$0xff]
    %v2008 = vld [vmem:[%s213 + $0x31a] sm:$0xff]
    %v2009 = vld [vmem:[%s213 + $0x322] sm:$0xff]
    %2074 = vrot.lane.b32.xlu0 %v1946, 5
    %v2075 = vpop.permute.xlu0 %2074
    %2076 = vrot.lane.b32.xlu0 %v1947, 5
    %v2077 = vpop.permute.xlu0 %2076
    %2078 = vrot.lane.b32.xlu0 %v1948, 5
    %v2079 = vpop.permute.xlu0 %2078
    %2080 = vrot.lane.b32.xlu0 %v1949, 5
    %v2081 = vpop.permute.xlu0 %2080
    %2082 = vrot.lane.b32.xlu0 %v1950, 5
    %v2083 = vpop.permute.xlu0 %2082
    %2084 = vrot.lane.b32.xlu0 %v1951, 5
    %v2085 = vpop.permute.xlu0 %2084
    %2086 = vrot.lane.b32.xlu0 %v1952, 5
    %v2087 = vpop.permute.xlu0 %2086
    %2088 = vrot.lane.b32.xlu0 %v1953, 5
    %v2089 = vpop.permute.xlu0 %2088
    %2090 = vrot.lane.b32.xlu0 %v1954, 5
    %v2091 = vpop.permute.xlu0 %2090
    %2092 = vrot.lane.b32.xlu0 %v1955, 5
    %v2093 = vpop.permute.xlu0 %2092
    %2094 = vrot.lane.b32.xlu0 %v1956, 5
    %v2095 = vpop.permute.xlu0 %2094
    %2096 = vrot.lane.b32.xlu0 %v1957, 5
    %v2097 = vpop.permute.xlu0 %2096
    %2098 = vrot.lane.b32.xlu0 %v1958, 5
    %v2099 = vpop.permute.xlu0 %2098
    %2100 = vrot.lane.b32.xlu0 %v1959, 5
    %v2101 = vpop.permute.xlu0 %2100
    %2102 = vrot.lane.b32.xlu0 %v1960, 5
    %v2103 = vpop.permute.xlu0 %2102
    %2104 = vrot.lane.b32.xlu0 %v1961, 5
    %v2105 = vpop.permute.xlu0 %2104
    %2106 = vrot.lane.b32.xlu0 %v1962, 5
    %v2107 = vpop.permute.xlu0 %2106
    %2108 = vrot.lane.b32.xlu0 %v1963, 5
    %v2109 = vpop.permute.xlu0 %2108
    %2110 = vrot.lane.b32.xlu0 %v1964, 5
    %v2111 = vpop.permute.xlu0 %2110
    %2112 = vrot.lane.b32.xlu0 %v1965, 5
    %v2113 = vpop.permute.xlu0 %2112
    %2114 = vrot.lane.b32.xlu0 %v1966, 5
    %v2115 = vpop.permute.xlu0 %2114
    %2116 = vrot.lane.b32.xlu0 %v1967, 5
    %v2117 = vpop.permute.xlu0 %2116
    %2118 = vrot.lane.b32.xlu0 %v1968, 5
    %v2119 = vpop.permute.xlu0 %2118
    %2120 = vrot.lane.b32.xlu0 %v1969, 5
    %v2121 = vpop.permute.xlu0 %2120
    %2122 = vrot.lane.b32.xlu0 %v1970, 5
    %v2123 = vpop.permute.xlu0 %2122
    %2124 = vrot.lane.b32.xlu0 %v1971, 5
    %v2125 = vpop.permute.xlu0 %2124
    %2126 = vrot.lane.b32.xlu0 %v1972, 5
    %v2127 = vpop.permute.xlu0 %2126
    %2128 = vrot.lane.b32.xlu0 %v1973, 5
    %v2129 = vpop.permute.xlu0 %2128
    %2130 = vrot.lane.b32.xlu0 %v1974, 5
    %v2131 = vpop.permute.xlu0 %2130
    %2132 = vrot.lane.b32.xlu0 %v1975, 5
    %v2133 = vpop.permute.xlu0 %2132
    %2134 = vrot.lane.b32.xlu0 %v1976, 5
    %v2135 = vpop.permute.xlu0 %2134
    %2136 = vrot.lane.b32.xlu0 %v1977, 5
    %v2137 = vpop.permute.xlu0 %2136
    %2138 = vrot.lane.b32.xlu0 %v1978, 5
    %v2139 = vpop.permute.xlu0 %2138
    %2140 = vrot.lane.b32.xlu0 %v1979, 5
    %v2141 = vpop.permute.xlu0 %2140
    %2142 = vrot.lane.b32.xlu0 %v1980, 5
    %v2143 = vpop.permute.xlu0 %2142
    %2144 = vrot.lane.b32.xlu0 %v1981, 5
    %v2145 = vpop.permute.xlu0 %2144
    %2146 = vrot.lane.b32.xlu0 %v1982, 5
    %v2147 = vpop.permute.xlu0 %2146
    %2148 = vrot.lane.b32.xlu0 %v1983, 5
    %v2149 = vpop.permute.xlu0 %2148
    %2150 = vrot.lane.b32.xlu0 %v1984, 5
    %v2151 = vpop.permute.xlu0 %2150
    %2152 = vrot.lane.b32.xlu0 %v1985, 5
    %v2153 = vpop.permute.xlu0 %2152
    %2154 = vrot.lane.b32.xlu0 %v1986, 5
    %v2155 = vpop.permute.xlu0 %2154
    %2156 = vrot.lane.b32.xlu0 %v1987, 5
    %v2157 = vpop.permute.xlu0 %2156
    %2158 = vrot.lane.b32.xlu0 %v1988, 5
    %v2159 = vpop.permute.xlu0 %2158
    %2160 = vrot.lane.b32.xlu0 %v1989, 5
    %v2161 = vpop.permute.xlu0 %2160
    %2162 = vrot.lane.b32.xlu0 %v1990, 5
    %v2163 = vpop.permute.xlu0 %2162
    %2164 = vrot.lane.b32.xlu0 %v1991, 5
    %v2165 = vpop.permute.xlu0 %2164
    %2166 = vrot.lane.b32.xlu0 %v1992, 5
    %v2167 = vpop.permute.xlu0 %2166
    %2168 = vrot.lane.b32.xlu0 %v1993, 5
    %v2169 = vpop.permute.xlu0 %2168
    %2170 = vrot.lane.b32.xlu0 %v1994, 5
    %v2171 = vpop.permute.xlu0 %2170
    %2172 = vrot.lane.b32.xlu0 %v1995, 5
    %v2173 = vpop.permute.xlu0 %2172
    %2174 = vrot.lane.b32.xlu0 %v1996, 5
    %v2175 = vpop.permute.xlu0 %2174
    %2176 = vrot.lane.b32.xlu0 %v1997, 5
    %v2177 = vpop.permute.xlu0 %2176
    %2178 = vrot.lane.b32.xlu0 %v1998, 5
    %v2179 = vpop.permute.xlu0 %2178
    %2180 = vrot.lane.b32.xlu0 %v1999, 5
    %v2181 = vpop.permute.xlu0 %2180
    %2182 = vrot.lane.b32.xlu0 %v2000, 5
    %v2183 = vpop.permute.xlu0 %2182
    %2184 = vrot.lane.b32.xlu0 %v2001, 5
    %v2185 = vpop.permute.xlu0 %2184
    %2186 = vrot.lane.b32.xlu0 %v2002, 5
    %v2187 = vpop.permute.xlu0 %2186
    %2188 = vrot.lane.b32.xlu0 %v2003, 5
    %v2189 = vpop.permute.xlu0 %2188
    %2190 = vrot.lane.b32.xlu0 %v2004, 5
    %v2191 = vpop.permute.xlu0 %2190
    %2192 = vrot.lane.b32.xlu0 %v2005, 5
    %v2193 = vpop.permute.xlu0 %2192
    %2194 = vrot.lane.b32.xlu0 %v2006, 5
    %v2195 = vpop.permute.xlu0 %2194
    %2196 = vrot.lane.b32.xlu0 %v2007, 5
    %v2197 = vpop.permute.xlu0 %2196
    %2198 = vrot.lane.b32.xlu0 %v2008, 5
    %v2199 = vpop.permute.xlu0 %2198
    %2200 = vrot.lane.b32.xlu0 %v2009, 5
    %v2201 = vpop.permute.xlu0 %2200
    %vm2266 = vcmask 48168
    %2267 = vst.msk [vmem:[#allocation3] sm:$0xff] %vm2266, %v2075
    %2268 = vst.msk [vmem:[#allocation3 + $0x8] sm:$0xff] %vm2266, %v2077
    %2269 = vst.msk [vmem:[#allocation3 + $0x10] sm:$0xff] %vm2266, %v2079
    %2270 = vst.msk [vmem:[#allocation3 + $0x18] sm:$0xff] %vm2266, %v2081
    %2271 = vst.msk [vmem:[#allocation3 + $0x20] sm:$0xff] %vm2266, %v2083
    %2272 = vst.msk [vmem:[#allocation3 + $0x28] sm:$0xff] %vm2266, %v2085
    %2273 = vst.msk [vmem:[#allocation3 + $0x30] sm:$0xff] %vm2266, %v2087
    %2274 = vst.msk [vmem:[#allocation3 + $0x38] sm:$0xff] %vm2266, %v2089
    %2275 = vst.msk [vmem:[#allocation3 + $0x40] sm:$0xff] %vm2266, %v2091
    %2276 = vst.msk [vmem:[#allocation3 + $0x48] sm:$0xff] %vm2266, %v2093
    %2277 = vst.msk [vmem:[#allocation3 + $0x50] sm:$0xff] %vm2266, %v2095
    %2278 = vst.msk [vmem:[#allocation3 + $0x58] sm:$0xff] %vm2266, %v2097
    %2279 = vst.msk [vmem:[#allocation3 + $0x60] sm:$0xff] %vm2266, %v2099
    %2280 = vst.msk [vmem:[#allocation3 + $0x68] sm:$0xff] %vm2266, %v2101
    %2281 = vst.msk [vmem:[#allocation3 + $0x70] sm:$0xff] %vm2266, %v2103
    %2282 = vst.msk [vmem:[#allocation3 + $0x78] sm:$0xff] %vm2266, %v2105
    %2283 = vst.msk [vmem:[#allocation3 + $0x80] sm:$0xff] %vm2266, %v2107
    %2284 = vst.msk [vmem:[#allocation3 + $0x88] sm:$0xff] %vm2266, %v2109
    %2285 = vst.msk [vmem:[#allocation3 + $0x90] sm:$0xff] %vm2266, %v2111
    %2286 = vst.msk [vmem:[#allocation3 + $0x98] sm:$0xff] %vm2266, %v2113
    %2287 = vst.msk [vmem:[#allocation3 + $0xa0] sm:$0xff] %vm2266, %v2115
    %2288 = vst.msk [vmem:[#allocation3 + $0xa8] sm:$0xff] %vm2266, %v2117
    %2289 = vst.msk [vmem:[#allocation3 + $0xb0] sm:$0xff] %vm2266, %v2119
    %2290 = vst.msk [vmem:[#allocation3 + $0xb8] sm:$0xff] %vm2266, %v2121
    %2291 = vst.msk [vmem:[#allocation3 + $0xc0] sm:$0xff] %vm2266, %v2123
    %2292 = vst.msk [vmem:[#allocation3 + $0xc8] sm:$0xff] %vm2266, %v2125
    %2293 = vst.msk [vmem:[#allocation3 + $0xd0] sm:$0xff] %vm2266, %v2127
    %2294 = vst.msk [vmem:[#allocation3 + $0xd8] sm:$0xff] %vm2266, %v2129
    %2295 = vst.msk [vmem:[#allocation3 + $0xe0] sm:$0xff] %vm2266, %v2131
    %2296 = vst.msk [vmem:[#allocation3 + $0xe8] sm:$0xff] %vm2266, %v2133
    %2297 = vst.msk [vmem:[#allocation3 + $0xf0] sm:$0xff] %vm2266, %v2135
    %2298 = vst.msk [vmem:[#allocation3 + $0xf8] sm:$0xff] %vm2266, %v2137
    %2299 = vst.msk [vmem:[#allocation3 + $0x100] sm:$0xff] %vm2266, %v2139
    %2300 = vst.msk [vmem:[#allocation3 + $0x108] sm:$0xff] %vm2266, %v2141
    %2301 = vst.msk [vmem:[#allocation3 + $0x110] sm:$0xff] %vm2266, %v2143
    %2302 = vst.msk [vmem:[#allocation3 + $0x118] sm:$0xff] %vm2266, %v2145
    %2303 = vst.msk [vmem:[#allocation3 + $0x120] sm:$0xff] %vm2266, %v2147
    %2304 = vst.msk [vmem:[#allocation3 + $0x128] sm:$0xff] %vm2266, %v2149
    %2305 = vst.msk [vmem:[#allocation3 + $0x130] sm:$0xff] %vm2266, %v2151
    %2306 = vst.msk [vmem:[#allocation3 + $0x138] sm:$0xff] %vm2266, %v2153
    %2307 = vst.msk [vmem:[#allocation3 + $0x140] sm:$0xff] %vm2266, %v2155
    %2308 = vst.msk [vmem:[#allocation3 + $0x148] sm:$0xff] %vm2266, %v2157
    %2309 = vst.msk [vmem:[#allocation3 + $0x150] sm:$0xff] %vm2266, %v2159
    %2310 = vst.msk [vmem:[#allocation3 + $0x158] sm:$0xff] %vm2266, %v2161
    %2311 = vst.msk [vmem:[#allocation3 + $0x160] sm:$0xff] %vm2266, %v2163
    %2312 = vst.msk [vmem:[#allocation3 + $0x168] sm:$0xff] %vm2266, %v2165
    %2313 = vst.msk [vmem:[#allocation3 + $0x170] sm:$0xff] %vm2266, %v2167
    %2314 = vst.msk [vmem:[#allocation3 + $0x178] sm:$0xff] %vm2266, %v2169
    %2315 = vst.msk [vmem:[#allocation3 + $0x180] sm:$0xff] %vm2266, %v2171
    %2316 = vst.msk [vmem:[#allocation3 + $0x188] sm:$0xff] %vm2266, %v2173
    %2317 = vst.msk [vmem:[#allocation3 + $0x190] sm:$0xff] %vm2266, %v2175
    %2318 = vst.msk [vmem:[#allocation3 + $0x198] sm:$0xff] %vm2266, %v2177
    %2319 = vst.msk [vmem:[#allocation3 + $0x1a0] sm:$0xff] %vm2266, %v2179
    %2320 = vst.msk [vmem:[#allocation3 + $0x1a8] sm:$0xff] %vm2266, %v2181
    %2321 = vst.msk [vmem:[#allocation3 + $0x1b0] sm:$0xff] %vm2266, %v2183
    %2322 = vst.msk [vmem:[#allocation3 + $0x1b8] sm:$0xff] %vm2266, %v2185
    %2323 = vst.msk [vmem:[#allocation3 + $0x1c0] sm:$0xff] %vm2266, %v2187
    %2324 = vst.msk [vmem:[#allocation3 + $0x1c8] sm:$0xff] %vm2266, %v2189
    %2325 = vst.msk [vmem:[#allocation3 + $0x1d0] sm:$0xff] %vm2266, %v2191
    %2326 = vst.msk [vmem:[#allocation3 + $0x1d8] sm:$0xff] %vm2266, %v2193
    %2327 = vst.msk [vmem:[#allocation3 + $0x1e0] sm:$0xff] %vm2266, %v2195
    %2328 = vst.msk [vmem:[#allocation3 + $0x1e8] sm:$0xff] %vm2266, %v2197
    %2329 = vst.msk [vmem:[#allocation3 + $0x1f0] sm:$0xff] %vm2266, %v2199
    %2330 = vst.msk [vmem:[#allocation3 + $0x1f8] sm:$0xff] %vm2266, %v2201
    %s2331 = scalar_lea.vmem [#allocation2], 48
    %v2332 = vld [vmem:[%s2331] sm:$0xff]
    %v2333 = vld [vmem:[%s2331 + $0x8] sm:$0xff]
    %v2334 = vld [vmem:[%s2331 + $0x18] sm:$0xff]
    %v2335 = vld [vmem:[%s2331 + $0x20] sm:$0xff]
    %v2336 = vld [vmem:[%s2331 + $0x30] sm:$0xff]
    %v2337 = vld [vmem:[%s2331 + $0x38] sm:$0xff]
    %v2338 = vld [vmem:[%s2331 + $0x48] sm:$0xff]
    %v2339 = vld [vmem:[%s2331 + $0x50] sm:$0xff]
    %v2340 = vld [vmem:[%s2331 + $0x60] sm:$0xff]
    %v2341 = vld [vmem:[%s2331 + $0x68] sm:$0xff]
    %v2342 = vld [vmem:[%s2331 + $0x78] sm:$0xff]
    %v2343 = vld [vmem:[%s2331 + $0x80] sm:$0xff]
    %v2344 = vld [vmem:[%s2331 + $0x90] sm:$0xff]
    %v2345 = vld [vmem:[%s2331 + $0x98] sm:$0xff]
    %v2346 = vld [vmem:[%s2331 + $0xa8] sm:$0xff]
    %v2347 = vld [vmem:[%s2331 + $0xb0] sm:$0xff]
    %v2348 = vld [vmem:[%s2331 + $0xc0] sm:$0xff]
    %v2349 = vld [vmem:[%s2331 + $0xc8] sm:$0xff]
    %v2350 = vld [vmem:[%s2331 + $0xd8] sm:$0xff]
    %v2351 = vld [vmem:[%s2331 + $0xe0] sm:$0xff]
    %v2352 = vld [vmem:[%s2331 + $0xf0] sm:$0xff]
    %v2353 = vld [vmem:[%s2331 + $0xf8] sm:$0xff]
    %v2354 = vld [vmem:[%s2331 + $0x108] sm:$0xff]
    %v2355 = vld [vmem:[%s2331 + $0x110] sm:$0xff]
    %v2356 = vld [vmem:[%s2331 + $0x120] sm:$0xff]
    %v2357 = vld [vmem:[%s2331 + $0x128] sm:$0xff]
    %v2358 = vld [vmem:[%s2331 + $0x138] sm:$0xff]
    %v2359 = vld [vmem:[%s2331 + $0x140] sm:$0xff]
    %v2360 = vld [vmem:[%s2331 + $0x150] sm:$0xff]
    %v2361 = vld [vmem:[%s2331 + $0x158] sm:$0xff]
    %v2362 = vld [vmem:[%s2331 + $0x168] sm:$0xff]
    %v2363 = vld [vmem:[%s2331 + $0x170] sm:$0xff]
    %v2364 = vld [vmem:[%s2331 + $0x1b0] sm:$0xff]
    %v2365 = vld [vmem:[%s2331 + $0x1b8] sm:$0xff]
    %v2366 = vld [vmem:[%s2331 + $0x1c8] sm:$0xff]
    %v2367 = vld [vmem:[%s2331 + $0x1d0] sm:$0xff]
    %v2368 = vld [vmem:[%s2331 + $0x1e0] sm:$0xff]
    %v2369 = vld [vmem:[%s2331 + $0x1e8] sm:$0xff]
    %v2370 = vld [vmem:[%s2331 + $0x1f8] sm:$0xff]
    %v2371 = vld [vmem:[%s2331 + $0x200] sm:$0xff]
    %v2372 = vld [vmem:[%s2331 + $0x210] sm:$0xff]
    %v2373 = vld [vmem:[%s2331 + $0x218] sm:$0xff]
    %v2374 = vld [vmem:[%s2331 + $0x228] sm:$0xff]
    %v2375 = vld [vmem:[%s2331 + $0x230] sm:$0xff]
    %v2376 = vld [vmem:[%s2331 + $0x240] sm:$0xff]
    %v2377 = vld [vmem:[%s2331 + $0x248] sm:$0xff]
    %v2378 = vld [vmem:[%s2331 + $0x258] sm:$0xff]
    %v2379 = vld [vmem:[%s2331 + $0x260] sm:$0xff]
    %v2380 = vld [vmem:[%s2331 + $0x270] sm:$0xff]
    %v2381 = vld [vmem:[%s2331 + $0x278] sm:$0xff]
    %v2382 = vld [vmem:[%s2331 + $0x288] sm:$0xff]
    %v2383 = vld [vmem:[%s2331 + $0x290] sm:$0xff]
    %v2384 = vld [vmem:[%s2331 + $0x2a0] sm:$0xff]
    %v2385 = vld [vmem:[%s2331 + $0x2a8] sm:$0xff]
    %v2386 = vld [vmem:[%s2331 + $0x2b8] sm:$0xff]
    %v2387 = vld [vmem:[%s2331 + $0x2c0] sm:$0xff]
    %v2388 = vld [vmem:[%s2331 + $0x2d0] sm:$0xff]
    %v2389 = vld [vmem:[%s2331 + $0x2d8] sm:$0xff]
    %v2390 = vld [vmem:[%s2331 + $0x2e8] sm:$0xff]
    %v2391 = vld [vmem:[%s2331 + $0x2f0] sm:$0xff]
    %v2392 = vld [vmem:[%s2331 + $0x300] sm:$0xff]
    %v2393 = vld [vmem:[%s2331 + $0x308] sm:$0xff]
    %v2394 = vld [vmem:[%s2331 + $0x318] sm:$0xff]
    %v2395 = vld [vmem:[%s2331 + $0x320] sm:$0xff]
    %2460 = vrot.lane.b32.xlu0 %v2332, 6
    %v2461 = vpop.permute.xlu0 %2460
    %2462 = vrot.lane.b32.xlu0 %v2333, 6
    %v2463 = vpop.permute.xlu0 %2462
    %2464 = vrot.lane.b32.xlu0 %v2334, 6
    %v2465 = vpop.permute.xlu0 %2464
    %2466 = vrot.lane.b32.xlu0 %v2335, 6
    %v2467 = vpop.permute.xlu0 %2466
    %2468 = vrot.lane.b32.xlu0 %v2336, 6
    %v2469 = vpop.permute.xlu0 %2468
    %2470 = vrot.lane.b32.xlu0 %v2337, 6
    %v2471 = vpop.permute.xlu0 %2470
    %2472 = vrot.lane.b32.xlu0 %v2338, 6
    %v2473 = vpop.permute.xlu0 %2472
    %2474 = vrot.lane.b32.xlu0 %v2339, 6
    %v2475 = vpop.permute.xlu0 %2474
    %2476 = vrot.lane.b32.xlu0 %v2340, 6
    %v2477 = vpop.permute.xlu0 %2476
    %2478 = vrot.lane.b32.xlu0 %v2341, 6
    %v2479 = vpop.permute.xlu0 %2478
    %2480 = vrot.lane.b32.xlu0 %v2342, 6
    %v2481 = vpop.permute.xlu0 %2480
    %2482 = vrot.lane.b32.xlu0 %v2343, 6
    %v2483 = vpop.permute.xlu0 %2482
    %2484 = vrot.lane.b32.xlu0 %v2344, 6
    %v2485 = vpop.permute.xlu0 %2484
    %2486 = vrot.lane.b32.xlu0 %v2345, 6
    %v2487 = vpop.permute.xlu0 %2486
    %2488 = vrot.lane.b32.xlu0 %v2346, 6
    %v2489 = vpop.permute.xlu0 %2488
    %2490 = vrot.lane.b32.xlu0 %v2347, 6
    %v2491 = vpop.permute.xlu0 %2490
    %2492 = vrot.lane.b32.xlu0 %v2348, 6
    %v2493 = vpop.permute.xlu0 %2492
    %2494 = vrot.lane.b32.xlu0 %v2349, 6
    %v2495 = vpop.permute.xlu0 %2494
    %2496 = vrot.lane.b32.xlu0 %v2350, 6
    %v2497 = vpop.permute.xlu0 %2496
    %2498 = vrot.lane.b32.xlu0 %v2351, 6
    %v2499 = vpop.permute.xlu0 %2498
    %2500 = vrot.lane.b32.xlu0 %v2352, 6
    %v2501 = vpop.permute.xlu0 %2500
    %2502 = vrot.lane.b32.xlu0 %v2353, 6
    %v2503 = vpop.permute.xlu0 %2502
    %2504 = vrot.lane.b32.xlu0 %v2354, 6
    %v2505 = vpop.permute.xlu0 %2504
    %2506 = vrot.lane.b32.xlu0 %v2355, 6
    %v2507 = vpop.permute.xlu0 %2506
    %2508 = vrot.lane.b32.xlu0 %v2356, 6
    %v2509 = vpop.permute.xlu0 %2508
    %2510 = vrot.lane.b32.xlu0 %v2357, 6
    %v2511 = vpop.permute.xlu0 %2510
    %2512 = vrot.lane.b32.xlu0 %v2358, 6
    %v2513 = vpop.permute.xlu0 %2512
    %2514 = vrot.lane.b32.xlu0 %v2359, 6
    %v2515 = vpop.permute.xlu0 %2514
    %2516 = vrot.lane.b32.xlu0 %v2360, 6
    %v2517 = vpop.permute.xlu0 %2516
    %2518 = vrot.lane.b32.xlu0 %v2361, 6
    %v2519 = vpop.permute.xlu0 %2518
    %2520 = vrot.lane.b32.xlu0 %v2362, 6
    %v2521 = vpop.permute.xlu0 %2520
    %2522 = vrot.lane.b32.xlu0 %v2363, 6
    %v2523 = vpop.permute.xlu0 %2522
    %2524 = vrot.lane.b32.xlu0 %v2364, 6
    %v2525 = vpop.permute.xlu0 %2524
    %2526 = vrot.lane.b32.xlu0 %v2365, 6
    %v2527 = vpop.permute.xlu0 %2526
    %2528 = vrot.lane.b32.xlu0 %v2366, 6
    %v2529 = vpop.permute.xlu0 %2528
    %2530 = vrot.lane.b32.xlu0 %v2367, 6
    %v2531 = vpop.permute.xlu0 %2530
    %2532 = vrot.lane.b32.xlu0 %v2368, 6
    %v2533 = vpop.permute.xlu0 %2532
    %2534 = vrot.lane.b32.xlu0 %v2369, 6
    %v2535 = vpop.permute.xlu0 %2534
    %2536 = vrot.lane.b32.xlu0 %v2370, 6
    %v2537 = vpop.permute.xlu0 %2536
    %2538 = vrot.lane.b32.xlu0 %v2371, 6
    %v2539 = vpop.permute.xlu0 %2538
    %2540 = vrot.lane.b32.xlu0 %v2372, 6
    %v2541 = vpop.permute.xlu0 %2540
    %2542 = vrot.lane.b32.xlu0 %v2373, 6
    %v2543 = vpop.permute.xlu0 %2542
    %2544 = vrot.lane.b32.xlu0 %v2374, 6
    %v2545 = vpop.permute.xlu0 %2544
    %2546 = vrot.lane.b32.xlu0 %v2375, 6
    %v2547 = vpop.permute.xlu0 %2546
    %2548 = vrot.lane.b32.xlu0 %v2376, 6
    %v2549 = vpop.permute.xlu0 %2548
    %2550 = vrot.lane.b32.xlu0 %v2377, 6
    %v2551 = vpop.permute.xlu0 %2550
    %2552 = vrot.lane.b32.xlu0 %v2378, 6
    %v2553 = vpop.permute.xlu0 %2552
    %2554 = vrot.lane.b32.xlu0 %v2379, 6
    %v2555 = vpop.permute.xlu0 %2554
    %2556 = vrot.lane.b32.xlu0 %v2380, 6
    %v2557 = vpop.permute.xlu0 %2556
    %2558 = vrot.lane.b32.xlu0 %v2381, 6
    %v2559 = vpop.permute.xlu0 %2558
    %2560 = vrot.lane.b32.xlu0 %v2382, 6
    %v2561 = vpop.permute.xlu0 %2560
    %2562 = vrot.lane.b32.xlu0 %v2383, 6
    %v2563 = vpop.permute.xlu0 %2562
    %2564 = vrot.lane.b32.xlu0 %v2384, 6
    %v2565 = vpop.permute.xlu0 %2564
    %2566 = vrot.lane.b32.xlu0 %v2385, 6
    %v2567 = vpop.permute.xlu0 %2566
    %2568 = vrot.lane.b32.xlu0 %v2386, 6
    %v2569 = vpop.permute.xlu0 %2568
    %2570 = vrot.lane.b32.xlu0 %v2387, 6
    %v2571 = vpop.permute.xlu0 %2570
    %2572 = vrot.lane.b32.xlu0 %v2388, 6
    %v2573 = vpop.permute.xlu0 %2572
    %2574 = vrot.lane.b32.xlu0 %v2389, 6
    %v2575 = vpop.permute.xlu0 %2574
    %2576 = vrot.lane.b32.xlu0 %v2390, 6
    %v2577 = vpop.permute.xlu0 %2576
    %2578 = vrot.lane.b32.xlu0 %v2391, 6
    %v2579 = vpop.permute.xlu0 %2578
    %2580 = vrot.lane.b32.xlu0 %v2392, 6
    %v2581 = vpop.permute.xlu0 %2580
    %2582 = vrot.lane.b32.xlu0 %v2393, 6
    %v2583 = vpop.permute.xlu0 %2582
    %2584 = vrot.lane.b32.xlu0 %v2394, 6
    %v2585 = vpop.permute.xlu0 %2584
    %2586 = vrot.lane.b32.xlu0 %v2395, 6
    %v2587 = vpop.permute.xlu0 %2586
    %vm2652 = vcmask 56368
    %2653 = vst.msk [vmem:[#allocation3] sm:$0xff] %vm2652, %v2461
    %2654 = vst.msk [vmem:[#allocation3 + $0x8] sm:$0xff] %vm2652, %v2463
    %2655 = vst.msk [vmem:[#allocation3 + $0x10] sm:$0xff] %vm2652, %v2465
    %2656 = vst.msk [vmem:[#allocation3 + $0x18] sm:$0xff] %vm2652, %v2467
    %2657 = vst.msk [vmem:[#allocation3 + $0x20] sm:$0xff] %vm2652, %v2469
    %2658 = vst.msk [vmem:[#allocation3 + $0x28] sm:$0xff] %vm2652, %v2471
    %2659 = vst.msk [vmem:[#allocation3 + $0x30] sm:$0xff] %vm2652, %v2473
    %2660 = vst.msk [vmem:[#allocation3 + $0x38] sm:$0xff] %vm2652, %v2475
    %2661 = vst.msk [vmem:[#allocation3 + $0x40] sm:$0xff] %vm2652, %v2477
    %2662 = vst.msk [vmem:[#allocation3 + $0x48] sm:$0xff] %vm2652, %v2479
    %2663 = vst.msk [vmem:[#allocation3 + $0x50] sm:$0xff] %vm2652, %v2481
    %2664 = vst.msk [vmem:[#allocation3 + $0x58] sm:$0xff] %vm2652, %v2483
    %2665 = vst.msk [vmem:[#allocation3 + $0x60] sm:$0xff] %vm2652, %v2485
    %2666 = vst.msk [vmem:[#allocation3 + $0x68] sm:$0xff] %vm2652, %v2487
    %2667 = vst.msk [vmem:[#allocation3 + $0x70] sm:$0xff] %vm2652, %v2489
    %2668 = vst.msk [vmem:[#allocation3 + $0x78] sm:$0xff] %vm2652, %v2491
    %2669 = vst.msk [vmem:[#allocation3 + $0x80] sm:$0xff] %vm2652, %v2493
    %2670 = vst.msk [vmem:[#allocation3 + $0x88] sm:$0xff] %vm2652, %v2495
    %2671 = vst.msk [vmem:[#allocation3 + $0x90] sm:$0xff] %vm2652, %v2497
    %2672 = vst.msk [vmem:[#allocation3 + $0x98] sm:$0xff] %vm2652, %v2499
    %2673 = vst.msk [vmem:[#allocation3 + $0xa0] sm:$0xff] %vm2652, %v2501
    %2674 = vst.msk [vmem:[#allocation3 + $0xa8] sm:$0xff] %vm2652, %v2503
    %2675 = vst.msk [vmem:[#allocation3 + $0xb0] sm:$0xff] %vm2652, %v2505
    %2676 = vst.msk [vmem:[#allocation3 + $0xb8] sm:$0xff] %vm2652, %v2507
    %2677 = vst.msk [vmem:[#allocation3 + $0xc0] sm:$0xff] %vm2652, %v2509
    %2678 = vst.msk [vmem:[#allocation3 + $0xc8] sm:$0xff] %vm2652, %v2511
    %2679 = vst.msk [vmem:[#allocation3 + $0xd0] sm:$0xff] %vm2652, %v2513
    %2680 = vst.msk [vmem:[#allocation3 + $0xd8] sm:$0xff] %vm2652, %v2515
    %2681 = vst.msk [vmem:[#allocation3 + $0xe0] sm:$0xff] %vm2652, %v2517
    %2682 = vst.msk [vmem:[#allocation3 + $0xe8] sm:$0xff] %vm2652, %v2519
    %2683 = vst.msk [vmem:[#allocation3 + $0xf0] sm:$0xff] %vm2652, %v2521
    %2684 = vst.msk [vmem:[#allocation3 + $0xf8] sm:$0xff] %vm2652, %v2523
    %2685 = vst.msk [vmem:[#allocation3 + $0x100] sm:$0xff] %vm2652, %v2525
    %2686 = vst.msk [vmem:[#allocation3 + $0x108] sm:$0xff] %vm2652, %v2527
    %2687 = vst.msk [vmem:[#allocation3 + $0x110] sm:$0xff] %vm2652, %v2529
    %2688 = vst.msk [vmem:[#allocation3 + $0x118] sm:$0xff] %vm2652, %v2531
    %2689 = vst.msk [vmem:[#allocation3 + $0x120] sm:$0xff] %vm2652, %v2533
    %2690 = vst.msk [vmem:[#allocation3 + $0x128] sm:$0xff] %vm2652, %v2535
    %2691 = vst.msk [vmem:[#allocation3 + $0x130] sm:$0xff] %vm2652, %v2537
    %2692 = vst.msk [vmem:[#allocation3 + $0x138] sm:$0xff] %vm2652, %v2539
    %2693 = vst.msk [vmem:[#allocation3 + $0x140] sm:$0xff] %vm2652, %v2541
    %2694 = vst.msk [vmem:[#allocation3 + $0x148] sm:$0xff] %vm2652, %v2543
    %2695 = vst.msk [vmem:[#allocation3 + $0x150] sm:$0xff] %vm2652, %v2545
    %2696 = vst.msk [vmem:[#allocation3 + $0x158] sm:$0xff] %vm2652, %v2547
    %2697 = vst.msk [vmem:[#allocation3 + $0x160] sm:$0xff] %vm2652, %v2549
    %2698 = vst.msk [vmem:[#allocation3 + $0x168] sm:$0xff] %vm2652, %v2551
    %2699 = vst.msk [vmem:[#allocation3 + $0x170] sm:$0xff] %vm2652, %v2553
    %2700 = vst.msk [vmem:[#allocation3 + $0x178] sm:$0xff] %vm2652, %v2555
    %2701 = vst.msk [vmem:[#allocation3 + $0x180] sm:$0xff] %vm2652, %v2557
    %2702 = vst.msk [vmem:[#allocation3 + $0x188] sm:$0xff] %vm2652, %v2559
    %2703 = vst.msk [vmem:[#allocation3 + $0x190] sm:$0xff] %vm2652, %v2561
    %2704 = vst.msk [vmem:[#allocation3 + $0x198] sm:$0xff] %vm2652, %v2563
    %2705 = vst.msk [vmem:[#allocation3 + $0x1a0] sm:$0xff] %vm2652, %v2565
    %2706 = vst.msk [vmem:[#allocation3 + $0x1a8] sm:$0xff] %vm2652, %v2567
    %2707 = vst.msk [vmem:[#allocation3 + $0x1b0] sm:$0xff] %vm2652, %v2569
    %2708 = vst.msk [vmem:[#allocation3 + $0x1b8] sm:$0xff] %vm2652, %v2571
    %2709 = vst.msk [vmem:[#allocation3 + $0x1c0] sm:$0xff] %vm2652, %v2573
    %2710 = vst.msk [vmem:[#allocation3 + $0x1c8] sm:$0xff] %vm2652, %v2575
    %2711 = vst.msk [vmem:[#allocation3 + $0x1d0] sm:$0xff] %vm2652, %v2577
    %2712 = vst.msk [vmem:[#allocation3 + $0x1d8] sm:$0xff] %vm2652, %v2579
    %2713 = vst.msk [vmem:[#allocation3 + $0x1e0] sm:$0xff] %vm2652, %v2581
    %2714 = vst.msk [vmem:[#allocation3 + $0x1e8] sm:$0xff] %vm2652, %v2583
    %2715 = vst.msk [vmem:[#allocation3 + $0x1f0] sm:$0xff] %vm2652, %v2585
    %2716 = vst.msk [vmem:[#allocation3 + $0x1f8] sm:$0xff] %vm2652, %v2587
    %v2717 = vld [vmem:[%s2331 + $0x1] sm:$0xff]
    %v2718 = vld [vmem:[%s2331 + $0x9] sm:$0xff]
    %v2719 = vld [vmem:[%s2331 + $0x19] sm:$0xff]
    %v2720 = vld [vmem:[%s2331 + $0x21] sm:$0xff]
    %v2721 = vld [vmem:[%s2331 + $0x31] sm:$0xff]
    %v2722 = vld [vmem:[%s2331 + $0x39] sm:$0xff]
    %v2723 = vld [vmem:[%s2331 + $0x49] sm:$0xff]
    %v2724 = vld [vmem:[%s2331 + $0x51] sm:$0xff]
    %v2725 = vld [vmem:[%s2331 + $0x61] sm:$0xff]
    %v2726 = vld [vmem:[%s2331 + $0x69] sm:$0xff]
    %v2727 = vld [vmem:[%s2331 + $0x79] sm:$0xff]
    %v2728 = vld [vmem:[%s2331 + $0x81] sm:$0xff]
    %v2729 = vld [vmem:[%s2331 + $0x91] sm:$0xff]
    %v2730 = vld [vmem:[%s2331 + $0x99] sm:$0xff]
    %v2731 = vld [vmem:[%s2331 + $0xa9] sm:$0xff]
    %v2732 = vld [vmem:[%s2331 + $0xb1] sm:$0xff]
    %v2733 = vld [vmem:[%s2331 + $0xc1] sm:$0xff]
    %v2734 = vld [vmem:[%s2331 + $0xc9] sm:$0xff]
    %v2735 = vld [vmem:[%s2331 + $0xd9] sm:$0xff]
    %v2736 = vld [vmem:[%s2331 + $0xe1] sm:$0xff]
    %v2737 = vld [vmem:[%s2331 + $0xf1] sm:$0xff]
    %v2738 = vld [vmem:[%s2331 + $0xf9] sm:$0xff]
    %v2739 = vld [vmem:[%s2331 + $0x109] sm:$0xff]
    %v2740 = vld [vmem:[%s2331 + $0x111] sm:$0xff]
    %v2741 = vld [vmem:[%s2331 + $0x121] sm:$0xff]
    %v2742 = vld [vmem:[%s2331 + $0x129] sm:$0xff]
    %v2743 = vld [vmem:[%s2331 + $0x139] sm:$0xff]
    %v2744 = vld [vmem:[%s2331 + $0x141] sm:$0xff]
    %v2745 = vld [vmem:[%s2331 + $0x151] sm:$0xff]
    %v2746 = vld [vmem:[%s2331 + $0x159] sm:$0xff]
    %v2747 = vld [vmem:[%s2331 + $0x169] sm:$0xff]
    %v2748 = vld [vmem:[%s2331 + $0x171] sm:$0xff]
    %v2749 = vld [vmem:[%s2331 + $0x1b1] sm:$0xff]
    %v2750 = vld [vmem:[%s2331 + $0x1b9] sm:$0xff]
    %v2751 = vld [vmem:[%s2331 + $0x1c9] sm:$0xff]
    %v2752 = vld [vmem:[%s2331 + $0x1d1] sm:$0xff]
    %v2753 = vld [vmem:[%s2331 + $0x1e1] sm:$0xff]
    %v2754 = vld [vmem:[%s2331 + $0x1e9] sm:$0xff]
    %v2755 = vld [vmem:[%s2331 + $0x1f9] sm:$0xff]
    %v2756 = vld [vmem:[%s2331 + $0x201] sm:$0xff]
    %v2757 = vld [vmem:[%s2331 + $0x211] sm:$0xff]
    %v2758 = vld [vmem:[%s2331 + $0x219] sm:$0xff]
    %v2759 = vld [vmem:[%s2331 + $0x229] sm:$0xff]
    %v2760 = vld [vmem:[%s2331 + $0x231] sm:$0xff]
    %v2761 = vld [vmem:[%s2331 + $0x241] sm:$0xff]
    %v2762 = vld [vmem:[%s2331 + $0x249] sm:$0xff]
    %v2763 = vld [vmem:[%s2331 + $0x259] sm:$0xff]
    %v2764 = vld [vmem:[%s2331 + $0x261] sm:$0xff]
    %v2765 = vld [vmem:[%s2331 + $0x271] sm:$0xff]
    %v2766 = vld [vmem:[%s2331 + $0x279] sm:$0xff]
    %v2767 = vld [vmem:[%s2331 + $0x289] sm:$0xff]
    %v2768 = vld [vmem:[%s2331 + $0x291] sm:$0xff]
    %v2769 = vld [vmem:[%s2331 + $0x2a1] sm:$0xff]
    %v2770 = vld [vmem:[%s2331 + $0x2a9] sm:$0xff]
    %v2771 = vld [vmem:[%s2331 + $0x2b9] sm:$0xff]
    %v2772 = vld [vmem:[%s2331 + $0x2c1] sm:$0xff]
    %v2773 = vld [vmem:[%s2331 + $0x2d1] sm:$0xff]
    %v2774 = vld [vmem:[%s2331 + $0x2d9] sm:$0xff]
    %v2775 = vld [vmem:[%s2331 + $0x2e9] sm:$0xff]
    %v2776 = vld [vmem:[%s2331 + $0x2f1] sm:$0xff]
    %v2777 = vld [vmem:[%s2331 + $0x301] sm:$0xff]
    %v2778 = vld [vmem:[%s2331 + $0x309] sm:$0xff]
    %v2779 = vld [vmem:[%s2331 + $0x319] sm:$0xff]
    %v2780 = vld [vmem:[%s2331 + $0x321] sm:$0xff]
    %2845 = vrot.lane.b32.xlu0 %v2717, 7
    %v2846 = vpop.permute.xlu0 %2845
    %2847 = vrot.lane.b32.xlu0 %v2718, 7
    %v2848 = vpop.permute.xlu0 %2847
    %2849 = vrot.lane.b32.xlu0 %v2719, 7
    %v2850 = vpop.permute.xlu0 %2849
    %2851 = vrot.lane.b32.xlu0 %v2720, 7
    %v2852 = vpop.permute.xlu0 %2851
    %2853 = vrot.lane.b32.xlu0 %v2721, 7
    %v2854 = vpop.permute.xlu0 %2853
    %2855 = vrot.lane.b32.xlu0 %v2722, 7
    %v2856 = vpop.permute.xlu0 %2855
    %2857 = vrot.lane.b32.xlu0 %v2723, 7
    %v2858 = vpop.permute.xlu0 %2857
    %2859 = vrot.lane.b32.xlu0 %v2724, 7
    %v2860 = vpop.permute.xlu0 %2859
    %2861 = vrot.lane.b32.xlu0 %v2725, 7
    %v2862 = vpop.permute.xlu0 %2861
    %2863 = vrot.lane.b32.xlu0 %v2726, 7
    %v2864 = vpop.permute.xlu0 %2863
    %2865 = vrot.lane.b32.xlu0 %v2727, 7
    %v2866 = vpop.permute.xlu0 %2865
    %2867 = vrot.lane.b32.xlu0 %v2728, 7
    %v2868 = vpop.permute.xlu0 %2867
    %2869 = vrot.lane.b32.xlu0 %v2729, 7
    %v2870 = vpop.permute.xlu0 %2869
    %2871 = vrot.lane.b32.xlu0 %v2730, 7
    %v2872 = vpop.permute.xlu0 %2871
    %2873 = vrot.lane.b32.xlu0 %v2731, 7
    %v2874 = vpop.permute.xlu0 %2873
    %2875 = vrot.lane.b32.xlu0 %v2732, 7
    %v2876 = vpop.permute.xlu0 %2875
    %2877 = vrot.lane.b32.xlu0 %v2733, 7
    %v2878 = vpop.permute.xlu0 %2877
    %2879 = vrot.lane.b32.xlu0 %v2734, 7
    %v2880 = vpop.permute.xlu0 %2879
    %2881 = vrot.lane.b32.xlu0 %v2735, 7
    %v2882 = vpop.permute.xlu0 %2881
    %2883 = vrot.lane.b32.xlu0 %v2736, 7
    %v2884 = vpop.permute.xlu0 %2883
    %2885 = vrot.lane.b32.xlu0 %v2737, 7
    %v2886 = vpop.permute.xlu0 %2885
    %2887 = vrot.lane.b32.xlu0 %v2738, 7
    %v2888 = vpop.permute.xlu0 %2887
    %2889 = vrot.lane.b32.xlu0 %v2739, 7
    %v2890 = vpop.permute.xlu0 %2889
    %2891 = vrot.lane.b32.xlu0 %v2740, 7
    %v2892 = vpop.permute.xlu0 %2891
    %2893 = vrot.lane.b32.xlu0 %v2741, 7
    %v2894 = vpop.permute.xlu0 %2893
    %2895 = vrot.lane.b32.xlu0 %v2742, 7
    %v2896 = vpop.permute.xlu0 %2895
    %2897 = vrot.lane.b32.xlu0 %v2743, 7
    %v2898 = vpop.permute.xlu0 %2897
    %2899 = vrot.lane.b32.xlu0 %v2744, 7
    %v2900 = vpop.permute.xlu0 %2899
    %2901 = vrot.lane.b32.xlu0 %v2745, 7
    %v2902 = vpop.permute.xlu0 %2901
    %2903 = vrot.lane.b32.xlu0 %v2746, 7
    %v2904 = vpop.permute.xlu0 %2903
    %2905 = vrot.lane.b32.xlu0 %v2747, 7
    %v2906 = vpop.permute.xlu0 %2905
    %2907 = vrot.lane.b32.xlu0 %v2748, 7
    %v2908 = vpop.permute.xlu0 %2907
    %2909 = vrot.lane.b32.xlu0 %v2749, 7
    %v2910 = vpop.permute.xlu0 %2909
    %2911 = vrot.lane.b32.xlu0 %v2750, 7
    %v2912 = vpop.permute.xlu0 %2911
    %2913 = vrot.lane.b32.xlu0 %v2751, 7
    %v2914 = vpop.permute.xlu0 %2913
    %2915 = vrot.lane.b32.xlu0 %v2752, 7
    %v2916 = vpop.permute.xlu0 %2915
    %2917 = vrot.lane.b32.xlu0 %v2753, 7
    %v2918 = vpop.permute.xlu0 %2917
    %2919 = vrot.lane.b32.xlu0 %v2754, 7
    %v2920 = vpop.permute.xlu0 %2919
    %2921 = vrot.lane.b32.xlu0 %v2755, 7
    %v2922 = vpop.permute.xlu0 %2921
    %2923 = vrot.lane.b32.xlu0 %v2756, 7
    %v2924 = vpop.permute.xlu0 %2923
    %2925 = vrot.lane.b32.xlu0 %v2757, 7
    %v2926 = vpop.permute.xlu0 %2925
    %2927 = vrot.lane.b32.xlu0 %v2758, 7
    %v2928 = vpop.permute.xlu0 %2927
    %2929 = vrot.lane.b32.xlu0 %v2759, 7
    %v2930 = vpop.permute.xlu0 %2929
    %2931 = vrot.lane.b32.xlu0 %v2760, 7
    %v2932 = vpop.permute.xlu0 %2931
    %2933 = vrot.lane.b32.xlu0 %v2761, 7
    %v2934 = vpop.permute.xlu0 %2933
    %2935 = vrot.lane.b32.xlu0 %v2762, 7
    %v2936 = vpop.permute.xlu0 %2935
    %2937 = vrot.lane.b32.xlu0 %v2763, 7
    %v2938 = vpop.permute.xlu0 %2937
    %2939 = vrot.lane.b32.xlu0 %v2764, 7
    %v2940 = vpop.permute.xlu0 %2939
    %2941 = vrot.lane.b32.xlu0 %v2765, 7
    %v2942 = vpop.permute.xlu0 %2941
    %2943 = vrot.lane.b32.xlu0 %v2766, 7
    %v2944 = vpop.permute.xlu0 %2943
    %2945 = vrot.lane.b32.xlu0 %v2767, 7
    %v2946 = vpop.permute.xlu0 %2945
    %2947 = vrot.lane.b32.xlu0 %v2768, 7
    %v2948 = vpop.permute.xlu0 %2947
    %2949 = vrot.lane.b32.xlu0 %v2769, 7
    %v2950 = vpop.permute.xlu0 %2949
    %2951 = vrot.lane.b32.xlu0 %v2770, 7
    %v2952 = vpop.permute.xlu0 %2951
    %2953 = vrot.lane.b32.xlu0 %v2771, 7
    %v2954 = vpop.permute.xlu0 %2953
    %2955 = vrot.lane.b32.xlu0 %v2772, 7
    %v2956 = vpop.permute.xlu0 %2955
    %2957 = vrot.lane.b32.xlu0 %v2773, 7
    %v2958 = vpop.permute.xlu0 %2957
    %2959 = vrot.lane.b32.xlu0 %v2774, 7
    %v2960 = vpop.permute.xlu0 %2959
    %2961 = vrot.lane.b32.xlu0 %v2775, 7
    %v2962 = vpop.permute.xlu0 %2961
    %2963 = vrot.lane.b32.xlu0 %v2776, 7
    %v2964 = vpop.permute.xlu0 %2963
    %2965 = vrot.lane.b32.xlu0 %v2777, 7
    %v2966 = vpop.permute.xlu0 %2965
    %2967 = vrot.lane.b32.xlu0 %v2778, 7
    %v2968 = vpop.permute.xlu0 %2967
    %2969 = vrot.lane.b32.xlu0 %v2779, 7
    %v2970 = vpop.permute.xlu0 %2969
    %2971 = vrot.lane.b32.xlu0 %v2780, 7
    %v2972 = vpop.permute.xlu0 %2971
    %vm3037 = vcmask 64568
    %3038 = vst.msk [vmem:[#allocation3] sm:$0xff] %vm3037, %v2846
    %3039 = vst.msk [vmem:[#allocation3 + $0x8] sm:$0xff] %vm3037, %v2848
    %3040 = vst.msk [vmem:[#allocation3 + $0x10] sm:$0xff] %vm3037, %v2850
    %3041 = vst.msk [vmem:[#allocation3 + $0x18] sm:$0xff] %vm3037, %v2852
    %3042 = vst.msk [vmem:[#allocation3 + $0x20] sm:$0xff] %vm3037, %v2854
    %3043 = vst.msk [vmem:[#allocation3 + $0x28] sm:$0xff] %vm3037, %v2856
    %3044 = vst.msk [vmem:[#allocation3 + $0x30] sm:$0xff] %vm3037, %v2858
    %3045 = vst.msk [vmem:[#allocation3 + $0x38] sm:$0xff] %vm3037, %v2860
    %3046 = vst.msk [vmem:[#allocation3 + $0x40] sm:$0xff] %vm3037, %v2862
    %3047 = vst.msk [vmem:[#allocation3 + $0x48] sm:$0xff] %vm3037, %v2864
    %3048 = vst.msk [vmem:[#allocation3 + $0x50] sm:$0xff] %vm3037, %v2866
    %3049 = vst.msk [vmem:[#allocation3 + $0x58] sm:$0xff] %vm3037, %v2868
    %3050 = vst.msk [vmem:[#allocation3 + $0x60] sm:$0xff] %vm3037, %v2870
    %3051 = vst.msk [vmem:[#allocation3 + $0x68] sm:$0xff] %vm3037, %v2872
    %3052 = vst.msk [vmem:[#allocation3 + $0x70] sm:$0xff] %vm3037, %v2874
    %3053 = vst.msk [vmem:[#allocation3 + $0x78] sm:$0xff] %vm3037, %v2876
    %3054 = vst.msk [vmem:[#allocation3 + $0x80] sm:$0xff] %vm3037, %v2878
    %3055 = vst.msk [vmem:[#allocation3 + $0x88] sm:$0xff] %vm3037, %v2880
    %3056 = vst.msk [vmem:[#allocation3 + $0x90] sm:$0xff] %vm3037, %v2882
    %3057 = vst.msk [vmem:[#allocation3 + $0x98] sm:$0xff] %vm3037, %v2884
    %3058 = vst.msk [vmem:[#allocation3 + $0xa0] sm:$0xff] %vm3037, %v2886
    %3059 = vst.msk [vmem:[#allocation3 + $0xa8] sm:$0xff] %vm3037, %v2888
    %3060 = vst.msk [vmem:[#allocation3 + $0xb0] sm:$0xff] %vm3037, %v2890
    %3061 = vst.msk [vmem:[#allocation3 + $0xb8] sm:$0xff] %vm3037, %v2892
    %3062 = vst.msk [vmem:[#allocation3 + $0xc0] sm:$0xff] %vm3037, %v2894
    %3063 = vst.msk [vmem:[#allocation3 + $0xc8] sm:$0xff] %vm3037, %v2896
    %3064 = vst.msk [vmem:[#allocation3 + $0xd0] sm:$0xff] %vm3037, %v2898
    %3065 = vst.msk [vmem:[#allocation3 + $0xd8] sm:$0xff] %vm3037, %v2900
    %3066 = vst.msk [vmem:[#allocation3 + $0xe0] sm:$0xff] %vm3037, %v2902
    %3067 = vst.msk [vmem:[#allocation3 + $0xe8] sm:$0xff] %vm3037, %v2904
    %3068 = vst.msk [vmem:[#allocation3 + $0xf0] sm:$0xff] %vm3037, %v2906
    %3069 = vst.msk [vmem:[#allocation3 + $0xf8] sm:$0xff] %vm3037, %v2908
    %3070 = vst.msk [vmem:[#allocation3 + $0x100] sm:$0xff] %vm3037, %v2910
    %3071 = vst.msk [vmem:[#allocation3 + $0x108] sm:$0xff] %vm3037, %v2912
    %3072 = vst.msk [vmem:[#allocation3 + $0x110] sm:$0xff] %vm3037, %v2914
    %3073 = vst.msk [vmem:[#allocation3 + $0x118] sm:$0xff] %vm3037, %v2916
    %3074 = vst.msk [vmem:[#allocation3 + $0x120] sm:$0xff] %vm3037, %v2918
    %3075 = vst.msk [vmem:[#allocation3 + $0x128] sm:$0xff] %vm3037, %v2920
    %3076 = vst.msk [vmem:[#allocation3 + $0x130] sm:$0xff] %vm3037, %v2922
    %3077 = vst.msk [vmem:[#allocation3 + $0x138] sm:$0xff] %vm3037, %v2924
    %3078 = vst.msk [vmem:[#allocation3 + $0x140] sm:$0xff] %vm3037, %v2926
    %3079 = vst.msk [vmem:[#allocation3 + $0x148] sm:$0xff] %vm3037, %v2928
    %3080 = vst.msk [vmem:[#allocation3 + $0x150] sm:$0xff] %vm3037, %v2930
    %3081 = vst.msk [vmem:[#allocation3 + $0x158] sm:$0xff] %vm3037, %v2932
    %3082 = vst.msk [vmem:[#allocation3 + $0x160] sm:$0xff] %vm3037, %v2934
    %3083 = vst.msk [vmem:[#allocation3 + $0x168] sm:$0xff] %vm3037, %v2936
    %3084 = vst.msk [vmem:[#allocation3 + $0x170] sm:$0xff] %vm3037, %v2938
    %3085 = vst.msk [vmem:[#allocation3 + $0x178] sm:$0xff] %vm3037, %v2940
    %3086 = vst.msk [vmem:[#allocation3 + $0x180] sm:$0xff] %vm3037, %v2942
    %3087 = vst.msk [vmem:[#allocation3 + $0x188] sm:$0xff] %vm3037, %v2944
    %3088 = vst.msk [vmem:[#allocation3 + $0x190] sm:$0xff] %vm3037, %v2946
    %3089 = vst.msk [vmem:[#allocation3 + $0x198] sm:$0xff] %vm3037, %v2948
    %3090 = vst.msk [vmem:[#allocation3 + $0x1a0] sm:$0xff] %vm3037, %v2950
    %3091 = vst.msk [vmem:[#allocation3 + $0x1a8] sm:$0xff] %vm3037, %v2952
    %3092 = vst.msk [vmem:[#allocation3 + $0x1b0] sm:$0xff] %vm3037, %v2954
    %3093 = vst.msk [vmem:[#allocation3 + $0x1b8] sm:$0xff] %vm3037, %v2956
    %3094 = vst.msk [vmem:[#allocation3 + $0x1c0] sm:$0xff] %vm3037, %v2958
    %3095 = vst.msk [vmem:[#allocation3 + $0x1c8] sm:$0xff] %vm3037, %v2960
    %3096 = vst.msk [vmem:[#allocation3 + $0x1d0] sm:$0xff] %vm3037, %v2962
    %3097 = vst.msk [vmem:[#allocation3 + $0x1d8] sm:$0xff] %vm3037, %v2964
    %3098 = vst.msk [vmem:[#allocation3 + $0x1e0] sm:$0xff] %vm3037, %v2966
    %3099 = vst.msk [vmem:[#allocation3 + $0x1e8] sm:$0xff] %vm3037, %v2968
    %3100 = vst.msk [vmem:[#allocation3 + $0x1f0] sm:$0xff] %vm3037, %v2970
    %3101 = vst.msk [vmem:[#allocation3 + $0x1f8] sm:$0xff] %vm3037, %v2972
    %v3102 = vld [vmem:[%s2331 + $0x2] sm:$0xff]
    %v3103 = vld [vmem:[%s2331 + $0xa] sm:$0xff]
    %v3104 = vld [vmem:[%s2331 + $0x1a] sm:$0xff]
    %v3105 = vld [vmem:[%s2331 + $0x22] sm:$0xff]
    %v3106 = vld [vmem:[%s2331 + $0x32] sm:$0xff]
    %v3107 = vld [vmem:[%s2331 + $0x3a] sm:$0xff]
    %v3108 = vld [vmem:[%s2331 + $0x4a] sm:$0xff]
    %v3109 = vld [vmem:[%s2331 + $0x52] sm:$0xff]
    %v3110 = vld [vmem:[%s2331 + $0x62] sm:$0xff]
    %v3111 = vld [vmem:[%s2331 + $0x6a] sm:$0xff]
    %v3112 = vld [vmem:[%s2331 + $0x7a] sm:$0xff]
    %v3113 = vld [vmem:[%s2331 + $0x82] sm:$0xff]
    %v3114 = vld [vmem:[%s2331 + $0x92] sm:$0xff]
    %v3115 = vld [vmem:[%s2331 + $0x9a] sm:$0xff]
    %v3116 = vld [vmem:[%s2331 + $0xaa] sm:$0xff]
    %v3117 = vld [vmem:[%s2331 + $0xb2] sm:$0xff]
    %v3118 = vld [vmem:[%s2331 + $0xc2] sm:$0xff]
    %v3119 = vld [vmem:[%s2331 + $0xca] sm:$0xff]
    %v3120 = vld [vmem:[%s2331 + $0xda] sm:$0xff]
    %v3121 = vld [vmem:[%s2331 + $0xe2] sm:$0xff]
    %v3122 = vld [vmem:[%s2331 + $0xf2] sm:$0xff]
    %v3123 = vld [vmem:[%s2331 + $0xfa] sm:$0xff]
    %v3124 = vld [vmem:[%s2331 + $0x10a] sm:$0xff]
    %v3125 = vld [vmem:[%s2331 + $0x112] sm:$0xff]
    %v3126 = vld [vmem:[%s2331 + $0x122] sm:$0xff]
    %v3127 = vld [vmem:[%s2331 + $0x12a] sm:$0xff]
    %v3128 = vld [vmem:[%s2331 + $0x13a] sm:$0xff]
    %v3129 = vld [vmem:[%s2331 + $0x142] sm:$0xff]
    %v3130 = vld [vmem:[%s2331 + $0x152] sm:$0xff]
    %v3131 = vld [vmem:[%s2331 + $0x15a] sm:$0xff]
    %v3132 = vld [vmem:[%s2331 + $0x16a] sm:$0xff]
    %v3133 = vld [vmem:[%s2331 + $0x172] sm:$0xff]
    %v3134 = vld [vmem:[%s2331 + $0x1b2] sm:$0xff]
    %v3135 = vld [vmem:[%s2331 + $0x1ba] sm:$0xff]
    %v3136 = vld [vmem:[%s2331 + $0x1ca] sm:$0xff]
    %v3137 = vld [vmem:[%s2331 + $0x1d2] sm:$0xff]
    %v3138 = vld [vmem:[%s2331 + $0x1e2] sm:$0xff]
    %v3139 = vld [vmem:[%s2331 + $0x1ea] sm:$0xff]
    %v3140 = vld [vmem:[%s2331 + $0x1fa] sm:$0xff]
    %v3141 = vld [vmem:[%s2331 + $0x202] sm:$0xff]
    %v3142 = vld [vmem:[%s2331 + $0x212] sm:$0xff]
    %v3143 = vld [vmem:[%s2331 + $0x21a] sm:$0xff]
    %v3144 = vld [vmem:[%s2331 + $0x22a] sm:$0xff]
    %v3145 = vld [vmem:[%s2331 + $0x232] sm:$0xff]
    %v3146 = vld [vmem:[%s2331 + $0x242] sm:$0xff]
    %v3147 = vld [vmem:[%s2331 + $0x24a] sm:$0xff]
    %v3148 = vld [vmem:[%s2331 + $0x25a] sm:$0xff]
    %v3149 = vld [vmem:[%s2331 + $0x262] sm:$0xff]
    %v3150 = vld [vmem:[%s2331 + $0x272] sm:$0xff]
    %v3151 = vld [vmem:[%s2331 + $0x27a] sm:$0xff]
    %v3152 = vld [vmem:[%s2331 + $0x28a] sm:$0xff]
    %v3153 = vld [vmem:[%s2331 + $0x292] sm:$0xff]
    %v3154 = vld [vmem:[%s2331 + $0x2a2] sm:$0xff]
    %v3155 = vld [vmem:[%s2331 + $0x2aa] sm:$0xff]
    %v3156 = vld [vmem:[%s2331 + $0x2ba] sm:$0xff]
    %v3157 = vld [vmem:[%s2331 + $0x2c2] sm:$0xff]
    %v3158 = vld [vmem:[%s2331 + $0x2d2] sm:$0xff]
    %v3159 = vld [vmem:[%s2331 + $0x2da] sm:$0xff]
    %v3160 = vld [vmem:[%s2331 + $0x2ea] sm:$0xff]
    %v3161 = vld [vmem:[%s2331 + $0x2f2] sm:$0xff]
    %v3162 = vld [vmem:[%s2331 + $0x302] sm:$0xff]
    %v3163 = vld [vmem:[%s2331 + $0x30a] sm:$0xff]
    %v3164 = vld [vmem:[%s2331 + $0x31a] sm:$0xff]
    %v3165 = vld [vmem:[%s2331 + $0x322] sm:$0xff]
    %3230 = vrot.lane.b32.xlu0 %v3102, 8
    %v3231 = vpop.permute.xlu0 %3230
    %3232 = vrot.lane.b32.xlu0 %v3103, 8
    %v3233 = vpop.permute.xlu0 %3232
    %3234 = vrot.lane.b32.xlu0 %v3104, 8
    %v3235 = vpop.permute.xlu0 %3234
    %3236 = vrot.lane.b32.xlu0 %v3105, 8
    %v3237 = vpop.permute.xlu0 %3236
    %3238 = vrot.lane.b32.xlu0 %v3106, 8
    %v3239 = vpop.permute.xlu0 %3238
    %3240 = vrot.lane.b32.xlu0 %v3107, 8
    %v3241 = vpop.permute.xlu0 %3240
    %3242 = vrot.lane.b32.xlu0 %v3108, 8
    %v3243 = vpop.permute.xlu0 %3242
    %3244 = vrot.lane.b32.xlu0 %v3109, 8
    %v3245 = vpop.permute.xlu0 %3244
    %3246 = vrot.lane.b32.xlu0 %v3110, 8
    %v3247 = vpop.permute.xlu0 %3246
    %3248 = vrot.lane.b32.xlu0 %v3111, 8
    %v3249 = vpop.permute.xlu0 %3248
    %3250 = vrot.lane.b32.xlu0 %v3112, 8
    %v3251 = vpop.permute.xlu0 %3250
    %3252 = vrot.lane.b32.xlu0 %v3113, 8
    %v3253 = vpop.permute.xlu0 %3252
    %3254 = vrot.lane.b32.xlu0 %v3114, 8
    %v3255 = vpop.permute.xlu0 %3254
    %3256 = vrot.lane.b32.xlu0 %v3115, 8
    %v3257 = vpop.permute.xlu0 %3256
    %3258 = vrot.lane.b32.xlu0 %v3116, 8
    %v3259 = vpop.permute.xlu0 %3258
    %3260 = vrot.lane.b32.xlu0 %v3117, 8
    %v3261 = vpop.permute.xlu0 %3260
    %3262 = vrot.lane.b32.xlu0 %v3118, 8
    %v3263 = vpop.permute.xlu0 %3262
    %3264 = vrot.lane.b32.xlu0 %v3119, 8
    %v3265 = vpop.permute.xlu0 %3264
    %3266 = vrot.lane.b32.xlu0 %v3120, 8
    %v3267 = vpop.permute.xlu0 %3266
    %3268 = vrot.lane.b32.xlu0 %v3121, 8
    %v3269 = vpop.permute.xlu0 %3268
    %3270 = vrot.lane.b32.xlu0 %v3122, 8
    %v3271 = vpop.permute.xlu0 %3270
    %3272 = vrot.lane.b32.xlu0 %v3123, 8
    %v3273 = vpop.permute.xlu0 %3272
    %3274 = vrot.lane.b32.xlu0 %v3124, 8
    %v3275 = vpop.permute.xlu0 %3274
    %3276 = vrot.lane.b32.xlu0 %v3125, 8
    %v3277 = vpop.permute.xlu0 %3276
    %3278 = vrot.lane.b32.xlu0 %v3126, 8
    %v3279 = vpop.permute.xlu0 %3278
    %3280 = vrot.lane.b32.xlu0 %v3127, 8
    %v3281 = vpop.permute.xlu0 %3280
    %3282 = vrot.lane.b32.xlu0 %v3128, 8
    %v3283 = vpop.permute.xlu0 %3282
    %3284 = vrot.lane.b32.xlu0 %v3129, 8
    %v3285 = vpop.permute.xlu0 %3284
    %3286 = vrot.lane.b32.xlu0 %v3130, 8
    %v3287 = vpop.permute.xlu0 %3286
    %3288 = vrot.lane.b32.xlu0 %v3131, 8
    %v3289 = vpop.permute.xlu0 %3288
    %3290 = vrot.lane.b32.xlu0 %v3132, 8
    %v3291 = vpop.permute.xlu0 %3290
    %3292 = vrot.lane.b32.xlu0 %v3133, 8
    %v3293 = vpop.permute.xlu0 %3292
    %3294 = vrot.lane.b32.xlu0 %v3134, 8
    %v3295 = vpop.permute.xlu0 %3294
    %3296 = vrot.lane.b32.xlu0 %v3135, 8
    %v3297 = vpop.permute.xlu0 %3296
    %3298 = vrot.lane.b32.xlu0 %v3136, 8
    %v3299 = vpop.permute.xlu0 %3298
    %3300 = vrot.lane.b32.xlu0 %v3137, 8
    %v3301 = vpop.permute.xlu0 %3300
    %3302 = vrot.lane.b32.xlu0 %v3138, 8
    %v3303 = vpop.permute.xlu0 %3302
    %3304 = vrot.lane.b32.xlu0 %v3139, 8
    %v3305 = vpop.permute.xlu0 %3304
    %3306 = vrot.lane.b32.xlu0 %v3140, 8
    %v3307 = vpop.permute.xlu0 %3306
    %3308 = vrot.lane.b32.xlu0 %v3141, 8
    %v3309 = vpop.permute.xlu0 %3308
    %3310 = vrot.lane.b32.xlu0 %v3142, 8
    %v3311 = vpop.permute.xlu0 %3310
    %3312 = vrot.lane.b32.xlu0 %v3143, 8
    %v3313 = vpop.permute.xlu0 %3312
    %3314 = vrot.lane.b32.xlu0 %v3144, 8
    %v3315 = vpop.permute.xlu0 %3314
    %3316 = vrot.lane.b32.xlu0 %v3145, 8
    %v3317 = vpop.permute.xlu0 %3316
    %3318 = vrot.lane.b32.xlu0 %v3146, 8
    %v3319 = vpop.permute.xlu0 %3318
    %3320 = vrot.lane.b32.xlu0 %v3147, 8
    %v3321 = vpop.permute.xlu0 %3320
    %3322 = vrot.lane.b32.xlu0 %v3148, 8
    %v3323 = vpop.permute.xlu0 %3322
    %3324 = vrot.lane.b32.xlu0 %v3149, 8
    %v3325 = vpop.permute.xlu0 %3324
    %3326 = vrot.lane.b32.xlu0 %v3150, 8
    %v3327 = vpop.permute.xlu0 %3326
    %3328 = vrot.lane.b32.xlu0 %v3151, 8
    %v3329 = vpop.permute.xlu0 %3328
    %3330 = vrot.lane.b32.xlu0 %v3152, 8
    %v3331 = vpop.permute.xlu0 %3330
    %3332 = vrot.lane.b32.xlu0 %v3153, 8
    %v3333 = vpop.permute.xlu0 %3332
    %3334 = vrot.lane.b32.xlu0 %v3154, 8
    %v3335 = vpop.permute.xlu0 %3334
    %3336 = vrot.lane.b32.xlu0 %v3155, 8
    %v3337 = vpop.permute.xlu0 %3336
    %3338 = vrot.lane.b32.xlu0 %v3156, 8
    %v3339 = vpop.permute.xlu0 %3338
    %3340 = vrot.lane.b32.xlu0 %v3157, 8
    %v3341 = vpop.permute.xlu0 %3340
    %3342 = vrot.lane.b32.xlu0 %v3158, 8
    %v3343 = vpop.permute.xlu0 %3342
    %3344 = vrot.lane.b32.xlu0 %v3159, 8
    %v3345 = vpop.permute.xlu0 %3344
    %3346 = vrot.lane.b32.xlu0 %v3160, 8
    %v3347 = vpop.permute.xlu0 %3346
    %3348 = vrot.lane.b32.xlu0 %v3161, 8
    %v3349 = vpop.permute.xlu0 %3348
    %3350 = vrot.lane.b32.xlu0 %v3162, 8
    %v3351 = vpop.permute.xlu0 %3350
    %3352 = vrot.lane.b32.xlu0 %v3163, 8
    %v3353 = vpop.permute.xlu0 %3352
    %3354 = vrot.lane.b32.xlu0 %v3164, 8
    %v3355 = vpop.permute.xlu0 %3354
    %3356 = vrot.lane.b32.xlu0 %v3165, 8
    %v3357 = vpop.permute.xlu0 %3356
    %vm3422 = vcmask 72768
    %3423 = vst.msk [vmem:[#allocation3] sm:$0xff] %vm3422, %v3231
    %3424 = vst.msk [vmem:[#allocation3 + $0x8] sm:$0xff] %vm3422, %v3233
    %3425 = vst.msk [vmem:[#allocation3 + $0x10] sm:$0xff] %vm3422, %v3235
    %3426 = vst.msk [vmem:[#allocation3 + $0x18] sm:$0xff] %vm3422, %v3237
    %3427 = vst.msk [vmem:[#allocation3 + $0x20] sm:$0xff] %vm3422, %v3239
    %3428 = vst.msk [vmem:[#allocation3 + $0x28] sm:$0xff] %vm3422, %v3241
    %3429 = vst.msk [vmem:[#allocation3 + $0x30] sm:$0xff] %vm3422, %v3243
    %3430 = vst.msk [vmem:[#allocation3 + $0x38] sm:$0xff] %vm3422, %v3245
    %3431 = vst.msk [vmem:[#allocation3 + $0x40] sm:$0xff] %vm3422, %v3247
    %3432 = vst.msk [vmem:[#allocation3 + $0x48] sm:$0xff] %vm3422, %v3249
    %3433 = vst.msk [vmem:[#allocation3 + $0x50] sm:$0xff] %vm3422, %v3251
    %3434 = vst.msk [vmem:[#allocation3 + $0x58] sm:$0xff] %vm3422, %v3253
    %3435 = vst.msk [vmem:[#allocation3 + $0x60] sm:$0xff] %vm3422, %v3255
    %3436 = vst.msk [vmem:[#allocation3 + $0x68] sm:$0xff] %vm3422, %v3257
    %3437 = vst.msk [vmem:[#allocation3 + $0x70] sm:$0xff] %vm3422, %v3259
    %3438 = vst.msk [vmem:[#allocation3 + $0x78] sm:$0xff] %vm3422, %v3261
    %3439 = vst.msk [vmem:[#allocation3 + $0x80] sm:$0xff] %vm3422, %v3263
    %3440 = vst.msk [vmem:[#allocation3 + $0x88] sm:$0xff] %vm3422, %v3265
    %3441 = vst.msk [vmem:[#allocation3 + $0x90] sm:$0xff] %vm3422, %v3267
    %3442 = vst.msk [vmem:[#allocation3 + $0x98] sm:$0xff] %vm3422, %v3269
    %3443 = vst.msk [vmem:[#allocation3 + $0xa0] sm:$0xff] %vm3422, %v3271
    %3444 = vst.msk [vmem:[#allocation3 + $0xa8] sm:$0xff] %vm3422, %v3273
    %3445 = vst.msk [vmem:[#allocation3 + $0xb0] sm:$0xff] %vm3422, %v3275
    %3446 = vst.msk [vmem:[#allocation3 + $0xb8] sm:$0xff] %vm3422, %v3277
    %3447 = vst.msk [vmem:[#allocation3 + $0xc0] sm:$0xff] %vm3422, %v3279
    %3448 = vst.msk [vmem:[#allocation3 + $0xc8] sm:$0xff] %vm3422, %v3281
    %3449 = vst.msk [vmem:[#allocation3 + $0xd0] sm:$0xff] %vm3422, %v3283
    %3450 = vst.msk [vmem:[#allocation3 + $0xd8] sm:$0xff] %vm3422, %v3285
    %3451 = vst.msk [vmem:[#allocation3 + $0xe0] sm:$0xff] %vm3422, %v3287
    %3452 = vst.msk [vmem:[#allocation3 + $0xe8] sm:$0xff] %vm3422, %v3289
    %3453 = vst.msk [vmem:[#allocation3 + $0xf0] sm:$0xff] %vm3422, %v3291
    %3454 = vst.msk [vmem:[#allocation3 + $0xf8] sm:$0xff] %vm3422, %v3293
    %3455 = vst.msk [vmem:[#allocation3 + $0x100] sm:$0xff] %vm3422, %v3295
    %3456 = vst.msk [vmem:[#allocation3 + $0x108] sm:$0xff] %vm3422, %v3297
    %3457 = vst.msk [vmem:[#allocation3 + $0x110] sm:$0xff] %vm3422, %v3299
    %3458 = vst.msk [vmem:[#allocation3 + $0x118] sm:$0xff] %vm3422, %v3301
    %3459 = vst.msk [vmem:[#allocation3 + $0x120] sm:$0xff] %vm3422, %v3303
    %3460 = vst.msk [vmem:[#allocation3 + $0x128] sm:$0xff] %vm3422, %v3305
    %3461 = vst.msk [vmem:[#allocation3 + $0x130] sm:$0xff] %vm3422, %v3307
    %3462 = vst.msk [vmem:[#allocation3 + $0x138] sm:$0xff] %vm3422, %v3309
    %3463 = vst.msk [vmem:[#allocation3 + $0x140] sm:$0xff] %vm3422, %v3311
    %3464 = vst.msk [vmem:[#allocation3 + $0x148] sm:$0xff] %vm3422, %v3313
    %3465 = vst.msk [vmem:[#allocation3 + $0x150] sm:$0xff] %vm3422, %v3315
    %3466 = vst.msk [vmem:[#allocation3 + $0x158] sm:$0xff] %vm3422, %v3317
    %3467 = vst.msk [vmem:[#allocation3 + $0x160] sm:$0xff] %vm3422, %v3319
    %3468 = vst.msk [vmem:[#allocation3 + $0x168] sm:$0xff] %vm3422, %v3321
    %3469 = vst.msk [vmem:[#allocation3 + $0x170] sm:$0xff] %vm3422, %v3323
    %3470 = vst.msk [vmem:[#allocation3 + $0x178] sm:$0xff] %vm3422, %v3325
    %3471 = vst.msk [vmem:[#allocation3 + $0x180] sm:$0xff] %vm3422, %v3327
    %3472 = vst.msk [vmem:[#allocation3 + $0x188] sm:$0xff] %vm3422, %v3329
    %3473 = vst.msk [vmem:[#allocation3 + $0x190] sm:$0xff] %vm3422, %v3331
    %3474 = vst.msk [vmem:[#allocation3 + $0x198] sm:$0xff] %vm3422, %v3333
    %3475 = vst.msk [vmem:[#allocation3 + $0x1a0] sm:$0xff] %vm3422, %v3335
    %3476 = vst.msk [vmem:[#allocation3 + $0x1a8] sm:$0xff] %vm3422, %v3337
    %3477 = vst.msk [vmem:[#allocation3 + $0x1b0] sm:$0xff] %vm3422, %v3339
    %3478 = vst.msk [vmem:[#allocation3 + $0x1b8] sm:$0xff] %vm3422, %v3341
    %3479 = vst.msk [vmem:[#allocation3 + $0x1c0] sm:$0xff] %vm3422, %v3343
    %3480 = vst.msk [vmem:[#allocation3 + $0x1c8] sm:$0xff] %vm3422, %v3345
    %3481 = vst.msk [vmem:[#allocation3 + $0x1d0] sm:$0xff] %vm3422, %v3347
    %3482 = vst.msk [vmem:[#allocation3 + $0x1d8] sm:$0xff] %vm3422, %v3349
    %3483 = vst.msk [vmem:[#allocation3 + $0x1e0] sm:$0xff] %vm3422, %v3351
    %3484 = vst.msk [vmem:[#allocation3 + $0x1e8] sm:$0xff] %vm3422, %v3353
    %3485 = vst.msk [vmem:[#allocation3 + $0x1f0] sm:$0xff] %vm3422, %v3355
    %3486 = vst.msk [vmem:[#allocation3 + $0x1f8] sm:$0xff] %vm3422, %v3357
    %v3487 = vld [vmem:[#allocation3] sm:$0xff]
    %v3488 = vld [vmem:[#allocation3 + $0x8] sm:$0xff]
    %v3489 = vld [vmem:[#allocation3 + $0x10] sm:$0xff]
    %v3490 = vld [vmem:[#allocation3 + $0x18] sm:$0xff]
    %v3491 = vld [vmem:[#allocation3 + $0x20] sm:$0xff]
    %v3492 = vld [vmem:[#allocation3 + $0x28] sm:$0xff]
    %v3493 = vld [vmem:[#allocation3 + $0x30] sm:$0xff]
    %v3494 = vld [vmem:[#allocation3 + $0x38] sm:$0xff]
    %v3495 = vld [vmem:[#allocation3 + $0x40] sm:$0xff]
    %v3496 = vld [vmem:[#allocation3 + $0x48] sm:$0xff]
    %v3497 = vld [vmem:[#allocation3 + $0x50] sm:$0xff]
    %v3498 = vld [vmem:[#allocation3 + $0x58] sm:$0xff]
    %v3499 = vld [vmem:[#allocation3 + $0x60] sm:$0xff]
    %v3500 = vld [vmem:[#allocation3 + $0x68] sm:$0xff]
    %v3501 = vld [vmem:[#allocation3 + $0x70] sm:$0xff]
    %v3502 = vld [vmem:[#allocation3 + $0x78] sm:$0xff]
    %v3503 = vld [vmem:[#allocation3 + $0x80] sm:$0xff]
    %v3504 = vld [vmem:[#allocation3 + $0x88] sm:$0xff]
    %v3505 = vld [vmem:[#allocation3 + $0x90] sm:$0xff]
    %v3506 = vld [vmem:[#allocation3 + $0x98] sm:$0xff]
    %v3507 = vld [vmem:[#allocation3 + $0xa0] sm:$0xff]
    %v3508 = vld [vmem:[#allocation3 + $0xa8] sm:$0xff]
    %v3509 = vld [vmem:[#allocation3 + $0xb0] sm:$0xff]
    %v3510 = vld [vmem:[#allocation3 + $0xb8] sm:$0xff]
    %v3511 = vld [vmem:[#allocation3 + $0xc0] sm:$0xff]
    %v3512 = vld [vmem:[#allocation3 + $0xc8] sm:$0xff]
    %v3513 = vld [vmem:[#allocation3 + $0xd0] sm:$0xff]
    %v3514 = vld [vmem:[#allocation3 + $0xd8] sm:$0xff]
    %v3515 = vld [vmem:[#allocation3 + $0xe0] sm:$0xff]
    %v3516 = vld [vmem:[#allocation3 + $0xe8] sm:$0xff]
    %v3517 = vld [vmem:[#allocation3 + $0xf0] sm:$0xff]
    %v3518 = vld [vmem:[#allocation3 + $0xf8] sm:$0xff]
    %v3519 = vld [vmem:[#allocation3 + $0x100] sm:$0xff]
    %v3520 = vld [vmem:[#allocation3 + $0x108] sm:$0xff]
    %v3521 = vld [vmem:[#allocation3 + $0x110] sm:$0xff]
    %v3522 = vld [vmem:[#allocation3 + $0x118] sm:$0xff]
    %v3523 = vld [vmem:[#allocation3 + $0x120] sm:$0xff]
    %v3524 = vld [vmem:[#allocation3 + $0x128] sm:$0xff]
    %v3525 = vld [vmem:[#allocation3 + $0x130] sm:$0xff]
    %v3526 = vld [vmem:[#allocation3 + $0x138] sm:$0xff]
    %v3527 = vld [vmem:[#allocation3 + $0x140] sm:$0xff]
    %v3528 = vld [vmem:[#allocation3 + $0x148] sm:$0xff]
    %v3529 = vld [vmem:[#allocation3 + $0x150] sm:$0xff]
    %v3530 = vld [vmem:[#allocation3 + $0x158] sm:$0xff]
    %v3531 = vld [vmem:[#allocation3 + $0x160] sm:$0xff]
    %v3532 = vld [vmem:[#allocation3 + $0x168] sm:$0xff]
    %v3533 = vld [vmem:[#allocation3 + $0x170] sm:$0xff]
    %v3534 = vld [vmem:[#allocation3 + $0x178] sm:$0xff]
    %v3535 = vld [vmem:[#allocation3 + $0x180] sm:$0xff]
    %v3536 = vld [vmem:[#allocation3 + $0x188] sm:$0xff]
    %v3537 = vld [vmem:[#allocation3 + $0x190] sm:$0xff]
    %v3538 = vld [vmem:[#allocation3 + $0x198] sm:$0xff]
    %v3539 = vld [vmem:[#allocation3 + $0x1a0] sm:$0xff]
    %v3540 = vld [vmem:[#allocation3 + $0x1a8] sm:$0xff]
    %v3541 = vld [vmem:[#allocation3 + $0x1b0] sm:$0xff]
    %v3542 = vld [vmem:[#allocation3 + $0x1b8] sm:$0xff]
    %v3543 = vld [vmem:[#allocation3 + $0x1c0] sm:$0xff]
    %v3544 = vld [vmem:[#allocation3 + $0x1c8] sm:$0xff]
    %v3545 = vld [vmem:[#allocation3 + $0x1d0] sm:$0xff]
    %v3546 = vld [vmem:[#allocation3 + $0x1d8] sm:$0xff]
    %v3547 = vld [vmem:[#allocation3 + $0x1e0] sm:$0xff]
    %v3548 = vld [vmem:[#allocation3 + $0x1e8] sm:$0xff]
    %v3549 = vld [vmem:[#allocation3 + $0x1f0] sm:$0xff]
    %v3550 = vld [vmem:[#allocation3 + $0x1f8] sm:$0xff]
    %v3551 = vld [vmem:[%s1] sm:$0xff]
    %v3552 = vld [vmem:[%s1 + $0x8] sm:$0x1]
    %vm3553 = vcmask 72704
    %v3555 = vsel %vm3553, %v3487, 0
    %v3558 = vsel %vm3553, %v3488, 0
    %v3561 = vsel %vm3553, %v3489, 0
    %v3564 = vsel %vm3553, %v3490, 0
    %v3567 = vsel %vm3553, %v3491, 0
    %v3570 = vsel %vm3553, %v3492, 0
    %v3573 = vsel %vm3553, %v3493, 0
    %v3576 = vsel %vm3553, %v3494, 0
    %v3579 = vsel %vm3553, %v3495, 0
    %v3582 = vsel %vm3553, %v3496, 0
    %v3585 = vsel %vm3553, %v3497, 0
    %v3588 = vsel %vm3553, %v3498, 0
    %v3591 = vsel %vm3553, %v3499, 0
    %v3594 = vsel %vm3553, %v3500, 0
    %v3597 = vsel %vm3553, %v3501, 0
    %v3600 = vsel %vm3553, %v3502, 0
    %v3603 = vsel %vm3553, %v3503, 0
    %v3606 = vsel %vm3553, %v3504, 0
    %v3609 = vsel %vm3553, %v3505, 0
    %v3612 = vsel %vm3553, %v3506, 0
    %v3615 = vsel %vm3553, %v3507, 0
    %v3618 = vsel %vm3553, %v3508, 0
    %v3621 = vsel %vm3553, %v3509, 0
    %v3624 = vsel %vm3553, %v3510, 0
    %v3627 = vsel %vm3553, %v3511, 0
    %v3630 = vsel %vm3553, %v3512, 0
    %v3633 = vsel %vm3553, %v3513, 0
    %v3636 = vsel %vm3553, %v3514, 0
    %v3639 = vsel %vm3553, %v3515, 0
    %v3642 = vsel %vm3553, %v3516, 0
    %v3645 = vsel %vm3553, %v3517, 0
    %v3648 = vsel %vm3553, %v3518, 0
    %v3651 = vsel %vm3553, %v3519, 0
    %v3654 = vsel %vm3553, %v3520, 0
    %v3657 = vsel %vm3553, %v3521, 0
    %v3660 = vsel %vm3553, %v3522, 0
    %v3663 = vsel %vm3553, %v3523, 0
    %v3666 = vsel %vm3553, %v3524, 0
    %v3669 = vsel %vm3553, %v3525, 0
    %v3672 = vsel %vm3553, %v3526, 0
    %v3675 = vsel %vm3553, %v3527, 0
    %v3678 = vsel %vm3553, %v3528, 0
    %v3681 = vsel %vm3553, %v3529, 0
    %v3684 = vsel %vm3553, %v3530, 0
    %v3687 = vsel %vm3553, %v3531, 0
    %v3690 = vsel %vm3553, %v3532, 0
    %v3693 = vsel %vm3553, %v3533, 0
    %v3696 = vsel %vm3553, %v3534, 0
    %v3699 = vsel %vm3553, %v3535, 0
    %v3702 = vsel %vm3553, %v3536, 0
    %v3705 = vsel %vm3553, %v3537, 0
    %v3708 = vsel %vm3553, %v3538, 0
    %v3711 = vsel %vm3553, %v3539, 0
    %v3714 = vsel %vm3553, %v3540, 0
    %v3717 = vsel %vm3553, %v3541, 0
    %v3720 = vsel %vm3553, %v3542, 0
    %v3723 = vsel %vm3553, %v3543, 0
    %v3726 = vsel %vm3553, %v3544, 0
    %v3729 = vsel %vm3553, %v3545, 0
    %v3732 = vsel %vm3553, %v3546, 0
    %v3735 = vsel %vm3553, %v3547, 0
    %v3738 = vsel %vm3553, %v3548, 0
    %v3741 = vsel %vm3553, %v3549, 0
    %v3744 = vsel %vm3553, %v3550, 0
    %vm3746 = vcmask 1040384
    %v3748 = vsel %vm3746, %v3552, 0
    %3750 = vmatprep.subr.mxu0 0.0
    %3751 = vmatpush1.msra.mxu0 0.0
    %3752 = vmatprep.subr.mxu0 0.0
    %3753 = vmatpush1.msra.mxu0 0.0
    %3754 = vmatprep.subr.mxu0 0.0
    %3755 = vmatpush1.msra.mxu0 0.0
    %3756 = vmatprep.subr.mxu0 0.0
    %3757 = vmatpush1.msra.mxu0 0.0
    %3758 = vmatprep.subr.mxu0 0.0
    %3759 = vmatpush1.msra.mxu0 0.0
    %3760 = vmatprep.subr.mxu0 0.0
    %3761 = vmatpush1.msra.mxu0 0.0
    %3762 = vmatprep.subr.mxu0 0.0
    %3763 = vmatpush1.msra.mxu0 0.0
    %3764 = vmatprep.subr.mxu0 0.0
    %3765 = vmatpush1.msra.mxu0 0.0
    %3766 = vmatprep.subr.mxu0 0.0
    %3767 = vmatpush1.msra.mxu0 0.0
    %3768 = vmatprep.subr.mxu0 0.0
    %3769 = vmatpush1.msra.mxu0 0.0
    %3770 = vmatprep.subr.mxu0 0.0
    %3771 = vmatpush1.msra.mxu0 0.0
    %3772 = vmatprep.subr.mxu0 0.0
    %3773 = vmatpush1.msra.mxu0 0.0
    %3774 = vmatprep.subr.mxu0 0.0
    %3775 = vmatpush1.msra.mxu0 0.0
    %3776 = vmatprep.subr.mxu0 0.0
    %3777 = vmatpush1.msra.mxu0 0.0
    %3778 = vmatprep.subr.mxu0 0.0
    %3779 = vmatpush1.msra.mxu0 %v3748
    %3780 = vmatprep.subr.mxu0 0.0
    %3781 = vmatpush1.msra.mxu0 %v3551
    %3782 = vmatprep.subr.mxu0 0.0
    %3783 = vmatpush2.msra.mxu0 0.0
    %3784 = vmatprep.subr.mxu0 0.0
    %3785 = vmatpush2.msra.mxu0 0.0
    %3786 = vmatprep.subr.mxu0 0.0
    %3787 = vmatpush2.msra.mxu0 0.0
    %3788 = vmatprep.subr.mxu0 0.0
    %3789 = vmatpush2.msra.mxu0 0.0
    %3790 = vmatprep.subr.mxu0 0.0
    %3791 = vmatpush2.msra.mxu0 0.0
    %3792 = vmatprep.subr.mxu0 0.0
    %3793 = vmatpush2.msra.mxu0 0.0
    %3794 = vmatprep.subr.mxu0 0.0
    %3795 = vmatpush2.msra.mxu0 0.0
    %3796 = vmatprep.subr.mxu0 0.0
    %3797 = vmatpush2.msra.mxu0 0.0
    %3798 = vmatprep.subr.mxu0 0.0
    %3799 = vmatpush2.msra.mxu0 0.0
    %3800 = vmatprep.subr.mxu0 0.0
    %3801 = vmatpush2.msra.mxu0 0.0
    %3802 = vmatprep.subr.mxu0 0.0
    %3803 = vmatpush2.msra.mxu0 0.0
    %3804 = vmatprep.subr.mxu0 0.0
    %3805 = vmatpush2.msra.mxu0 0.0
    %3806 = vmatprep.subr.mxu0 0.0
    %3807 = vmatpush2.msra.mxu0 0.0
    %3808 = vmatprep.subr.mxu0 0.0
    %3809 = vmatpush2.msra.mxu0 0.0
    %3810 = vmatprep.subr.mxu0 0.0
    %3811 = vmatpush2.msra.mxu0 0.0
    %3812 = vmatprep.subr.mxu0 0.0
    %3813 = vmatpush2.msra.mxu0 0.0
    %3814 = vmatprep.mubr.f32.mxu0 0.0
    %3815 = vmatmul.mubr.f32.gmra.mxu0 %v3555
    %v3816 = vpop.f32.mrf.mxu0
    %v3817 = vadd.f32 0.0, %v3816
    %v3818 = vpop.f32.mrf.mxu0
    %3819 = vmatprep.mubr.f32.mxu0 0.0
    %3820 = vmatmul.mubr.f32.gmra.mxu0 %v3558
    %v3821 = vpop.f32.mrf.mxu0
    %v3822 = vadd.f32 0.0, %v3821
    %v3823 = vpop.f32.mrf.mxu0
    %3824 = vmatprep.mubr.f32.mxu0 0.0
    %3825 = vmatmul.mubr.f32.gmra.mxu0 %v3561
    %v3826 = vpop.f32.mrf.mxu0
    %v3827 = vadd.f32 0.0, %v3826
    %v3828 = vpop.f32.mrf.mxu0
    %3829 = vmatprep.mubr.f32.mxu0 0.0
    %3830 = vmatmul.mubr.f32.gmra.mxu0 %v3564
    %v3831 = vpop.f32.mrf.mxu0
    %v3832 = vadd.f32 0.0, %v3831
    %v3833 = vpop.f32.mrf.mxu0
    %3834 = vmatprep.mubr.f32.mxu0 0.0
    %3835 = vmatmul.mubr.f32.gmra.mxu0 %v3567
    %v3836 = vpop.f32.mrf.mxu0
    %v3837 = vadd.f32 0.0, %v3836
    %v3838 = vpop.f32.mrf.mxu0
    %3839 = vmatprep.mubr.f32.mxu0 0.0
    %3840 = vmatmul.mubr.f32.gmra.mxu0 %v3570
    %v3841 = vpop.f32.mrf.mxu0
    %v3842 = vadd.f32 0.0, %v3841
    %v3843 = vpop.f32.mrf.mxu0
    %3844 = vmatprep.mubr.f32.mxu0 0.0
    %3845 = vmatmul.mubr.f32.gmra.mxu0 %v3573
    %v3846 = vpop.f32.mrf.mxu0
    %v3847 = vadd.f32 0.0, %v3846
    %v3848 = vpop.f32.mrf.mxu0
    %3849 = vmatprep.mubr.f32.mxu0 0.0
    %3850 = vmatmul.mubr.f32.gmra.mxu0 %v3576
    %v3851 = vpop.f32.mrf.mxu0
    %v3852 = vadd.f32 0.0, %v3851
    %v3853 = vpop.f32.mrf.mxu0
    %3854 = vmatprep.mubr.f32.mxu0 0.0
    %3855 = vmatmul.mubr.f32.gmra.mxu0 %v3579
    %v3856 = vpop.f32.mrf.mxu0
    %v3857 = vadd.f32 0.0, %v3856
    %v3858 = vpop.f32.mrf.mxu0
    %3859 = vmatprep.mubr.f32.mxu0 0.0
    %3860 = vmatmul.mubr.f32.gmra.mxu0 %v3582
    %v3861 = vpop.f32.mrf.mxu0
    %v3862 = vadd.f32 0.0, %v3861
    %v3863 = vpop.f32.mrf.mxu0
    %3864 = vmatprep.mubr.f32.mxu0 0.0
    %3865 = vmatmul.mubr.f32.gmra.mxu0 %v3585
    %v3866 = vpop.f32.mrf.mxu0
    %v3867 = vadd.f32 0.0, %v3866
    %v3868 = vpop.f32.mrf.mxu0
    %3869 = vmatprep.mubr.f32.mxu0 0.0
    %3870 = vmatmul.mubr.f32.gmra.mxu0 %v3588
    %v3871 = vpop.f32.mrf.mxu0
    %v3872 = vadd.f32 0.0, %v3871
    %v3873 = vpop.f32.mrf.mxu0
    %3874 = vmatprep.mubr.f32.mxu0 0.0
    %3875 = vmatmul.mubr.f32.gmra.mxu0 %v3591
    %v3876 = vpop.f32.mrf.mxu0
    %v3877 = vadd.f32 0.0, %v3876
    %v3878 = vpop.f32.mrf.mxu0
    %3879 = vmatprep.mubr.f32.mxu0 0.0
    %3880 = vmatmul.mubr.f32.gmra.mxu0 %v3594
    %v3881 = vpop.f32.mrf.mxu0
    %v3882 = vadd.f32 0.0, %v3881
    %v3883 = vpop.f32.mrf.mxu0
    %3884 = vmatprep.mubr.f32.mxu0 0.0
    %3885 = vmatmul.mubr.f32.gmra.mxu0 %v3597
    %v3886 = vpop.f32.mrf.mxu0
    %v3887 = vadd.f32 0.0, %v3886
    %v3888 = vpop.f32.mrf.mxu0
    %3889 = vmatprep.mubr.f32.mxu0 0.0
    %3890 = vmatmul.mubr.f32.gmra.mxu0 %v3600
    %v3891 = vpop.f32.mrf.mxu0
    %v3892 = vadd.f32 0.0, %v3891
    %v3893 = vpop.f32.mrf.mxu0
    %3894 = vmatprep.mubr.f32.mxu0 0.0
    %3895 = vmatmul.mubr.f32.gmra.mxu0 %v3603
    %v3896 = vpop.f32.mrf.mxu0
    %v3897 = vadd.f32 0.0, %v3896
    %v3898 = vpop.f32.mrf.mxu0
    %3899 = vmatprep.mubr.f32.mxu0 0.0
    %3900 = vmatmul.mubr.f32.gmra.mxu0 %v3606
    %v3901 = vpop.f32.mrf.mxu0
    %v3902 = vadd.f32 0.0, %v3901
    %v3903 = vpop.f32.mrf.mxu0
    %3904 = vmatprep.mubr.f32.mxu0 0.0
    %3905 = vmatmul.mubr.f32.gmra.mxu0 %v3609
    %v3906 = vpop.f32.mrf.mxu0
    %v3907 = vadd.f32 0.0, %v3906
    %v3908 = vpop.f32.mrf.mxu0
    %3909 = vmatprep.mubr.f32.mxu0 0.0
    %3910 = vmatmul.mubr.f32.gmra.mxu0 %v3612
    %v3911 = vpop.f32.mrf.mxu0
    %v3912 = vadd.f32 0.0, %v3911
    %v3913 = vpop.f32.mrf.mxu0
    %3914 = vmatprep.mubr.f32.mxu0 0.0
    %3915 = vmatmul.mubr.f32.gmra.mxu0 %v3615
    %v3916 = vpop.f32.mrf.mxu0
    %v3917 = vadd.f32 0.0, %v3916
    %v3918 = vpop.f32.mrf.mxu0
    %3919 = vmatprep.mubr.f32.mxu0 0.0
    %3920 = vmatmul.mubr.f32.gmra.mxu0 %v3618
    %v3921 = vpop.f32.mrf.mxu0
    %v3922 = vadd.f32 0.0, %v3921
    %v3923 = vpop.f32.mrf.mxu0
    %3924 = vmatprep.mubr.f32.mxu0 0.0
    %3925 = vmatmul.mubr.f32.gmra.mxu0 %v3621
    %v3926 = vpop.f32.mrf.mxu0
    %v3927 = vadd.f32 0.0, %v3926
    %v3928 = vpop.f32.mrf.mxu0
    %3929 = vmatprep.mubr.f32.mxu0 0.0
    %3930 = vmatmul.mubr.f32.gmra.mxu0 %v3624
    %v3931 = vpop.f32.mrf.mxu0
    %v3932 = vadd.f32 0.0, %v3931
    %v3933 = vpop.f32.mrf.mxu0
    %3934 = vmatprep.mubr.f32.mxu0 0.0
    %3935 = vmatmul.mubr.f32.gmra.mxu0 %v3627
    %v3936 = vpop.f32.mrf.mxu0
    %v3937 = vadd.f32 0.0, %v3936
    %v3938 = vpop.f32.mrf.mxu0
    %3939 = vmatprep.mubr.f32.mxu0 0.0
    %3940 = vmatmul.mubr.f32.gmra.mxu0 %v3630
    %v3941 = vpop.f32.mrf.mxu0
    %v3942 = vadd.f32 0.0, %v3941
    %v3943 = vpop.f32.mrf.mxu0
    %3944 = vmatprep.mubr.f32.mxu0 0.0
    %3945 = vmatmul.mubr.f32.gmra.mxu0 %v3633
    %v3946 = vpop.f32.mrf.mxu0
    %v3947 = vadd.f32 0.0, %v3946
    %v3948 = vpop.f32.mrf.mxu0
    %3949 = vmatprep.mubr.f32.mxu0 0.0
    %3950 = vmatmul.mubr.f32.gmra.mxu0 %v3636
    %v3951 = vpop.f32.mrf.mxu0
    %v3952 = vadd.f32 0.0, %v3951
    %v3953 = vpop.f32.mrf.mxu0
    %3954 = vmatprep.mubr.f32.mxu0 0.0
    %3955 = vmatmul.mubr.f32.gmra.mxu0 %v3639
    %v3956 = vpop.f32.mrf.mxu0
    %v3957 = vadd.f32 0.0, %v3956
    %v3958 = vpop.f32.mrf.mxu0
    %3959 = vmatprep.mubr.f32.mxu0 0.0
    %3960 = vmatmul.mubr.f32.gmra.mxu0 %v3642
    %v3961 = vpop.f32.mrf.mxu0
    %v3962 = vadd.f32 0.0, %v3961
    %v3963 = vpop.f32.mrf.mxu0
    %3964 = vmatprep.mubr.f32.mxu0 0.0
    %3965 = vmatmul.mubr.f32.gmra.mxu0 %v3645
    %v3966 = vpop.f32.mrf.mxu0
    %v3967 = vadd.f32 0.0, %v3966
    %v3968 = vpop.f32.mrf.mxu0
    %3969 = vmatprep.mubr.f32.mxu0 0.0
    %3970 = vmatmul.mubr.f32.gmra.mxu0 %v3648
    %v3971 = vpop.f32.mrf.mxu0
    %v3972 = vadd.f32 0.0, %v3971
    %v3973 = vpop.f32.mrf.mxu0
    %3974 = vmatprep.mubr.f32.mxu0 0.0
    %3975 = vmatmul.mubr.f32.gmra.mxu0 %v3651
    %v3976 = vpop.f32.mrf.mxu0
    %v3977 = vadd.f32 0.0, %v3976
    %v3978 = vpop.f32.mrf.mxu0
    %3979 = vmatprep.mubr.f32.mxu0 0.0
    %3980 = vmatmul.mubr.f32.gmra.mxu0 %v3654
    %v3981 = vpop.f32.mrf.mxu0
    %v3982 = vadd.f32 0.0, %v3981
    %v3983 = vpop.f32.mrf.mxu0
    %3984 = vmatprep.mubr.f32.mxu0 0.0
    %3985 = vmatmul.mubr.f32.gmra.mxu0 %v3657
    %v3986 = vpop.f32.mrf.mxu0
    %v3987 = vadd.f32 0.0, %v3986
    %v3988 = vpop.f32.mrf.mxu0
    %3989 = vmatprep.mubr.f32.mxu0 0.0
    %3990 = vmatmul.mubr.f32.gmra.mxu0 %v3660
    %v3991 = vpop.f32.mrf.mxu0
    %v3992 = vadd.f32 0.0, %v3991
    %v3993 = vpop.f32.mrf.mxu0
    %3994 = vmatprep.mubr.f32.mxu0 0.0
    %3995 = vmatmul.mubr.f32.gmra.mxu0 %v3663
    %v3996 = vpop.f32.mrf.mxu0
    %v3997 = vadd.f32 0.0, %v3996
    %v3998 = vpop.f32.mrf.mxu0
    %3999 = vmatprep.mubr.f32.mxu0 0.0
    %4000 = vmatmul.mubr.f32.gmra.mxu0 %v3666
    %v4001 = vpop.f32.mrf.mxu0
    %v4002 = vadd.f32 0.0, %v4001
    %v4003 = vpop.f32.mrf.mxu0
    %4004 = vmatprep.mubr.f32.mxu0 0.0
    %4005 = vmatmul.mubr.f32.gmra.mxu0 %v3669
    %v4006 = vpop.f32.mrf.mxu0
    %v4007 = vadd.f32 0.0, %v4006
    %v4008 = vpop.f32.mrf.mxu0
    %4009 = vmatprep.mubr.f32.mxu0 0.0
    %4010 = vmatmul.mubr.f32.gmra.mxu0 %v3672
    %v4011 = vpop.f32.mrf.mxu0
    %v4012 = vadd.f32 0.0, %v4011
    %v4013 = vpop.f32.mrf.mxu0
    %4014 = vmatprep.mubr.f32.mxu0 0.0
    %4015 = vmatmul.mubr.f32.gmra.mxu0 %v3675
    %v4016 = vpop.f32.mrf.mxu0
    %v4017 = vadd.f32 0.0, %v4016
    %v4018 = vpop.f32.mrf.mxu0
    %4019 = vmatprep.mubr.f32.mxu0 0.0
    %4020 = vmatmul.mubr.f32.gmra.mxu0 %v3678
    %v4021 = vpop.f32.mrf.mxu0
    %v4022 = vadd.f32 0.0, %v4021
    %v4023 = vpop.f32.mrf.mxu0
    %4024 = vmatprep.mubr.f32.mxu0 0.0
    %4025 = vmatmul.mubr.f32.gmra.mxu0 %v3681
    %v4026 = vpop.f32.mrf.mxu0
    %v4027 = vadd.f32 0.0, %v4026
    %v4028 = vpop.f32.mrf.mxu0
    %4029 = vmatprep.mubr.f32.mxu0 0.0
    %4030 = vmatmul.mubr.f32.gmra.mxu0 %v3684
    %v4031 = vpop.f32.mrf.mxu0
    %v4032 = vadd.f32 0.0, %v4031
    %v4033 = vpop.f32.mrf.mxu0
    %4034 = vmatprep.mubr.f32.mxu0 0.0
    %4035 = vmatmul.mubr.f32.gmra.mxu0 %v3687
    %v4036 = vpop.f32.mrf.mxu0
    %v4037 = vadd.f32 0.0, %v4036
    %v4038 = vpop.f32.mrf.mxu0
    %4039 = vmatprep.mubr.f32.mxu0 0.0
    %4040 = vmatmul.mubr.f32.gmra.mxu0 %v3690
    %v4041 = vpop.f32.mrf.mxu0
    %v4042 = vadd.f32 0.0, %v4041
    %v4043 = vpop.f32.mrf.mxu0
    %4044 = vmatprep.mubr.f32.mxu0 0.0
    %4045 = vmatmul.mubr.f32.gmra.mxu0 %v3693
    %v4046 = vpop.f32.mrf.mxu0
    %v4047 = vadd.f32 0.0, %v4046
    %v4048 = vpop.f32.mrf.mxu0
    %4049 = vmatprep.mubr.f32.mxu0 0.0
    %4050 = vmatmul.mubr.f32.gmra.mxu0 %v3696
    %v4051 = vpop.f32.mrf.mxu0
    %v4052 = vadd.f32 0.0, %v4051
    %v4053 = vpop.f32.mrf.mxu0
    %4054 = vmatprep.mubr.f32.mxu0 0.0
    %4055 = vmatmul.mubr.f32.gmra.mxu0 %v3699
    %v4056 = vpop.f32.mrf.mxu0
    %v4057 = vadd.f32 0.0, %v4056
    %v4058 = vpop.f32.mrf.mxu0
    %4059 = vmatprep.mubr.f32.mxu0 0.0
    %4060 = vmatmul.mubr.f32.gmra.mxu0 %v3702
    %v4061 = vpop.f32.mrf.mxu0
    %v4062 = vadd.f32 0.0, %v4061
    %v4063 = vpop.f32.mrf.mxu0
    %4064 = vmatprep.mubr.f32.mxu0 0.0
    %4065 = vmatmul.mubr.f32.gmra.mxu0 %v3705
    %v4066 = vpop.f32.mrf.mxu0
    %v4067 = vadd.f32 0.0, %v4066
    %v4068 = vpop.f32.mrf.mxu0
    %4069 = vmatprep.mubr.f32.mxu0 0.0
    %4070 = vmatmul.mubr.f32.gmra.mxu0 %v3708
    %v4071 = vpop.f32.mrf.mxu0
    %v4072 = vadd.f32 0.0, %v4071
    %v4073 = vpop.f32.mrf.mxu0
    %4074 = vmatprep.mubr.f32.mxu0 0.0
    %4075 = vmatmul.mubr.f32.gmra.mxu0 %v3711
    %v4076 = vpop.f32.mrf.mxu0
    %v4077 = vadd.f32 0.0, %v4076
    %v4078 = vpop.f32.mrf.mxu0
    %4079 = vmatprep.mubr.f32.mxu0 0.0
    %4080 = vmatmul.mubr.f32.gmra.mxu0 %v3714
    %v4081 = vpop.f32.mrf.mxu0
    %v4082 = vadd.f32 0.0, %v4081
    %v4083 = vpop.f32.mrf.mxu0
    %4084 = vmatprep.mubr.f32.mxu0 0.0
    %4085 = vmatmul.mubr.f32.gmra.mxu0 %v3717
    %v4086 = vpop.f32.mrf.mxu0
    %v4087 = vadd.f32 0.0, %v4086
    %v4088 = vpop.f32.mrf.mxu0
    %4089 = vmatprep.mubr.f32.mxu0 0.0
    %4090 = vmatmul.mubr.f32.gmra.mxu0 %v3720
    %v4091 = vpop.f32.mrf.mxu0
    %v4092 = vadd.f32 0.0, %v4091
    %v4093 = vpop.f32.mrf.mxu0
    %4094 = vmatprep.mubr.f32.mxu0 0.0
    %4095 = vmatmul.mubr.f32.gmra.mxu0 %v3723
    %v4096 = vpop.f32.mrf.mxu0
    %v4097 = vadd.f32 0.0, %v4096
    %v4098 = vpop.f32.mrf.mxu0
    %4099 = vmatprep.mubr.f32.mxu0 0.0
    %4100 = vmatmul.mubr.f32.gmra.mxu0 %v3726
    %v4101 = vpop.f32.mrf.mxu0
    %v4102 = vadd.f32 0.0, %v4101
    %v4103 = vpop.f32.mrf.mxu0
    %4104 = vmatprep.mubr.f32.mxu0 0.0
    %4105 = vmatmul.mubr.f32.gmra.mxu0 %v3729
    %v4106 = vpop.f32.mrf.mxu0
    %v4107 = vadd.f32 0.0, %v4106
    %v4108 = vpop.f32.mrf.mxu0
    %4109 = vmatprep.mubr.f32.mxu0 0.0
    %4110 = vmatmul.mubr.f32.gmra.mxu0 %v3732
    %v4111 = vpop.f32.mrf.mxu0
    %v4112 = vadd.f32 0.0, %v4111
    %v4113 = vpop.f32.mrf.mxu0
    %4114 = vmatprep.mubr.f32.mxu0 0.0
    %4115 = vmatmul.mubr.f32.gmra.mxu0 %v3735
    %v4116 = vpop.f32.mrf.mxu0
    %v4117 = vadd.f32 0.0, %v4116
    %v4118 = vpop.f32.mrf.mxu0
    %4119 = vmatprep.mubr.f32.mxu0 0.0
    %4120 = vmatmul.mubr.f32.gmra.mxu0 %v3738
    %v4121 = vpop.f32.mrf.mxu0
    %v4122 = vadd.f32 0.0, %v4121
    %v4123 = vpop.f32.mrf.mxu0
    %4124 = vmatprep.mubr.f32.mxu0 0.0
    %4125 = vmatmul.mubr.f32.gmra.mxu0 %v3741
    %v4126 = vpop.f32.mrf.mxu0
    %v4127 = vadd.f32 0.0, %v4126
    %v4128 = vpop.f32.mrf.mxu0
    %4129 = vmatprep.mubr.f32.mxu0 0.0
    %4130 = vmatmul.mubr.f32.gmra.mxu0 %v3744
    %v4131 = vpop.f32.mrf.mxu0
    %v4132 = vadd.f32 0.0, %v4131
    %v4133 = vpop.f32.mrf.mxu0
    %4134 = vdwg.mxu0
    %v4135 = vld [vmem:[%s2] sm:$0x1]
    %v4137 = vlaneseq
    %v4138 = vshrl.u32 %v4137, 7
    %v4139 = vsub.s32 0, %v4138
    %v4140 = vrot.slane %v4135, %v4139
    %v4142 = vmul.f32 %v3817, %v4140
    %v4143 = vmul.f32 %v3822, %v4140
    %v4144 = vmul.f32 %v3827, %v4140
    %v4145 = vmul.f32 %v3832, %v4140
    %v4146 = vmul.f32 %v3837, %v4140
    %v4147 = vmul.f32 %v3842, %v4140
    %v4148 = vmul.f32 %v3847, %v4140
    %v4149 = vmul.f32 %v3852, %v4140
    %v4150 = vmul.f32 %v3857, %v4140
    %v4151 = vmul.f32 %v3862, %v4140
    %v4152 = vmul.f32 %v3867, %v4140
    %v4153 = vmul.f32 %v3872, %v4140
    %v4154 = vmul.f32 %v3877, %v4140
    %v4155 = vmul.f32 %v3882, %v4140
    %v4156 = vmul.f32 %v3887, %v4140
    %v4157 = vmul.f32 %v3892, %v4140
    %v4158 = vmul.f32 %v3897, %v4140
    %v4159 = vmul.f32 %v3902, %v4140
    %v4160 = vmul.f32 %v3907, %v4140
    %v4161 = vmul.f32 %v3912, %v4140
    %v4162 = vmul.f32 %v3917, %v4140
    %v4163 = vmul.f32 %v3922, %v4140
    %v4164 = vmul.f32 %v3927, %v4140
    %v4165 = vmul.f32 %v3932, %v4140
    %v4166 = vmul.f32 %v3937, %v4140
    %v4167 = vmul.f32 %v3942, %v4140
    %v4168 = vmul.f32 %v3947, %v4140
    %v4169 = vmul.f32 %v3952, %v4140
    %v4170 = vmul.f32 %v3957, %v4140
    %v4171 = vmul.f32 %v3962, %v4140
    %v4172 = vmul.f32 %v3967, %v4140
    %v4173 = vmul.f32 %v3972, %v4140
    %v4174 = vmul.f32 %v3977, %v4140
    %v4175 = vmul.f32 %v3982, %v4140
    %v4176 = vmul.f32 %v3987, %v4140
    %v4177 = vmul.f32 %v3992, %v4140
    %v4178 = vmul.f32 %v3997, %v4140
    %v4179 = vmul.f32 %v4002, %v4140
    %v4180 = vmul.f32 %v4007, %v4140
    %v4181 = vmul.f32 %v4012, %v4140
    %v4182 = vmul.f32 %v4017, %v4140
    %v4183 = vmul.f32 %v4022, %v4140
    %v4184 = vmul.f32 %v4027, %v4140
    %v4185 = vmul.f32 %v4032, %v4140
    %v4186 = vmul.f32 %v4037, %v4140
    %v4187 = vmul.f32 %v4042, %v4140
    %v4188 = vmul.f32 %v4047, %v4140
    %v4189 = vmul.f32 %v4052, %v4140
    %v4190 = vmul.f32 %v4057, %v4140
    %v4191 = vmul.f32 %v4062, %v4140
    %v4192 = vmul.f32 %v4067, %v4140
    %v4193 = vmul.f32 %v4072, %v4140
    %v4194 = vmul.f32 %v4077, %v4140
    %v4195 = vmul.f32 %v4082, %v4140
    %v4196 = vmul.f32 %v4087, %v4140
    %v4197 = vmul.f32 %v4092, %v4140
    %v4198 = vmul.f32 %v4097, %v4140
    %v4199 = vmul.f32 %v4102, %v4140
    %v4200 = vmul.f32 %v4107, %v4140
    %v4201 = vmul.f32 %v4112, %v4140
    %v4202 = vmul.f32 %v4117, %v4140
    %v4203 = vmul.f32 %v4122, %v4140
    %v4204 = vmul.f32 %v4127, %v4140
    %v4205 = vmul.f32 %v4132, %v4140
    %v4206 = vld [vmem:[%s3] sm:$0x1]
    %v4208 = vlaneseq
    %v4209 = vshrl.u32 %v4208, 7
    %v4210 = vsub.s32 0, %v4209
    %v4211 = vrot.slane %v4206, %v4210
    %v4213 = vadd.f32 %v4142, %v4211
    %v4214 = vadd.f32 %v4143, %v4211
    %v4215 = vadd.f32 %v4144, %v4211
    %v4216 = vadd.f32 %v4145, %v4211
    %v4217 = vadd.f32 %v4146, %v4211
    %v4218 = vadd.f32 %v4147, %v4211
    %v4219 = vadd.f32 %v4148, %v4211
    %v4220 = vadd.f32 %v4149, %v4211
    %v4221 = vadd.f32 %v4150, %v4211
    %v4222 = vadd.f32 %v4151, %v4211
    %v4223 = vadd.f32 %v4152, %v4211
    %v4224 = vadd.f32 %v4153, %v4211
    %v4225 = vadd.f32 %v4154, %v4211
    %v4226 = vadd.f32 %v4155, %v4211
    %v4227 = vadd.f32 %v4156, %v4211
    %v4228 = vadd.f32 %v4157, %v4211
    %v4229 = vadd.f32 %v4158, %v4211
    %v4230 = vadd.f32 %v4159, %v4211
    %v4231 = vadd.f32 %v4160, %v4211
    %v4232 = vadd.f32 %v4161, %v4211
    %v4233 = vadd.f32 %v4162, %v4211
    %v4234 = vadd.f32 %v4163, %v4211
    %v4235 = vadd.f32 %v4164, %v4211
    %v4236 = vadd.f32 %v4165, %v4211
    %v4237 = vadd.f32 %v4166, %v4211
    %v4238 = vadd.f32 %v4167, %v4211
    %v4239 = vadd.f32 %v4168, %v4211
    %v4240 = vadd.f32 %v4169, %v4211
    %v4241 = vadd.f32 %v4170, %v4211
    %v4242 = vadd.f32 %v4171, %v4211
    %v4243 = vadd.f32 %v4172, %v4211
    %v4244 = vadd.f32 %v4173, %v4211
    %v4245 = vadd.f32 %v4174, %v4211
    %v4246 = vadd.f32 %v4175, %v4211
    %v4247 = vadd.f32 %v4176, %v4211
    %v4248 = vadd.f32 %v4177, %v4211
    %v4249 = vadd.f32 %v4178, %v4211
    %v4250 = vadd.f32 %v4179, %v4211
    %v4251 = vadd.f32 %v4180, %v4211
    %v4252 = vadd.f32 %v4181, %v4211
    %v4253 = vadd.f32 %v4182, %v4211
    %v4254 = vadd.f32 %v4183, %v4211
    %v4255 = vadd.f32 %v4184, %v4211
    %v4256 = vadd.f32 %v4185, %v4211
    %v4257 = vadd.f32 %v4186, %v4211
    %v4258 = vadd.f32 %v4187, %v4211
    %v4259 = vadd.f32 %v4188, %v4211
    %v4260 = vadd.f32 %v4189, %v4211
    %v4261 = vadd.f32 %v4190, %v4211
    %v4262 = vadd.f32 %v4191, %v4211
    %v4263 = vadd.f32 %v4192, %v4211
    %v4264 = vadd.f32 %v4193, %v4211
    %v4265 = vadd.f32 %v4194, %v4211
    %v4266 = vadd.f32 %v4195, %v4211
    %v4267 = vadd.f32 %v4196, %v4211
    %v4268 = vadd.f32 %v4197, %v4211
    %v4269 = vadd.f32 %v4198, %v4211
    %v4270 = vadd.f32 %v4199, %v4211
    %v4271 = vadd.f32 %v4200, %v4211
    %v4272 = vadd.f32 %v4201, %v4211
    %v4273 = vadd.f32 %v4202, %v4211
    %v4274 = vadd.f32 %v4203, %v4211
    %v4275 = vadd.f32 %v4204, %v4211
    %v4276 = vadd.f32 %v4205, %v4211
    %v4277 = vmax.f32 %v4213, 0.0
    %v4278 = vmax.f32 %v4214, 0.0
    %v4279 = vmax.f32 %v4215, 0.0
    %v4280 = vmax.f32 %v4216, 0.0
    %v4281 = vmax.f32 %v4217, 0.0
    %v4282 = vmax.f32 %v4218, 0.0
    %v4283 = vmax.f32 %v4219, 0.0
    %v4284 = vmax.f32 %v4220, 0.0
    %v4285 = vmax.f32 %v4221, 0.0
    %v4286 = vmax.f32 %v4222, 0.0
    %v4287 = vmax.f32 %v4223, 0.0
    %v4288 = vmax.f32 %v4224, 0.0
    %v4289 = vmax.f32 %v4225, 0.0
    %v4290 = vmax.f32 %v4226, 0.0
    %v4291 = vmax.f32 %v4227, 0.0
    %v4292 = vmax.f32 %v4228, 0.0
    %v4293 = vmax.f32 %v4229, 0.0
    %v4294 = vmax.f32 %v4230, 0.0
    %v4295 = vmax.f32 %v4231, 0.0
    %v4296 = vmax.f32 %v4232, 0.0
    %v4297 = vmax.f32 %v4233, 0.0
    %v4298 = vmax.f32 %v4234, 0.0
    %v4299 = vmax.f32 %v4235, 0.0
    %v4300 = vmax.f32 %v4236, 0.0
    %v4301 = vmax.f32 %v4237, 0.0
    %v4302 = vmax.f32 %v4238, 0.0
    %v4303 = vmax.f32 %v4239, 0.0
    %v4304 = vmax.f32 %v4240, 0.0
    %v4305 = vmax.f32 %v4241, 0.0
    %v4306 = vmax.f32 %v4242, 0.0
    %v4307 = vmax.f32 %v4243, 0.0
    %v4308 = vmax.f32 %v4244, 0.0
    %v4309 = vmax.f32 %v4245, 0.0
    %v4310 = vmax.f32 %v4246, 0.0
    %v4311 = vmax.f32 %v4247, 0.0
    %v4312 = vmax.f32 %v4248, 0.0
    %v4313 = vmax.f32 %v4249, 0.0
    %v4314 = vmax.f32 %v4250, 0.0
    %v4315 = vmax.f32 %v4251, 0.0
    %v4316 = vmax.f32 %v4252, 0.0
    %v4317 = vmax.f32 %v4253, 0.0
    %v4318 = vmax.f32 %v4254, 0.0
    %v4319 = vmax.f32 %v4255, 0.0
    %v4320 = vmax.f32 %v4256, 0.0
    %v4321 = vmax.f32 %v4257, 0.0
    %v4322 = vmax.f32 %v4258, 0.0
    %v4323 = vmax.f32 %v4259, 0.0
    %v4324 = vmax.f32 %v4260, 0.0
    %v4325 = vmax.f32 %v4261, 0.0
    %v4326 = vmax.f32 %v4262, 0.0
    %v4327 = vmax.f32 %v4263, 0.0
    %v4328 = vmax.f32 %v4264, 0.0
    %v4329 = vmax.f32 %v4265, 0.0
    %v4330 = vmax.f32 %v4266, 0.0
    %v4331 = vmax.f32 %v4267, 0.0
    %v4332 = vmax.f32 %v4268, 0.0
    %v4333 = vmax.f32 %v4269, 0.0
    %v4334 = vmax.f32 %v4270, 0.0
    %v4335 = vmax.f32 %v4271, 0.0
    %v4336 = vmax.f32 %v4272, 0.0
    %v4337 = vmax.f32 %v4273, 0.0
    %v4338 = vmax.f32 %v4274, 0.0
    %v4339 = vmax.f32 %v4275, 0.0
    %v4340 = vmax.f32 %v4276, 0.0
    %vm4341 = vcmask 31744
    %v4342 = vsel %vm4341, %v4277, -inf
    %v4343 = vsel %vm4341, %v4279, -inf
    %v4344 = vmax.f32 %v4342, %v4343
    %v4345 = vsel %vm4341, %v4278, -inf
    %v4346 = vsel %vm4341, %v4280, -inf
    %v4347 = vmax.f32 %v4345, %v4346
    %v4348 = vsel %vm4341, %v4281, -inf
    %v4349 = vsel %vm4341, %v4283, -inf
    %v4350 = vmax.f32 %v4348, %v4349
    %v4351 = vsel %vm4341, %v4282, -inf
    %v4352 = vsel %vm4341, %v4284, -inf
    %v4353 = vmax.f32 %v4351, %v4352
    %v4354 = vsel %vm4341, %v4285, -inf
    %v4355 = vsel %vm4341, %v4287, -inf
    %v4356 = vmax.f32 %v4354, %v4355
    %v4357 = vsel %vm4341, %v4286, -inf
    %v4358 = vsel %vm4341, %v4288, -inf
    %v4359 = vmax.f32 %v4357, %v4358
    %v4360 = vsel %vm4341, %v4289, -inf
    %v4361 = vsel %vm4341, %v4291, -inf
    %v4362 = vmax.f32 %v4360, %v4361
    %v4363 = vsel %vm4341, %v4290, -inf
    %v4364 = vsel %vm4341, %v4292, -inf
    %v4365 = vmax.f32 %v4363, %v4364
    %v4366 = vsel %vm4341, %v4293, -inf
    %v4367 = vsel %vm4341, %v4295, -inf
    %v4368 = vmax.f32 %v4366, %v4367
    %v4369 = vsel %vm4341, %v4294, -inf
    %v4370 = vsel %vm4341, %v4296, -inf
    %v4371 = vmax.f32 %v4369, %v4370
    %v4372 = vsel %vm4341, %v4297, -inf
    %v4373 = vsel %vm4341, %v4299, -inf
    %v4374 = vmax.f32 %v4372, %v4373
    %v4375 = vsel %vm4341, %v4298, -inf
    %v4376 = vsel %vm4341, %v4300, -inf
    %v4377 = vmax.f32 %v4375, %v4376
    %v4378 = vsel %vm4341, %v4301, -inf
    %v4379 = vsel %vm4341, %v4303, -inf
    %v4380 = vmax.f32 %v4378, %v4379
    %v4381 = vsel %vm4341, %v4302, -inf
    %v4382 = vsel %vm4341, %v4304, -inf
    %v4383 = vmax.f32 %v4381, %v4382
    %v4384 = vsel %vm4341, %v4305, -inf
    %v4385 = vsel %vm4341, %v4307, -inf
    %v4386 = vmax.f32 %v4384, %v4385
    %v4387 = vsel %vm4341, %v4306, -inf
    %v4388 = vsel %vm4341, %v4308, -inf
    %v4389 = vmax.f32 %v4387, %v4388
    %v4390 = vsel %vm4341, %v4309, -inf
    %v4391 = vsel %vm4341, %v4311, -inf
    %v4392 = vmax.f32 %v4390, %v4391
    %v4393 = vsel %vm4341, %v4310, -inf
    %v4394 = vsel %vm4341, %v4312, -inf
    %v4395 = vmax.f32 %v4393, %v4394
    %v4396 = vsel %vm4341, %v4313, -inf
    %v4397 = vsel %vm4341, %v4315, -inf
    %v4398 = vmax.f32 %v4396, %v4397
    %v4399 = vsel %vm4341, %v4314, -inf
    %v4400 = vsel %vm4341, %v4316, -inf
    %v4401 = vmax.f32 %v4399, %v4400
    %v4402 = vsel %vm4341, %v4317, -inf
    %v4403 = vsel %vm4341, %v4319, -inf
    %v4404 = vmax.f32 %v4402, %v4403
    %v4405 = vsel %vm4341, %v4318, -inf
    %v4406 = vsel %vm4341, %v4320, -inf
    %v4407 = vmax.f32 %v4405, %v4406
    %v4408 = vsel %vm4341, %v4321, -inf
    %v4409 = vsel %vm4341, %v4323, -inf
    %v4410 = vmax.f32 %v4408, %v4409
    %v4411 = vsel %vm4341, %v4322, -inf
    %v4412 = vsel %vm4341, %v4324, -inf
    %v4413 = vmax.f32 %v4411, %v4412
    %v4414 = vsel %vm4341, %v4325, -inf
    %v4415 = vsel %vm4341, %v4327, -inf
    %v4416 = vmax.f32 %v4414, %v4415
    %v4417 = vsel %vm4341, %v4326, -inf
    %v4418 = vsel %vm4341, %v4328, -inf
    %v4419 = vmax.f32 %v4417, %v4418
    %v4420 = vsel %vm4341, %v4329, -inf
    %v4421 = vsel %vm4341, %v4331, -inf
    %v4422 = vmax.f32 %v4420, %v4421
    %v4423 = vsel %vm4341, %v4330, -inf
    %v4424 = vsel %vm4341, %v4332, -inf
    %v4425 = vmax.f32 %v4423, %v4424
    %v4426 = vsel %vm4341, %v4333, -inf
    %v4427 = vsel %vm4341, %v4335, -inf
    %v4428 = vmax.f32 %v4426, %v4427
    %v4429 = vsel %vm4341, %v4334, -inf
    %v4430 = vsel %vm4341, %v4336, -inf
    %v4431 = vmax.f32 %v4429, %v4430
    %v4432 = vsel %vm4341, %v4337, -inf
    %v4433 = vsel %vm4341, %v4339, -inf
    %v4434 = vmax.f32 %v4432, %v4433
    %v4435 = vsel %vm4341, %v4338, -inf
    %v4436 = vsel %vm4341, %v4340, -inf
    %v4437 = vmax.f32 %v4435, %v4436
    %v4470 = vcombine.high %v4344, %v4344
    %v4472 = vunpack.c.l.s4 1983009808
    %v4473 = vunpack.c.0.s8 %v4472
    %v4474 = vlaneseq
    %v4475 = vshrl.u32 %v4474, 7
    %v4476 = vsub.s32 %v4473, %v4475
    %v4477 = vrot.slane %v4344, %v4476
    %v4479 = vunpack.c.l.s4 1983009808
    %v4480 = vunpack.c.0.s8 %v4479
    %v4481 = vlaneseq
    %v4482 = vshrl.u32 %v4481, 7
    %v4483 = vsub.s32 %v4480, %v4482
    %v4484 = vrot.slane %v4470, %v4483
    %v4485 = vcombine.high %v4477, %v4477
    %v4486 = vcombine.high %v4484, %v4484
    %v4487 = vcombine.high %v4347, %v4347
    %v4489 = vunpack.c.l.s4 1983009808
    %v4490 = vunpack.c.0.s8 %v4489
    %v4491 = vlaneseq
    %v4492 = vshrl.u32 %v4491, 7
    %v4493 = vsub.s32 %v4490, %v4492
    %v4494 = vrot.slane %v4347, %v4493
    %v4496 = vunpack.c.l.s4 1983009808
    %v4497 = vunpack.c.0.s8 %v4496
    %v4498 = vlaneseq
    %v4499 = vshrl.u32 %v4498, 7
    %v4500 = vsub.s32 %v4497, %v4499
    %v4501 = vrot.slane %v4487, %v4500
    %v4502 = vcombine.high %v4494, %v4494
    %v4503 = vcombine.high %v4501, %v4501
    %v4504 = vcombine.high %v4350, %v4350
    %v4506 = vunpack.c.l.s4 1983009808
    %v4507 = vunpack.c.0.s8 %v4506
    %v4508 = vlaneseq
    %v4509 = vshrl.u32 %v4508, 7
    %v4510 = vsub.s32 %v4507, %v4509
    %v4511 = vrot.slane %v4350, %v4510
    %v4513 = vunpack.c.l.s4 1983009808
    %v4514 = vunpack.c.0.s8 %v4513
    %v4515 = vlaneseq
    %v4516 = vshrl.u32 %v4515, 7
    %v4517 = vsub.s32 %v4514, %v4516
    %v4518 = vrot.slane %v4504, %v4517
    %v4519 = vcombine.high %v4511, %v4511
    %v4520 = vcombine.high %v4518, %v4518
    %v4521 = vcombine.high %v4353, %v4353
    %v4523 = vunpack.c.l.s4 1983009808
    %v4524 = vunpack.c.0.s8 %v4523
    %v4525 = vlaneseq
    %v4526 = vshrl.u32 %v4525, 7
    %v4527 = vsub.s32 %v4524, %v4526
    %v4528 = vrot.slane %v4353, %v4527
    %v4530 = vunpack.c.l.s4 1983009808
    %v4531 = vunpack.c.0.s8 %v4530
    %v4532 = vlaneseq
    %v4533 = vshrl.u32 %v4532, 7
    %v4534 = vsub.s32 %v4531, %v4533
    %v4535 = vrot.slane %v4521, %v4534
    %v4536 = vcombine.high %v4528, %v4528
    %v4537 = vcombine.high %v4535, %v4535
    %v4538 = vcombine.high %v4356, %v4356
    %v4540 = vunpack.c.l.s4 1983009808
    %v4541 = vunpack.c.0.s8 %v4540
    %v4542 = vlaneseq
    %v4543 = vshrl.u32 %v4542, 7
    %v4544 = vsub.s32 %v4541, %v4543
    %v4545 = vrot.slane %v4356, %v4544
    %v4547 = vunpack.c.l.s4 1983009808
    %v4548 = vunpack.c.0.s8 %v4547
    %v4549 = vlaneseq
    %v4550 = vshrl.u32 %v4549, 7
    %v4551 = vsub.s32 %v4548, %v4550
    %v4552 = vrot.slane %v4538, %v4551
    %v4553 = vcombine.high %v4545, %v4545
    %v4554 = vcombine.high %v4552, %v4552
    %v4555 = vcombine.high %v4359, %v4359
    %v4557 = vunpack.c.l.s4 1983009808
    %v4558 = vunpack.c.0.s8 %v4557
    %v4559 = vlaneseq
    %v4560 = vshrl.u32 %v4559, 7
    %v4561 = vsub.s32 %v4558, %v4560
    %v4562 = vrot.slane %v4359, %v4561
    %v4564 = vunpack.c.l.s4 1983009808
    %v4565 = vunpack.c.0.s8 %v4564
    %v4566 = vlaneseq
    %v4567 = vshrl.u32 %v4566, 7
    %v4568 = vsub.s32 %v4565, %v4567
    %v4569 = vrot.slane %v4555, %v4568
    %v4570 = vcombine.high %v4562, %v4562
    %v4571 = vcombine.high %v4569, %v4569
    %v4572 = vcombine.high %v4362, %v4362
    %v4574 = vunpack.c.l.s4 1983009808
    %v4575 = vunpack.c.0.s8 %v4574
    %v4576 = vlaneseq
    %v4577 = vshrl.u32 %v4576, 7
    %v4578 = vsub.s32 %v4575, %v4577
    %v4579 = vrot.slane %v4362, %v4578
    %v4581 = vunpack.c.l.s4 1983009808
    %v4582 = vunpack.c.0.s8 %v4581
    %v4583 = vlaneseq
    %v4584 = vshrl.u32 %v4583, 7
    %v4585 = vsub.s32 %v4582, %v4584
    %v4586 = vrot.slane %v4572, %v4585
    %v4587 = vcombine.high %v4579, %v4579
    %v4588 = vcombine.high %v4586, %v4586
    %v4589 = vcombine.high %v4365, %v4365
    %v4591 = vunpack.c.l.s4 1983009808
    %v4592 = vunpack.c.0.s8 %v4591
    %v4593 = vlaneseq
    %v4594 = vshrl.u32 %v4593, 7
    %v4595 = vsub.s32 %v4592, %v4594
    %v4596 = vrot.slane %v4365, %v4595
    %v4598 = vunpack.c.l.s4 1983009808
    %v4599 = vunpack.c.0.s8 %v4598
    %v4600 = vlaneseq
    %v4601 = vshrl.u32 %v4600, 7
    %v4602 = vsub.s32 %v4599, %v4601
    %v4603 = vrot.slane %v4589, %v4602
    %v4604 = vcombine.high %v4596, %v4596
    %v4605 = vcombine.high %v4603, %v4603
    %v4606 = vcombine.high %v4368, %v4368
    %v4608 = vunpack.c.l.s4 1983009808
    %v4609 = vunpack.c.0.s8 %v4608
    %v4610 = vlaneseq
    %v4611 = vshrl.u32 %v4610, 7
    %v4612 = vsub.s32 %v4609, %v4611
    %v4613 = vrot.slane %v4368, %v4612
    %v4615 = vunpack.c.l.s4 1983009808
    %v4616 = vunpack.c.0.s8 %v4615
    %v4617 = vlaneseq
    %v4618 = vshrl.u32 %v4617, 7
    %v4619 = vsub.s32 %v4616, %v4618
    %v4620 = vrot.slane %v4606, %v4619
    %v4621 = vcombine.high %v4613, %v4613
    %v4622 = vcombine.high %v4620, %v4620
    %v4623 = vcombine.high %v4371, %v4371
    %v4625 = vunpack.c.l.s4 1983009808
    %v4626 = vunpack.c.0.s8 %v4625
    %v4627 = vlaneseq
    %v4628 = vshrl.u32 %v4627, 7
    %v4629 = vsub.s32 %v4626, %v4628
    %v4630 = vrot.slane %v4371, %v4629
    %v4632 = vunpack.c.l.s4 1983009808
    %v4633 = vunpack.c.0.s8 %v4632
    %v4634 = vlaneseq
    %v4635 = vshrl.u32 %v4634, 7
    %v4636 = vsub.s32 %v4633, %v4635
    %v4637 = vrot.slane %v4623, %v4636
    %v4638 = vcombine.high %v4630, %v4630
    %v4639 = vcombine.high %v4637, %v4637
    %v4640 = vcombine.high %v4374, %v4374
    %v4642 = vunpack.c.l.s4 1983009808
    %v4643 = vunpack.c.0.s8 %v4642
    %v4644 = vlaneseq
    %v4645 = vshrl.u32 %v4644, 7
    %v4646 = vsub.s32 %v4643, %v4645
    %v4647 = vrot.slane %v4374, %v4646
    %v4649 = vunpack.c.l.s4 1983009808
    %v4650 = vunpack.c.0.s8 %v4649
    %v4651 = vlaneseq
    %v4652 = vshrl.u32 %v4651, 7
    %v4653 = vsub.s32 %v4650, %v4652
    %v4654 = vrot.slane %v4640, %v4653
    %v4655 = vcombine.high %v4647, %v4647
    %v4656 = vcombine.high %v4654, %v4654
    %v4657 = vcombine.high %v4377, %v4377
    %v4659 = vunpack.c.l.s4 1983009808
    %v4660 = vunpack.c.0.s8 %v4659
    %v4661 = vlaneseq
    %v4662 = vshrl.u32 %v4661, 7
    %v4663 = vsub.s32 %v4660, %v4662
    %v4664 = vrot.slane %v4377, %v4663
    %v4666 = vunpack.c.l.s4 1983009808
    %v4667 = vunpack.c.0.s8 %v4666
    %v4668 = vlaneseq
    %v4669 = vshrl.u32 %v4668, 7
    %v4670 = vsub.s32 %v4667, %v4669
    %v4671 = vrot.slane %v4657, %v4670
    %v4672 = vcombine.high %v4664, %v4664
    %v4673 = vcombine.high %v4671, %v4671
    %v4674 = vcombine.high %v4380, %v4380
    %v4676 = vunpack.c.l.s4 1983009808
    %v4677 = vunpack.c.0.s8 %v4676
    %v4678 = vlaneseq
    %v4679 = vshrl.u32 %v4678, 7
    %v4680 = vsub.s32 %v4677, %v4679
    %v4681 = vrot.slane %v4380, %v4680
    %v4683 = vunpack.c.l.s4 1983009808
    %v4684 = vunpack.c.0.s8 %v4683
    %v4685 = vlaneseq
    %v4686 = vshrl.u32 %v4685, 7
    %v4687 = vsub.s32 %v4684, %v4686
    %v4688 = vrot.slane %v4674, %v4687
    %v4689 = vcombine.high %v4681, %v4681
    %v4690 = vcombine.high %v4688, %v4688
    %v4691 = vcombine.high %v4383, %v4383
    %v4693 = vunpack.c.l.s4 1983009808
    %v4694 = vunpack.c.0.s8 %v4693
    %v4695 = vlaneseq
    %v4696 = vshrl.u32 %v4695, 7
    %v4697 = vsub.s32 %v4694, %v4696
    %v4698 = vrot.slane %v4383, %v4697
    %v4700 = vunpack.c.l.s4 1983009808
    %v4701 = vunpack.c.0.s8 %v4700
    %v4702 = vlaneseq
    %v4703 = vshrl.u32 %v4702, 7
    %v4704 = vsub.s32 %v4701, %v4703
    %v4705 = vrot.slane %v4691, %v4704
    %v4706 = vcombine.high %v4698, %v4698
    %v4707 = vcombine.high %v4705, %v4705
    %v4708 = vcombine.high %v4386, %v4386
    %v4710 = vunpack.c.l.s4 1983009808
    %v4711 = vunpack.c.0.s8 %v4710
    %v4712 = vlaneseq
    %v4713 = vshrl.u32 %v4712, 7
    %v4714 = vsub.s32 %v4711, %v4713
    %v4715 = vrot.slane %v4386, %v4714
    %v4717 = vunpack.c.l.s4 1983009808
    %v4718 = vunpack.c.0.s8 %v4717
    %v4719 = vlaneseq
    %v4720 = vshrl.u32 %v4719, 7
    %v4721 = vsub.s32 %v4718, %v4720
    %v4722 = vrot.slane %v4708, %v4721
    %v4723 = vcombine.high %v4715, %v4715
    %v4724 = vcombine.high %v4722, %v4722
    %v4725 = vcombine.high %v4389, %v4389
    %v4727 = vunpack.c.l.s4 1983009808
    %v4728 = vunpack.c.0.s8 %v4727
    %v4729 = vlaneseq
    %v4730 = vshrl.u32 %v4729, 7
    %v4731 = vsub.s32 %v4728, %v4730
    %v4732 = vrot.slane %v4389, %v4731
    %v4734 = vunpack.c.l.s4 1983009808
    %v4735 = vunpack.c.0.s8 %v4734
    %v4736 = vlaneseq
    %v4737 = vshrl.u32 %v4736, 7
    %v4738 = vsub.s32 %v4735, %v4737
    %v4739 = vrot.slane %v4725, %v4738
    %v4740 = vcombine.high %v4732, %v4732
    %v4741 = vcombine.high %v4739, %v4739
    %v4742 = vcombine.high %v4392, %v4392
    %v4744 = vunpack.c.l.s4 1983009808
    %v4745 = vunpack.c.0.s8 %v4744
    %v4746 = vlaneseq
    %v4747 = vshrl.u32 %v4746, 7
    %v4748 = vsub.s32 %v4745, %v4747
    %v4749 = vrot.slane %v4392, %v4748
    %v4751 = vunpack.c.l.s4 1983009808
    %v4752 = vunpack.c.0.s8 %v4751
    %v4753 = vlaneseq
    %v4754 = vshrl.u32 %v4753, 7
    %v4755 = vsub.s32 %v4752, %v4754
    %v4756 = vrot.slane %v4742, %v4755
    %v4757 = vcombine.high %v4749, %v4749
    %v4758 = vcombine.high %v4756, %v4756
    %v4759 = vcombine.high %v4395, %v4395
    %v4761 = vunpack.c.l.s4 1983009808
    %v4762 = vunpack.c.0.s8 %v4761
    %v4763 = vlaneseq
    %v4764 = vshrl.u32 %v4763, 7
    %v4765 = vsub.s32 %v4762, %v4764
    %v4766 = vrot.slane %v4395, %v4765
    %v4768 = vunpack.c.l.s4 1983009808
    %v4769 = vunpack.c.0.s8 %v4768
    %v4770 = vlaneseq
    %v4771 = vshrl.u32 %v4770, 7
    %v4772 = vsub.s32 %v4769, %v4771
    %v4773 = vrot.slane %v4759, %v4772
    %v4774 = vcombine.high %v4766, %v4766
    %v4775 = vcombine.high %v4773, %v4773
    %v4776 = vcombine.high %v4398, %v4398
    %v4778 = vunpack.c.l.s4 1983009808
    %v4779 = vunpack.c.0.s8 %v4778
    %v4780 = vlaneseq
    %v4781 = vshrl.u32 %v4780, 7
    %v4782 = vsub.s32 %v4779, %v4781
    %v4783 = vrot.slane %v4398, %v4782
    %v4785 = vunpack.c.l.s4 1983009808
    %v4786 = vunpack.c.0.s8 %v4785
    %v4787 = vlaneseq
    %v4788 = vshrl.u32 %v4787, 7
    %v4789 = vsub.s32 %v4786, %v4788
    %v4790 = vrot.slane %v4776, %v4789
    %v4791 = vcombine.high %v4783, %v4783
    %v4792 = vcombine.high %v4790, %v4790
    %v4793 = vcombine.high %v4401, %v4401
    %v4795 = vunpack.c.l.s4 1983009808
    %v4796 = vunpack.c.0.s8 %v4795
    %v4797 = vlaneseq
    %v4798 = vshrl.u32 %v4797, 7
    %v4799 = vsub.s32 %v4796, %v4798
    %v4800 = vrot.slane %v4401, %v4799
    %v4802 = vunpack.c.l.s4 1983009808
    %v4803 = vunpack.c.0.s8 %v4802
    %v4804 = vlaneseq
    %v4805 = vshrl.u32 %v4804, 7
    %v4806 = vsub.s32 %v4803, %v4805
    %v4807 = vrot.slane %v4793, %v4806
    %v4808 = vcombine.high %v4800, %v4800
    %v4809 = vcombine.high %v4807, %v4807
    %v4810 = vcombine.high %v4404, %v4404
    %v4812 = vunpack.c.l.s4 1983009808
    %v4813 = vunpack.c.0.s8 %v4812
    %v4814 = vlaneseq
    %v4815 = vshrl.u32 %v4814, 7
    %v4816 = vsub.s32 %v4813, %v4815
    %v4817 = vrot.slane %v4404, %v4816
    %v4819 = vunpack.c.l.s4 1983009808
    %v4820 = vunpack.c.0.s8 %v4819
    %v4821 = vlaneseq
    %v4822 = vshrl.u32 %v4821, 7
    %v4823 = vsub.s32 %v4820, %v4822
    %v4824 = vrot.slane %v4810, %v4823
    %v4825 = vcombine.high %v4817, %v4817
    %v4826 = vcombine.high %v4824, %v4824
    %v4827 = vcombine.high %v4407, %v4407
    %v4829 = vunpack.c.l.s4 1983009808
    %v4830 = vunpack.c.0.s8 %v4829
    %v4831 = vlaneseq
    %v4832 = vshrl.u32 %v4831, 7
    %v4833 = vsub.s32 %v4830, %v4832
    %v4834 = vrot.slane %v4407, %v4833
    %v4836 = vunpack.c.l.s4 1983009808
    %v4837 = vunpack.c.0.s8 %v4836
    %v4838 = vlaneseq
    %v4839 = vshrl.u32 %v4838, 7
    %v4840 = vsub.s32 %v4837, %v4839
    %v4841 = vrot.slane %v4827, %v4840
    %v4842 = vcombine.high %v4834, %v4834
    %v4843 = vcombine.high %v4841, %v4841
    %v4844 = vcombine.high %v4410, %v4410
    %v4846 = vunpack.c.l.s4 1983009808
    %v4847 = vunpack.c.0.s8 %v4846
    %v4848 = vlaneseq
    %v4849 = vshrl.u32 %v4848, 7
    %v4850 = vsub.s32 %v4847, %v4849
    %v4851 = vrot.slane %v4410, %v4850
    %v4853 = vunpack.c.l.s4 1983009808
    %v4854 = vunpack.c.0.s8 %v4853
    %v4855 = vlaneseq
    %v4856 = vshrl.u32 %v4855, 7
    %v4857 = vsub.s32 %v4854, %v4856
    %v4858 = vrot.slane %v4844, %v4857
    %v4859 = vcombine.high %v4851, %v4851
    %v4860 = vcombine.high %v4858, %v4858
    %v4861 = vcombine.high %v4413, %v4413
    %v4863 = vunpack.c.l.s4 1983009808
    %v4864 = vunpack.c.0.s8 %v4863
    %v4865 = vlaneseq
    %v4866 = vshrl.u32 %v4865, 7
    %v4867 = vsub.s32 %v4864, %v4866
    %v4868 = vrot.slane %v4413, %v4867
    %v4870 = vunpack.c.l.s4 1983009808
    %v4871 = vunpack.c.0.s8 %v4870
    %v4872 = vlaneseq
    %v4873 = vshrl.u32 %v4872, 7
    %v4874 = vsub.s32 %v4871, %v4873
    %v4875 = vrot.slane %v4861, %v4874
    %v4876 = vcombine.high %v4868, %v4868
    %v4877 = vcombine.high %v4875, %v4875
    %v4878 = vcombine.high %v4416, %v4416
    %v4880 = vunpack.c.l.s4 1983009808
    %v4881 = vunpack.c.0.s8 %v4880
    %v4882 = vlaneseq
    %v4883 = vshrl.u32 %v4882, 7
    %v4884 = vsub.s32 %v4881, %v4883
    %v4885 = vrot.slane %v4416, %v4884
    %v4887 = vunpack.c.l.s4 1983009808
    %v4888 = vunpack.c.0.s8 %v4887
    %v4889 = vlaneseq
    %v4890 = vshrl.u32 %v4889, 7
    %v4891 = vsub.s32 %v4888, %v4890
    %v4892 = vrot.slane %v4878, %v4891
    %v4893 = vcombine.high %v4885, %v4885
    %v4894 = vcombine.high %v4892, %v4892
    %v4895 = vcombine.high %v4419, %v4419
    %v4897 = vunpack.c.l.s4 1983009808
    %v4898 = vunpack.c.0.s8 %v4897
    %v4899 = vlaneseq
    %v4900 = vshrl.u32 %v4899, 7
    %v4901 = vsub.s32 %v4898, %v4900
    %v4902 = vrot.slane %v4419, %v4901
    %v4904 = vunpack.c.l.s4 1983009808
    %v4905 = vunpack.c.0.s8 %v4904
    %v4906 = vlaneseq
    %v4907 = vshrl.u32 %v4906, 7
    %v4908 = vsub.s32 %v4905, %v4907
    %v4909 = vrot.slane %v4895, %v4908
    %v4910 = vcombine.high %v4902, %v4902
    %v4911 = vcombine.high %v4909, %v4909
    %v4912 = vcombine.high %v4422, %v4422
    %v4914 = vunpack.c.l.s4 1983009808
    %v4915 = vunpack.c.0.s8 %v4914
    %v4916 = vlaneseq
    %v4917 = vshrl.u32 %v4916, 7
    %v4918 = vsub.s32 %v4915, %v4917
    %v4919 = vrot.slane %v4422, %v4918
    %v4921 = vunpack.c.l.s4 1983009808
    %v4922 = vunpack.c.0.s8 %v4921
    %v4923 = vlaneseq
    %v4924 = vshrl.u32 %v4923, 7
    %v4925 = vsub.s32 %v4922, %v4924
    %v4926 = vrot.slane %v4912, %v4925
    %v4927 = vcombine.high %v4919, %v4919
    %v4928 = vcombine.high %v4926, %v4926
    %v4929 = vcombine.high %v4425, %v4425
    %v4931 = vunpack.c.l.s4 1983009808
    %v4932 = vunpack.c.0.s8 %v4931
    %v4933 = vlaneseq
    %v4934 = vshrl.u32 %v4933, 7
    %v4935 = vsub.s32 %v4932, %v4934
    %v4936 = vrot.slane %v4425, %v4935
    %v4938 = vunpack.c.l.s4 1983009808
    %v4939 = vunpack.c.0.s8 %v4938
    %v4940 = vlaneseq
    %v4941 = vshrl.u32 %v4940, 7
    %v4942 = vsub.s32 %v4939, %v4941
    %v4943 = vrot.slane %v4929, %v4942
    %v4944 = vcombine.high %v4936, %v4936
    %v4945 = vcombine.high %v4943, %v4943
    %v4946 = vcombine.high %v4428, %v4428
    %v4948 = vunpack.c.l.s4 1983009808
    %v4949 = vunpack.c.0.s8 %v4948
    %v4950 = vlaneseq
    %v4951 = vshrl.u32 %v4950, 7
    %v4952 = vsub.s32 %v4949, %v4951
    %v4953 = vrot.slane %v4428, %v4952
    %v4955 = vunpack.c.l.s4 1983009808
    %v4956 = vunpack.c.0.s8 %v4955
    %v4957 = vlaneseq
    %v4958 = vshrl.u32 %v4957, 7
    %v4959 = vsub.s32 %v4956, %v4958
    %v4960 = vrot.slane %v4946, %v4959
    %v4961 = vcombine.high %v4953, %v4953
    %v4962 = vcombine.high %v4960, %v4960
    %v4963 = vcombine.high %v4431, %v4431
    %v4965 = vunpack.c.l.s4 1983009808
    %v4966 = vunpack.c.0.s8 %v4965
    %v4967 = vlaneseq
    %v4968 = vshrl.u32 %v4967, 7
    %v4969 = vsub.s32 %v4966, %v4968
    %v4970 = vrot.slane %v4431, %v4969
    %v4972 = vunpack.c.l.s4 1983009808
    %v4973 = vunpack.c.0.s8 %v4972
    %v4974 = vlaneseq
    %v4975 = vshrl.u32 %v4974, 7
    %v4976 = vsub.s32 %v4973, %v4975
    %v4977 = vrot.slane %v4963, %v4976
    %v4978 = vcombine.high %v4970, %v4970
    %v4979 = vcombine.high %v4977, %v4977
    %v4980 = vcombine.high %v4434, %v4434
    %v4982 = vunpack.c.l.s4 1983009808
    %v4983 = vunpack.c.0.s8 %v4982
    %v4984 = vlaneseq
    %v4985 = vshrl.u32 %v4984, 7
    %v4986 = vsub.s32 %v4983, %v4985
    %v4987 = vrot.slane %v4434, %v4986
    %v4989 = vunpack.c.l.s4 1983009808
    %v4990 = vunpack.c.0.s8 %v4989
    %v4991 = vlaneseq
    %v4992 = vshrl.u32 %v4991, 7
    %v4993 = vsub.s32 %v4990, %v4992
    %v4994 = vrot.slane %v4980, %v4993
    %v4995 = vcombine.high %v4987, %v4987
    %v4996 = vcombine.high %v4994, %v4994
    %v4997 = vcombine.high %v4437, %v4437
    %v4999 = vunpack.c.l.s4 1983009808
    %v5000 = vunpack.c.0.s8 %v4999
    %v5001 = vlaneseq
    %v5002 = vshrl.u32 %v5001, 7
    %v5003 = vsub.s32 %v5000, %v5002
    %v5004 = vrot.slane %v4437, %v5003
    %v5006 = vunpack.c.l.s4 1983009808
    %v5007 = vunpack.c.0.s8 %v5006
    %v5008 = vlaneseq
    %v5009 = vshrl.u32 %v5008, 7
    %v5010 = vsub.s32 %v5007, %v5009
    %v5011 = vrot.slane %v4997, %v5010
    %v5012 = vcombine.high %v5004, %v5004
    %v5013 = vcombine.high %v5011, %v5011
    %vm5142 = vcmask 25600
    %v5143 = vsel %vm5142, %v4477, -inf
    %v5144 = vrot.slane %v5143, 4
    %v5145 = vmax.f32 %v5143, %v5144
    %v5146 = vrot.slane %v5145, 2
    %v5147 = vmax.f32 %v5145, %v5146
    %v5148 = vrot.slane %v5147, 1
    %v5149 = vmax.f32 %v5147, %v5148
    %v5150 = vsel %vm5142, %v4485, -inf
    %v5151 = vrot.slane %v5150, 4
    %v5152 = vmax.f32 %v5150, %v5151
    %v5153 = vrot.slane %v5152, 2
    %v5154 = vmax.f32 %v5152, %v5153
    %v5155 = vrot.slane %v5154, 1
    %v5156 = vmax.f32 %v5154, %v5155
    %v5157 = vsel %vm5142, %v4484, -inf
    %v5158 = vrot.slane %v5157, 4
    %v5159 = vmax.f32 %v5157, %v5158
    %v5160 = vrot.slane %v5159, 2
    %v5161 = vmax.f32 %v5159, %v5160
    %v5162 = vrot.slane %v5161, 1
    %v5163 = vmax.f32 %v5161, %v5162
    %v5164 = vsel %vm5142, %v4486, -inf
    %v5165 = vrot.slane %v5164, 4
    %v5166 = vmax.f32 %v5164, %v5165
    %v5167 = vrot.slane %v5166, 2
    %v5168 = vmax.f32 %v5166, %v5167
    %v5169 = vrot.slane %v5168, 1
    %v5170 = vmax.f32 %v5168, %v5169
    %v5171 = vsel %vm5142, %v4494, -inf
    %v5172 = vrot.slane %v5171, 4
    %v5173 = vmax.f32 %v5171, %v5172
    %v5174 = vrot.slane %v5173, 2
    %v5175 = vmax.f32 %v5173, %v5174
    %v5176 = vrot.slane %v5175, 1
    %v5177 = vmax.f32 %v5175, %v5176
    %v5178 = vsel %vm5142, %v4502, -inf
    %v5179 = vrot.slane %v5178, 4
    %v5180 = vmax.f32 %v5178, %v5179
    %v5181 = vrot.slane %v5180, 2
    %v5182 = vmax.f32 %v5180, %v5181
    %v5183 = vrot.slane %v5182, 1
    %v5184 = vmax.f32 %v5182, %v5183
    %v5185 = vsel %vm5142, %v4501, -inf
    %v5186 = vrot.slane %v5185, 4
    %v5187 = vmax.f32 %v5185, %v5186
    %v5188 = vrot.slane %v5187, 2
    %v5189 = vmax.f32 %v5187, %v5188
    %v5190 = vrot.slane %v5189, 1
    %v5191 = vmax.f32 %v5189, %v5190
    %v5192 = vsel %vm5142, %v4503, -inf
    %v5193 = vrot.slane %v5192, 4
    %v5194 = vmax.f32 %v5192, %v5193
    %v5195 = vrot.slane %v5194, 2
    %v5196 = vmax.f32 %v5194, %v5195
    %v5197 = vrot.slane %v5196, 1
    %v5198 = vmax.f32 %v5196, %v5197
    %v5199 = vsel %vm5142, %v4511, -inf
    %v5200 = vrot.slane %v5199, 4
    %v5201 = vmax.f32 %v5199, %v5200
    %v5202 = vrot.slane %v5201, 2
    %v5203 = vmax.f32 %v5201, %v5202
    %v5204 = vrot.slane %v5203, 1
    %v5205 = vmax.f32 %v5203, %v5204
    %v5206 = vsel %vm5142, %v4519, -inf
    %v5207 = vrot.slane %v5206, 4
    %v5208 = vmax.f32 %v5206, %v5207
    %v5209 = vrot.slane %v5208, 2
    %v5210 = vmax.f32 %v5208, %v5209
    %v5211 = vrot.slane %v5210, 1
    %v5212 = vmax.f32 %v5210, %v5211
    %v5213 = vsel %vm5142, %v4518, -inf
    %v5214 = vrot.slane %v5213, 4
    %v5215 = vmax.f32 %v5213, %v5214
    %v5216 = vrot.slane %v5215, 2
    %v5217 = vmax.f32 %v5215, %v5216
    %v5218 = vrot.slane %v5217, 1
    %v5219 = vmax.f32 %v5217, %v5218
    %v5220 = vsel %vm5142, %v4520, -inf
    %v5221 = vrot.slane %v5220, 4
    %v5222 = vmax.f32 %v5220, %v5221
    %v5223 = vrot.slane %v5222, 2
    %v5224 = vmax.f32 %v5222, %v5223
    %v5225 = vrot.slane %v5224, 1
    %v5226 = vmax.f32 %v5224, %v5225
    %v5227 = vsel %vm5142, %v4528, -inf
    %v5228 = vrot.slane %v5227, 4
    %v5229 = vmax.f32 %v5227, %v5228
    %v5230 = vrot.slane %v5229, 2
    %v5231 = vmax.f32 %v5229, %v5230
    %v5232 = vrot.slane %v5231, 1
    %v5233 = vmax.f32 %v5231, %v5232
    %v5234 = vsel %vm5142, %v4536, -inf
    %v5235 = vrot.slane %v5234, 4
    %v5236 = vmax.f32 %v5234, %v5235
    %v5237 = vrot.slane %v5236, 2
    %v5238 = vmax.f32 %v5236, %v5237
    %v5239 = vrot.slane %v5238, 1
    %v5240 = vmax.f32 %v5238, %v5239
    %v5241 = vsel %vm5142, %v4535, -inf
    %v5242 = vrot.slane %v5241, 4
    %v5243 = vmax.f32 %v5241, %v5242
    %v5244 = vrot.slane %v5243, 2
    %v5245 = vmax.f32 %v5243, %v5244
    %v5246 = vrot.slane %v5245, 1
    %v5247 = vmax.f32 %v5245, %v5246
    %v5248 = vsel %vm5142, %v4537, -inf
    %v5249 = vrot.slane %v5248, 4
    %v5250 = vmax.f32 %v5248, %v5249
    %v5251 = vrot.slane %v5250, 2
    %v5252 = vmax.f32 %v5250, %v5251
    %v5253 = vrot.slane %v5252, 1
    %v5254 = vmax.f32 %v5252, %v5253
    %v5255 = vsel %vm5142, %v4545, -inf
    %v5256 = vrot.slane %v5255, 4
    %v5257 = vmax.f32 %v5255, %v5256
    %v5258 = vrot.slane %v5257, 2
    %v5259 = vmax.f32 %v5257, %v5258
    %v5260 = vrot.slane %v5259, 1
    %v5261 = vmax.f32 %v5259, %v5260
    %v5262 = vsel %vm5142, %v4553, -inf
    %v5263 = vrot.slane %v5262, 4
    %v5264 = vmax.f32 %v5262, %v5263
    %v5265 = vrot.slane %v5264, 2
    %v5266 = vmax.f32 %v5264, %v5265
    %v5267 = vrot.slane %v5266, 1
    %v5268 = vmax.f32 %v5266, %v5267
    %v5269 = vsel %vm5142, %v4552, -inf
    %v5270 = vrot.slane %v5269, 4
    %v5271 = vmax.f32 %v5269, %v5270
    %v5272 = vrot.slane %v5271, 2
    %v5273 = vmax.f32 %v5271, %v5272
    %v5274 = vrot.slane %v5273, 1
    %v5275 = vmax.f32 %v5273, %v5274
    %v5276 = vsel %vm5142, %v4554, -inf
    %v5277 = vrot.slane %v5276, 4
    %v5278 = vmax.f32 %v5276, %v5277
    %v5279 = vrot.slane %v5278, 2
    %v5280 = vmax.f32 %v5278, %v5279
    %v5281 = vrot.slane %v5280, 1
    %v5282 = vmax.f32 %v5280, %v5281
    %v5283 = vsel %vm5142, %v4562, -inf
    %v5284 = vrot.slane %v5283, 4
    %v5285 = vmax.f32 %v5283, %v5284
    %v5286 = vrot.slane %v5285, 2
    %v5287 = vmax.f32 %v5285, %v5286
    %v5288 = vrot.slane %v5287, 1
    %v5289 = vmax.f32 %v5287, %v5288
    %v5290 = vsel %vm5142, %v4570, -inf
    %v5291 = vrot.slane %v5290, 4
    %v5292 = vmax.f32 %v5290, %v5291
    %v5293 = vrot.slane %v5292, 2
    %v5294 = vmax.f32 %v5292, %v5293
    %v5295 = vrot.slane %v5294, 1
    %v5296 = vmax.f32 %v5294, %v5295
    %v5297 = vsel %vm5142, %v4569, -inf
    %v5298 = vrot.slane %v5297, 4
    %v5299 = vmax.f32 %v5297, %v5298
    %v5300 = vrot.slane %v5299, 2
    %v5301 = vmax.f32 %v5299, %v5300
    %v5302 = vrot.slane %v5301, 1
    %v5303 = vmax.f32 %v5301, %v5302
    %v5304 = vsel %vm5142, %v4571, -inf
    %v5305 = vrot.slane %v5304, 4
    %v5306 = vmax.f32 %v5304, %v5305
    %v5307 = vrot.slane %v5306, 2
    %v5308 = vmax.f32 %v5306, %v5307
    %v5309 = vrot.slane %v5308, 1
    %v5310 = vmax.f32 %v5308, %v5309
    %v5311 = vsel %vm5142, %v4579, -inf
    %v5312 = vrot.slane %v5311, 4
    %v5313 = vmax.f32 %v5311, %v5312
    %v5314 = vrot.slane %v5313, 2
    %v5315 = vmax.f32 %v5313, %v5314
    %v5316 = vrot.slane %v5315, 1
    %v5317 = vmax.f32 %v5315, %v5316
    %v5318 = vsel %vm5142, %v4587, -inf
    %v5319 = vrot.slane %v5318, 4
    %v5320 = vmax.f32 %v5318, %v5319
    %v5321 = vrot.slane %v5320, 2
    %v5322 = vmax.f32 %v5320, %v5321
    %v5323 = vrot.slane %v5322, 1
    %v5324 = vmax.f32 %v5322, %v5323
    %v5325 = vsel %vm5142, %v4586, -inf
    %v5326 = vrot.slane %v5325, 4
    %v5327 = vmax.f32 %v5325, %v5326
    %v5328 = vrot.slane %v5327, 2
    %v5329 = vmax.f32 %v5327, %v5328
    %v5330 = vrot.slane %v5329, 1
    %v5331 = vmax.f32 %v5329, %v5330
    %v5332 = vsel %vm5142, %v4588, -inf
    %v5333 = vrot.slane %v5332, 4
    %v5334 = vmax.f32 %v5332, %v5333
    %v5335 = vrot.slane %v5334, 2
    %v5336 = vmax.f32 %v5334, %v5335
    %v5337 = vrot.slane %v5336, 1
    %v5338 = vmax.f32 %v5336, %v5337
    %v5339 = vsel %vm5142, %v4596, -inf
    %v5340 = vrot.slane %v5339, 4
    %v5341 = vmax.f32 %v5339, %v5340
    %v5342 = vrot.slane %v5341, 2
    %v5343 = vmax.f32 %v5341, %v5342
    %v5344 = vrot.slane %v5343, 1
    %v5345 = vmax.f32 %v5343, %v5344
    %v5346 = vsel %vm5142, %v4604, -inf
    %v5347 = vrot.slane %v5346, 4
    %v5348 = vmax.f32 %v5346, %v5347
    %v5349 = vrot.slane %v5348, 2
    %v5350 = vmax.f32 %v5348, %v5349
    %v5351 = vrot.slane %v5350, 1
    %v5352 = vmax.f32 %v5350, %v5351
    %v5353 = vsel %vm5142, %v4603, -inf
    %v5354 = vrot.slane %v5353, 4
    %v5355 = vmax.f32 %v5353, %v5354
    %v5356 = vrot.slane %v5355, 2
    %v5357 = vmax.f32 %v5355, %v5356
    %v5358 = vrot.slane %v5357, 1
    %v5359 = vmax.f32 %v5357, %v5358
    %v5360 = vsel %vm5142, %v4605, -inf
    %v5361 = vrot.slane %v5360, 4
    %v5362 = vmax.f32 %v5360, %v5361
    %v5363 = vrot.slane %v5362, 2
    %v5364 = vmax.f32 %v5362, %v5363
    %v5365 = vrot.slane %v5364, 1
    %v5366 = vmax.f32 %v5364, %v5365
    %v5367 = vsel %vm5142, %v4613, -inf
    %v5368 = vrot.slane %v5367, 4
    %v5369 = vmax.f32 %v5367, %v5368
    %v5370 = vrot.slane %v5369, 2
    %v5371 = vmax.f32 %v5369, %v5370
    %v5372 = vrot.slane %v5371, 1
    %v5373 = vmax.f32 %v5371, %v5372
    %v5374 = vsel %vm5142, %v4621, -inf
    %v5375 = vrot.slane %v5374, 4
    %v5376 = vmax.f32 %v5374, %v5375
    %v5377 = vrot.slane %v5376, 2
    %v5378 = vmax.f32 %v5376, %v5377
    %v5379 = vrot.slane %v5378, 1
    %v5380 = vmax.f32 %v5378, %v5379
    %v5381 = vsel %vm5142, %v4620, -inf
    %v5382 = vrot.slane %v5381, 4
    %v5383 = vmax.f32 %v5381, %v5382
    %v5384 = vrot.slane %v5383, 2
    %v5385 = vmax.f32 %v5383, %v5384
    %v5386 = vrot.slane %v5385, 1
    %v5387 = vmax.f32 %v5385, %v5386
    %v5388 = vsel %vm5142, %v4622, -inf
    %v5389 = vrot.slane %v5388, 4
    %v5390 = vmax.f32 %v5388, %v5389
    %v5391 = vrot.slane %v5390, 2
    %v5392 = vmax.f32 %v5390, %v5391
    %v5393 = vrot.slane %v5392, 1
    %v5394 = vmax.f32 %v5392, %v5393
    %v5395 = vsel %vm5142, %v4630, -inf
    %v5396 = vrot.slane %v5395, 4
    %v5397 = vmax.f32 %v5395, %v5396
    %v5398 = vrot.slane %v5397, 2
    %v5399 = vmax.f32 %v5397, %v5398
    %v5400 = vrot.slane %v5399, 1
    %v5401 = vmax.f32 %v5399, %v5400
    %v5402 = vsel %vm5142, %v4638, -inf
    %v5403 = vrot.slane %v5402, 4
    %v5404 = vmax.f32 %v5402, %v5403
    %v5405 = vrot.slane %v5404, 2
    %v5406 = vmax.f32 %v5404, %v5405
    %v5407 = vrot.slane %v5406, 1
    %v5408 = vmax.f32 %v5406, %v5407
    %v5409 = vsel %vm5142, %v4637, -inf
    %v5410 = vrot.slane %v5409, 4
    %v5411 = vmax.f32 %v5409, %v5410
    %v5412 = vrot.slane %v5411, 2
    %v5413 = vmax.f32 %v5411, %v5412
    %v5414 = vrot.slane %v5413, 1
    %v5415 = vmax.f32 %v5413, %v5414
    %v5416 = vsel %vm5142, %v4639, -inf
    %v5417 = vrot.slane %v5416, 4
    %v5418 = vmax.f32 %v5416, %v5417
    %v5419 = vrot.slane %v5418, 2
    %v5420 = vmax.f32 %v5418, %v5419
    %v5421 = vrot.slane %v5420, 1
    %v5422 = vmax.f32 %v5420, %v5421
    %v5423 = vsel %vm5142, %v4647, -inf
    %v5424 = vrot.slane %v5423, 4
    %v5425 = vmax.f32 %v5423, %v5424
    %v5426 = vrot.slane %v5425, 2
    %v5427 = vmax.f32 %v5425, %v5426
    %v5428 = vrot.slane %v5427, 1
    %v5429 = vmax.f32 %v5427, %v5428
    %v5430 = vsel %vm5142, %v4655, -inf
    %v5431 = vrot.slane %v5430, 4
    %v5432 = vmax.f32 %v5430, %v5431
    %v5433 = vrot.slane %v5432, 2
    %v5434 = vmax.f32 %v5432, %v5433
    %v5435 = vrot.slane %v5434, 1
    %v5436 = vmax.f32 %v5434, %v5435
    %v5437 = vsel %vm5142, %v4654, -inf
    %v5438 = vrot.slane %v5437, 4
    %v5439 = vmax.f32 %v5437, %v5438
    %v5440 = vrot.slane %v5439, 2
    %v5441 = vmax.f32 %v5439, %v5440
    %v5442 = vrot.slane %v5441, 1
    %v5443 = vmax.f32 %v5441, %v5442
    %v5444 = vsel %vm5142, %v4656, -inf
    %v5445 = vrot.slane %v5444, 4
    %v5446 = vmax.f32 %v5444, %v5445
    %v5447 = vrot.slane %v5446, 2
    %v5448 = vmax.f32 %v5446, %v5447
    %v5449 = vrot.slane %v5448, 1
    %v5450 = vmax.f32 %v5448, %v5449
    %v5451 = vsel %vm5142, %v4664, -inf
    %v5452 = vrot.slane %v5451, 4
    %v5453 = vmax.f32 %v5451, %v5452
    %v5454 = vrot.slane %v5453, 2
    %v5455 = vmax.f32 %v5453, %v5454
    %v5456 = vrot.slane %v5455, 1
    %v5457 = vmax.f32 %v5455, %v5456
    %v5458 = vsel %vm5142, %v4672, -inf
    %v5459 = vrot.slane %v5458, 4
    %v5460 = vmax.f32 %v5458, %v5459
    %v5461 = vrot.slane %v5460, 2
    %v5462 = vmax.f32 %v5460, %v5461
    %v5463 = vrot.slane %v5462, 1
    %v5464 = vmax.f32 %v5462, %v5463
    %v5465 = vsel %vm5142, %v4671, -inf
    %v5466 = vrot.slane %v5465, 4
    %v5467 = vmax.f32 %v5465, %v5466
    %v5468 = vrot.slane %v5467, 2
    %v5469 = vmax.f32 %v5467, %v5468
    %v5470 = vrot.slane %v5469, 1
    %v5471 = vmax.f32 %v5469, %v5470
    %v5472 = vsel %vm5142, %v4673, -inf
    %v5473 = vrot.slane %v5472, 4
    %v5474 = vmax.f32 %v5472, %v5473
    %v5475 = vrot.slane %v5474, 2
    %v5476 = vmax.f32 %v5474, %v5475
    %v5477 = vrot.slane %v5476, 1
    %v5478 = vmax.f32 %v5476, %v5477
    %v5479 = vsel %vm5142, %v4681, -inf
    %v5480 = vrot.slane %v5479, 4
    %v5481 = vmax.f32 %v5479, %v5480
    %v5482 = vrot.slane %v5481, 2
    %v5483 = vmax.f32 %v5481, %v5482
    %v5484 = vrot.slane %v5483, 1
    %v5485 = vmax.f32 %v5483, %v5484
    %v5486 = vsel %vm5142, %v4689, -inf
    %v5487 = vrot.slane %v5486, 4
    %v5488 = vmax.f32 %v5486, %v5487
    %v5489 = vrot.slane %v5488, 2
    %v5490 = vmax.f32 %v5488, %v5489
    %v5491 = vrot.slane %v5490, 1
    %v5492 = vmax.f32 %v5490, %v5491
    %v5493 = vsel %vm5142, %v4688, -inf
    %v5494 = vrot.slane %v5493, 4
    %v5495 = vmax.f32 %v5493, %v5494
    %v5496 = vrot.slane %v5495, 2
    %v5497 = vmax.f32 %v5495, %v5496
    %v5498 = vrot.slane %v5497, 1
    %v5499 = vmax.f32 %v5497, %v5498
    %v5500 = vsel %vm5142, %v4690, -inf
    %v5501 = vrot.slane %v5500, 4
    %v5502 = vmax.f32 %v5500, %v5501
    %v5503 = vrot.slane %v5502, 2
    %v5504 = vmax.f32 %v5502, %v5503
    %v5505 = vrot.slane %v5504, 1
    %v5506 = vmax.f32 %v5504, %v5505
    %v5507 = vsel %vm5142, %v4698, -inf
    %v5508 = vrot.slane %v5507, 4
    %v5509 = vmax.f32 %v5507, %v5508
    %v5510 = vrot.slane %v5509, 2
    %v5511 = vmax.f32 %v5509, %v5510
    %v5512 = vrot.slane %v5511, 1
    %v5513 = vmax.f32 %v5511, %v5512
    %v5514 = vsel %vm5142, %v4706, -inf
    %v5515 = vrot.slane %v5514, 4
    %v5516 = vmax.f32 %v5514, %v5515
    %v5517 = vrot.slane %v5516, 2
    %v5518 = vmax.f32 %v5516, %v5517
    %v5519 = vrot.slane %v5518, 1
    %v5520 = vmax.f32 %v5518, %v5519
    %v5521 = vsel %vm5142, %v4705, -inf
    %v5522 = vrot.slane %v5521, 4
    %v5523 = vmax.f32 %v5521, %v5522
    %v5524 = vrot.slane %v5523, 2
    %v5525 = vmax.f32 %v5523, %v5524
    %v5526 = vrot.slane %v5525, 1
    %v5527 = vmax.f32 %v5525, %v5526
    %v5528 = vsel %vm5142, %v4707, -inf
    %v5529 = vrot.slane %v5528, 4
    %v5530 = vmax.f32 %v5528, %v5529
    %v5531 = vrot.slane %v5530, 2
    %v5532 = vmax.f32 %v5530, %v5531
    %v5533 = vrot.slane %v5532, 1
    %v5534 = vmax.f32 %v5532, %v5533
    %v5535 = vsel %vm5142, %v4715, -inf
    %v5536 = vrot.slane %v5535, 4
    %v5537 = vmax.f32 %v5535, %v5536
    %v5538 = vrot.slane %v5537, 2
    %v5539 = vmax.f32 %v5537, %v5538
    %v5540 = vrot.slane %v5539, 1
    %v5541 = vmax.f32 %v5539, %v5540
    %v5542 = vsel %vm5142, %v4723, -inf
    %v5543 = vrot.slane %v5542, 4
    %v5544 = vmax.f32 %v5542, %v5543
    %v5545 = vrot.slane %v5544, 2
    %v5546 = vmax.f32 %v5544, %v5545
    %v5547 = vrot.slane %v5546, 1
    %v5548 = vmax.f32 %v5546, %v5547
    %v5549 = vsel %vm5142, %v4722, -inf
    %v5550 = vrot.slane %v5549, 4
    %v5551 = vmax.f32 %v5549, %v5550
    %v5552 = vrot.slane %v5551, 2
    %v5553 = vmax.f32 %v5551, %v5552
    %v5554 = vrot.slane %v5553, 1
    %v5555 = vmax.f32 %v5553, %v5554
    %v5556 = vsel %vm5142, %v4724, -inf
    %v5557 = vrot.slane %v5556, 4
    %v5558 = vmax.f32 %v5556, %v5557
    %v5559 = vrot.slane %v5558, 2
    %v5560 = vmax.f32 %v5558, %v5559
    %v5561 = vrot.slane %v5560, 1
    %v5562 = vmax.f32 %v5560, %v5561
    %v5563 = vsel %vm5142, %v4732, -inf
    %v5564 = vrot.slane %v5563, 4
    %v5565 = vmax.f32 %v5563, %v5564
    %v5566 = vrot.slane %v5565, 2
    %v5567 = vmax.f32 %v5565, %v5566
    %v5568 = vrot.slane %v5567, 1
    %v5569 = vmax.f32 %v5567, %v5568
    %v5570 = vsel %vm5142, %v4740, -inf
    %v5571 = vrot.slane %v5570, 4
    %v5572 = vmax.f32 %v5570, %v5571
    %v5573 = vrot.slane %v5572, 2
    %v5574 = vmax.f32 %v5572, %v5573
    %v5575 = vrot.slane %v5574, 1
    %v5576 = vmax.f32 %v5574, %v5575
    %v5577 = vsel %vm5142, %v4739, -inf
    %v5578 = vrot.slane %v5577, 4
    %v5579 = vmax.f32 %v5577, %v5578
    %v5580 = vrot.slane %v5579, 2
    %v5581 = vmax.f32 %v5579, %v5580
    %v5582 = vrot.slane %v5581, 1
    %v5583 = vmax.f32 %v5581, %v5582
    %v5584 = vsel %vm5142, %v4741, -inf
    %v5585 = vrot.slane %v5584, 4
    %v5586 = vmax.f32 %v5584, %v5585
    %v5587 = vrot.slane %v5586, 2
    %v5588 = vmax.f32 %v5586, %v5587
    %v5589 = vrot.slane %v5588, 1
    %v5590 = vmax.f32 %v5588, %v5589
    %v5591 = vsel %vm5142, %v4749, -inf
    %v5592 = vrot.slane %v5591, 4
    %v5593 = vmax.f32 %v5591, %v5592
    %v5594 = vrot.slane %v5593, 2
    %v5595 = vmax.f32 %v5593, %v5594
    %v5596 = vrot.slane %v5595, 1
    %v5597 = vmax.f32 %v5595, %v5596
    %v5598 = vsel %vm5142, %v4757, -inf
    %v5599 = vrot.slane %v5598, 4
    %v5600 = vmax.f32 %v5598, %v5599
    %v5601 = vrot.slane %v5600, 2
    %v5602 = vmax.f32 %v5600, %v5601
    %v5603 = vrot.slane %v5602, 1
    %v5604 = vmax.f32 %v5602, %v5603
    %v5605 = vsel %vm5142, %v4756, -inf
    %v5606 = vrot.slane %v5605, 4
    %v5607 = vmax.f32 %v5605, %v5606
    %v5608 = vrot.slane %v5607, 2
    %v5609 = vmax.f32 %v5607, %v5608
    %v5610 = vrot.slane %v5609, 1
    %v5611 = vmax.f32 %v5609, %v5610
    %v5612 = vsel %vm5142, %v4758, -inf
    %v5613 = vrot.slane %v5612, 4
    %v5614 = vmax.f32 %v5612, %v5613
    %v5615 = vrot.slane %v5614, 2
    %v5616 = vmax.f32 %v5614, %v5615
    %v5617 = vrot.slane %v5616, 1
    %v5618 = vmax.f32 %v5616, %v5617
    %v5619 = vsel %vm5142, %v4766, -inf
    %v5620 = vrot.slane %v5619, 4
    %v5621 = vmax.f32 %v5619, %v5620
    %v5622 = vrot.slane %v5621, 2
    %v5623 = vmax.f32 %v5621, %v5622
    %v5624 = vrot.slane %v5623, 1
    %v5625 = vmax.f32 %v5623, %v5624
    %v5626 = vsel %vm5142, %v4774, -inf
    %v5627 = vrot.slane %v5626, 4
    %v5628 = vmax.f32 %v5626, %v5627
    %v5629 = vrot.slane %v5628, 2
    %v5630 = vmax.f32 %v5628, %v5629
    %v5631 = vrot.slane %v5630, 1
    %v5632 = vmax.f32 %v5630, %v5631
    %v5633 = vsel %vm5142, %v4773, -inf
    %v5634 = vrot.slane %v5633, 4
    %v5635 = vmax.f32 %v5633, %v5634
    %v5636 = vrot.slane %v5635, 2
    %v5637 = vmax.f32 %v5635, %v5636
    %v5638 = vrot.slane %v5637, 1
    %v5639 = vmax.f32 %v5637, %v5638
    %v5640 = vsel %vm5142, %v4775, -inf
    %v5641 = vrot.slane %v5640, 4
    %v5642 = vmax.f32 %v5640, %v5641
    %v5643 = vrot.slane %v5642, 2
    %v5644 = vmax.f32 %v5642, %v5643
    %v5645 = vrot.slane %v5644, 1
    %v5646 = vmax.f32 %v5644, %v5645
    %v5647 = vsel %vm5142, %v4783, -inf
    %v5648 = vrot.slane %v5647, 4
    %v5649 = vmax.f32 %v5647, %v5648
    %v5650 = vrot.slane %v5649, 2
    %v5651 = vmax.f32 %v5649, %v5650
    %v5652 = vrot.slane %v5651, 1
    %v5653 = vmax.f32 %v5651, %v5652
    %v5654 = vsel %vm5142, %v4791, -inf
    %v5655 = vrot.slane %v5654, 4
    %v5656 = vmax.f32 %v5654, %v5655
    %v5657 = vrot.slane %v5656, 2
    %v5658 = vmax.f32 %v5656, %v5657
    %v5659 = vrot.slane %v5658, 1
    %v5660 = vmax.f32 %v5658, %v5659
    %v5661 = vsel %vm5142, %v4790, -inf
    %v5662 = vrot.slane %v5661, 4
    %v5663 = vmax.f32 %v5661, %v5662
    %v5664 = vrot.slane %v5663, 2
    %v5665 = vmax.f32 %v5663, %v5664
    %v5666 = vrot.slane %v5665, 1
    %v5667 = vmax.f32 %v5665, %v5666
    %v5668 = vsel %vm5142, %v4792, -inf
    %v5669 = vrot.slane %v5668, 4
    %v5670 = vmax.f32 %v5668, %v5669
    %v5671 = vrot.slane %v5670, 2
    %v5672 = vmax.f32 %v5670, %v5671
    %v5673 = vrot.slane %v5672, 1
    %v5674 = vmax.f32 %v5672, %v5673
    %v5675 = vsel %vm5142, %v4800, -inf
    %v5676 = vrot.slane %v5675, 4
    %v5677 = vmax.f32 %v5675, %v5676
    %v5678 = vrot.slane %v5677, 2
    %v5679 = vmax.f32 %v5677, %v5678
    %v5680 = vrot.slane %v5679, 1
    %v5681 = vmax.f32 %v5679, %v5680
    %v5682 = vsel %vm5142, %v4808, -inf
    %v5683 = vrot.slane %v5682, 4
    %v5684 = vmax.f32 %v5682, %v5683
    %v5685 = vrot.slane %v5684, 2
    %v5686 = vmax.f32 %v5684, %v5685
    %v5687 = vrot.slane %v5686, 1
    %v5688 = vmax.f32 %v5686, %v5687
    %v5689 = vsel %vm5142, %v4807, -inf
    %v5690 = vrot.slane %v5689, 4
    %v5691 = vmax.f32 %v5689, %v5690
    %v5692 = vrot.slane %v5691, 2
    %v5693 = vmax.f32 %v5691, %v5692
    %v5694 = vrot.slane %v5693, 1
    %v5695 = vmax.f32 %v5693, %v5694
    %v5696 = vsel %vm5142, %v4809, -inf
    %v5697 = vrot.slane %v5696, 4
    %v5698 = vmax.f32 %v5696, %v5697
    %v5699 = vrot.slane %v5698, 2
    %v5700 = vmax.f32 %v5698, %v5699
    %v5701 = vrot.slane %v5700, 1
    %v5702 = vmax.f32 %v5700, %v5701
    %v5703 = vsel %vm5142, %v4817, -inf
    %v5704 = vrot.slane %v5703, 4
    %v5705 = vmax.f32 %v5703, %v5704
    %v5706 = vrot.slane %v5705, 2
    %v5707 = vmax.f32 %v5705, %v5706
    %v5708 = vrot.slane %v5707, 1
    %v5709 = vmax.f32 %v5707, %v5708
    %v5710 = vsel %vm5142, %v4825, -inf
    %v5711 = vrot.slane %v5710, 4
    %v5712 = vmax.f32 %v5710, %v5711
    %v5713 = vrot.slane %v5712, 2
    %v5714 = vmax.f32 %v5712, %v5713
    %v5715 = vrot.slane %v5714, 1
    %v5716 = vmax.f32 %v5714, %v5715
    %v5717 = vsel %vm5142, %v4824, -inf
    %v5718 = vrot.slane %v5717, 4
    %v5719 = vmax.f32 %v5717, %v5718
    %v5720 = vrot.slane %v5719, 2
    %v5721 = vmax.f32 %v5719, %v5720
    %v5722 = vrot.slane %v5721, 1
    %v5723 = vmax.f32 %v5721, %v5722
    %v5724 = vsel %vm5142, %v4826, -inf
    %v5725 = vrot.slane %v5724, 4
    %v5726 = vmax.f32 %v5724, %v5725
    %v5727 = vrot.slane %v5726, 2
    %v5728 = vmax.f32 %v5726, %v5727
    %v5729 = vrot.slane %v5728, 1
    %v5730 = vmax.f32 %v5728, %v5729
    %v5731 = vsel %vm5142, %v4834, -inf
    %v5732 = vrot.slane %v5731, 4
    %v5733 = vmax.f32 %v5731, %v5732
    %v5734 = vrot.slane %v5733, 2
    %v5735 = vmax.f32 %v5733, %v5734
    %v5736 = vrot.slane %v5735, 1
    %v5737 = vmax.f32 %v5735, %v5736
    %v5738 = vsel %vm5142, %v4842, -inf
    %v5739 = vrot.slane %v5738, 4
    %v5740 = vmax.f32 %v5738, %v5739
    %v5741 = vrot.slane %v5740, 2
    %v5742 = vmax.f32 %v5740, %v5741
    %v5743 = vrot.slane %v5742, 1
    %v5744 = vmax.f32 %v5742, %v5743
    %v5745 = vsel %vm5142, %v4841, -inf
    %v5746 = vrot.slane %v5745, 4
    %v5747 = vmax.f32 %v5745, %v5746
    %v5748 = vrot.slane %v5747, 2
    %v5749 = vmax.f32 %v5747, %v5748
    %v5750 = vrot.slane %v5749, 1
    %v5751 = vmax.f32 %v5749, %v5750
    %v5752 = vsel %vm5142, %v4843, -inf
    %v5753 = vrot.slane %v5752, 4
    %v5754 = vmax.f32 %v5752, %v5753
    %v5755 = vrot.slane %v5754, 2
    %v5756 = vmax.f32 %v5754, %v5755
    %v5757 = vrot.slane %v5756, 1
    %v5758 = vmax.f32 %v5756, %v5757
    %v5759 = vsel %vm5142, %v4851, -inf
    %v5760 = vrot.slane %v5759, 4
    %v5761 = vmax.f32 %v5759, %v5760
    %v5762 = vrot.slane %v5761, 2
    %v5763 = vmax.f32 %v5761, %v5762
    %v5764 = vrot.slane %v5763, 1
    %v5765 = vmax.f32 %v5763, %v5764
    %v5766 = vsel %vm5142, %v4859, -inf
    %v5767 = vrot.slane %v5766, 4
    %v5768 = vmax.f32 %v5766, %v5767
    %v5769 = vrot.slane %v5768, 2
    %v5770 = vmax.f32 %v5768, %v5769
    %v5771 = vrot.slane %v5770, 1
    %v5772 = vmax.f32 %v5770, %v5771
    %v5773 = vsel %vm5142, %v4858, -inf
    %v5774 = vrot.slane %v5773, 4
    %v5775 = vmax.f32 %v5773, %v5774
    %v5776 = vrot.slane %v5775, 2
    %v5777 = vmax.f32 %v5775, %v5776
    %v5778 = vrot.slane %v5777, 1
    %v5779 = vmax.f32 %v5777, %v5778
    %v5780 = vsel %vm5142, %v4860, -inf
    %v5781 = vrot.slane %v5780, 4
    %v5782 = vmax.f32 %v5780, %v5781
    %v5783 = vrot.slane %v5782, 2
    %v5784 = vmax.f32 %v5782, %v5783
    %v5785 = vrot.slane %v5784, 1
    %v5786 = vmax.f32 %v5784, %v5785
    %v5787 = vsel %vm5142, %v4868, -inf
    %v5788 = vrot.slane %v5787, 4
    %v5789 = vmax.f32 %v5787, %v5788
    %v5790 = vrot.slane %v5789, 2
    %v5791 = vmax.f32 %v5789, %v5790
    %v5792 = vrot.slane %v5791, 1
    %v5793 = vmax.f32 %v5791, %v5792
    %v5794 = vsel %vm5142, %v4876, -inf
    %v5795 = vrot.slane %v5794, 4
    %v5796 = vmax.f32 %v5794, %v5795
    %v5797 = vrot.slane %v5796, 2
    %v5798 = vmax.f32 %v5796, %v5797
    %v5799 = vrot.slane %v5798, 1
    %v5800 = vmax.f32 %v5798, %v5799
    %v5801 = vsel %vm5142, %v4875, -inf
    %v5802 = vrot.slane %v5801, 4
    %v5803 = vmax.f32 %v5801, %v5802
    %v5804 = vrot.slane %v5803, 2
    %v5805 = vmax.f32 %v5803, %v5804
    %v5806 = vrot.slane %v5805, 1
    %v5807 = vmax.f32 %v5805, %v5806
    %v5808 = vsel %vm5142, %v4877, -inf
    %v5809 = vrot.slane %v5808, 4
    %v5810 = vmax.f32 %v5808, %v5809
    %v5811 = vrot.slane %v5810, 2
    %v5812 = vmax.f32 %v5810, %v5811
    %v5813 = vrot.slane %v5812, 1
    %v5814 = vmax.f32 %v5812, %v5813
    %v5815 = vsel %vm5142, %v4885, -inf
    %v5816 = vrot.slane %v5815, 4
    %v5817 = vmax.f32 %v5815, %v5816
    %v5818 = vrot.slane %v5817, 2
    %v5819 = vmax.f32 %v5817, %v5818
    %v5820 = vrot.slane %v5819, 1
    %v5821 = vmax.f32 %v5819, %v5820
    %v5822 = vsel %vm5142, %v4893, -inf
    %v5823 = vrot.slane %v5822, 4
    %v5824 = vmax.f32 %v5822, %v5823
    %v5825 = vrot.slane %v5824, 2
    %v5826 = vmax.f32 %v5824, %v5825
    %v5827 = vrot.slane %v5826, 1
    %v5828 = vmax.f32 %v5826, %v5827
    %v5829 = vsel %vm5142, %v4892, -inf
    %v5830 = vrot.slane %v5829, 4
    %v5831 = vmax.f32 %v5829, %v5830
    %v5832 = vrot.slane %v5831, 2
    %v5833 = vmax.f32 %v5831, %v5832
    %v5834 = vrot.slane %v5833, 1
    %v5835 = vmax.f32 %v5833, %v5834
    %v5836 = vsel %vm5142, %v4894, -inf
    %v5837 = vrot.slane %v5836, 4
    %v5838 = vmax.f32 %v5836, %v5837
    %v5839 = vrot.slane %v5838, 2
    %v5840 = vmax.f32 %v5838, %v5839
    %v5841 = vrot.slane %v5840, 1
    %v5842 = vmax.f32 %v5840, %v5841
    %v5843 = vsel %vm5142, %v4902, -inf
    %v5844 = vrot.slane %v5843, 4
    %v5845 = vmax.f32 %v5843, %v5844
    %v5846 = vrot.slane %v5845, 2
    %v5847 = vmax.f32 %v5845, %v5846
    %v5848 = vrot.slane %v5847, 1
    %v5849 = vmax.f32 %v5847, %v5848
    %v5850 = vsel %vm5142, %v4910, -inf
    %v5851 = vrot.slane %v5850, 4
    %v5852 = vmax.f32 %v5850, %v5851
    %v5853 = vrot.slane %v5852, 2
    %v5854 = vmax.f32 %v5852, %v5853
    %v5855 = vrot.slane %v5854, 1
    %v5856 = vmax.f32 %v5854, %v5855
    %v5857 = vsel %vm5142, %v4909, -inf
    %v5858 = vrot.slane %v5857, 4
    %v5859 = vmax.f32 %v5857, %v5858
    %v5860 = vrot.slane %v5859, 2
    %v5861 = vmax.f32 %v5859, %v5860
    %v5862 = vrot.slane %v5861, 1
    %v5863 = vmax.f32 %v5861, %v5862
    %v5864 = vsel %vm5142, %v4911, -inf
    %v5865 = vrot.slane %v5864, 4
    %v5866 = vmax.f32 %v5864, %v5865
    %v5867 = vrot.slane %v5866, 2
    %v5868 = vmax.f32 %v5866, %v5867
    %v5869 = vrot.slane %v5868, 1
    %v5870 = vmax.f32 %v5868, %v5869
    %v5871 = vsel %vm5142, %v4919, -inf
    %v5872 = vrot.slane %v5871, 4
    %v5873 = vmax.f32 %v5871, %v5872
    %v5874 = vrot.slane %v5873, 2
    %v5875 = vmax.f32 %v5873, %v5874
    %v5876 = vrot.slane %v5875, 1
    %v5877 = vmax.f32 %v5875, %v5876
    %v5878 = vsel %vm5142, %v4927, -inf
    %v5879 = vrot.slane %v5878, 4
    %v5880 = vmax.f32 %v5878, %v5879
    %v5881 = vrot.slane %v5880, 2
    %v5882 = vmax.f32 %v5880, %v5881
    %v5883 = vrot.slane %v5882, 1
    %v5884 = vmax.f32 %v5882, %v5883
    %v5885 = vsel %vm5142, %v4926, -inf
    %v5886 = vrot.slane %v5885, 4
    %v5887 = vmax.f32 %v5885, %v5886
    %v5888 = vrot.slane %v5887, 2
    %v5889 = vmax.f32 %v5887, %v5888
    %v5890 = vrot.slane %v5889, 1
    %v5891 = vmax.f32 %v5889, %v5890
    %v5892 = vsel %vm5142, %v4928, -inf
    %v5893 = vrot.slane %v5892, 4
    %v5894 = vmax.f32 %v5892, %v5893
    %v5895 = vrot.slane %v5894, 2
    %v5896 = vmax.f32 %v5894, %v5895
    %v5897 = vrot.slane %v5896, 1
    %v5898 = vmax.f32 %v5896, %v5897
    %v5899 = vsel %vm5142, %v4936, -inf
    %v5900 = vrot.slane %v5899, 4
    %v5901 = vmax.f32 %v5899, %v5900
    %v5902 = vrot.slane %v5901, 2
    %v5903 = vmax.f32 %v5901, %v5902
    %v5904 = vrot.slane %v5903, 1
    %v5905 = vmax.f32 %v5903, %v5904
    %v5906 = vsel %vm5142, %v4944, -inf
    %v5907 = vrot.slane %v5906, 4
    %v5908 = vmax.f32 %v5906, %v5907
    %v5909 = vrot.slane %v5908, 2
    %v5910 = vmax.f32 %v5908, %v5909
    %v5911 = vrot.slane %v5910, 1
    %v5912 = vmax.f32 %v5910, %v5911
    %v5913 = vsel %vm5142, %v4943, -inf
    %v5914 = vrot.slane %v5913, 4
    %v5915 = vmax.f32 %v5913, %v5914
    %v5916 = vrot.slane %v5915, 2
    %v5917 = vmax.f32 %v5915, %v5916
    %v5918 = vrot.slane %v5917, 1
    %v5919 = vmax.f32 %v5917, %v5918
    %v5920 = vsel %vm5142, %v4945, -inf
    %v5921 = vrot.slane %v5920, 4
    %v5922 = vmax.f32 %v5920, %v5921
    %v5923 = vrot.slane %v5922, 2
    %v5924 = vmax.f32 %v5922, %v5923
    %v5925 = vrot.slane %v5924, 1
    %v5926 = vmax.f32 %v5924, %v5925
    %v5927 = vsel %vm5142, %v4953, -inf
    %v5928 = vrot.slane %v5927, 4
    %v5929 = vmax.f32 %v5927, %v5928
    %v5930 = vrot.slane %v5929, 2
    %v5931 = vmax.f32 %v5929, %v5930
    %v5932 = vrot.slane %v5931, 1
    %v5933 = vmax.f32 %v5931, %v5932
    %v5934 = vsel %vm5142, %v4961, -inf
    %v5935 = vrot.slane %v5934, 4
    %v5936 = vmax.f32 %v5934, %v5935
    %v5937 = vrot.slane %v5936, 2
    %v5938 = vmax.f32 %v5936, %v5937
    %v5939 = vrot.slane %v5938, 1
    %v5940 = vmax.f32 %v5938, %v5939
    %v5941 = vsel %vm5142, %v4960, -inf
    %v5942 = vrot.slane %v5941, 4
    %v5943 = vmax.f32 %v5941, %v5942
    %v5944 = vrot.slane %v5943, 2
    %v5945 = vmax.f32 %v5943, %v5944
    %v5946 = vrot.slane %v5945, 1
    %v5947 = vmax.f32 %v5945, %v5946
    %v5948 = vsel %vm5142, %v4962, -inf
    %v5949 = vrot.slane %v5948, 4
    %v5950 = vmax.f32 %v5948, %v5949
    %v5951 = vrot.slane %v5950, 2
    %v5952 = vmax.f32 %v5950, %v5951
    %v5953 = vrot.slane %v5952, 1
    %v5954 = vmax.f32 %v5952, %v5953
    %v5955 = vsel %vm5142, %v4970, -inf
    %v5956 = vrot.slane %v5955, 4
    %v5957 = vmax.f32 %v5955, %v5956
    %v5958 = vrot.slane %v5957, 2
    %v5959 = vmax.f32 %v5957, %v5958
    %v5960 = vrot.slane %v5959, 1
    %v5961 = vmax.f32 %v5959, %v5960
    %v5962 = vsel %vm5142, %v4978, -inf
    %v5963 = vrot.slane %v5962, 4
    %v5964 = vmax.f32 %v5962, %v5963
    %v5965 = vrot.slane %v5964, 2
    %v5966 = vmax.f32 %v5964, %v5965
    %v5967 = vrot.slane %v5966, 1
    %v5968 = vmax.f32 %v5966, %v5967
    %v5969 = vsel %vm5142, %v4977, -inf
    %v5970 = vrot.slane %v5969, 4
    %v5971 = vmax.f32 %v5969, %v5970
    %v5972 = vrot.slane %v5971, 2
    %v5973 = vmax.f32 %v5971, %v5972
    %v5974 = vrot.slane %v5973, 1
    %v5975 = vmax.f32 %v5973, %v5974
    %v5976 = vsel %vm5142, %v4979, -inf
    %v5977 = vrot.slane %v5976, 4
    %v5978 = vmax.f32 %v5976, %v5977
    %v5979 = vrot.slane %v5978, 2
    %v5980 = vmax.f32 %v5978, %v5979
    %v5981 = vrot.slane %v5980, 1
    %v5982 = vmax.f32 %v5980, %v5981
    %v5983 = vsel %vm5142, %v4987, -inf
    %v5984 = vrot.slane %v5983, 4
    %v5985 = vmax.f32 %v5983, %v5984
    %v5986 = vrot.slane %v5985, 2
    %v5987 = vmax.f32 %v5985, %v5986
    %v5988 = vrot.slane %v5987, 1
    %v5989 = vmax.f32 %v5987, %v5988
    %v5990 = vsel %vm5142, %v4995, -inf
    %v5991 = vrot.slane %v5990, 4
    %v5992 = vmax.f32 %v5990, %v5991
    %v5993 = vrot.slane %v5992, 2
    %v5994 = vmax.f32 %v5992, %v5993
    %v5995 = vrot.slane %v5994, 1
    %v5996 = vmax.f32 %v5994, %v5995
    %v5997 = vsel %vm5142, %v4994, -inf
    %v5998 = vrot.slane %v5997, 4
    %v5999 = vmax.f32 %v5997, %v5998
    %v6000 = vrot.slane %v5999, 2
    %v6001 = vmax.f32 %v5999, %v6000
    %v6002 = vrot.slane %v6001, 1
    %v6003 = vmax.f32 %v6001, %v6002
    %v6004 = vsel %vm5142, %v4996, -inf
    %v6005 = vrot.slane %v6004, 4
    %v6006 = vmax.f32 %v6004, %v6005
    %v6007 = vrot.slane %v6006, 2
    %v6008 = vmax.f32 %v6006, %v6007
    %v6009 = vrot.slane %v6008, 1
    %v6010 = vmax.f32 %v6008, %v6009
    %v6011 = vsel %vm5142, %v5004, -inf
    %v6012 = vrot.slane %v6011, 4
    %v6013 = vmax.f32 %v6011, %v6012
    %v6014 = vrot.slane %v6013, 2
    %v6015 = vmax.f32 %v6013, %v6014
    %v6016 = vrot.slane %v6015, 1
    %v6017 = vmax.f32 %v6015, %v6016
    %v6018 = vsel %vm5142, %v5012, -inf
    %v6019 = vrot.slane %v6018, 4
    %v6020 = vmax.f32 %v6018, %v6019
    %v6021 = vrot.slane %v6020, 2
    %v6022 = vmax.f32 %v6020, %v6021
    %v6023 = vrot.slane %v6022, 1
    %v6024 = vmax.f32 %v6022, %v6023
    %v6025 = vsel %vm5142, %v5011, -inf
    %v6026 = vrot.slane %v6025, 4
    %v6027 = vmax.f32 %v6025, %v6026
    %v6028 = vrot.slane %v6027, 2
    %v6029 = vmax.f32 %v6027, %v6028
    %v6030 = vrot.slane %v6029, 1
    %v6031 = vmax.f32 %v6029, %v6030
    %v6032 = vsel %vm5142, %v5013, -inf
    %v6033 = vrot.slane %v6032, 4
    %v6034 = vmax.f32 %v6032, %v6033
    %v6035 = vrot.slane %v6034, 2
    %v6036 = vmax.f32 %v6034, %v6035
    %v6037 = vrot.slane %v6036, 1
    %v6038 = vmax.f32 %v6036, %v6037
    %6039 = vst.msk [vmem:[#allocation4] sm:$0xff] %vm4341, 0.0
    %6040 = vst.msk [vmem:[#allocation4 + $0x8] sm:$0x3] %vm5142, 0.0
    %6041 = vst.msk [vmem:[#allocation4 + $0x10] sm:$0xff] %vm4341, 0.0
    %6042 = vst.msk [vmem:[#allocation4 + $0x18] sm:$0x3] %vm5142, 0.0
    %6043 = vst.msk [vmem:[#allocation4 + $0x20] sm:$0xff] %vm4341, 0.0
    %6044 = vst.msk [vmem:[#allocation4 + $0x28] sm:$0x3] %vm5142, 0.0
    %6045 = vst.msk [vmem:[#allocation4 + $0x30] sm:$0xff] %vm4341, 0.0
    %6046 = vst.msk [vmem:[#allocation4 + $0x38] sm:$0x3] %vm5142, 0.0
    %6047 = vst.msk [vmem:[#allocation4 + $0x40] sm:$0xff] %vm4341, 0.0
    %6048 = vst.msk [vmem:[#allocation4 + $0x48] sm:$0x3] %vm5142, 0.0
    %6049 = vst.msk [vmem:[#allocation4 + $0x50] sm:$0xff] %vm4341, 0.0
    %6050 = vst.msk [vmem:[#allocation4 + $0x58] sm:$0x3] %vm5142, 0.0
    %6051 = vst.msk [vmem:[#allocation4 + $0x60] sm:$0xff] %vm4341, 0.0
    %6052 = vst.msk [vmem:[#allocation4 + $0x68] sm:$0x3] %vm5142, 0.0
    %6053 = vst.msk [vmem:[#allocation4 + $0x70] sm:$0xff] %vm4341, 0.0
    %6054 = vst.msk [vmem:[#allocation4 + $0x78] sm:$0x3] %vm5142, 0.0
    %6055 = vst.msk [vmem:[#allocation4 + $0x80] sm:$0xff] %vm4341, 0.0
    %6056 = vst.msk [vmem:[#allocation4 + $0x88] sm:$0x3] %vm5142, 0.0
    %6057 = vst.msk [vmem:[#allocation4 + $0x90] sm:$0xff] %vm4341, 0.0
    %6058 = vst.msk [vmem:[#allocation4 + $0x98] sm:$0x3] %vm5142, 0.0
    %6059 = vst.msk [vmem:[#allocation4 + $0xa0] sm:$0xff] %vm4341, 0.0
    %6060 = vst.msk [vmem:[#allocation4 + $0xa8] sm:$0x3] %vm5142, 0.0
    %6061 = vst.msk [vmem:[#allocation4 + $0xb0] sm:$0xff] %vm4341, 0.0
    %6062 = vst.msk [vmem:[#allocation4 + $0xb8] sm:$0x3] %vm5142, 0.0
    %6063 = vst.msk [vmem:[#allocation4 + $0xc0] sm:$0xff] %vm4341, 0.0
    %6064 = vst.msk [vmem:[#allocation4 + $0xc8] sm:$0x3] %vm5142, 0.0
    %6065 = vst.msk [vmem:[#allocation4 + $0xd0] sm:$0xff] %vm4341, 0.0
    %6066 = vst.msk [vmem:[#allocation4 + $0xd8] sm:$0x3] %vm5142, 0.0
    %6067 = vst.msk [vmem:[#allocation4 + $0xe0] sm:$0xff] %vm4341, 0.0
    %6068 = vst.msk [vmem:[#allocation4 + $0xe8] sm:$0x3] %vm5142, 0.0
    %6069 = vst.msk [vmem:[#allocation4 + $0xf0] sm:$0xff] %vm4341, 0.0
    %6070 = vst.msk [vmem:[#allocation4 + $0xf8] sm:$0x3] %vm5142, 0.0
    %6071 = vst.msk [vmem:[#allocation4 + $0x100] sm:$0xff] %vm4341, 0.0
    %6072 = vst.msk [vmem:[#allocation4 + $0x108] sm:$0x3] %vm5142, 0.0
    %6073 = vst.msk [vmem:[#allocation4 + $0x110] sm:$0xff] %vm4341, 0.0
    %6074 = vst.msk [vmem:[#allocation4 + $0x118] sm:$0x3] %vm5142, 0.0
    %6075 = vst.msk [vmem:[#allocation4 + $0x120] sm:$0xff] %vm4341, 0.0
    %6076 = vst.msk [vmem:[#allocation4 + $0x128] sm:$0x3] %vm5142, 0.0
    %6077 = vst.msk [vmem:[#allocation4 + $0x130] sm:$0xff] %vm4341, 0.0
    %6078 = vst.msk [vmem:[#allocation4 + $0x138] sm:$0x3] %vm5142, 0.0
    %vm6207 = vcmask 1041409
    %v6208 = vsel %vm6207, %v5156, %v5149
    %vm6209 = vcmask 1042434
    %v6210 = vsel %vm6209, %v5163, %v6208
    %vm6211 = vcmask 1043459
    %v6212 = vsel %vm6211, %v5170, %v6210
    %vm6213 = vcmask 1044484
    %v6214 = vsel %vm6213, %v5177, %v6212
    %vm6215 = vcmask 1045509
    %v6216 = vsel %vm6215, %v5184, %v6214
    %vm6217 = vcmask 1046534
    %v6218 = vsel %vm6217, %v5191, %v6216
    %vm6219 = vcmask 1047559
    %v6220 = vsel %vm6219, %v5198, %v6218
    %v6221 = vsel %vm6207, %v5212, %v5205
    %v6222 = vsel %vm6209, %v5219, %v6221
    %v6223 = vsel %vm6211, %v5226, %v6222
    %v6224 = vsel %vm6213, %v5233, %v6223
    %v6225 = vsel %vm6215, %v5240, %v6224
    %v6226 = vsel %vm6217, %v5247, %v6225
    %v6227 = vsel %vm6219, %v5254, %v6226
    %v6228 = vsel %vm6207, %v5268, %v5261
    %v6229 = vsel %vm6209, %v5275, %v6228
    %v6230 = vsel %vm6211, %v5282, %v6229
    %v6231 = vsel %vm6213, %v5289, %v6230
    %v6232 = vsel %vm6215, %v5296, %v6231
    %v6233 = vsel %vm6217, %v5303, %v6232
    %v6234 = vsel %vm6219, %v5310, %v6233
    %v6235 = vsel %vm6207, %v5324, %v5317
    %v6236 = vsel %vm6209, %v5331, %v6235
    %v6237 = vsel %vm6211, %v5338, %v6236
    %v6238 = vsel %vm6213, %v5345, %v6237
    %v6239 = vsel %vm6215, %v5352, %v6238
    %v6240 = vsel %vm6217, %v5359, %v6239
    %v6241 = vsel %vm6219, %v5366, %v6240
    %v6242 = vsel %vm6207, %v5380, %v5373
    %v6243 = vsel %vm6209, %v5387, %v6242
    %v6244 = vsel %vm6211, %v5394, %v6243
    %v6245 = vsel %vm6213, %v5401, %v6244
    %v6246 = vsel %vm6215, %v5408, %v6245
    %v6247 = vsel %vm6217, %v5415, %v6246
    %v6248 = vsel %vm6219, %v5422, %v6247
    %v6249 = vsel %vm6207, %v5436, %v5429
    %v6250 = vsel %vm6209, %v5443, %v6249
    %v6251 = vsel %vm6211, %v5450, %v6250
    %v6252 = vsel %vm6213, %v5457, %v6251
    %v6253 = vsel %vm6215, %v5464, %v6252
    %v6254 = vsel %vm6217, %v5471, %v6253
    %v6255 = vsel %vm6219, %v5478, %v6254
    %v6256 = vsel %vm6207, %v5492, %v5485
    %v6257 = vsel %vm6209, %v5499, %v6256
    %v6258 = vsel %vm6211, %v5506, %v6257
    %v6259 = vsel %vm6213, %v5513, %v6258
    %v6260 = vsel %vm6215, %v5520, %v6259
    %v6261 = vsel %vm6217, %v5527, %v6260
    %v6262 = vsel %vm6219, %v5534, %v6261
    %v6263 = vsel %vm6207, %v5548, %v5541
    %v6264 = vsel %vm6209, %v5555, %v6263
    %v6265 = vsel %vm6211, %v5562, %v6264
    %v6266 = vsel %vm6213, %v5569, %v6265
    %v6267 = vsel %vm6215, %v5576, %v6266
    %v6268 = vsel %vm6217, %v5583, %v6267
    %v6269 = vsel %vm6219, %v5590, %v6268
    %v6270 = vsel %vm6207, %v5604, %v5597
    %v6271 = vsel %vm6209, %v5611, %v6270
    %v6272 = vsel %vm6211, %v5618, %v6271
    %v6273 = vsel %vm6213, %v5625, %v6272
    %v6274 = vsel %vm6215, %v5632, %v6273
    %v6275 = vsel %vm6217, %v5639, %v6274
    %v6276 = vsel %vm6219, %v5646, %v6275
    %v6277 = vsel %vm6207, %v5660, %v5653
    %v6278 = vsel %vm6209, %v5667, %v6277
    %v6279 = vsel %vm6211, %v5674, %v6278
    %v6280 = vsel %vm6213, %v5681, %v6279
    %v6281 = vsel %vm6215, %v5688, %v6280
    %v6282 = vsel %vm6217, %v5695, %v6281
    %v6283 = vsel %vm6219, %v5702, %v6282
    %v6284 = vsel %vm6207, %v5716, %v5709
    %v6285 = vsel %vm6209, %v5723, %v6284
    %v6286 = vsel %vm6211, %v5730, %v6285
    %v6287 = vsel %vm6213, %v5737, %v6286
    %v6288 = vsel %vm6215, %v5744, %v6287
    %v6289 = vsel %vm6217, %v5751, %v6288
    %v6290 = vsel %vm6219, %v5758, %v6289
    %v6291 = vsel %vm6207, %v5772, %v5765
    %v6292 = vsel %vm6209, %v5779, %v6291
    %v6293 = vsel %vm6211, %v5786, %v6292
    %v6294 = vsel %vm6213, %v5793, %v6293
    %v6295 = vsel %vm6215, %v5800, %v6294
    %v6296 = vsel %vm6217, %v5807, %v6295
    %v6297 = vsel %vm6219, %v5814, %v6296
    %v6298 = vsel %vm6207, %v5828, %v5821
    %v6299 = vsel %vm6209, %v5835, %v6298
    %v6300 = vsel %vm6211, %v5842, %v6299
    %v6301 = vsel %vm6213, %v5849, %v6300
    %v6302 = vsel %vm6215, %v5856, %v6301
    %v6303 = vsel %vm6217, %v5863, %v6302
    %v6304 = vsel %vm6219, %v5870, %v6303
    %v6305 = vsel %vm6207, %v5884, %v5877
    %v6306 = vsel %vm6209, %v5891, %v6305
    %v6307 = vsel %vm6211, %v5898, %v6306
    %v6308 = vsel %vm6213, %v5905, %v6307
    %v6309 = vsel %vm6215, %v5912, %v6308
    %v6310 = vsel %vm6217, %v5919, %v6309
    %v6311 = vsel %vm6219, %v5926, %v6310
    %v6312 = vsel %vm6207, %v5940, %v5933
    %v6313 = vsel %vm6209, %v5947, %v6312
    %v6314 = vsel %vm6211, %v5954, %v6313
    %v6315 = vsel %vm6213, %v5961, %v6314
    %v6316 = vsel %vm6215, %v5968, %v6315
    %v6317 = vsel %vm6217, %v5975, %v6316
    %v6318 = vsel %vm6219, %v5982, %v6317
    %v6319 = vsel %vm6207, %v5996, %v5989
    %v6320 = vsel %vm6209, %v6003, %v6319
    %v6321 = vsel %vm6211, %v6010, %v6320
    %v6322 = vsel %vm6213, %v6017, %v6321
    %v6323 = vsel %vm6215, %v6024, %v6322
    %v6324 = vsel %vm6217, %v6031, %v6323
    %v6325 = vsel %vm6219, %v6038, %v6324
    %s6342 = scalar_lea.vmem [#allocation4], 16
    %6343 = vst.msk [vmem:[%s6342 + $0x1] sm:$0xff] %vm4341, %v6220
    %6344 = vst.msk [vmem:[%s6342 + $0x11] sm:$0xff] %vm4341, %v6227
    %6345 = vst.msk [vmem:[%s6342 + $0x21] sm:$0xff] %vm4341, %v6234
    %6346 = vst.msk [vmem:[%s6342 + $0x31] sm:$0xff] %vm4341, %v6241
    %6347 = vst.msk [vmem:[%s6342 + $0x41] sm:$0xff] %vm4341, %v6248
    %6348 = vst.msk [vmem:[%s6342 + $0x51] sm:$0xff] %vm4341, %v6255
    %6349 = vst.msk [vmem:[%s6342 + $0x61] sm:$0xff] %vm4341, %v6262
    %6350 = vst.msk [vmem:[%s6342 + $0x71] sm:$0xff] %vm4341, %v6269
    %6351 = vst.msk [vmem:[%s6342 + $0xa1] sm:$0xff] %vm4341, %v6276
    %6352 = vst.msk [vmem:[%s6342 + $0xb1] sm:$0xff] %vm4341, %v6283
    %6353 = vst.msk [vmem:[%s6342 + $0xc1] sm:$0xff] %vm4341, %v6290
    %6354 = vst.msk [vmem:[%s6342 + $0xd1] sm:$0xff] %vm4341, %v6297
    %6355 = vst.msk [vmem:[%s6342 + $0xe1] sm:$0xff] %vm4341, %v6304
    %6356 = vst.msk [vmem:[%s6342 + $0xf1] sm:$0xff] %vm4341, %v6311
    %6357 = vst.msk [vmem:[%s6342 + $0x101] sm:$0xff] %vm4341, %v6318
    %6358 = vst.msk [vmem:[%s6342 + $0x111] sm:$0xff] %vm4341, %v6325
    %v6359 = vld [vmem:[#allocation4] sm:$0xff]
    %v6360 = vld [vmem:[#allocation4 + $0x10] sm:$0xff]
    %v6361 = vld [vmem:[#allocation4 + $0x20] sm:$0xff]
    %v6362 = vld [vmem:[#allocation4 + $0x30] sm:$0xff]
    %v6363 = vld [vmem:[#allocation4 + $0x40] sm:$0xff]
    %v6364 = vld [vmem:[#allocation4 + $0x50] sm:$0xff]
    %v6365 = vld [vmem:[#allocation4 + $0x60] sm:$0xff]
    %v6366 = vld [vmem:[#allocation4 + $0x70] sm:$0xff]
    %v6367 = vld [vmem:[#allocation4 + $0xa0] sm:$0xff]
    %v6368 = vld [vmem:[#allocation4 + $0xb0] sm:$0xff]
    %v6369 = vld [vmem:[#allocation4 + $0xc0] sm:$0xff]
    %v6370 = vld [vmem:[#allocation4 + $0xd0] sm:$0xff]
    %v6371 = vld [vmem:[#allocation4 + $0xe0] sm:$0xff]
    %v6372 = vld [vmem:[#allocation4 + $0xf0] sm:$0xff]
    %v6373 = vld [vmem:[#allocation4 + $0x100] sm:$0xff]
    %v6374 = vld [vmem:[#allocation4 + $0x110] sm:$0xff]
    %6375 = vst.msk [vmem:[#allocation5] sm:$0xff] %vm4341, %v6359
    %6376 = vst.msk [vmem:[#allocation5 + $0x8] sm:$0xff] %vm4341, %v6360
    %6377 = vst.msk [vmem:[#allocation5 + $0x10] sm:$0xff] %vm4341, %v6361
    %6378 = vst.msk [vmem:[#allocation5 + $0x18] sm:$0xff] %vm4341, %v6362
    %6379 = vst.msk [vmem:[#allocation5 + $0x20] sm:$0xff] %vm4341, %v6363
    %6380 = vst.msk [vmem:[#allocation5 + $0x28] sm:$0xff] %vm4341, %v6364
    %6381 = vst.msk [vmem:[#allocation5 + $0x30] sm:$0xff] %vm4341, %v6365
    %6382 = vst.msk [vmem:[#allocation5 + $0x38] sm:$0xff] %vm4341, %v6366
    %6383 = vst.msk [vmem:[#allocation5 + $0x40] sm:$0xff] %vm4341, %v6367
    %6384 = vst.msk [vmem:[#allocation5 + $0x48] sm:$0xff] %vm4341, %v6368
    %6385 = vst.msk [vmem:[#allocation5 + $0x50] sm:$0xff] %vm4341, %v6369
    %6386 = vst.msk [vmem:[#allocation5 + $0x58] sm:$0xff] %vm4341, %v6370
    %6387 = vst.msk [vmem:[#allocation5 + $0x60] sm:$0xff] %vm4341, %v6371
    %6388 = vst.msk [vmem:[#allocation5 + $0x68] sm:$0xff] %vm4341, %v6372
    %6389 = vst.msk [vmem:[#allocation5 + $0x70] sm:$0xff] %vm4341, %v6373
    %6390 = vst.msk [vmem:[#allocation5 + $0x78] sm:$0xff] %vm4341, %v6374
    %v6391 = vld [vmem:[#allocation4 + $0x1] sm:$0xff]
    %v6392 = vld [vmem:[#allocation4 + $0x11] sm:$0xff]
    %v6393 = vld [vmem:[#allocation4 + $0x21] sm:$0xff]
    %v6394 = vld [vmem:[#allocation4 + $0x31] sm:$0xff]
    %v6395 = vld [vmem:[#allocation4 + $0x41] sm:$0xff]
    %v6396 = vld [vmem:[#allocation4 + $0x51] sm:$0xff]
    %v6397 = vld [vmem:[#allocation4 + $0x61] sm:$0xff]
    %v6398 = vld [vmem:[#allocation4 + $0x71] sm:$0xff]
    %v6399 = vld [vmem:[#allocation4 + $0xa1] sm:$0xff]
    %v6400 = vld [vmem:[#allocation4 + $0xb1] sm:$0xff]
    %v6401 = vld [vmem:[#allocation4 + $0xc1] sm:$0xff]
    %v6402 = vld [vmem:[#allocation4 + $0xd1] sm:$0xff]
    %v6403 = vld [vmem:[#allocation4 + $0xe1] sm:$0xff]
    %v6404 = vld [vmem:[#allocation4 + $0xf1] sm:$0xff]
    %v6405 = vld [vmem:[#allocation4 + $0x101] sm:$0xff]
    %v6406 = vld [vmem:[#allocation4 + $0x111] sm:$0xff]
    %6423 = vrot.lane.b32.xlu0 %v6391, 4
    %v6424 = vpop.permute.xlu0 %6423
    %6425 = vrot.lane.b32.xlu0 %v6392, 4
    %v6426 = vpop.permute.xlu0 %6425
    %6427 = vrot.lane.b32.xlu0 %v6393, 4
    %v6428 = vpop.permute.xlu0 %6427
    %6429 = vrot.lane.b32.xlu0 %v6394, 4
    %v6430 = vpop.permute.xlu0 %6429
    %6431 = vrot.lane.b32.xlu0 %v6395, 4
    %v6432 = vpop.permute.xlu0 %6431
    %6433 = vrot.lane.b32.xlu0 %v6396, 4
    %v6434 = vpop.permute.xlu0 %6433
    %6435 = vrot.lane.b32.xlu0 %v6397, 4
    %v6436 = vpop.permute.xlu0 %6435
    %6437 = vrot.lane.b32.xlu0 %v6398, 4
    %v6438 = vpop.permute.xlu0 %6437
    %6439 = vrot.lane.b32.xlu0 %v6399, 4
    %v6440 = vpop.permute.xlu0 %6439
    %6441 = vrot.lane.b32.xlu0 %v6400, 4
    %v6442 = vpop.permute.xlu0 %6441
    %6443 = vrot.lane.b32.xlu0 %v6401, 4
    %v6444 = vpop.permute.xlu0 %6443
    %6445 = vrot.lane.b32.xlu0 %v6402, 4
    %v6446 = vpop.permute.xlu0 %6445
    %6447 = vrot.lane.b32.xlu0 %v6403, 4
    %v6448 = vpop.permute.xlu0 %6447
    %6449 = vrot.lane.b32.xlu0 %v6404, 4
    %v6450 = vpop.permute.xlu0 %6449
    %6451 = vrot.lane.b32.xlu0 %v6405, 4
    %v6452 = vpop.permute.xlu0 %6451
    %6453 = vrot.lane.b32.xlu0 %v6406, 4
    %v6454 = vpop.permute.xlu0 %6453
    %vm6471 = vcmask 64544
    %6472 = vst.msk [vmem:[#allocation5] sm:$0xff] %vm6471, %v6424
    %6473 = vst.msk [vmem:[#allocation5 + $0x8] sm:$0xff] %vm6471, %v6426
    %6474 = vst.msk [vmem:[#allocation5 + $0x10] sm:$0xff] %vm6471, %v6428
    %6475 = vst.msk [vmem:[#allocation5 + $0x18] sm:$0xff] %vm6471, %v6430
    %6476 = vst.msk [vmem:[#allocation5 + $0x20] sm:$0xff] %vm6471, %v6432
    %6477 = vst.msk [vmem:[#allocation5 + $0x28] sm:$0xff] %vm6471, %v6434
    %6478 = vst.msk [vmem:[#allocation5 + $0x30] sm:$0xff] %vm6471, %v6436
    %6479 = vst.msk [vmem:[#allocation5 + $0x38] sm:$0xff] %vm6471, %v6438
    %6480 = vst.msk [vmem:[#allocation5 + $0x40] sm:$0xff] %vm6471, %v6440
    %6481 = vst.msk [vmem:[#allocation5 + $0x48] sm:$0xff] %vm6471, %v6442
    %6482 = vst.msk [vmem:[#allocation5 + $0x50] sm:$0xff] %vm6471, %v6444
    %6483 = vst.msk [vmem:[#allocation5 + $0x58] sm:$0xff] %vm6471, %v6446
    %6484 = vst.msk [vmem:[#allocation5 + $0x60] sm:$0xff] %vm6471, %v6448
    %6485 = vst.msk [vmem:[#allocation5 + $0x68] sm:$0xff] %vm6471, %v6450
    %6486 = vst.msk [vmem:[#allocation5 + $0x70] sm:$0xff] %vm6471, %v6452
    %6487 = vst.msk [vmem:[#allocation5 + $0x78] sm:$0xff] %vm6471, %v6454
    %v6488 = vld [vmem:[#allocation4 + $0x2] sm:$0xff]
    %v6489 = vld [vmem:[#allocation4 + $0x12] sm:$0xff]
    %v6490 = vld [vmem:[#allocation4 + $0x22] sm:$0xff]
    %v6491 = vld [vmem:[#allocation4 + $0x32] sm:$0xff]
    %v6492 = vld [vmem:[#allocation4 + $0x42] sm:$0xff]
    %v6493 = vld [vmem:[#allocation4 + $0x52] sm:$0xff]
    %v6494 = vld [vmem:[#allocation4 + $0x62] sm:$0xff]
    %v6495 = vld [vmem:[#allocation4 + $0x72] sm:$0xff]
    %v6496 = vld [vmem:[#allocation4 + $0xa2] sm:$0xff]
    %v6497 = vld [vmem:[#allocation4 + $0xb2] sm:$0xff]
    %v6498 = vld [vmem:[#allocation4 + $0xc2] sm:$0xff]
    %v6499 = vld [vmem:[#allocation4 + $0xd2] sm:$0xff]
    %v6500 = vld [vmem:[#allocation4 + $0xe2] sm:$0xff]
    %v6501 = vld [vmem:[#allocation4 + $0xf2] sm:$0xff]
    %v6502 = vld [vmem:[#allocation4 + $0x102] sm:$0xff]
    %v6503 = vld [vmem:[#allocation4 + $0x112] sm:$0xff]
    %6520 = vrot.lane.b32.xlu0 %v6488, 8
    %v6521 = vpop.permute.xlu0 %6520
    %6522 = vrot.lane.b32.xlu0 %v6489, 8
    %v6523 = vpop.permute.xlu0 %6522
    %6524 = vrot.lane.b32.xlu0 %v6490, 8
    %v6525 = vpop.permute.xlu0 %6524
    %6526 = vrot.lane.b32.xlu0 %v6491, 8
    %v6527 = vpop.permute.xlu0 %6526
    %6528 = vrot.lane.b32.xlu0 %v6492, 8
    %v6529 = vpop.permute.xlu0 %6528
    %6530 = vrot.lane.b32.xlu0 %v6493, 8
    %v6531 = vpop.permute.xlu0 %6530
    %6532 = vrot.lane.b32.xlu0 %v6494, 8
    %v6533 = vpop.permute.xlu0 %6532
    %6534 = vrot.lane.b32.xlu0 %v6495, 8
    %v6535 = vpop.permute.xlu0 %6534
    %6536 = vrot.lane.b32.xlu0 %v6496, 8
    %v6537 = vpop.permute.xlu0 %6536
    %6538 = vrot.lane.b32.xlu0 %v6497, 8
    %v6539 = vpop.permute.xlu0 %6538
    %6540 = vrot.lane.b32.xlu0 %v6498, 8
    %v6541 = vpop.permute.xlu0 %6540
    %6542 = vrot.lane.b32.xlu0 %v6499, 8
    %v6543 = vpop.permute.xlu0 %6542
    %6544 = vrot.lane.b32.xlu0 %v6500, 8
    %v6545 = vpop.permute.xlu0 %6544
    %6546 = vrot.lane.b32.xlu0 %v6501, 8
    %v6547 = vpop.permute.xlu0 %6546
    %6548 = vrot.lane.b32.xlu0 %v6502, 8
    %v6549 = vpop.permute.xlu0 %6548
    %6550 = vrot.lane.b32.xlu0 %v6503, 8
    %v6551 = vpop.permute.xlu0 %6550
    %vm6568 = vcmask 97344
    %6569 = vst.msk [vmem:[#allocation5] sm:$0xff] %vm6568, %v6521
    %6570 = vst.msk [vmem:[#allocation5 + $0x8] sm:$0xff] %vm6568, %v6523
    %6571 = vst.msk [vmem:[#allocation5 + $0x10] sm:$0xff] %vm6568, %v6525
    %6572 = vst.msk [vmem:[#allocation5 + $0x18] sm:$0xff] %vm6568, %v6527
    %6573 = vst.msk [vmem:[#allocation5 + $0x20] sm:$0xff] %vm6568, %v6529
    %6574 = vst.msk [vmem:[#allocation5 + $0x28] sm:$0xff] %vm6568, %v6531
    %6575 = vst.msk [vmem:[#allocation5 + $0x30] sm:$0xff] %vm6568, %v6533
    %6576 = vst.msk [vmem:[#allocation5 + $0x38] sm:$0xff] %vm6568, %v6535
    %6577 = vst.msk [vmem:[#allocation5 + $0x40] sm:$0xff] %vm6568, %v6537
    %6578 = vst.msk [vmem:[#allocation5 + $0x48] sm:$0xff] %vm6568, %v6539
    %6579 = vst.msk [vmem:[#allocation5 + $0x50] sm:$0xff] %vm6568, %v6541
    %6580 = vst.msk [vmem:[#allocation5 + $0x58] sm:$0xff] %vm6568, %v6543
    %6581 = vst.msk [vmem:[#allocation5 + $0x60] sm:$0xff] %vm6568, %v6545
    %6582 = vst.msk [vmem:[#allocation5 + $0x68] sm:$0xff] %vm6568, %v6547
    %6583 = vst.msk [vmem:[#allocation5 + $0x70] sm:$0xff] %vm6568, %v6549
    %6584 = vst.msk [vmem:[#allocation5 + $0x78] sm:$0xff] %vm6568, %v6551
    %v6585 = vld [vmem:[%s6342] sm:$0xff]
    %v6586 = vld [vmem:[%s6342 + $0x10] sm:$0xff]
    %v6587 = vld [vmem:[%s6342 + $0x20] sm:$0xff]
    %v6588 = vld [vmem:[%s6342 + $0x30] sm:$0xff]
    %v6589 = vld [vmem:[%s6342 + $0x40] sm:$0xff]
    %v6590 = vld [vmem:[%s6342 + $0x50] sm:$0xff]
    %v6591 = vld [vmem:[%s6342 + $0x60] sm:$0xff]
    %v6592 = vld [vmem:[%s6342 + $0x70] sm:$0xff]
    %v6593 = vld [vmem:[%s6342 + $0xa0] sm:$0xff]
    %v6594 = vld [vmem:[%s6342 + $0xb0] sm:$0xff]
    %v6595 = vld [vmem:[%s6342 + $0xc0] sm:$0xff]
    %v6596 = vld [vmem:[%s6342 + $0xd0] sm:$0xff]
    %v6597 = vld [vmem:[%s6342 + $0xe0] sm:$0xff]
    %v6598 = vld [vmem:[%s6342 + $0xf0] sm:$0xff]
    %v6599 = vld [vmem:[%s6342 + $0x100] sm:$0xff]
    %v6600 = vld [vmem:[%s6342 + $0x110] sm:$0xff]
    %6617 = vrot.lane.b32.xlu0 %v6585, 12
    %v6618 = vpop.permute.xlu0 %6617
    %6619 = vrot.lane.b32.xlu0 %v6586, 12
    %v6620 = vpop.permute.xlu0 %6619
    %6621 = vrot.lane.b32.xlu0 %v6587, 12
    %v6622 = vpop.permute.xlu0 %6621
    %6623 = vrot.lane.b32.xlu0 %v6588, 12
    %v6624 = vpop.permute.xlu0 %6623
    %6625 = vrot.lane.b32.xlu0 %v6589, 12
    %v6626 = vpop.permute.xlu0 %6625
    %6627 = vrot.lane.b32.xlu0 %v6590, 12
    %v6628 = vpop.permute.xlu0 %6627
    %6629 = vrot.lane.b32.xlu0 %v6591, 12
    %v6630 = vpop.permute.xlu0 %6629
    %6631 = vrot.lane.b32.xlu0 %v6592, 12
    %v6632 = vpop.permute.xlu0 %6631
    %6633 = vrot.lane.b32.xlu0 %v6593, 12
    %v6634 = vpop.permute.xlu0 %6633
    %6635 = vrot.lane.b32.xlu0 %v6594, 12
    %v6636 = vpop.permute.xlu0 %6635
    %6637 = vrot.lane.b32.xlu0 %v6595, 12
    %v6638 = vpop.permute.xlu0 %6637
    %6639 = vrot.lane.b32.xlu0 %v6596, 12
    %v6640 = vpop.permute.xlu0 %6639
    %6641 = vrot.lane.b32.xlu0 %v6597, 12
    %v6642 = vpop.permute.xlu0 %6641
    %6643 = vrot.lane.b32.xlu0 %v6598, 12
    %v6644 = vpop.permute.xlu0 %6643
    %6645 = vrot.lane.b32.xlu0 %v6599, 12
    %v6646 = vpop.permute.xlu0 %6645
    %6647 = vrot.lane.b32.xlu0 %v6600, 12
    %v6648 = vpop.permute.xlu0 %6647
    %vm6665 = vcmask 130144
    %6666 = vst.msk [vmem:[#allocation5] sm:$0xff] %vm6665, %v6618
    %6667 = vst.msk [vmem:[#allocation5 + $0x8] sm:$0xff] %vm6665, %v6620
    %6668 = vst.msk [vmem:[#allocation5 + $0x10] sm:$0xff] %vm6665, %v6622
    %6669 = vst.msk [vmem:[#allocation5 + $0x18] sm:$0xff] %vm6665, %v6624
    %6670 = vst.msk [vmem:[#allocation5 + $0x20] sm:$0xff] %vm6665, %v6626
    %6671 = vst.msk [vmem:[#allocation5 + $0x28] sm:$0xff] %vm6665, %v6628
    %6672 = vst.msk [vmem:[#allocation5 + $0x30] sm:$0xff] %vm6665, %v6630
    %6673 = vst.msk [vmem:[#allocation5 + $0x38] sm:$0xff] %vm6665, %v6632
    %6674 = vst.msk [vmem:[#allocation5 + $0x40] sm:$0xff] %vm6665, %v6634
    %6675 = vst.msk [vmem:[#allocation5 + $0x48] sm:$0xff] %vm6665, %v6636
    %6676 = vst.msk [vmem:[#allocation5 + $0x50] sm:$0xff] %vm6665, %v6638
    %6677 = vst.msk [vmem:[#allocation5 + $0x58] sm:$0xff] %vm6665, %v6640
    %6678 = vst.msk [vmem:[#allocation5 + $0x60] sm:$0xff] %vm6665, %v6642
    %6679 = vst.msk [vmem:[#allocation5 + $0x68] sm:$0xff] %vm6665, %v6644
    %6680 = vst.msk [vmem:[#allocation5 + $0x70] sm:$0xff] %vm6665, %v6646
    %6681 = vst.msk [vmem:[#allocation5 + $0x78] sm:$0xff] %vm6665, %v6648
    %v6682 = vld [vmem:[%s6342 + $0x1] sm:$0xff]
    %v6683 = vld [vmem:[%s6342 + $0x11] sm:$0xff]
    %v6684 = vld [vmem:[%s6342 + $0x21] sm:$0xff]
    %v6685 = vld [vmem:[%s6342 + $0x31] sm:$0xff]
    %v6686 = vld [vmem:[%s6342 + $0x41] sm:$0xff]
    %v6687 = vld [vmem:[%s6342 + $0x51] sm:$0xff]
    %v6688 = vld [vmem:[%s6342 + $0x61] sm:$0xff]
    %v6689 = vld [vmem:[%s6342 + $0x71] sm:$0xff]
    %v6690 = vld [vmem:[%s6342 + $0xa1] sm:$0xff]
    %v6691 = vld [vmem:[%s6342 + $0xb1] sm:$0xff]
    %v6692 = vld [vmem:[%s6342 + $0xc1] sm:$0xff]
    %v6693 = vld [vmem:[%s6342 + $0xd1] sm:$0xff]
    %v6694 = vld [vmem:[%s6342 + $0xe1] sm:$0xff]
    %v6695 = vld [vmem:[%s6342 + $0xf1] sm:$0xff]
    %v6696 = vld [vmem:[%s6342 + $0x101] sm:$0xff]
    %v6697 = vld [vmem:[%s6342 + $0x111] sm:$0xff]
    %6714 = vrot.lane.b32.xlu0 %v6682, 16
    %v6715 = vpop.permute.xlu0 %6714
    %6716 = vrot.lane.b32.xlu0 %v6683, 16
    %v6717 = vpop.permute.xlu0 %6716
    %6718 = vrot.lane.b32.xlu0 %v6684, 16
    %v6719 = vpop.permute.xlu0 %6718
    %6720 = vrot.lane.b32.xlu0 %v6685, 16
    %v6721 = vpop.permute.xlu0 %6720
    %6722 = vrot.lane.b32.xlu0 %v6686, 16
    %v6723 = vpop.permute.xlu0 %6722
    %6724 = vrot.lane.b32.xlu0 %v6687, 16
    %v6725 = vpop.permute.xlu0 %6724
    %6726 = vrot.lane.b32.xlu0 %v6688, 16
    %v6727 = vpop.permute.xlu0 %6726
    %6728 = vrot.lane.b32.xlu0 %v6689, 16
    %v6729 = vpop.permute.xlu0 %6728
    %6730 = vrot.lane.b32.xlu0 %v6690, 16
    %v6731 = vpop.permute.xlu0 %6730
    %6732 = vrot.lane.b32.xlu0 %v6691, 16
    %v6733 = vpop.permute.xlu0 %6732
    %6734 = vrot.lane.b32.xlu0 %v6692, 16
    %v6735 = vpop.permute.xlu0 %6734
    %6736 = vrot.lane.b32.xlu0 %v6693, 16
    %v6737 = vpop.permute.xlu0 %6736
    %6738 = vrot.lane.b32.xlu0 %v6694, 16
    %v6739 = vpop.permute.xlu0 %6738
    %6740 = vrot.lane.b32.xlu0 %v6695, 16
    %v6741 = vpop.permute.xlu0 %6740
    %6742 = vrot.lane.b32.xlu0 %v6696, 16
    %v6743 = vpop.permute.xlu0 %6742
    %6744 = vrot.lane.b32.xlu0 %v6697, 16
    %v6745 = vpop.permute.xlu0 %6744
    %vm6762 = vcmask 162944
    %6763 = vst.msk [vmem:[#allocation5] sm:$0xff] %vm6762, %v6715
    %6764 = vst.msk [vmem:[#allocation5 + $0x8] sm:$0xff] %vm6762, %v6717
    %6765 = vst.msk [vmem:[#allocation5 + $0x10] sm:$0xff] %vm6762, %v6719
    %6766 = vst.msk [vmem:[#allocation5 + $0x18] sm:$0xff] %vm6762, %v6721
    %6767 = vst.msk [vmem:[#allocation5 + $0x20] sm:$0xff] %vm6762, %v6723
    %6768 = vst.msk [vmem:[#allocation5 + $0x28] sm:$0xff] %vm6762, %v6725
    %6769 = vst.msk [vmem:[#allocation5 + $0x30] sm:$0xff] %vm6762, %v6727
    %6770 = vst.msk [vmem:[#allocation5 + $0x38] sm:$0xff] %vm6762, %v6729
    %6771 = vst.msk [vmem:[#allocation5 + $0x40] sm:$0xff] %vm6762, %v6731
    %6772 = vst.msk [vmem:[#allocation5 + $0x48] sm:$0xff] %vm6762, %v6733
    %6773 = vst.msk [vmem:[#allocation5 + $0x50] sm:$0xff] %vm6762, %v6735
    %6774 = vst.msk [vmem:[#allocation5 + $0x58] sm:$0xff] %vm6762, %v6737
    %6775 = vst.msk [vmem:[#allocation5 + $0x60] sm:$0xff] %vm6762, %v6739
    %6776 = vst.msk [vmem:[#allocation5 + $0x68] sm:$0xff] %vm6762, %v6741
    %6777 = vst.msk [vmem:[#allocation5 + $0x70] sm:$0xff] %vm6762, %v6743
    %6778 = vst.msk [vmem:[#allocation5 + $0x78] sm:$0xff] %vm6762, %v6745
    %v6779 = vld [vmem:[%s6342 + $0x2] sm:$0xff]
    %v6780 = vld [vmem:[%s6342 + $0x12] sm:$0xff]
    %v6781 = vld [vmem:[%s6342 + $0x22] sm:$0xff]
    %v6782 = vld [vmem:[%s6342 + $0x32] sm:$0xff]
    %v6783 = vld [vmem:[%s6342 + $0x42] sm:$0xff]
    %v6784 = vld [vmem:[%s6342 + $0x52] sm:$0xff]
    %v6785 = vld [vmem:[%s6342 + $0x62] sm:$0xff]
    %v6786 = vld [vmem:[%s6342 + $0x72] sm:$0xff]
    %v6787 = vld [vmem:[%s6342 + $0xa2] sm:$0xff]
    %v6788 = vld [vmem:[%s6342 + $0xb2] sm:$0xff]
    %v6789 = vld [vmem:[%s6342 + $0xc2] sm:$0xff]
    %v6790 = vld [vmem:[%s6342 + $0xd2] sm:$0xff]
    %v6791 = vld [vmem:[%s6342 + $0xe2] sm:$0xff]
    %v6792 = vld [vmem:[%s6342 + $0xf2] sm:$0xff]
    %v6793 = vld [vmem:[%s6342 + $0x102] sm:$0xff]
    %v6794 = vld [vmem:[%s6342 + $0x112] sm:$0xff]
    %6811 = vrot.lane.b32.xlu0 %v6779, 20
    %v6812 = vpop.permute.xlu0 %6811
    %6813 = vrot.lane.b32.xlu0 %v6780, 20
    %v6814 = vpop.permute.xlu0 %6813
    %6815 = vrot.lane.b32.xlu0 %v6781, 20
    %v6816 = vpop.permute.xlu0 %6815
    %6817 = vrot.lane.b32.xlu0 %v6782, 20
    %v6818 = vpop.permute.xlu0 %6817
    %6819 = vrot.lane.b32.xlu0 %v6783, 20
    %v6820 = vpop.permute.xlu0 %6819
    %6821 = vrot.lane.b32.xlu0 %v6784, 20
    %v6822 = vpop.permute.xlu0 %6821
    %6823 = vrot.lane.b32.xlu0 %v6785, 20
    %v6824 = vpop.permute.xlu0 %6823
    %6825 = vrot.lane.b32.xlu0 %v6786, 20
    %v6826 = vpop.permute.xlu0 %6825
    %6827 = vrot.lane.b32.xlu0 %v6787, 20
    %v6828 = vpop.permute.xlu0 %6827
    %6829 = vrot.lane.b32.xlu0 %v6788, 20
    %v6830 = vpop.permute.xlu0 %6829
    %6831 = vrot.lane.b32.xlu0 %v6789, 20
    %v6832 = vpop.permute.xlu0 %6831
    %6833 = vrot.lane.b32.xlu0 %v6790, 20
    %v6834 = vpop.permute.xlu0 %6833
    %6835 = vrot.lane.b32.xlu0 %v6791, 20
    %v6836 = vpop.permute.xlu0 %6835
    %6837 = vrot.lane.b32.xlu0 %v6792, 20
    %v6838 = vpop.permute.xlu0 %6837
    %6839 = vrot.lane.b32.xlu0 %v6793, 20
    %v6840 = vpop.permute.xlu0 %6839
    %6841 = vrot.lane.b32.xlu0 %v6794, 20
    %v6842 = vpop.permute.xlu0 %6841
    %vm6859 = vcmask 195744
    %6860 = vst.msk [vmem:[#allocation5] sm:$0xff] %vm6859, %v6812
    %6861 = vst.msk [vmem:[#allocation5 + $0x8] sm:$0xff] %vm6859, %v6814
    %6862 = vst.msk [vmem:[#allocation5 + $0x10] sm:$0xff] %vm6859, %v6816
    %6863 = vst.msk [vmem:[#allocation5 + $0x18] sm:$0xff] %vm6859, %v6818
    %6864 = vst.msk [vmem:[#allocation5 + $0x20] sm:$0xff] %vm6859, %v6820
    %6865 = vst.msk [vmem:[#allocation5 + $0x28] sm:$0xff] %vm6859, %v6822
    %6866 = vst.msk [vmem:[#allocation5 + $0x30] sm:$0xff] %vm6859, %v6824
    %6867 = vst.msk [vmem:[#allocation5 + $0x38] sm:$0xff] %vm6859, %v6826
    %6868 = vst.msk [vmem:[#allocation5 + $0x40] sm:$0xff] %vm6859, %v6828
    %6869 = vst.msk [vmem:[#allocation5 + $0x48] sm:$0xff] %vm6859, %v6830
    %6870 = vst.msk [vmem:[#allocation5 + $0x50] sm:$0xff] %vm6859, %v6832
    %6871 = vst.msk [vmem:[#allocation5 + $0x58] sm:$0xff] %vm6859, %v6834
    %6872 = vst.msk [vmem:[#allocation5 + $0x60] sm:$0xff] %vm6859, %v6836
    %6873 = vst.msk [vmem:[#allocation5 + $0x68] sm:$0xff] %vm6859, %v6838
    %6874 = vst.msk [vmem:[#allocation5 + $0x70] sm:$0xff] %vm6859, %v6840
    %6875 = vst.msk [vmem:[#allocation5 + $0x78] sm:$0xff] %vm6859, %v6842
    %s6876 = scalar_lea.vmem [#allocation4], 32
    %v6877 = vld [vmem:[%s6876] sm:$0xff]
    %v6878 = vld [vmem:[%s6876 + $0x10] sm:$0xff]
    %v6879 = vld [vmem:[%s6876 + $0x20] sm:$0xff]
    %v6880 = vld [vmem:[%s6876 + $0x30] sm:$0xff]
    %v6881 = vld [vmem:[%s6876 + $0x40] sm:$0xff]
    %v6882 = vld [vmem:[%s6876 + $0x50] sm:$0xff]
    %v6883 = vld [vmem:[%s6876 + $0x60] sm:$0xff]
    %v6884 = vld [vmem:[%s6876 + $0x70] sm:$0xff]
    %v6885 = vld [vmem:[%s6876 + $0xa0] sm:$0xff]
    %v6886 = vld [vmem:[%s6876 + $0xb0] sm:$0xff]
    %v6887 = vld [vmem:[%s6876 + $0xc0] sm:$0xff]
    %v6888 = vld [vmem:[%s6876 + $0xd0] sm:$0xff]
    %v6889 = vld [vmem:[%s6876 + $0xe0] sm:$0xff]
    %v6890 = vld [vmem:[%s6876 + $0xf0] sm:$0xff]
    %v6891 = vld [vmem:[%s6876 + $0x100] sm:$0xff]
    %v6892 = vld [vmem:[%s6876 + $0x110] sm:$0xff]
    %6909 = vrot.lane.b32.xlu0 %v6877, 24
    %v6910 = vpop.permute.xlu0 %6909
    %6911 = vrot.lane.b32.xlu0 %v6878, 24
    %v6912 = vpop.permute.xlu0 %6911
    %6913 = vrot.lane.b32.xlu0 %v6879, 24
    %v6914 = vpop.permute.xlu0 %6913
    %6915 = vrot.lane.b32.xlu0 %v6880, 24
    %v6916 = vpop.permute.xlu0 %6915
    %6917 = vrot.lane.b32.xlu0 %v6881, 24
    %v6918 = vpop.permute.xlu0 %6917
    %6919 = vrot.lane.b32.xlu0 %v6882, 24
    %v6920 = vpop.permute.xlu0 %6919
    %6921 = vrot.lane.b32.xlu0 %v6883, 24
    %v6922 = vpop.permute.xlu0 %6921
    %6923 = vrot.lane.b32.xlu0 %v6884, 24
    %v6924 = vpop.permute.xlu0 %6923
    %6925 = vrot.lane.b32.xlu0 %v6885, 24
    %v6926 = vpop.permute.xlu0 %6925
    %6927 = vrot.lane.b32.xlu0 %v6886, 24
    %v6928 = vpop.permute.xlu0 %6927
    %6929 = vrot.lane.b32.xlu0 %v6887, 24
    %v6930 = vpop.permute.xlu0 %6929
    %6931 = vrot.lane.b32.xlu0 %v6888, 24
    %v6932 = vpop.permute.xlu0 %6931
    %6933 = vrot.lane.b32.xlu0 %v6889, 24
    %v6934 = vpop.permute.xlu0 %6933
    %6935 = vrot.lane.b32.xlu0 %v6890, 24
    %v6936 = vpop.permute.xlu0 %6935
    %6937 = vrot.lane.b32.xlu0 %v6891, 24
    %v6938 = vpop.permute.xlu0 %6937
    %6939 = vrot.lane.b32.xlu0 %v6892, 24
    %v6940 = vpop.permute.xlu0 %6939
    %vm6957 = vcmask 228544
    %6958 = vst.msk [vmem:[#allocation5] sm:$0xff] %vm6957, %v6910
    %6959 = vst.msk [vmem:[#allocation5 + $0x8] sm:$0xff] %vm6957, %v6912
    %6960 = vst.msk [vmem:[#allocation5 + $0x10] sm:$0xff] %vm6957, %v6914
    %6961 = vst.msk [vmem:[#allocation5 + $0x18] sm:$0xff] %vm6957, %v6916
    %6962 = vst.msk [vmem:[#allocation5 + $0x20] sm:$0xff] %vm6957, %v6918
    %6963 = vst.msk [vmem:[#allocation5 + $0x28] sm:$0xff] %vm6957, %v6920
    %6964 = vst.msk [vmem:[#allocation5 + $0x30] sm:$0xff] %vm6957, %v6922
    %6965 = vst.msk [vmem:[#allocation5 + $0x38] sm:$0xff] %vm6957, %v6924
    %6966 = vst.msk [vmem:[#allocation5 + $0x40] sm:$0xff] %vm6957, %v6926
    %6967 = vst.msk [vmem:[#allocation5 + $0x48] sm:$0xff] %vm6957, %v6928
    %6968 = vst.msk [vmem:[#allocation5 + $0x50] sm:$0xff] %vm6957, %v6930
    %6969 = vst.msk [vmem:[#allocation5 + $0x58] sm:$0xff] %vm6957, %v6932
    %6970 = vst.msk [vmem:[#allocation5 + $0x60] sm:$0xff] %vm6957, %v6934
    %6971 = vst.msk [vmem:[#allocation5 + $0x68] sm:$0xff] %vm6957, %v6936
    %6972 = vst.msk [vmem:[#allocation5 + $0x70] sm:$0xff] %vm6957, %v6938
    %6973 = vst.msk [vmem:[#allocation5 + $0x78] sm:$0xff] %vm6957, %v6940
    %v6974 = vld [vmem:[%s6876 + $0x1] sm:$0xff]
    %v6975 = vld [vmem:[%s6876 + $0x11] sm:$0xff]
    %v6976 = vld [vmem:[%s6876 + $0x21] sm:$0xff]
    %v6977 = vld [vmem:[%s6876 + $0x31] sm:$0xff]
    %v6978 = vld [vmem:[%s6876 + $0x41] sm:$0xff]
    %v6979 = vld [vmem:[%s6876 + $0x51] sm:$0xff]
    %v6980 = vld [vmem:[%s6876 + $0x61] sm:$0xff]
    %v6981 = vld [vmem:[%s6876 + $0x71] sm:$0xff]
    %v6982 = vld [vmem:[%s6876 + $0xa1] sm:$0xff]
    %v6983 = vld [vmem:[%s6876 + $0xb1] sm:$0xff]
    %v6984 = vld [vmem:[%s6876 + $0xc1] sm:$0xff]
    %v6985 = vld [vmem:[%s6876 + $0xd1] sm:$0xff]
    %v6986 = vld [vmem:[%s6876 + $0xe1] sm:$0xff]
    %v6987 = vld [vmem:[%s6876 + $0xf1] sm:$0xff]
    %v6988 = vld [vmem:[%s6876 + $0x101] sm:$0xff]
    %v6989 = vld [vmem:[%s6876 + $0x111] sm:$0xff]
    %7006 = vrot.lane.b32.xlu0 %v6974, 28
    %v7007 = vpop.permute.xlu0 %7006
    %7008 = vrot.lane.b32.xlu0 %v6975, 28
    %v7009 = vpop.permute.xlu0 %7008
    %7010 = vrot.lane.b32.xlu0 %v6976, 28
    %v7011 = vpop.permute.xlu0 %7010
    %7012 = vrot.lane.b32.xlu0 %v6977, 28
    %v7013 = vpop.permute.xlu0 %7012
    %7014 = vrot.lane.b32.xlu0 %v6978, 28
    %v7015 = vpop.permute.xlu0 %7014
    %7016 = vrot.lane.b32.xlu0 %v6979, 28
    %v7017 = vpop.permute.xlu0 %7016
    %7018 = vrot.lane.b32.xlu0 %v6980, 28
    %v7019 = vpop.permute.xlu0 %7018
    %7020 = vrot.lane.b32.xlu0 %v6981, 28
    %v7021 = vpop.permute.xlu0 %7020
    %7022 = vrot.lane.b32.xlu0 %v6982, 28
    %v7023 = vpop.permute.xlu0 %7022
    %7024 = vrot.lane.b32.xlu0 %v6983, 28
    %v7025 = vpop.permute.xlu0 %7024
    %7026 = vrot.lane.b32.xlu0 %v6984, 28
    %v7027 = vpop.permute.xlu0 %7026
    %7028 = vrot.lane.b32.xlu0 %v6985, 28
    %v7029 = vpop.permute.xlu0 %7028
    %7030 = vrot.lane.b32.xlu0 %v6986, 28
    %v7031 = vpop.permute.xlu0 %7030
    %7032 = vrot.lane.b32.xlu0 %v6987, 28
    %v7033 = vpop.permute.xlu0 %7032
    %7034 = vrot.lane.b32.xlu0 %v6988, 28
    %v7035 = vpop.permute.xlu0 %7034
    %7036 = vrot.lane.b32.xlu0 %v6989, 28
    %v7037 = vpop.permute.xlu0 %7036
    %vm7054 = vcmask 261344
    %7055 = vst.msk [vmem:[#allocation5] sm:$0xff] %vm7054, %v7007
    %7056 = vst.msk [vmem:[#allocation5 + $0x8] sm:$0xff] %vm7054, %v7009
    %7057 = vst.msk [vmem:[#allocation5 + $0x10] sm:$0xff] %vm7054, %v7011
    %7058 = vst.msk [vmem:[#allocation5 + $0x18] sm:$0xff] %vm7054, %v7013
    %7059 = vst.msk [vmem:[#allocation5 + $0x20] sm:$0xff] %vm7054, %v7015
    %7060 = vst.msk [vmem:[#allocation5 + $0x28] sm:$0xff] %vm7054, %v7017
    %7061 = vst.msk [vmem:[#allocation5 + $0x30] sm:$0xff] %vm7054, %v7019
    %7062 = vst.msk [vmem:[#allocation5 + $0x38] sm:$0xff] %vm7054, %v7021
    %7063 = vst.msk [vmem:[#allocation5 + $0x40] sm:$0xff] %vm7054, %v7023
    %7064 = vst.msk [vmem:[#allocation5 + $0x48] sm:$0xff] %vm7054, %v7025
    %7065 = vst.msk [vmem:[#allocation5 + $0x50] sm:$0xff] %vm7054, %v7027
    %7066 = vst.msk [vmem:[#allocation5 + $0x58] sm:$0xff] %vm7054, %v7029
    %7067 = vst.msk [vmem:[#allocation5 + $0x60] sm:$0xff] %vm7054, %v7031
    %7068 = vst.msk [vmem:[#allocation5 + $0x68] sm:$0xff] %vm7054, %v7033
    %7069 = vst.msk [vmem:[#allocation5 + $0x70] sm:$0xff] %vm7054, %v7035
    %7070 = vst.msk [vmem:[#allocation5 + $0x78] sm:$0xff] %vm7054, %v7037
    %v7071 = vld [vmem:[%s6876 + $0x2] sm:$0xff]
    %v7072 = vld [vmem:[%s6876 + $0x12] sm:$0xff]
    %v7073 = vld [vmem:[%s6876 + $0x22] sm:$0xff]
    %v7074 = vld [vmem:[%s6876 + $0x32] sm:$0xff]
    %v7075 = vld [vmem:[%s6876 + $0x42] sm:$0xff]
    %v7076 = vld [vmem:[%s6876 + $0x52] sm:$0xff]
    %v7077 = vld [vmem:[%s6876 + $0x62] sm:$0xff]
    %v7078 = vld [vmem:[%s6876 + $0x72] sm:$0xff]
    %v7079 = vld [vmem:[%s6876 + $0xa2] sm:$0xff]
    %v7080 = vld [vmem:[%s6876 + $0xb2] sm:$0xff]
    %v7081 = vld [vmem:[%s6876 + $0xc2] sm:$0xff]
    %v7082 = vld [vmem:[%s6876 + $0xd2] sm:$0xff]
    %v7083 = vld [vmem:[%s6876 + $0xe2] sm:$0xff]
    %v7084 = vld [vmem:[%s6876 + $0xf2] sm:$0xff]
    %v7085 = vld [vmem:[%s6876 + $0x102] sm:$0xff]
    %v7086 = vld [vmem:[%s6876 + $0x112] sm:$0xff]
    %7103 = vrot.lane.b32.xlu0 %v7071, 32
    %v7104 = vpop.permute.xlu0 %7103
    %7105 = vrot.lane.b32.xlu0 %v7072, 32
    %v7106 = vpop.permute.xlu0 %7105
    %7107 = vrot.lane.b32.xlu0 %v7073, 32
    %v7108 = vpop.permute.xlu0 %7107
    %7109 = vrot.lane.b32.xlu0 %v7074, 32
    %v7110 = vpop.permute.xlu0 %7109
    %7111 = vrot.lane.b32.xlu0 %v7075, 32
    %v7112 = vpop.permute.xlu0 %7111
    %7113 = vrot.lane.b32.xlu0 %v7076, 32
    %v7114 = vpop.permute.xlu0 %7113
    %7115 = vrot.lane.b32.xlu0 %v7077, 32
    %v7116 = vpop.permute.xlu0 %7115
    %7117 = vrot.lane.b32.xlu0 %v7078, 32
    %v7118 = vpop.permute.xlu0 %7117
    %7119 = vrot.lane.b32.xlu0 %v7079, 32
    %v7120 = vpop.permute.xlu0 %7119
    %7121 = vrot.lane.b32.xlu0 %v7080, 32
    %v7122 = vpop.permute.xlu0 %7121
    %7123 = vrot.lane.b32.xlu0 %v7081, 32
    %v7124 = vpop.permute.xlu0 %7123
    %7125 = vrot.lane.b32.xlu0 %v7082, 32
    %v7126 = vpop.permute.xlu0 %7125
    %7127 = vrot.lane.b32.xlu0 %v7083, 32
    %v7128 = vpop.permute.xlu0 %7127
    %7129 = vrot.lane.b32.xlu0 %v7084, 32
    %v7130 = vpop.permute.xlu0 %7129
    %7131 = vrot.lane.b32.xlu0 %v7085, 32
    %v7132 = vpop.permute.xlu0 %7131
    %7133 = vrot.lane.b32.xlu0 %v7086, 32
    %v7134 = vpop.permute.xlu0 %7133
    %vm7151 = vcmask 294144
    %7152 = vst.msk [vmem:[#allocation5] sm:$0xff] %vm7151, %v7104
    %7153 = vst.msk [vmem:[#allocation5 + $0x8] sm:$0xff] %vm7151, %v7106
    %7154 = vst.msk [vmem:[#allocation5 + $0x10] sm:$0xff] %vm7151, %v7108
    %7155 = vst.msk [vmem:[#allocation5 + $0x18] sm:$0xff] %vm7151, %v7110
    %7156 = vst.msk [vmem:[#allocation5 + $0x20] sm:$0xff] %vm7151, %v7112
    %7157 = vst.msk [vmem:[#allocation5 + $0x28] sm:$0xff] %vm7151, %v7114
    %7158 = vst.msk [vmem:[#allocation5 + $0x30] sm:$0xff] %vm7151, %v7116
    %7159 = vst.msk [vmem:[#allocation5 + $0x38] sm:$0xff] %vm7151, %v7118
    %7160 = vst.msk [vmem:[#allocation5 + $0x40] sm:$0xff] %vm7151, %v7120
    %7161 = vst.msk [vmem:[#allocation5 + $0x48] sm:$0xff] %vm7151, %v7122
    %7162 = vst.msk [vmem:[#allocation5 + $0x50] sm:$0xff] %vm7151, %v7124
    %7163 = vst.msk [vmem:[#allocation5 + $0x58] sm:$0xff] %vm7151, %v7126
    %7164 = vst.msk [vmem:[#allocation5 + $0x60] sm:$0xff] %vm7151, %v7128
    %7165 = vst.msk [vmem:[#allocation5 + $0x68] sm:$0xff] %vm7151, %v7130
    %7166 = vst.msk [vmem:[#allocation5 + $0x70] sm:$0xff] %vm7151, %v7132
    %7167 = vst.msk [vmem:[#allocation5 + $0x78] sm:$0xff] %vm7151, %v7134
    %v7168 = vld [vmem:[#allocation5] sm:$0xff]
    %v7169 = vld [vmem:[#allocation5 + $0x8] sm:$0xff]
    %v7170 = vld [vmem:[#allocation5 + $0x10] sm:$0xff]
    %v7171 = vld [vmem:[#allocation5 + $0x18] sm:$0xff]
    %v7172 = vld [vmem:[#allocation5 + $0x20] sm:$0xff]
    %v7173 = vld [vmem:[#allocation5 + $0x28] sm:$0xff]
    %v7174 = vld [vmem:[#allocation5 + $0x30] sm:$0xff]
    %v7175 = vld [vmem:[#allocation5 + $0x38] sm:$0xff]
    %v7176 = vld [vmem:[#allocation5 + $0x40] sm:$0xff]
    %v7177 = vld [vmem:[#allocation5 + $0x48] sm:$0xff]
    %v7178 = vld [vmem:[#allocation5 + $0x50] sm:$0xff]
    %v7179 = vld [vmem:[#allocation5 + $0x58] sm:$0xff]
    %v7180 = vld [vmem:[#allocation5 + $0x60] sm:$0xff]
    %v7181 = vld [vmem:[#allocation5 + $0x68] sm:$0xff]
    %v7182 = vld [vmem:[#allocation5 + $0x70] sm:$0xff]
    %v7183 = vld [vmem:[#allocation5 + $0x78] sm:$0xff]
    %v7184 = vld [vmem:[%s4] sm:$0xff]
    %v7185 = vld [vmem:[%s4 + $0x8] sm:$0xff]
    %v7186 = vld [vmem:[%s4 + $0x10] sm:$0xff]
    %v7187 = vld [vmem:[%s4 + $0x18] sm:$0xff]
    %v7188 = vld [vmem:[%s4 + $0x20] sm:$0xf]
    %vm7189 = vcmask 293888
    %v7191 = vsel %vm7189, %v7168, 0
    %v7194 = vsel %vm7189, %v7169, 0
    %v7197 = vsel %vm7189, %v7170, 0
    %v7200 = vsel %vm7189, %v7171, 0
    %v7203 = vsel %vm7189, %v7172, 0
    %v7206 = vsel %vm7189, %v7173, 0
    %v7209 = vsel %vm7189, %v7174, 0
    %v7212 = vsel %vm7189, %v7175, 0
    %v7215 = vsel %vm7189, %v7176, 0
    %v7218 = vsel %vm7189, %v7177, 0
    %v7221 = vsel %vm7189, %v7178, 0
    %v7224 = vsel %vm7189, %v7179, 0
    %v7227 = vsel %vm7189, %v7180, 0
    %v7230 = vsel %vm7189, %v7181, 0
    %v7233 = vsel %vm7189, %v7182, 0
    %v7236 = vsel %vm7189, %v7183, 0
    %vm7238 = vcmask 1043456
    %v7240 = vsel %vm7238, %v7188, 0
    %7242 = vmatprep.subr.mxu0 0.0
    %7243 = vmatpush1.msra.mxu0 0.0
    %7244 = vmatprep.subr.mxu0 0.0
    %7245 = vmatpush1.msra.mxu0 0.0
    %7246 = vmatprep.subr.mxu0 0.0
    %7247 = vmatpush1.msra.mxu0 0.0
    %7248 = vmatprep.subr.mxu0 0.0
    %7249 = vmatpush1.msra.mxu0 0.0
    %7250 = vmatprep.subr.mxu0 0.0
    %7251 = vmatpush1.msra.mxu0 0.0
    %7252 = vmatprep.subr.mxu0 0.0
    %7253 = vmatpush1.msra.mxu0 0.0
    %7254 = vmatprep.subr.mxu0 0.0
    %7255 = vmatpush1.msra.mxu0 0.0
    %7256 = vmatprep.subr.mxu0 0.0
    %7257 = vmatpush1.msra.mxu0 0.0
    %7258 = vmatprep.subr.mxu0 0.0
    %7259 = vmatpush1.msra.mxu0 0.0
    %7260 = vmatprep.subr.mxu0 0.0
    %7261 = vmatpush1.msra.mxu0 0.0
    %7262 = vmatprep.subr.mxu0 0.0
    %7263 = vmatpush1.msra.mxu0 0.0
    %7264 = vmatprep.subr.mxu0 0.0
    %7265 = vmatpush1.msra.mxu0 %v7240
    %7266 = vmatprep.subr.mxu0 0.0
    %7267 = vmatpush1.msra.mxu0 %v7187
    %7268 = vmatprep.subr.mxu0 0.0
    %7269 = vmatpush1.msra.mxu0 %v7186
    %7270 = vmatprep.subr.mxu0 0.0
    %7271 = vmatpush1.msra.mxu0 %v7185
    %7272 = vmatprep.subr.mxu0 0.0
    %7273 = vmatpush1.msra.mxu0 %v7184
    %7274 = vmatprep.subr.mxu0 0.0
    %7275 = vmatpush2.msra.mxu0 0.0
    %7276 = vmatprep.subr.mxu0 0.0
    %7277 = vmatpush2.msra.mxu0 0.0
    %7278 = vmatprep.subr.mxu0 0.0
    %7279 = vmatpush2.msra.mxu0 0.0
    %7280 = vmatprep.subr.mxu0 0.0
    %7281 = vmatpush2.msra.mxu0 0.0
    %7282 = vmatprep.subr.mxu0 0.0
    %7283 = vmatpush2.msra.mxu0 0.0
    %7284 = vmatprep.subr.mxu0 0.0
    %7285 = vmatpush2.msra.mxu0 0.0
    %7286 = vmatprep.subr.mxu0 0.0
    %7287 = vmatpush2.msra.mxu0 0.0
    %7288 = vmatprep.subr.mxu0 0.0
    %7289 = vmatpush2.msra.mxu0 0.0
    %7290 = vmatprep.subr.mxu0 0.0
    %7291 = vmatpush2.msra.mxu0 0.0
    %7292 = vmatprep.subr.mxu0 0.0
    %7293 = vmatpush2.msra.mxu0 0.0
    %7294 = vmatprep.subr.mxu0 0.0
    %7295 = vmatpush2.msra.mxu0 0.0
    %7296 = vmatprep.subr.mxu0 0.0
    %7297 = vmatpush2.msra.mxu0 0.0
    %7298 = vmatprep.subr.mxu0 0.0
    %7299 = vmatpush2.msra.mxu0 0.0
    %7300 = vmatprep.subr.mxu0 0.0
    %7301 = vmatpush2.msra.mxu0 0.0
    %7302 = vmatprep.subr.mxu0 0.0
    %7303 = vmatpush2.msra.mxu0 0.0
    %7304 = vmatprep.subr.mxu0 0.0
    %7305 = vmatpush2.msra.mxu0 0.0
    %7306 = vmatprep.mubr.f32.mxu0 0.0
    %7307 = vmatmul.mubr.f32.gmra.mxu0 %v7191
    %v7308 = vpop.f32.mrf.mxu0
    %v7309 = vadd.f32 0.0, %v7308
    %v7310 = vpop.f32.mrf.mxu0
    %7311 = vmatprep.mubr.f32.mxu0 0.0
    %7312 = vmatmul.mubr.f32.gmra.mxu0 %v7194
    %v7313 = vpop.f32.mrf.mxu0
    %v7314 = vadd.f32 0.0, %v7313
    %v7315 = vpop.f32.mrf.mxu0
    %7316 = vmatprep.mubr.f32.mxu0 0.0
    %7317 = vmatmul.mubr.f32.gmra.mxu0 %v7197
    %v7318 = vpop.f32.mrf.mxu0
    %v7319 = vadd.f32 0.0, %v7318
    %v7320 = vpop.f32.mrf.mxu0
    %7321 = vmatprep.mubr.f32.mxu0 0.0
    %7322 = vmatmul.mubr.f32.gmra.mxu0 %v7200
    %v7323 = vpop.f32.mrf.mxu0
    %v7324 = vadd.f32 0.0, %v7323
    %v7325 = vpop.f32.mrf.mxu0
    %7326 = vmatprep.mubr.f32.mxu0 0.0
    %7327 = vmatmul.mubr.f32.gmra.mxu0 %v7203
    %v7328 = vpop.f32.mrf.mxu0
    %v7329 = vadd.f32 0.0, %v7328
    %v7330 = vpop.f32.mrf.mxu0
    %7331 = vmatprep.mubr.f32.mxu0 0.0
    %7332 = vmatmul.mubr.f32.gmra.mxu0 %v7206
    %v7333 = vpop.f32.mrf.mxu0
    %v7334 = vadd.f32 0.0, %v7333
    %v7335 = vpop.f32.mrf.mxu0
    %7336 = vmatprep.mubr.f32.mxu0 0.0
    %7337 = vmatmul.mubr.f32.gmra.mxu0 %v7209
    %v7338 = vpop.f32.mrf.mxu0
    %v7339 = vadd.f32 0.0, %v7338
    %v7340 = vpop.f32.mrf.mxu0
    %7341 = vmatprep.mubr.f32.mxu0 0.0
    %7342 = vmatmul.mubr.f32.gmra.mxu0 %v7212
    %v7343 = vpop.f32.mrf.mxu0
    %v7344 = vadd.f32 0.0, %v7343
    %v7345 = vpop.f32.mrf.mxu0
    %7346 = vmatprep.mubr.f32.mxu0 0.0
    %7347 = vmatmul.mubr.f32.gmra.mxu0 %v7215
    %v7348 = vpop.f32.mrf.mxu0
    %v7349 = vadd.f32 0.0, %v7348
    %v7350 = vpop.f32.mrf.mxu0
    %7351 = vmatprep.mubr.f32.mxu0 0.0
    %7352 = vmatmul.mubr.f32.gmra.mxu0 %v7218
    %v7353 = vpop.f32.mrf.mxu0
    %v7354 = vadd.f32 0.0, %v7353
    %v7355 = vpop.f32.mrf.mxu0
    %7356 = vmatprep.mubr.f32.mxu0 0.0
    %7357 = vmatmul.mubr.f32.gmra.mxu0 %v7221
    %v7358 = vpop.f32.mrf.mxu0
    %v7359 = vadd.f32 0.0, %v7358
    %v7360 = vpop.f32.mrf.mxu0
    %7361 = vmatprep.mubr.f32.mxu0 0.0
    %7362 = vmatmul.mubr.f32.gmra.mxu0 %v7224
    %v7363 = vpop.f32.mrf.mxu0
    %v7364 = vadd.f32 0.0, %v7363
    %v7365 = vpop.f32.mrf.mxu0
    %7366 = vmatprep.mubr.f32.mxu0 0.0
    %7367 = vmatmul.mubr.f32.gmra.mxu0 %v7227
    %v7368 = vpop.f32.mrf.mxu0
    %v7369 = vadd.f32 0.0, %v7368
    %v7370 = vpop.f32.mrf.mxu0
    %7371 = vmatprep.mubr.f32.mxu0 0.0
    %7372 = vmatmul.mubr.f32.gmra.mxu0 %v7230
    %v7373 = vpop.f32.mrf.mxu0
    %v7374 = vadd.f32 0.0, %v7373
    %v7375 = vpop.f32.mrf.mxu0
    %7376 = vmatprep.mubr.f32.mxu0 0.0
    %7377 = vmatmul.mubr.f32.gmra.mxu0 %v7233
    %v7378 = vpop.f32.mrf.mxu0
    %v7379 = vadd.f32 0.0, %v7378
    %v7380 = vpop.f32.mrf.mxu0
    %7381 = vmatprep.mubr.f32.mxu0 0.0
    %7382 = vmatmul.mubr.f32.gmra.mxu0 %v7236
    %v7383 = vpop.f32.mrf.mxu0
    %v7384 = vadd.f32 0.0, %v7383
    %v7385 = vpop.f32.mrf.mxu0
    %7386 = vdwg.mxu0
    %v7387 = vld [vmem:[%s5] sm:$0x1]
    %v7389 = vlaneseq
    %v7390 = vshrl.u32 %v7389, 7
    %v7391 = vsub.s32 0, %v7390
    %v7392 = vrot.slane %v7387, %v7391
    %v7394 = vmul.f32 %v7309, %v7392
    %v7395 = vmul.f32 %v7314, %v7392
    %v7396 = vmul.f32 %v7319, %v7392
    %v7397 = vmul.f32 %v7324, %v7392
    %v7398 = vmul.f32 %v7329, %v7392
    %v7399 = vmul.f32 %v7334, %v7392
    %v7400 = vmul.f32 %v7339, %v7392
    %v7401 = vmul.f32 %v7344, %v7392
    %v7402 = vmul.f32 %v7349, %v7392
    %v7403 = vmul.f32 %v7354, %v7392
    %v7404 = vmul.f32 %v7359, %v7392
    %v7405 = vmul.f32 %v7364, %v7392
    %v7406 = vmul.f32 %v7369, %v7392
    %v7407 = vmul.f32 %v7374, %v7392
    %v7408 = vmul.f32 %v7379, %v7392
    %v7409 = vmul.f32 %v7384, %v7392
    %v7410 = vld [vmem:[%s6] sm:$0x1]
    %v7412 = vlaneseq
    %v7413 = vshrl.u32 %v7412, 7
    %v7414 = vsub.s32 0, %v7413
    %v7415 = vrot.slane %v7410, %v7414
    %v7417 = vadd.f32 %v7394, %v7415
    %v7418 = vadd.f32 %v7395, %v7415
    %v7419 = vadd.f32 %v7396, %v7415
    %v7420 = vadd.f32 %v7397, %v7415
    %v7421 = vadd.f32 %v7398, %v7415
    %v7422 = vadd.f32 %v7399, %v7415
    %v7423 = vadd.f32 %v7400, %v7415
    %v7424 = vadd.f32 %v7401, %v7415
    %v7425 = vadd.f32 %v7402, %v7415
    %v7426 = vadd.f32 %v7403, %v7415
    %v7427 = vadd.f32 %v7404, %v7415
    %v7428 = vadd.f32 %v7405, %v7415
    %v7429 = vadd.f32 %v7406, %v7415
    %v7430 = vadd.f32 %v7407, %v7415
    %v7431 = vadd.f32 %v7408, %v7415
    %v7432 = vadd.f32 %v7409, %v7415
    %v7433 = vmax.f32 %v7417, 0.0
    %v7434 = vmax.f32 %v7418, 0.0
    %v7435 = vmax.f32 %v7419, 0.0
    %v7436 = vmax.f32 %v7420, 0.0
    %v7437 = vmax.f32 %v7421, 0.0
    %v7438 = vmax.f32 %v7422, 0.0
    %v7439 = vmax.f32 %v7423, 0.0
    %v7440 = vmax.f32 %v7424, 0.0
    %v7441 = vmax.f32 %v7425, 0.0
    %v7442 = vmax.f32 %v7426, 0.0
    %v7443 = vmax.f32 %v7427, 0.0
    %v7444 = vmax.f32 %v7428, 0.0
    %v7445 = vmax.f32 %v7429, 0.0
    %v7446 = vmax.f32 %v7430, 0.0
    %v7447 = vmax.f32 %v7431, 0.0
    %v7448 = vmax.f32 %v7432, 0.0
    %vm7449 = vcmask 64512
    %v7450 = vsel %vm7449, %v7433, -inf
    %v7451 = vsel %vm7449, %v7434, -inf
    %v7452 = vmax.f32 %v7450, %v7451
    %v7453 = vsel %vm7449, %v7435, -inf
    %v7454 = vsel %vm7449, %v7436, -inf
    %v7455 = vmax.f32 %v7453, %v7454
    %v7456 = vsel %vm7449, %v7437, -inf
    %v7457 = vsel %vm7449, %v7438, -inf
    %v7458 = vmax.f32 %v7456, %v7457
    %v7459 = vsel %vm7449, %v7439, -inf
    %v7460 = vsel %vm7449, %v7440, -inf
    %v7461 = vmax.f32 %v7459, %v7460
    %v7462 = vsel %vm7449, %v7441, -inf
    %v7463 = vsel %vm7449, %v7442, -inf
    %v7464 = vmax.f32 %v7462, %v7463
    %v7465 = vsel %vm7449, %v7443, -inf
    %v7466 = vsel %vm7449, %v7444, -inf
    %v7467 = vmax.f32 %v7465, %v7466
    %v7468 = vsel %vm7449, %v7445, -inf
    %v7469 = vsel %vm7449, %v7446, -inf
    %v7470 = vmax.f32 %v7468, %v7469
    %v7471 = vsel %vm7449, %v7447, -inf
    %v7472 = vsel %vm7449, %v7448, -inf
    %v7473 = vmax.f32 %v7471, %v7472
    %v7482 = vcombine.high %v7452, %v7452
    %v7484 = vunpack.c.l.s4 1983009808
    %v7485 = vunpack.c.0.s8 %v7484
    %v7486 = vlaneseq
    %v7487 = vshrl.u32 %v7486, 7
    %v7488 = vsub.s32 %v7485, %v7487
    %v7489 = vrot.slane %v7452, %v7488
    %v7491 = vunpack.c.l.s4 1983009808
    %v7492 = vunpack.c.0.s8 %v7491
    %v7493 = vlaneseq
    %v7494 = vshrl.u32 %v7493, 7
    %v7495 = vsub.s32 %v7492, %v7494
    %v7496 = vrot.slane %v7482, %v7495
    %v7497 = vcombine.high %v7489, %v7489
    %v7498 = vcombine.high %v7496, %v7496
    %v7499 = vcombine.high %v7455, %v7455
    %v7501 = vunpack.c.l.s4 1983009808
    %v7502 = vunpack.c.0.s8 %v7501
    %v7503 = vlaneseq
    %v7504 = vshrl.u32 %v7503, 7
    %v7505 = vsub.s32 %v7502, %v7504
    %v7506 = vrot.slane %v7455, %v7505
    %v7508 = vunpack.c.l.s4 1983009808
    %v7509 = vunpack.c.0.s8 %v7508
    %v7510 = vlaneseq
    %v7511 = vshrl.u32 %v7510, 7
    %v7512 = vsub.s32 %v7509, %v7511
    %v7513 = vrot.slane %v7499, %v7512
    %v7514 = vcombine.high %v7506, %v7506
    %v7515 = vcombine.high %v7513, %v7513
    %v7516 = vcombine.high %v7458, %v7458
    %v7518 = vunpack.c.l.s4 1983009808
    %v7519 = vunpack.c.0.s8 %v7518
    %v7520 = vlaneseq
    %v7521 = vshrl.u32 %v7520, 7
    %v7522 = vsub.s32 %v7519, %v7521
    %v7523 = vrot.slane %v7458, %v7522
    %v7525 = vunpack.c.l.s4 1983009808
    %v7526 = vunpack.c.0.s8 %v7525
    %v7527 = vlaneseq
    %v7528 = vshrl.u32 %v7527, 7
    %v7529 = vsub.s32 %v7526, %v7528
    %v7530 = vrot.slane %v7516, %v7529
    %v7531 = vcombine.high %v7523, %v7523
    %v7532 = vcombine.high %v7530, %v7530
    %v7533 = vcombine.high %v7461, %v7461
    %v7535 = vunpack.c.l.s4 1983009808
    %v7536 = vunpack.c.0.s8 %v7535
    %v7537 = vlaneseq
    %v7538 = vshrl.u32 %v7537, 7
    %v7539 = vsub.s32 %v7536, %v7538
    %v7540 = vrot.slane %v7461, %v7539
    %v7542 = vunpack.c.l.s4 1983009808
    %v7543 = vunpack.c.0.s8 %v7542
    %v7544 = vlaneseq
    %v7545 = vshrl.u32 %v7544, 7
    %v7546 = vsub.s32 %v7543, %v7545
    %v7547 = vrot.slane %v7533, %v7546
    %v7548 = vcombine.high %v7540, %v7540
    %v7549 = vcombine.high %v7547, %v7547
    %v7550 = vcombine.high %v7464, %v7464
    %v7552 = vunpack.c.l.s4 1983009808
    %v7553 = vunpack.c.0.s8 %v7552
    %v7554 = vlaneseq
    %v7555 = vshrl.u32 %v7554, 7
    %v7556 = vsub.s32 %v7553, %v7555
    %v7557 = vrot.slane %v7464, %v7556
    %v7559 = vunpack.c.l.s4 1983009808
    %v7560 = vunpack.c.0.s8 %v7559
    %v7561 = vlaneseq
    %v7562 = vshrl.u32 %v7561, 7
    %v7563 = vsub.s32 %v7560, %v7562
    %v7564 = vrot.slane %v7550, %v7563
    %v7565 = vcombine.high %v7557, %v7557
    %v7566 = vcombine.high %v7564, %v7564
    %v7567 = vcombine.high %v7467, %v7467
    %v7569 = vunpack.c.l.s4 1983009808
    %v7570 = vunpack.c.0.s8 %v7569
    %v7571 = vlaneseq
    %v7572 = vshrl.u32 %v7571, 7
    %v7573 = vsub.s32 %v7570, %v7572
    %v7574 = vrot.slane %v7467, %v7573
    %v7576 = vunpack.c.l.s4 1983009808
    %v7577 = vunpack.c.0.s8 %v7576
    %v7578 = vlaneseq
    %v7579 = vshrl.u32 %v7578, 7
    %v7580 = vsub.s32 %v7577, %v7579
    %v7581 = vrot.slane %v7567, %v7580
    %v7582 = vcombine.high %v7574, %v7574
    %v7583 = vcombine.high %v7581, %v7581
    %v7584 = vcombine.high %v7470, %v7470
    %v7586 = vunpack.c.l.s4 1983009808
    %v7587 = vunpack.c.0.s8 %v7586
    %v7588 = vlaneseq
    %v7589 = vshrl.u32 %v7588, 7
    %v7590 = vsub.s32 %v7587, %v7589
    %v7591 = vrot.slane %v7470, %v7590
    %v7593 = vunpack.c.l.s4 1983009808
    %v7594 = vunpack.c.0.s8 %v7593
    %v7595 = vlaneseq
    %v7596 = vshrl.u32 %v7595, 7
    %v7597 = vsub.s32 %v7594, %v7596
    %v7598 = vrot.slane %v7584, %v7597
    %v7599 = vcombine.high %v7591, %v7591
    %v7600 = vcombine.high %v7598, %v7598
    %v7601 = vcombine.high %v7473, %v7473
    %v7603 = vunpack.c.l.s4 1983009808
    %v7604 = vunpack.c.0.s8 %v7603
    %v7605 = vlaneseq
    %v7606 = vshrl.u32 %v7605, 7
    %v7607 = vsub.s32 %v7604, %v7606
    %v7608 = vrot.slane %v7473, %v7607
    %v7610 = vunpack.c.l.s4 1983009808
    %v7611 = vunpack.c.0.s8 %v7610
    %v7612 = vlaneseq
    %v7613 = vshrl.u32 %v7612, 7
    %v7614 = vsub.s32 %v7611, %v7613
    %v7615 = vrot.slane %v7601, %v7614
    %v7616 = vcombine.high %v7608, %v7608
    %v7617 = vcombine.high %v7615, %v7615
    %vm7650 = vcmask 58368
    %v7651 = vsel %vm7650, %v7489, -inf
    %v7652 = vrot.slane %v7651, 4
    %v7653 = vmax.f32 %v7651, %v7652
    %v7654 = vrot.slane %v7653, 2
    %v7655 = vmax.f32 %v7653, %v7654
    %v7656 = vrot.slane %v7655, 1
    %v7657 = vmax.f32 %v7655, %v7656
    %v7658 = vsel %vm7650, %v7497, -inf
    %v7659 = vrot.slane %v7658, 4
    %v7660 = vmax.f32 %v7658, %v7659
    %v7661 = vrot.slane %v7660, 2
    %v7662 = vmax.f32 %v7660, %v7661
    %v7663 = vrot.slane %v7662, 1
    %v7664 = vmax.f32 %v7662, %v7663
    %v7665 = vsel %vm7650, %v7496, -inf
    %v7666 = vrot.slane %v7665, 4
    %v7667 = vmax.f32 %v7665, %v7666
    %v7668 = vrot.slane %v7667, 2
    %v7669 = vmax.f32 %v7667, %v7668
    %v7670 = vrot.slane %v7669, 1
    %v7671 = vmax.f32 %v7669, %v7670
    %v7672 = vsel %vm7650, %v7498, -inf
    %v7673 = vrot.slane %v7672, 4
    %v7674 = vmax.f32 %v7672, %v7673
    %v7675 = vrot.slane %v7674, 2
    %v7676 = vmax.f32 %v7674, %v7675
    %v7677 = vrot.slane %v7676, 1
    %v7678 = vmax.f32 %v7676, %v7677
    %v7679 = vsel %vm7650, %v7506, -inf
    %v7680 = vrot.slane %v7679, 4
    %v7681 = vmax.f32 %v7679, %v7680
    %v7682 = vrot.slane %v7681, 2
    %v7683 = vmax.f32 %v7681, %v7682
    %v7684 = vrot.slane %v7683, 1
    %v7685 = vmax.f32 %v7683, %v7684
    %v7686 = vsel %vm7650, %v7514, -inf
    %v7687 = vrot.slane %v7686, 4
    %v7688 = vmax.f32 %v7686, %v7687
    %v7689 = vrot.slane %v7688, 2
    %v7690 = vmax.f32 %v7688, %v7689
    %v7691 = vrot.slane %v7690, 1
    %v7692 = vmax.f32 %v7690, %v7691
    %v7693 = vsel %vm7650, %v7513, -inf
    %v7694 = vrot.slane %v7693, 4
    %v7695 = vmax.f32 %v7693, %v7694
    %v7696 = vrot.slane %v7695, 2
    %v7697 = vmax.f32 %v7695, %v7696
    %v7698 = vrot.slane %v7697, 1
    %v7699 = vmax.f32 %v7697, %v7698
    %v7700 = vsel %vm7650, %v7515, -inf
    %v7701 = vrot.slane %v7700, 4
    %v7702 = vmax.f32 %v7700, %v7701
    %v7703 = vrot.slane %v7702, 2
    %v7704 = vmax.f32 %v7702, %v7703
    %v7705 = vrot.slane %v7704, 1
    %v7706 = vmax.f32 %v7704, %v7705
    %v7707 = vsel %vm7650, %v7523, -inf
    %v7708 = vrot.slane %v7707, 4
    %v7709 = vmax.f32 %v7707, %v7708
    %v7710 = vrot.slane %v7709, 2
    %v7711 = vmax.f32 %v7709, %v7710
    %v7712 = vrot.slane %v7711, 1
    %v7713 = vmax.f32 %v7711, %v7712
    %v7714 = vsel %vm7650, %v7531, -inf
    %v7715 = vrot.slane %v7714, 4
    %v7716 = vmax.f32 %v7714, %v7715
    %v7717 = vrot.slane %v7716, 2
    %v7718 = vmax.f32 %v7716, %v7717
    %v7719 = vrot.slane %v7718, 1
    %v7720 = vmax.f32 %v7718, %v7719
    %v7721 = vsel %vm7650, %v7530, -inf
    %v7722 = vrot.slane %v7721, 4
    %v7723 = vmax.f32 %v7721, %v7722
    %v7724 = vrot.slane %v7723, 2
    %v7725 = vmax.f32 %v7723, %v7724
    %v7726 = vrot.slane %v7725, 1
    %v7727 = vmax.f32 %v7725, %v7726
    %v7728 = vsel %vm7650, %v7532, -inf
    %v7729 = vrot.slane %v7728, 4
    %v7730 = vmax.f32 %v7728, %v7729
    %v7731 = vrot.slane %v7730, 2
    %v7732 = vmax.f32 %v7730, %v7731
    %v7733 = vrot.slane %v7732, 1
    %v7734 = vmax.f32 %v7732, %v7733
    %v7735 = vsel %vm7650, %v7540, -inf
    %v7736 = vrot.slane %v7735, 4
    %v7737 = vmax.f32 %v7735, %v7736
    %v7738 = vrot.slane %v7737, 2
    %v7739 = vmax.f32 %v7737, %v7738
    %v7740 = vrot.slane %v7739, 1
    %v7741 = vmax.f32 %v7739, %v7740
    %v7742 = vsel %vm7650, %v7548, -inf
    %v7743 = vrot.slane %v7742, 4
    %v7744 = vmax.f32 %v7742, %v7743
    %v7745 = vrot.slane %v7744, 2
    %v7746 = vmax.f32 %v7744, %v7745
    %v7747 = vrot.slane %v7746, 1
    %v7748 = vmax.f32 %v7746, %v7747
    %v7749 = vsel %vm7650, %v7547, -inf
    %v7750 = vrot.slane %v7749, 4
    %v7751 = vmax.f32 %v7749, %v7750
    %v7752 = vrot.slane %v7751, 2
    %v7753 = vmax.f32 %v7751, %v7752
    %v7754 = vrot.slane %v7753, 1
    %v7755 = vmax.f32 %v7753, %v7754
    %v7756 = vsel %vm7650, %v7549, -inf
    %v7757 = vrot.slane %v7756, 4
    %v7758 = vmax.f32 %v7756, %v7757
    %v7759 = vrot.slane %v7758, 2
    %v7760 = vmax.f32 %v7758, %v7759
    %v7761 = vrot.slane %v7760, 1
    %v7762 = vmax.f32 %v7760, %v7761
    %v7763 = vsel %vm7650, %v7557, -inf
    %v7764 = vrot.slane %v7763, 4
    %v7765 = vmax.f32 %v7763, %v7764
    %v7766 = vrot.slane %v7765, 2
    %v7767 = vmax.f32 %v7765, %v7766
    %v7768 = vrot.slane %v7767, 1
    %v7769 = vmax.f32 %v7767, %v7768
    %v7770 = vsel %vm7650, %v7565, -inf
    %v7771 = vrot.slane %v7770, 4
    %v7772 = vmax.f32 %v7770, %v7771
    %v7773 = vrot.slane %v7772, 2
    %v7774 = vmax.f32 %v7772, %v7773
    %v7775 = vrot.slane %v7774, 1
    %v7776 = vmax.f32 %v7774, %v7775
    %v7777 = vsel %vm7650, %v7564, -inf
    %v7778 = vrot.slane %v7777, 4
    %v7779 = vmax.f32 %v7777, %v7778
    %v7780 = vrot.slane %v7779, 2
    %v7781 = vmax.f32 %v7779, %v7780
    %v7782 = vrot.slane %v7781, 1
    %v7783 = vmax.f32 %v7781, %v7782
    %v7784 = vsel %vm7650, %v7566, -inf
    %v7785 = vrot.slane %v7784, 4
    %v7786 = vmax.f32 %v7784, %v7785
    %v7787 = vrot.slane %v7786, 2
    %v7788 = vmax.f32 %v7786, %v7787
    %v7789 = vrot.slane %v7788, 1
    %v7790 = vmax.f32 %v7788, %v7789
    %v7791 = vsel %vm7650, %v7574, -inf
    %v7792 = vrot.slane %v7791, 4
    %v7793 = vmax.f32 %v7791, %v7792
    %v7794 = vrot.slane %v7793, 2
    %v7795 = vmax.f32 %v7793, %v7794
    %v7796 = vrot.slane %v7795, 1
    %v7797 = vmax.f32 %v7795, %v7796
    %v7798 = vsel %vm7650, %v7582, -inf
    %v7799 = vrot.slane %v7798, 4
    %v7800 = vmax.f32 %v7798, %v7799
    %v7801 = vrot.slane %v7800, 2
    %v7802 = vmax.f32 %v7800, %v7801
    %v7803 = vrot.slane %v7802, 1
    %v7804 = vmax.f32 %v7802, %v7803
    %v7805 = vsel %vm7650, %v7581, -inf
    %v7806 = vrot.slane %v7805, 4
    %v7807 = vmax.f32 %v7805, %v7806
    %v7808 = vrot.slane %v7807, 2
    %v7809 = vmax.f32 %v7807, %v7808
    %v7810 = vrot.slane %v7809, 1
    %v7811 = vmax.f32 %v7809, %v7810
    %v7812 = vsel %vm7650, %v7583, -inf
    %v7813 = vrot.slane %v7812, 4
    %v7814 = vmax.f32 %v7812, %v7813
    %v7815 = vrot.slane %v7814, 2
    %v7816 = vmax.f32 %v7814, %v7815
    %v7817 = vrot.slane %v7816, 1
    %v7818 = vmax.f32 %v7816, %v7817
    %v7819 = vsel %vm7650, %v7591, -inf
    %v7820 = vrot.slane %v7819, 4
    %v7821 = vmax.f32 %v7819, %v7820
    %v7822 = vrot.slane %v7821, 2
    %v7823 = vmax.f32 %v7821, %v7822
    %v7824 = vrot.slane %v7823, 1
    %v7825 = vmax.f32 %v7823, %v7824
    %v7826 = vsel %vm7650, %v7599, -inf
    %v7827 = vrot.slane %v7826, 4
    %v7828 = vmax.f32 %v7826, %v7827
    %v7829 = vrot.slane %v7828, 2
    %v7830 = vmax.f32 %v7828, %v7829
    %v7831 = vrot.slane %v7830, 1
    %v7832 = vmax.f32 %v7830, %v7831
    %v7833 = vsel %vm7650, %v7598, -inf
    %v7834 = vrot.slane %v7833, 4
    %v7835 = vmax.f32 %v7833, %v7834
    %v7836 = vrot.slane %v7835, 2
    %v7837 = vmax.f32 %v7835, %v7836
    %v7838 = vrot.slane %v7837, 1
    %v7839 = vmax.f32 %v7837, %v7838
    %v7840 = vsel %vm7650, %v7600, -inf
    %v7841 = vrot.slane %v7840, 4
    %v7842 = vmax.f32 %v7840, %v7841
    %v7843 = vrot.slane %v7842, 2
    %v7844 = vmax.f32 %v7842, %v7843
    %v7845 = vrot.slane %v7844, 1
    %v7846 = vmax.f32 %v7844, %v7845
    %v7847 = vsel %vm7650, %v7608, -inf
    %v7848 = vrot.slane %v7847, 4
    %v7849 = vmax.f32 %v7847, %v7848
    %v7850 = vrot.slane %v7849, 2
    %v7851 = vmax.f32 %v7849, %v7850
    %v7852 = vrot.slane %v7851, 1
    %v7853 = vmax.f32 %v7851, %v7852
    %v7854 = vsel %vm7650, %v7616, -inf
    %v7855 = vrot.slane %v7854, 4
    %v7856 = vmax.f32 %v7854, %v7855
    %v7857 = vrot.slane %v7856, 2
    %v7858 = vmax.f32 %v7856, %v7857
    %v7859 = vrot.slane %v7858, 1
    %v7860 = vmax.f32 %v7858, %v7859
    %v7861 = vsel %vm7650, %v7615, -inf
    %v7862 = vrot.slane %v7861, 4
    %v7863 = vmax.f32 %v7861, %v7862
    %v7864 = vrot.slane %v7863, 2
    %v7865 = vmax.f32 %v7863, %v7864
    %v7866 = vrot.slane %v7865, 1
    %v7867 = vmax.f32 %v7865, %v7866
    %v7868 = vsel %vm7650, %v7617, -inf
    %v7869 = vrot.slane %v7868, 4
    %v7870 = vmax.f32 %v7868, %v7869
    %v7871 = vrot.slane %v7870, 2
    %v7872 = vmax.f32 %v7870, %v7871
    %v7873 = vrot.slane %v7872, 1
    %v7874 = vmax.f32 %v7872, %v7873
    %v7877 = vsel %vm6207, %v7769, %v7657
    %7879 = vst.msk [vmem:[#allocation6] sm:$0x3] %vm7650, %v7877
    %v7882 = vsel %vm6207, %v7776, %v7664
    %7883 = vrot.lane.b32.xlu0 %v7882, 8
    %v7884 = vpop.permute.xlu0 %7883
    %vm7886 = vcmask 123968
    %7887 = vst.msk [vmem:[#allocation6] sm:$0x3] %vm7886, %v7884
    %v7890 = vsel %vm6207, %v7783, %v7671
    %7891 = vrot.lane.b32.xlu0 %v7890, 16
    %v7892 = vpop.permute.xlu0 %7891
    %vm7894 = vcmask 189568
    %7895 = vst.msk [vmem:[#allocation6] sm:$0x3] %vm7894, %v7892
    %v7898 = vsel %vm6207, %v7790, %v7678
    %7899 = vrot.lane.b32.xlu0 %v7898, 24
    %v7900 = vpop.permute.xlu0 %7899
    %vm7902 = vcmask 255168
    %7903 = vst.msk [vmem:[#allocation6] sm:$0x3] %vm7902, %v7900
    %v7906 = vsel %vm6207, %v7797, %v7685
    %7907 = vrot.lane.b32.xlu0 %v7906, 32
    %v7908 = vpop.permute.xlu0 %7907
    %vm7910 = vcmask 320768
    %7911 = vst.msk [vmem:[#allocation6] sm:$0x3] %vm7910, %v7908
    %v7914 = vsel %vm6207, %v7804, %v7692
    %7915 = vrot.lane.b32.xlu0 %v7914, 40
    %v7916 = vpop.permute.xlu0 %7915
    %vm7918 = vcmask 386368
    %7919 = vst.msk [vmem:[#allocation6] sm:$0x3] %vm7918, %v7916
    %v7922 = vsel %vm6207, %v7811, %v7699
    %7923 = vrot.lane.b32.xlu0 %v7922, 48
    %v7924 = vpop.permute.xlu0 %7923
    %vm7926 = vcmask 451968
    %7927 = vst.msk [vmem:[#allocation6] sm:$0x3] %vm7926, %v7924
    %v7930 = vsel %vm6207, %v7818, %v7706
    %7931 = vrot.lane.b32.xlu0 %v7930, 56
    %v7932 = vpop.permute.xlu0 %7931
    %vm7934 = vcmask 517568
    %7935 = vst.msk [vmem:[#allocation6] sm:$0x3] %vm7934, %v7932
    %v7938 = vsel %vm6207, %v7825, %v7713
    %7939 = vrot.lane.b32.xlu0 %v7938, 64
    %v7940 = vpop.permute.xlu0 %7939
    %vm7942 = vcmask 583168
    %7943 = vst.msk [vmem:[#allocation6] sm:$0x3] %vm7942, %v7940
    %v7946 = vsel %vm6207, %v7832, %v7720
    %7947 = vrot.lane.b32.xlu0 %v7946, 72
    %v7948 = vpop.permute.xlu0 %7947
    %vm7950 = vcmask 648768
    %7951 = vst.msk [vmem:[#allocation6] sm:$0x3] %vm7950, %v7948
    %v7954 = vsel %vm6207, %v7839, %v7727
    %7955 = vrot.lane.b32.xlu0 %v7954, 80
    %v7956 = vpop.permute.xlu0 %7955
    %vm7958 = vcmask 714368
    %7959 = vst.msk [vmem:[#allocation6] sm:$0x3] %vm7958, %v7956
    %v7962 = vsel %vm6207, %v7846, %v7734
    %7963 = vrot.lane.b32.xlu0 %v7962, 88
    %v7964 = vpop.permute.xlu0 %7963
    %vm7966 = vcmask 779968
    %7967 = vst.msk [vmem:[#allocation6] sm:$0x3] %vm7966, %v7964
    %v7970 = vsel %vm6207, %v7853, %v7741
    %7971 = vrot.lane.b32.xlu0 %v7970, 96
    %v7972 = vpop.permute.xlu0 %7971
    %vm7974 = vcmask 845568
    %7975 = vst.msk [vmem:[#allocation6] sm:$0x3] %vm7974, %v7972
    %v7978 = vsel %vm6207, %v7860, %v7748
    %7979 = vrot.lane.b32.xlu0 %v7978, 104
    %v7980 = vpop.permute.xlu0 %7979
    %vm7982 = vcmask 911168
    %7983 = vst.msk [vmem:[#allocation6] sm:$0x3] %vm7982, %v7980
    %v7986 = vsel %vm6207, %v7867, %v7755
    %7987 = vrot.lane.b32.xlu0 %v7986, 112
    %v7988 = vpop.permute.xlu0 %7987
    %vm7990 = vcmask 976768
    %7991 = vst.msk [vmem:[#allocation6] sm:$0x3] %vm7990, %v7988
    %v7994 = vsel %vm6207, %v7874, %v7762
    %7995 = vrot.lane.b32.xlu0 %v7994, 120
    %v7996 = vpop.permute.xlu0 %7995
    %vm7998 = vcmask 1042368
    %7999 = vst.msk [vmem:[#allocation6] sm:$0x3] %vm7998, %v7996
    %v8000 = vld [vmem:[#allocation6] sm:$0x3]
    %v8001 = vld [vmem:[%s7] sm:$0xff]
    %v8002 = vld [vmem:[%s7 + $0x8] sm:$0xff]
    %v8003 = vld [vmem:[%s7 + $0x10] sm:$0xff]
    %v8004 = vld [vmem:[%s7 + $0x18] sm:$0xff]
    %v8005 = vld [vmem:[%s7 + $0x20] sm:$0xff]
    %v8006 = vld [vmem:[%s7 + $0x28] sm:$0xff]
    %v8007 = vld [vmem:[%s7 + $0x30] sm:$0xff]
    %v8008 = vld [vmem:[%s7 + $0x38] sm:$0xff]
    %v8009 = vld [vmem:[%s7 + $0x40] sm:$0xff]
    %v8010 = vld [vmem:[%s7 + $0x48] sm:$0xff]
    %v8011 = vld [vmem:[%s7 + $0x50] sm:$0xff]
    %v8012 = vld [vmem:[%s7 + $0x58] sm:$0xff]
    %v8013 = vld [vmem:[%s7 + $0x60] sm:$0xff]
    %v8014 = vld [vmem:[%s7 + $0x68] sm:$0xff]
    %v8015 = vld [vmem:[%s7 + $0x70] sm:$0xff]
    %v8016 = vld [vmem:[%s7 + $0x78] sm:$0xff]
    %v8017 = vld [vmem:[%s8] sm:$0x1]
    %v8019 = vlaneseq
    %v8020 = vshrl.u32 %v8019, 7
    %v8021 = vsub.s32 0, %v8020
    %v8022 = vrot.slane %v8017, %v8021
    %8024 = vmatprep.subr.mxu0 0.0
    %8025 = vmatpush1.msra.mxu0 %v8016
    %8026 = vmatprep.subr.mxu0 0.0
    %8027 = vmatpush1.msra.mxu0 %v8015
    %8028 = vmatprep.subr.mxu0 0.0
    %8029 = vmatpush1.msra.mxu0 %v8014
    %8030 = vmatprep.subr.mxu0 0.0
    %8031 = vmatpush1.msra.mxu0 %v8013
    %8032 = vmatprep.subr.mxu0 0.0
    %8033 = vmatpush1.msra.mxu0 %v8012
    %8034 = vmatprep.subr.mxu0 0.0
    %8035 = vmatpush1.msra.mxu0 %v8011
    %8036 = vmatprep.subr.mxu0 0.0
    %8037 = vmatpush1.msra.mxu0 %v8010
    %8038 = vmatprep.subr.mxu0 0.0
    %8039 = vmatpush1.msra.mxu0 %v8009
    %8040 = vmatprep.subr.mxu0 0.0
    %8041 = vmatpush1.msra.mxu0 %v8008
    %8042 = vmatprep.subr.mxu0 0.0
    %8043 = vmatpush1.msra.mxu0 %v8007
    %8044 = vmatprep.subr.mxu0 0.0
    %8045 = vmatpush1.msra.mxu0 %v8006
    %8046 = vmatprep.subr.mxu0 0.0
    %8047 = vmatpush1.msra.mxu0 %v8005
    %8048 = vmatprep.subr.mxu0 0.0
    %8049 = vmatpush1.msra.mxu0 %v8004
    %8050 = vmatprep.subr.mxu0 0.0
    %8051 = vmatpush1.msra.mxu0 %v8003
    %8052 = vmatprep.subr.mxu0 0.0
    %8053 = vmatpush1.msra.mxu0 %v8002
    %8054 = vmatprep.subr.mxu0 0.0
    %8055 = vmatpush1.msra.mxu0 %v8001
    %8056 = vmatprep.subr.mxu0 0.0
    %8057 = vmatpush2.msra.mxu0 0.0
    %8058 = vmatprep.subr.mxu0 0.0
    %8059 = vmatpush2.msra.mxu0 0.0
    %8060 = vmatprep.subr.mxu0 0.0
    %8061 = vmatpush2.msra.mxu0 0.0
    %8062 = vmatprep.subr.mxu0 0.0
    %8063 = vmatpush2.msra.mxu0 0.0
    %8064 = vmatprep.subr.mxu0 0.0
    %8065 = vmatpush2.msra.mxu0 0.0
    %8066 = vmatprep.subr.mxu0 0.0
    %8067 = vmatpush2.msra.mxu0 0.0
    %8068 = vmatprep.subr.mxu0 0.0
    %8069 = vmatpush2.msra.mxu0 0.0
    %8070 = vmatprep.subr.mxu0 0.0
    %8071 = vmatpush2.msra.mxu0 0.0
    %8072 = vmatprep.subr.mxu0 0.0
    %8073 = vmatpush2.msra.mxu0 0.0
    %8074 = vmatprep.subr.mxu0 0.0
    %8075 = vmatpush2.msra.mxu0 0.0
    %8076 = vmatprep.subr.mxu0 0.0
    %8077 = vmatpush2.msra.mxu0 0.0
    %8078 = vmatprep.subr.mxu0 0.0
    %8079 = vmatpush2.msra.mxu0 0.0
    %8080 = vmatprep.subr.mxu0 0.0
    %8081 = vmatpush2.msra.mxu0 0.0
    %8082 = vmatprep.subr.mxu0 0.0
    %8083 = vmatpush2.msra.mxu0 0.0
    %8084 = vmatprep.subr.mxu0 0.0
    %8085 = vmatpush2.msra.mxu0 0.0
    %8086 = vmatprep.subr.mxu0 0.0
    %8087 = vmatpush2.msra.mxu0 0.0
    %8088 = vmatprep.mubr.f32.mxu0 0.0
    %8089 = vmatmul.mubr.f32.gmra.mxu0 %v8000
    %v8090 = vpop.f32.mrf.mxu0
    %v8091 = vadd.f32 %v8022, %v8090
    %v8092 = vpop.f32.mrf.mxu0
    %8093 = vdwg.mxu0
    %v8094 = vmax.f32 %v8091, 0.0
    %v8095 = vld [vmem:[%s9] sm:$0xff]
    %v8096 = vld [vmem:[%s9 + $0x8] sm:$0xff]
    %v8097 = vld [vmem:[%s9 + $0x10] sm:$0xff]
    %v8098 = vld [vmem:[%s9 + $0x18] sm:$0xff]
    %v8099 = vld [vmem:[%s9 + $0x20] sm:$0xff]
    %v8100 = vld [vmem:[%s9 + $0x28] sm:$0xff]
    %v8101 = vld [vmem:[%s9 + $0x30] sm:$0xff]
    %v8102 = vld [vmem:[%s9 + $0x38] sm:$0xff]
    %v8103 = vld [vmem:[%s9 + $0x40] sm:$0xff]
    %v8104 = vld [vmem:[%s9 + $0x48] sm:$0xff]
    %v8105 = vld [vmem:[%s9 + $0x50] sm:$0xff]
    %v8106 = vld [vmem:[%s9 + $0x58] sm:$0xff]
    %v8107 = vld [vmem:[%s9 + $0x60] sm:$0xff]
    %v8108 = vld [vmem:[%s9 + $0x68] sm:$0xff]
    %v8109 = vld [vmem:[%s9 + $0x70] sm:$0xff]
    %v8110 = vld [vmem:[%s9 + $0x78] sm:$0xff]
    %v8111 = vld [vmem:[%s10] sm:$0x1]
    %v8113 = vlaneseq
    %v8114 = vshrl.u32 %v8113, 7
    %v8115 = vsub.s32 0, %v8114
    %v8116 = vrot.slane %v8111, %v8115
    %8118 = vmatprep.subr.mxu0 0.0
    %8119 = vmatpush1.msra.mxu0 %v8110
    %8120 = vmatprep.subr.mxu0 0.0
    %8121 = vmatpush1.msra.mxu0 %v8109
    %8122 = vmatprep.subr.mxu0 0.0
    %8123 = vmatpush1.msra.mxu0 %v8108
    %8124 = vmatprep.subr.mxu0 0.0
    %8125 = vmatpush1.msra.mxu0 %v8107
    %8126 = vmatprep.subr.mxu0 0.0
    %8127 = vmatpush1.msra.mxu0 %v8106
    %8128 = vmatprep.subr.mxu0 0.0
    %8129 = vmatpush1.msra.mxu0 %v8105
    %8130 = vmatprep.subr.mxu0 0.0
    %8131 = vmatpush1.msra.mxu0 %v8104
    %8132 = vmatprep.subr.mxu0 0.0
    %8133 = vmatpush1.msra.mxu0 %v8103
    %8134 = vmatprep.subr.mxu0 0.0
    %8135 = vmatpush1.msra.mxu0 %v8102
    %8136 = vmatprep.subr.mxu0 0.0
    %8137 = vmatpush1.msra.mxu0 %v8101
    %8138 = vmatprep.subr.mxu0 0.0
    %8139 = vmatpush1.msra.mxu0 %v8100
    %8140 = vmatprep.subr.mxu0 0.0
    %8141 = vmatpush1.msra.mxu0 %v8099
    %8142 = vmatprep.subr.mxu0 0.0
    %8143 = vmatpush1.msra.mxu0 %v8098
    %8144 = vmatprep.subr.mxu0 0.0
    %8145 = vmatpush1.msra.mxu0 %v8097
    %8146 = vmatprep.subr.mxu0 0.0
    %8147 = vmatpush1.msra.mxu0 %v8096
    %8148 = vmatprep.subr.mxu0 0.0
    %8149 = vmatpush1.msra.mxu0 %v8095
    %8150 = vmatprep.subr.mxu0 0.0
    %8151 = vmatpush2.msra.mxu0 0.0
    %8152 = vmatprep.subr.mxu0 0.0
    %8153 = vmatpush2.msra.mxu0 0.0
    %8154 = vmatprep.subr.mxu0 0.0
    %8155 = vmatpush2.msra.mxu0 0.0
    %8156 = vmatprep.subr.mxu0 0.0
    %8157 = vmatpush2.msra.mxu0 0.0
    %8158 = vmatprep.subr.mxu0 0.0
    %8159 = vmatpush2.msra.mxu0 0.0
    %8160 = vmatprep.subr.mxu0 0.0
    %8161 = vmatpush2.msra.mxu0 0.0
    %8162 = vmatprep.subr.mxu0 0.0
    %8163 = vmatpush2.msra.mxu0 0.0
    %8164 = vmatprep.subr.mxu0 0.0
    %8165 = vmatpush2.msra.mxu0 0.0
    %8166 = vmatprep.subr.mxu0 0.0
    %8167 = vmatpush2.msra.mxu0 0.0
    %8168 = vmatprep.subr.mxu0 0.0
    %8169 = vmatpush2.msra.mxu0 0.0
    %8170 = vmatprep.subr.mxu0 0.0
    %8171 = vmatpush2.msra.mxu0 0.0
    %8172 = vmatprep.subr.mxu0 0.0
    %8173 = vmatpush2.msra.mxu0 0.0
    %8174 = vmatprep.subr.mxu0 0.0
    %8175 = vmatpush2.msra.mxu0 0.0
    %8176 = vmatprep.subr.mxu0 0.0
    %8177 = vmatpush2.msra.mxu0 0.0
    %8178 = vmatprep.subr.mxu0 0.0
    %8179 = vmatpush2.msra.mxu0 0.0
    %8180 = vmatprep.subr.mxu0 0.0
    %8181 = vmatpush2.msra.mxu0 0.0
    %8182 = vmatprep.mubr.f32.mxu0 0.0
    %8183 = vmatmul.mubr.f32.gmra.mxu0 %v8094
    %v8184 = vpop.f32.mrf.mxu0
    %v8185 = vadd.f32 %v8116, %v8184
    %v8186 = vpop.f32.mrf.mxu0
    %8187 = vdwg.mxu0
    %8188 = vst [vmem:[#allocation7] sm:$0x3] %v8185
    // Predicated region
    $region46: #{fwd.1} parent=1 // pred_check
      _
    $region47: #{fwd.1} parent=1 // pred_check_branch
      %8190 = sbr.rel (0) target = $region49
    $region48: #{fwd.1} parent=1 // pred_region
      %s8192 = ssub.s32 32, 32
      %8193 = vsyncadd [#allocation8], %s8192
      %s8195 = sshll.u32 [#allocation7], 4
      %s8196 = int_to_ptr.vmem [resolvable:$true] %s8195
      %8198 = dma.vmem_to_hbm [thread:$0]  %s8196, 32, %s11, [#allocation8]
    $region49: #{fwd.1} parent=1 // pred_fallthru
      _
    // Predicated region
    $region50: #{fwd.1} parent=1 // pred_check
      _
    $region51: #{fwd.1} parent=1 // pred_check_branch
      %8200 = sbr.rel (0) target = $region53
    $region52: #{fwd.1} parent=1 // pred_region
      %8201 = dma.done [#allocation8], 32
    $region53: #{fwd.1} parent=1 // pred_fallthru
      _
    %8202 = vsyncpa [#allocation8], 1

</llo_original>
